<compile_context>
chip_gen: v7x
topology: tpu7x:2x2x1
jax: 0.10.0
libtpu: 0.0.40
codegen_flags: <defaults>
</compile_context>

<pallas_src>
import math

import jax
import jax.numpy as jnp
from jax.experimental import pallas as pl
from jax.experimental.pallas import tpu as pltpu

# ----------------------------- small config ---------------------------------
IMG = 32          # image_size  (module default: 1000)
PATCH = 16        # patch_size
CH = 3            # num_channels
HIDDEN = 32       # hidden_size (module default: 768)
HEADS = 4         # num_attention_heads
NLAYERS = 2       # num_hidden_layers (module default: 12)
INTER = 64        # intermediate_size (module default: 3072)
NUM_CLASSES = 128
BATCH = 2
LN_EPS = 1e-12
HEAD_DIM = HIDDEN // HEADS
N_PATCHES = (IMG // PATCH) ** 2
SEQ = N_PATCHES + 1               # +1 for the CLS token
PATCH_DIM = CH * PATCH * PATCH
LSTM_H = HIDDEN // 2              # per-direction LSTM hidden size
LSTM_LAYERS = 2


# ------------------------------ math helpers ---------------------------------
def _sigmoid(x):
    return 1.0 / (1.0 + jnp.exp(-x))


def _erf(x):
    # Abramowitz & Stegun 7.1.26 rational approximation, |error| <= 1.5e-7.
    # TODO(synk): replace with lax.erf if/when an exact Mosaic lowering is guaranteed.
    z = jnp.abs(x)
    t = 1.0 / (1.0 + 0.3275911 * z)
    poly = t * (0.254829592 + t * (-0.284496736 + t * (1.421413741
               + t * (-1.453152027 + t * 1.061405429))))
    y = 1.0 - poly * jnp.exp(-z * z)
    return jnp.where(x < 0.0, -y, y)


def _gelu_exact(x):
    # matches torch.nn.functional.gelu / HF "gelu" (erf form) to ~1e-7
    return 0.5 * x * (1.0 + _erf(x * 0.7071067811865476))


def _layernorm(x, g, b):
    mu = jnp.mean(x, axis=-1, keepdims=True)
    var = jnp.mean(jnp.square(x - mu), axis=-1, keepdims=True)
    return (x - mu) * jax.lax.rsqrt(var + LN_EPS) * g + b


# ------------------------------- kernels -------------------------------------
def _vit_kernel(patches_ref, pw_ref, tokb_ref,
                ln1g_ref, ln1b_ref, wqkv_ref, bqkv_ref, wo_ref, bo_ref,
                ln2g_ref, ln2b_ref, w1_ref, b1_ref, w2_ref, b2_ref,
                lnfg_ref, lnfb_ref, out_ref, h_sc):
    layer = pl.program_id(1)

    # ---- patch embedding + CLS/pos bias into the residual-stream scratch ----
    @pl.when(layer == 0)
    def _embed():
        emb = jnp.dot(patches_ref[0], pw_ref[...],
                      preferred_element_type=jnp.float32)       # (SEQ, D)
        h_sc[...] = emb + tokb_ref[...]

    scale = 1.0 / math.sqrt(HEAD_DIM)
    h = h_sc[...]                                               # (SEQ, D)

    # ---- self-attention (pre-LN), fused QKV, heads unrolled ----
    xn = _layernorm(h, ln1g_ref[0], ln1b_ref[0])
    qkv = jnp.dot(xn, wqkv_ref[0],
                  preferred_element_type=jnp.float32) + bqkv_ref[0]   # (SEQ, 3D)
    wo = wo_ref[0]                                              # (D, D)
    attn = jnp.zeros((SEQ, HIDDEN), jnp.float32)
    for hh in range(HEADS):
        lo = hh * HEAD_DIM
        hi = lo + HEAD_DIM
        q = qkv[:, lo:hi]
        k = qkv[:, HIDDEN + lo:HIDDEN + hi]
        v = qkv[:, 2 * HIDDEN + lo:2 * HIDDEN + hi]
        s = jax.lax.dot_general(q, k, (((1,), (1,)), ((), ())),
                                preferred_element_type=jnp.float32) * scale
        s = s - jnp.max(s, axis=-1, keepdims=True)
        p = jnp.exp(s)
        p = p / jnp.sum(p, axis=-1, keepdims=True)
        ctx = jnp.dot(p, v, preferred_element_type=jnp.float32)        # (SEQ, Dh)
        attn = attn + jnp.dot(ctx, wo[lo:hi, :],
                              preferred_element_type=jnp.float32)      # (SEQ, D)
    h1 = h + attn + bo_ref[0]

    # ---- MLP (pre-LN) with in-kernel exact GELU ----
    x2 = _layernorm(h1, ln2g_ref[0], ln2b_ref[0])
    inter = _gelu_exact(jnp.dot(x2, w1_ref[0],
                                preferred_element_type=jnp.float32) + b1_ref[0])
    ffn = jnp.dot(inter, w2_ref[0],
                  preferred_element_type=jnp.float32) + b2_ref[0]
    hout = h1 + ffn
    h_sc[...] = hout

    # ---- final LayerNorm + writeback on the last layer ----
    @pl.when(layer == pl.num_programs(1) - 1)
    def _finalize():
        out_ref[0] = _layernorm(hout, lnfg_ref[...],
                                lnfb_ref[...]).astype(out_ref.dtype)


def _bilstm_head_kernel(x_ref, wih_ref, whh_ref, bg_ref, wc_ref, bc_ref,
                        logits_ref, preds_ref, st_sc):
    H = LSTM_H

    def cell(gates, c_prev):
        # PyTorch gate order: i, f, g, o
        i_g = _sigmoid(gates[:, 0 * H:1 * H])
        f_g = _sigmoid(gates[:, 1 * H:2 * H])
        g_g = jnp.tanh(gates[:, 2 * H:3 * H])
        o_g = _sigmoid(gates[:, 3 * H:4 * H])
        c = f_g * c_prev + i_g * g_g
        h = o_g * jnp.tanh(c)
        return h, c

    cur = x_ref[0]                                              # (SEQ, D)
    for l in range(LSTM_LAYERS):
        # fused input-gate matmul for BOTH directions: (SEQ, D) @ (D, 8H)
        xg = jnp.dot(cur, wih_ref[l],
                     preferred_element_type=jnp.float32) + bg_ref[l]    # (SEQ, 8H)
        whh_f = whh_ref[l, 0]                                   # (H, 4H)
        whh_b = whh_ref[l, 1]
        # forward direction
        h = jnp.zeros((1, H), jnp.float32)
        c = jnp.zeros((1, H), jnp.float32)
        for t in range(SEQ):
            g = xg[t:t + 1, 0:4 * H] + jnp.dot(
                h, whh_f, preferred_element_type=jnp.float32)
            h, c = cell(g, c)
            st_sc[t:t + 1, 0:H] = h
        # reverse direction (reads reversed time, no flip materialization)
        h = jnp.zeros((1, H), jnp.float32)
        c = jnp.zeros((1, H), jnp.float32)
        for t in range(SEQ - 1, -1, -1):
            g = xg[t:t + 1, 4 * H:8 * H] + jnp.dot(
                h, whh_b, preferred_element_type=jnp.float32)
            h, c = cell(g, c)
            st_sc[t:t + 1, H:2 * H] = h
        cur = st_sc[...]                                        # (SEQ, 2H) == (SEQ, D)

    # ---- classifier + argmax (lane-dense prediction slab) ----
    logits = jnp.dot(cur, wc_ref[...],
                     preferred_element_type=jnp.float32) + bc_ref[...]  # (SEQ, NC)
    logits_ref[0] = logits.astype(logits_ref.dtype)
    mx = jnp.max(logits, axis=-1, keepdims=True)
    idx = jax.lax.broadcasted_iota(jnp.int32, logits.shape, 1)
    # first index of the maximum (matches torch.argmax tie-break)
    pred = jnp.min(jnp.where(logits == mx, idx, jnp.int32(NUM_CLASSES)),
                   axis=-1, keepdims=True)                      # (SEQ, 1)
    preds_ref[0] = jnp.broadcast_to(pred, (SEQ, NUM_CLASSES))


# ------------------------------ wrappers --------------------------------------
def patchify_padded(x, P):
    # NCHW -> (B, 1 + num_patches, C*P*P): Conv2d(kernel=stride=P) unfold order,
    # with a leading zero row so the CLS position falls out of the same matmul.
    B, C, H, W = x.shape
    nh, nw = H // P, W // P
    p = x.reshape(B, C, nh, P, nw, P)
    p = p.transpose(0, 2, 4, 1, 3, 5).reshape(B, nh * nw, C * P * P)
    return jnp.pad(p, ((0, 0), (1, 0), (0, 0)))


def vit_encode(x, p):
    B = x.shape[0]
    patches = patchify_padded(x, PATCH)                          # (B, SEQ, PATCH_DIM)
    return pl.pallas_call(
        _vit_kernel,
        out_shape=jax.ShapeDtypeStruct((B, SEQ, HIDDEN), jnp.float32),
        grid=(B, NLAYERS),
        in_specs=[
            pl.BlockSpec((1, SEQ, PATCH_DIM), lambda b, l: (b, 0, 0)),     # patches
            pl.BlockSpec((PATCH_DIM, HIDDEN), lambda b, l: (0, 0)),        # patch_w
            pl.BlockSpec((SEQ, HIDDEN), lambda b, l: (0, 0)),              # tokbias
            pl.BlockSpec((1, 1, HIDDEN), lambda b, l: (l, 0, 0)),          # ln1_g
            pl.BlockSpec((1, 1, HIDDEN), lambda b, l: (l, 0, 0)),          # ln1_b
            pl.BlockSpec((1, HIDDEN, 3 * HIDDEN), lambda b, l: (l, 0, 0)), # wqkv
            pl.BlockSpec((1, 1, 3 * HIDDEN), lambda b, l: (l, 0, 0)),      # bqkv
            pl.BlockSpec((1, HIDDEN, HIDDEN), lambda b, l: (l, 0, 0)),     # wo
            pl.BlockSpec((1, 1, HIDDEN), lambda b, l: (l, 0, 0)),          # bo
            pl.BlockSpec((1, 1, HIDDEN), lambda b, l: (l, 0, 0)),          # ln2_g
            pl.BlockSpec((1, 1, HIDDEN), lambda b, l: (l, 0, 0)),          # ln2_b
            pl.BlockSpec((1, HIDDEN, INTER), lambda b, l: (l, 0, 0)),      # w1
            pl.BlockSpec((1, 1, INTER), lambda b, l: (l, 0, 0)),           # b1
            pl.BlockSpec((1, INTER, HIDDEN), lambda b, l: (l, 0, 0)),      # w2
            pl.BlockSpec((1, 1, HIDDEN), lambda b, l: (l, 0, 0)),          # b2
            pl.BlockSpec((1, HIDDEN), lambda b, l: (0, 0)),                # ln_f_g
            pl.BlockSpec((1, HIDDEN), lambda b, l: (0, 0)),                # ln_f_b
        ],
        out_specs=pl.BlockSpec((1, SEQ, HIDDEN), lambda b, l: (b, 0, 0)),
        scratch_shapes=[pltpu.VMEM((SEQ, HIDDEN), jnp.float32)],
        compiler_params=pltpu.CompilerParams(
            dimension_semantics=("parallel", "arbitrary")),
    )(patches, p["patch_w"], p["tokbias"],
      p["ln1_g"], p["ln1_b"], p["wqkv"], p["bqkv"], p["wo"], p["bo"],
      p["ln2_g"], p["ln2_b"], p["w1"], p["b1"], p["w2"], p["b2"],
      p["ln_f_g"], p["ln_f_b"])


def lstm_classify(feats, p):
    B = feats.shape[0]
    logits, preds_slab = pl.pallas_call(
        _bilstm_head_kernel,
        out_shape=(
            jax.ShapeDtypeStruct((B, SEQ, NUM_CLASSES), jnp.float32),
            jax.ShapeDtypeStruct((B, SEQ, NUM_CLASSES), jnp.int32),
        ),
        grid=(B,),
        in_specs=[
            pl.BlockSpec((1, SEQ, HIDDEN), lambda b: (b, 0, 0)),                  # feats
            pl.BlockSpec((LSTM_LAYERS, HIDDEN, 8 * LSTM_H), lambda b: (0, 0, 0)), # w_ih
            pl.BlockSpec((LSTM_LAYERS, 2, LSTM_H, 4 * LSTM_H),
                         lambda b: (0, 0, 0, 0)),                                 # w_hh
            pl.BlockSpec((LSTM_LAYERS, 1, 8 * LSTM_H), lambda b: (0, 0, 0)),      # biases
            pl.BlockSpec((HIDDEN, NUM_CLASSES), lambda b: (0, 0)),                # cls_w
            pl.BlockSpec((1, NUM_CLASSES), lambda b: (0, 0)),                     # cls_b
        ],
        out_specs=(
            pl.BlockSpec((1, SEQ, NUM_CLASSES), lambda b: (b, 0, 0)),
            pl.BlockSpec((1, SEQ, NUM_CLASSES), lambda b: (b, 0, 0)),
        ),
        scratch_shapes=[pltpu.VMEM((SEQ, HIDDEN), jnp.float32)],
        compiler_params=pltpu.CompilerParams(dimension_semantics=("parallel",)),
    )(feats, p["lstm_wih"], p["lstm_whh"], p["lstm_b"], p["cls_w"], p["cls_b"])
    return logits, preds_slab[:, :, 0]


@jax.jit
def ocr_forward(x, params):
    feats = vit_encode(x, params)               # (B, SEQ, HIDDEN) last_hidden_state
    logits, preds = lstm_classify(feats, params)
    return logits, preds


# ------------------------------ parameters ------------------------------------
def init_params(key):
    keys = iter(jax.random.split(key, 256))

    def nrm(shape, std=0.02):
        return (std * jax.random.normal(next(keys), shape)).astype(jnp.float32)

    patch_w = nrm((PATCH_DIM, HIDDEN))
    patch_b = jnp.zeros((HIDDEN,), jnp.float32)
    cls_tok = nrm((1, HIDDEN))
    pos = nrm((SEQ, HIDDEN))
    # combined per-token additive bias: row 0 = CLS + pos[0]; rows 1.. = patch_b + pos[j]
    tokbias = jnp.concatenate(
        [cls_tok, jnp.broadcast_to(patch_b, (N_PATCHES, HIDDEN))], axis=0) + pos

    ln1_g, ln1_b, wqkv, bqkv, wo, bo = [], [], [], [], [], []
    ln2_g, ln2_b, w1, b1, w2, b2 = [], [], [], [], [], []
    for _ in range(NLAYERS):
        wq, wk, wv = nrm((HIDDEN, HIDDEN)), nrm((HIDDEN, HIDDEN)), nrm((HIDDEN, HIDDEN))
        ln1_g.append(jnp.ones((1, HIDDEN), jnp.float32))
        ln1_b.append(jnp.zeros((1, HIDDEN), jnp.float32))
        wqkv.append(jnp.concatenate([wq, wk, wv], axis=1))            # (D, 3D)
        bqkv.append(jnp.zeros((1, 3 * HIDDEN), jnp.float32))
        wo.append(nrm((HIDDEN, HIDDEN)))
        bo.append(jnp.zeros((1, HIDDEN), jnp.float32))
        ln2_g.append(jnp.ones((1, HIDDEN), jnp.float32))
        ln2_b.append(jnp.zeros((1, HIDDEN), jnp.float32))
        w1.append(nrm((HIDDEN, INTER)))
        b1.append(jnp.zeros((1, INTER), jnp.float32))
        w2.append(nrm((INTER, HIDDEN)))
        b2.append(jnp.zeros((1, HIDDEN), jnp.float32))

    p = dict(
        patch_w=patch_w, tokbias=tokbias,
        ln1_g=jnp.stack(ln1_g), ln1_b=jnp.stack(ln1_b),
        wqkv=jnp.stack(wqkv), bqkv=jnp.stack(bqkv),
        wo=jnp.stack(wo), bo=jnp.stack(bo),
        ln2_g=jnp.stack(ln2_g), ln2_b=jnp.stack(ln2_b),
        w1=jnp.stack(w1), b1=jnp.stack(b1),
        w2=jnp.stack(w2), b2=jnp.stack(b2),
        ln_f_g=jnp.ones((1, HIDDEN), jnp.float32),
        ln_f_b=jnp.zeros((1, HIDDEN), jnp.float32),
    )

    k_lstm = 1.0 / math.sqrt(LSTM_H)

    def uni(shape):
        return jax.random.uniform(next(keys), shape, jnp.float32, -k_lstm, k_lstm)

    wih_layers, whh_layers, b_layers = [], [], []
    for _l in range(LSTM_LAYERS):
        wih_f = uni((HIDDEN, 4 * LSTM_H))          # both layers see HIDDEN-wide inputs
        wih_b = uni((HIDDEN, 4 * LSTM_H))
        whh_f = uni((LSTM_H, 4 * LSTM_H))
        whh_b = uni((LSTM_H, 4 * LSTM_H))
        bias_f = uni((4 * LSTM_H,)) + uni((4 * LSTM_H,))   # b_ih + b_hh
        bias_b = uni((4 * LSTM_H,)) + uni((4 * LSTM_H,))
        wih_layers.append(jnp.concatenate([wih_f, wih_b], axis=1))        # (D, 8H)
        whh_layers.append(jnp.stack([whh_f, whh_b], axis=0))              # (2, H, 4H)
        b_layers.append(jnp.concatenate([bias_f, bias_b]).reshape(1, 8 * LSTM_H))
    p["lstm_wih"] = jnp.stack(wih_layers)          # (L, D, 8H)
    p["lstm_whh"] = jnp.stack(whh_layers)          # (L, 2, H, 4H)
    p["lstm_b"] = jnp.stack(b_layers)              # (L, 1, 8H)

    p["cls_w"] = nrm((HIDDEN, NUM_CLASSES))
    p["cls_b"] = jnp.zeros((1, NUM_CLASSES), jnp.float32)
    return p


# --------------------------------- main ---------------------------------------
if __name__ == "__main__":
    key = jax.random.PRNGKey(0)
    pkey, xkey = jax.random.split(key)
    params = init_params(pkey)
    x = jax.random.normal(xkey, (BATCH, CH, IMG, IMG), jnp.float32)

    logits, preds = ocr_forward(x, params)
    jax.block_until_ready((logits, preds))

    # _decode_predictions: ASCII char map, then (undefined) LanguageProcessor.
    preds_np = jax.device_get(preds)
    texts = ["".join(chr(int(c)) for c in row) for row in preds_np]
    # TODO(synk): LanguageProcessor.batch_process is undefined in the source module;
    # treated as identity pass-through on the decoded strings.
    processed_texts = texts

    assert logits.shape == (BATCH, SEQ, NUM_CLASSES)
    assert preds.shape == (BATCH, SEQ)
    assert len(processed_texts) == BATCH and all(len(t) == SEQ for t in processed_texts)
    print("KERNEL_OK")
</pallas_src>

<mosaic_0001>
module attributes {stable_mosaic.version = 11 : i64} {
  func.func @_vit_kernel(%arg0: i32, %arg1: i32, %arg2: memref<1x5x768xf32, #tpu.memory_space<vmem>>, %arg3: memref<768x32xf32, #tpu.memory_space<vmem>>, %arg4: memref<5x32xf32, #tpu.memory_space<vmem>>, %arg5: memref<1x1x32xf32, #tpu.memory_space<vmem>>, %arg6: memref<1x1x32xf32, #tpu.memory_space<vmem>>, %arg7: memref<1x32x96xf32, #tpu.memory_space<vmem>>, %arg8: memref<1x1x96xf32, #tpu.memory_space<vmem>>, %arg9: memref<1x32x32xf32, #tpu.memory_space<vmem>>, %arg10: memref<1x1x32xf32, #tpu.memory_space<vmem>>, %arg11: memref<1x1x32xf32, #tpu.memory_space<vmem>>, %arg12: memref<1x1x32xf32, #tpu.memory_space<vmem>>, %arg13: memref<1x32x64xf32, #tpu.memory_space<vmem>>, %arg14: memref<1x1x64xf32, #tpu.memory_space<vmem>>, %arg15: memref<1x64x32xf32, #tpu.memory_space<vmem>>, %arg16: memref<1x1x32xf32, #tpu.memory_space<vmem>>, %arg17: memref<1x32xf32, #tpu.memory_space<vmem>>, %arg18: memref<1x32xf32, #tpu.memory_space<vmem>>, %arg19: memref<1x5x32xf32, #tpu.memory_space<vmem>>, %arg20: memref<5x32xf32, #tpu.memory_space<vmem>>) attributes {dimension_semantics = [#tpu.dimension_semantics<parallel>, #tpu.dimension_semantics<arbitrary>], iteration_bounds = array<i64: 2, 2>, scalar_prefetch = 0 : i64, scratch_operands = 1 : i64, tpu.core_type = #tpu.core_type<tc>, window_params = [{transform_indices = @transform_0, window_bounds = array<i64: 1, 5, 768>}, {pipeline_mode = #tpu.pipeline_mode<synchronous>, transform_indices = @transform_1, window_bounds = array<i64: 768, 32>}, {pipeline_mode = #tpu.pipeline_mode<synchronous>, transform_indices = @transform_2, window_bounds = array<i64: 5, 32>}, {transform_indices = @transform_3, window_bounds = array<i64: 1, 1, 32>}, {transform_indices = @transform_4, window_bounds = array<i64: 1, 1, 32>}, {transform_indices = @transform_5, window_bounds = array<i64: 1, 32, 96>}, {transform_indices = @transform_6, window_bounds = array<i64: 1, 1, 96>}, {transform_indices = @transform_7, window_bounds = array<i64: 1, 32, 32>}, {transform_indices = @transform_8, window_bounds = array<i64: 1, 1, 32>}, {transform_indices = @transform_9, window_bounds = array<i64: 1, 1, 32>}, {transform_indices = @transform_10, window_bounds = array<i64: 1, 1, 32>}, {transform_indices = @transform_11, window_bounds = array<i64: 1, 32, 64>}, {transform_indices = @transform_12, window_bounds = array<i64: 1, 1, 64>}, {transform_indices = @transform_13, window_bounds = array<i64: 1, 64, 32>}, {transform_indices = @transform_14, window_bounds = array<i64: 1, 1, 32>}, {pipeline_mode = #tpu.pipeline_mode<synchronous>, transform_indices = @transform_15, window_bounds = array<i64: 1, 32>}, {pipeline_mode = #tpu.pipeline_mode<synchronous>, transform_indices = @transform_16, window_bounds = array<i64: 1, 32>}, {transform_indices = @transform_17, window_bounds = array<i64: 1, 5, 32>}]} {
    %c0_i32 = arith.constant 0 : i32
    %0 = arith.cmpi eq, %arg1, %c0_i32 : i32
    %1 = arith.extui %0 : i1 to i32
    %c0_i32_0 = arith.constant 0 : i32
    %2 = arith.cmpi ne, %1, %c0_i32_0 : i32
    scf.if %2 {
      %c0_93 = arith.constant 0 : index
      %c0_94 = arith.constant 0 : index
      %c0_95 = arith.constant 0 : index
      %206 = vector.load %arg2[%c0_93, %c0_94, %c0_95] : memref<1x5x768xf32, #tpu.memory_space<vmem>>, vector<1x5x768xf32>
      %207 = vector.shape_cast %206 : vector<1x5x768xf32> to vector<5x768xf32>
      %c0_96 = arith.constant 0 : index
      %c0_97 = arith.constant 0 : index
      %208 = vector.load %arg3[%c0_96, %c0_97] : memref<768x32xf32, #tpu.memory_space<vmem>>, vector<768x32xf32>
      %cst_98 = arith.constant dense<0.000000e+00> : vector<5x32xf32>
      %209 = tpu.matmul %207, %208, %cst_98 {dimension_numbers = #tpu.dot_dimension_numbers<[1], [0], [0], [1], [0, 0, 1, 1], [], []>} : vector<5x768xf32>, vector<768x32xf32>, vector<5x32xf32> -> vector<5x32xf32>
      %c0_99 = arith.constant 0 : index
      %c0_100 = arith.constant 0 : index
      %210 = vector.load %arg4[%c0_99, %c0_100] : memref<5x32xf32, #tpu.memory_space<vmem>>, vector<5x32xf32>
      %211 = arith.addf %209, %210 : vector<5x32xf32>
      %c0_101 = arith.constant 0 : index
      %c0_102 = arith.constant 0 : index
      %212 = vector.load %arg20[%c0_101, %c0_102] : memref<5x32xf32, #tpu.memory_space<vmem>>, vector<5x32xf32>
      tpu.vector_store %arg20[%c0_101, %c0_102], %211 {strides = array<i32>} : memref<5x32xf32, #tpu.memory_space<vmem>>, vector<5x32xf32>,
    } else {
    }
    %c0 = arith.constant 0 : index
    %c0_1 = arith.constant 0 : index
    %3 = vector.load %arg20[%c0, %c0_1] : memref<5x32xf32, #tpu.memory_space<vmem>>, vector<5x32xf32>
    %c0_2 = arith.constant 0 : index
    %c0_3 = arith.constant 0 : index
    %c0_4 = arith.constant 0 : index
    %4 = vector.load %arg5[%c0_2, %c0_3, %c0_4] : memref<1x1x32xf32, #tpu.memory_space<vmem>>, vector<1x1x32xf32>
    %5 = vector.shape_cast %4 : vector<1x1x32xf32> to vector<1x32xf32>
    %c0_5 = arith.constant 0 : index
    %c0_6 = arith.constant 0 : index
    %c0_7 = arith.constant 0 : index
    %6 = vector.load %arg6[%c0_5, %c0_6, %c0_7] : memref<1x1x32xf32, #tpu.memory_space<vmem>>, vector<1x1x32xf32>
    %7 = vector.shape_cast %6 : vector<1x1x32xf32> to vector<1x32xf32>
    %cst = arith.constant dense<0.000000e+00> : vector<5xf32>
    %8 = vector.multi_reduction <add>, %3, %cst [1] : vector<5x32xf32> to vector<5xf32>
    %9 = vector.shape_cast %8 : vector<5xf32> to vector<5x1xf32>
    %cst_8 = arith.constant 3.200000e+01 : f32
    %10 = vector.broadcast %cst_8 : f32 to vector<5x1xf32>
    %11 = arith.divf %9, %10 : vector<5x1xf32>
    %12 = vector.broadcast %11 : vector<5x1xf32> to vector<5x32xf32>
    %13 = arith.subf %3, %12 : vector<5x32xf32>
    %14 = arith.mulf %13, %13 : vector<5x32xf32>
    %cst_9 = arith.constant dense<0.000000e+00> : vector<5xf32>
    %15 = vector.multi_reduction <add>, %14, %cst_9 [1] : vector<5x32xf32> to vector<5xf32>
    %16 = vector.shape_cast %15 : vector<5xf32> to vector<5x1xf32>
    %cst_10 = arith.constant 3.200000e+01 : f32
    %17 = vector.broadcast %cst_10 : f32 to vector<5x1xf32>
    %18 = arith.divf %16, %17 : vector<5x1xf32>
    %19 = vector.broadcast %11 : vector<5x1xf32> to vector<5x32xf32>
    %20 = arith.subf %3, %19 : vector<5x32xf32>
    %cst_11 = arith.constant 9.99999996E-13 : f32
    %21 = vector.broadcast %cst_11 : f32 to vector<5x1xf32>
    %22 = arith.addf %18, %21 : vector<5x1xf32>
    %23 = math.rsqrt %22 : vector<5x1xf32>
    %24 = vector.broadcast %23 : vector<5x1xf32> to vector<5x32xf32>
    %25 = arith.mulf %20, %24 : vector<5x32xf32>
    %26 = vector.broadcast %5 : vector<1x32xf32> to vector<5x32xf32>
    %27 = arith.mulf %25, %26 : vector<5x32xf32>
    %28 = vector.broadcast %7 : vector<1x32xf32> to vector<5x32xf32>
    %29 = arith.addf %27, %28 : vector<5x32xf32>
    %c0_12 = arith.constant 0 : index
    %c0_13 = arith.constant 0 : index
    %c0_14 = arith.constant 0 : index
    %30 = vector.load %arg7[%c0_12, %c0_13, %c0_14] : memref<1x32x96xf32, #tpu.memory_space<vmem>>, vector<1x32x96xf32>
    %31 = vector.shape_cast %30 : vector<1x32x96xf32> to vector<32x96xf32>
    %cst_15 = arith.constant dense<0.000000e+00> : vector<5x96xf32>
    %32 = tpu.matmul %29, %31, %cst_15 {dimension_numbers = #tpu.dot_dimension_numbers<[1], [0], [0], [1], [0, 0, 1, 1], [], []>} : vector<5x32xf32>, vector<32x96xf32>, vector<5x96xf32> -> vector<5x96xf32>
    %c0_16 = arith.constant 0 : index
    %c0_17 = arith.constant 0 : index
    %c0_18 = arith.constant 0 : index
    %33 = vector.load %arg8[%c0_16, %c0_17, %c0_18] : memref<1x1x96xf32, #tpu.memory_space<vmem>>, vector<1x1x96xf32>
    %34 = vector.shape_cast %33 : vector<1x1x96xf32> to vector<1x96xf32>
    %35 = vector.broadcast %34 : vector<1x96xf32> to vector<5x96xf32>
    %36 = arith.addf %32, %35 : vector<5x96xf32>
    %c0_19 = arith.constant 0 : index
    %c0_20 = arith.constant 0 : index
    %c0_21 = arith.constant 0 : index
    %37 = vector.load %arg9[%c0_19, %c0_20, %c0_21] : memref<1x32x32xf32, #tpu.memory_space<vmem>>, vector<1x32x32xf32>
    %38 = vector.shape_cast %37 : vector<1x32x32xf32> to vector<32x32xf32>
    %cst_22 = arith.constant 0.000000e+00 : f32
    %39 = vector.broadcast %cst_22 : f32 to vector<5x32xf32>
    %40 = vector.extract_strided_slice %36 {offsets = [0, 0], sizes = [5, 8], strides = [1, 1]} : vector<5x96xf32> to vector<5x8xf32>
    %41 = vector.extract_strided_slice %36 {offsets = [0, 32], sizes = [5, 8], strides = [1, 1]} : vector<5x96xf32> to vector<5x8xf32>
    %42 = vector.extract_strided_slice %36 {offsets = [0, 64], sizes = [5, 8], strides = [1, 1]} : vector<5x96xf32> to vector<5x8xf32>
    %cst_23 = arith.constant dense<0.000000e+00> : vector<5x5xf32>
    %43 = tpu.matmul %40, %41, %cst_23 {dimension_numbers = #tpu.dot_dimension_numbers<[1], [1], [0], [0], [0, 0, 1, 0], [], []>} : vector<5x8xf32>, vector<5x8xf32>, vector<5x5xf32> -> vector<5x5xf32>
    %cst_24 = arith.constant 0.353553385 : f32
    %44 = vector.broadcast %cst_24 : f32 to vector<5x5xf32>
    %45 = arith.mulf %43, %44 : vector<5x5xf32>
    %cst_25 = arith.constant dense<0xFF800000> : vector<5xf32>
    %46 = vector.multi_reduction <maximumf>, %45, %cst_25 [1] : vector<5x5xf32> to vector<5xf32>
    %47 = vector.shape_cast %46 : vector<5xf32> to vector<5x1xf32>
    %48 = vector.broadcast %47 : vector<5x1xf32> to vector<5x5xf32>
    %49 = arith.subf %45, %48 : vector<5x5xf32>
    %50 = math.exp %49 : vector<5x5xf32>
    %cst_26 = arith.constant dense<0.000000e+00> : vector<5xf32>
    %51 = vector.multi_reduction <add>, %50, %cst_26 [1] : vector<5x5xf32> to vector<5xf32>
    %52 = vector.shape_cast %51 : vector<5xf32> to vector<5x1xf32>
    %53 = vector.broadcast %52 : vector<5x1xf32> to vector<5x5xf32>
    %54 = arith.divf %50, %53 : vector<5x5xf32>
    %cst_27 = arith.constant dense<0.000000e+00> : vector<5x8xf32>
    %55 = tpu.matmul %54, %42, %cst_27 {dimension_numbers = #tpu.dot_dimension_numbers<[1], [0], [0], [1], [0, 0, 1, 1], [], []>} : vector<5x5xf32>, vector<5x8xf32>, vector<5x8xf32> -> vector<5x8xf32>
    %56 = vector.extract_strided_slice %38 {offsets = [0, 0], sizes = [8, 32], strides = [1, 1]} : vector<32x32xf32> to vector<8x32xf32>
    %cst_28 = arith.constant dense<0.000000e+00> : vector<5x32xf32>
    %57 = tpu.matmul %55, %56, %cst_28 {dimension_numbers = #tpu.dot_dimension_numbers<[1], [0], [0], [1], [0, 0, 1, 1], [], []>} : vector<5x8xf32>, vector<8x32xf32>, vector<5x32xf32> -> vector<5x32xf32>
    %58 = arith.addf %39, %57 : vector<5x32xf32>
    %59 = vector.extract_strided_slice %36 {offsets = [0, 8], sizes = [5, 8], strides = [1, 1]} : vector<5x96xf32> to vector<5x8xf32>
    %60 = vector.extract_strided_slice %36 {offsets = [0, 40], sizes = [5, 8], strides = [1, 1]} : vector<5x96xf32> to vector<5x8xf32>
    %61 = vector.extract_strided_slice %36 {offsets = [0, 72], sizes = [5, 8], strides = [1, 1]} : vector<5x96xf32> to vector<5x8xf32>
    %cst_29 = arith.constant dense<0.000000e+00> : vector<5x5xf32>
    %62 = tpu.matmul %59, %60, %cst_29 {dimension_numbers = #tpu.dot_dimension_numbers<[1], [1], [0], [0], [0, 0, 1, 0], [], []>} : vector<5x8xf32>, vector<5x8xf32>, vector<5x5xf32> -> vector<5x5xf32>
    %cst_30 = arith.constant 0.353553385 : f32
    %63 = vector.broadcast %cst_30 : f32 to vector<5x5xf32>
    %64 = arith.mulf %62, %63 : vector<5x5xf32>
    %cst_31 = arith.constant dense<0xFF800000> : vector<5xf32>
    %65 = vector.multi_reduction <maximumf>, %64, %cst_31 [1] : vector<5x5xf32> to vector<5xf32>
    %66 = vector.shape_cast %65 : vector<5xf32> to vector<5x1xf32>
    %67 = vector.broadcast %66 : vector<5x1xf32> to vector<5x5xf32>
    %68 = arith.subf %64, %67 : vector<5x5xf32>
    %69 = math.exp %68 : vector<5x5xf32>
    %cst_32 = arith.constant dense<0.000000e+00> : vector<5xf32>
    %70 = vector.multi_reduction <add>, %69, %cst_32 [1] : vector<5x5xf32> to vector<5xf32>
    %71 = vector.shape_cast %70 : vector<5xf32> to vector<5x1xf32>
    %72 = vector.broadcast %71 : vector<5x1xf32> to vector<5x5xf32>
    %73 = arith.divf %69, %72 : vector<5x5xf32>
    %cst_33 = arith.constant dense<0.000000e+00> : vector<5x8xf32>
    %74 = tpu.matmul %73, %61, %cst_33 {dimension_numbers = #tpu.dot_dimension_numbers<[1], [0], [0], [1], [0, 0, 1, 1], [], []>} : vector<5x5xf32>, vector<5x8xf32>, vector<5x8xf32> -> vector<5x8xf32>
    %75 = vector.extract_strided_slice %38 {offsets = [8, 0], sizes = [8, 32], strides = [1, 1]} : vector<32x32xf32> to vector<8x32xf32>
    %cst_34 = arith.constant dense<0.000000e+00> : vector<5x32xf32>
    %76 = tpu.matmul %74, %75, %cst_34 {dimension_numbers = #tpu.dot_dimension_numbers<[1], [0], [0], [1], [0, 0, 1, 1], [], []>} : vector<5x8xf32>, vector<8x32xf32>, vector<5x32xf32> -> vector<5x32xf32>
    %77 = arith.addf %58, %76 : vector<5x32xf32>
    %78 = vector.extract_strided_slice %36 {offsets = [0, 16], sizes = [5, 8], strides = [1, 1]} : vector<5x96xf32> to vector<5x8xf32>
    %79 = vector.extract_strided_slice %36 {offsets = [0, 48], sizes = [5, 8], strides = [1, 1]} : vector<5x96xf32> to vector<5x8xf32>
    %80 = vector.extract_strided_slice %36 {offsets = [0, 80], sizes = [5, 8], strides = [1, 1]} : vector<5x96xf32> to vector<5x8xf32>
    %cst_35 = arith.constant dense<0.000000e+00> : vector<5x5xf32>
    %81 = tpu.matmul %78, %79, %cst_35 {dimension_numbers = #tpu.dot_dimension_numbers<[1], [1], [0], [0], [0, 0, 1, 0], [], []>} : vector<5x8xf32>, vector<5x8xf32>, vector<5x5xf32> -> vector<5x5xf32>
    %cst_36 = arith.constant 0.353553385 : f32
    %82 = vector.broadcast %cst_36 : f32 to vector<5x5xf32>
    %83 = arith.mulf %81, %82 : vector<5x5xf32>
    %cst_37 = arith.constant dense<0xFF800000> : vector<5xf32>
    %84 = vector.multi_reduction <maximumf>, %83, %cst_37 [1] : vector<5x5xf32> to vector<5xf32>
    %85 = vector.shape_cast %84 : vector<5xf32> to vector<5x1xf32>
    %86 = vector.broadcast %85 : vector<5x1xf32> to vector<5x5xf32>
    %87 = arith.subf %83, %86 : vector<5x5xf32>
    %88 = math.exp %87 : vector<5x5xf32>
    %cst_38 = arith.constant dense<0.000000e+00> : vector<5xf32>
    %89 = vector.multi_reduction <add>, %88, %cst_38 [1] : vector<5x5xf32> to vector<5xf32>
    %90 = vector.shape_cast %89 : vector<5xf32> to vector<5x1xf32>
    %91 = vector.broadcast %90 : vector<5x1xf32> to vector<5x5xf32>
    %92 = arith.divf %88, %91 : vector<5x5xf32>
    %cst_39 = arith.constant dense<0.000000e+00> : vector<5x8xf32>
    %93 = tpu.matmul %92, %80, %cst_39 {dimension_numbers = #tpu.dot_dimension_numbers<[1], [0], [0], [1], [0, 0, 1, 1], [], []>} : vector<5x5xf32>, vector<5x8xf32>, vector<5x8xf32> -> vector<5x8xf32>
    %94 = vector.extract_strided_slice %38 {offsets = [16, 0], sizes = [8, 32], strides = [1, 1]} : vector<32x32xf32> to vector<8x32xf32>
    %cst_40 = arith.constant dense<0.000000e+00> : vector<5x32xf32>
    %95 = tpu.matmul %93, %94, %cst_40 {dimension_numbers = #tpu.dot_dimension_numbers<[1], [0], [0], [1], [0, 0, 1, 1], [], []>} : vector<5x8xf32>, vector<8x32xf32>, vector<5x32xf32> -> vector<5x32xf32>
    %96 = arith.addf %77, %95 : vector<5x32xf32>
    %97 = vector.extract_strided_slice %36 {offsets = [0, 24], sizes = [5, 8], strides = [1, 1]} : vector<5x96xf32> to vector<5x8xf32>
    %98 = vector.extract_strided_slice %36 {offsets = [0, 56], sizes = [5, 8], strides = [1, 1]} : vector<5x96xf32> to vector<5x8xf32>
    %99 = vector.extract_strided_slice %36 {offsets = [0, 88], sizes = [5, 8], strides = [1, 1]} : vector<5x96xf32> to vector<5x8xf32>
    %cst_41 = arith.constant dense<0.000000e+00> : vector<5x5xf32>
    %100 = tpu.matmul %97, %98, %cst_41 {dimension_numbers = #tpu.dot_dimension_numbers<[1], [1], [0], [0], [0, 0, 1, 0], [], []>} : vector<5x8xf32>, vector<5x8xf32>, vector<5x5xf32> -> vector<5x5xf32>
    %cst_42 = arith.constant 0.353553385 : f32
    %101 = vector.broadcast %cst_42 : f32 to vector<5x5xf32>
    %102 = arith.mulf %100, %101 : vector<5x5xf32>
    %cst_43 = arith.constant dense<0xFF800000> : vector<5xf32>
    %103 = vector.multi_reduction <maximumf>, %102, %cst_43 [1] : vector<5x5xf32> to vector<5xf32>
    %104 = vector.shape_cast %103 : vector<5xf32> to vector<5x1xf32>
    %105 = vector.broadcast %104 : vector<5x1xf32> to vector<5x5xf32>
    %106 = arith.subf %102, %105 : vector<5x5xf32>
    %107 = math.exp %106 : vector<5x5xf32>
    %cst_44 = arith.constant dense<0.000000e+00> : vector<5xf32>
    %108 = vector.multi_reduction <add>, %107, %cst_44 [1] : vector<5x5xf32> to vector<5xf32>
    %109 = vector.shape_cast %108 : vector<5xf32> to vector<5x1xf32>
    %110 = vector.broadcast %109 : vector<5x1xf32> to vector<5x5xf32>
    %111 = arith.divf %107, %110 : vector<5x5xf32>
    %cst_45 = arith.constant dense<0.000000e+00> : vector<5x8xf32>
    %112 = tpu.matmul %111, %99, %cst_45 {dimension_numbers = #tpu.dot_dimension_numbers<[1], [0], [0], [1], [0, 0, 1, 1], [], []>} : vector<5x5xf32>, vector<5x8xf32>, vector<5x8xf32> -> vector<5x8xf32>
    %113 = vector.extract_strided_slice %38 {offsets = [24, 0], sizes = [8, 32], strides = [1, 1]} : vector<32x32xf32> to vector<8x32xf32>
    %cst_46 = arith.constant dense<0.000000e+00> : vector<5x32xf32>
    %114 = tpu.matmul %112, %113, %cst_46 {dimension_numbers = #tpu.dot_dimension_numbers<[1], [0], [0], [1], [0, 0, 1, 1], [], []>} : vector<5x8xf32>, vector<8x32xf32>, vector<5x32xf32> -> vector<5x32xf32>
    %115 = arith.addf %96, %114 : vector<5x32xf32>
    %116 = arith.addf %3, %115 : vector<5x32xf32>
    %c0_47 = arith.constant 0 : index
    %c0_48 = arith.constant 0 : index
    %c0_49 = arith.constant 0 : index
    %117 = vector.load %arg10[%c0_47, %c0_48, %c0_49] : memref<1x1x32xf32, #tpu.memory_space<vmem>>, vector<1x1x32xf32>
    %118 = vector.shape_cast %117 : vector<1x1x32xf32> to vector<1x32xf32>
    %119 = vector.broadcast %118 : vector<1x32xf32> to vector<5x32xf32>
    %120 = arith.addf %116, %119 : vector<5x32xf32>
    %c0_50 = arith.constant 0 : index
    %c0_51 = arith.constant 0 : index
    %c0_52 = arith.constant 0 : index
    %121 = vector.load %arg11[%c0_50, %c0_51, %c0_52] : memref<1x1x32xf32, #tpu.memory_space<vmem>>, vector<1x1x32xf32>
    %122 = vector.shape_cast %121 : vector<1x1x32xf32> to vector<1x32xf32>
    %c0_53 = arith.constant 0 : index
    %c0_54 = arith.constant 0 : index
    %c0_55 = arith.constant 0 : index
    %123 = vector.load %arg12[%c0_53, %c0_54, %c0_55] : memref<1x1x32xf32, #tpu.memory_space<vmem>>, vector<1x1x32xf32>
    %124 = vector.shape_cast %123 : vector<1x1x32xf32> to vector<1x32xf32>
    %cst_56 = arith.constant dense<0.000000e+00> : vector<5xf32>
    %125 = vector.multi_reduction <add>, %120, %cst_56 [1] : vector<5x32xf32> to vector<5xf32>
    %126 = vector.shape_cast %125 : vector<5xf32> to vector<5x1xf32>
    %cst_57 = arith.constant 3.200000e+01 : f32
    %127 = vector.broadcast %cst_57 : f32 to vector<5x1xf32>
    %128 = arith.divf %126, %127 : vector<5x1xf32>
    %129 = vector.broadcast %128 : vector<5x1xf32> to vector<5x32xf32>
    %130 = arith.subf %120, %129 : vector<5x32xf32>
    %131 = arith.mulf %130, %130 : vector<5x32xf32>
    %cst_58 = arith.constant dense<0.000000e+00> : vector<5xf32>
    %132 = vector.multi_reduction <add>, %131, %cst_58 [1] : vector<5x32xf32> to vector<5xf32>
    %133 = vector.shape_cast %132 : vector<5xf32> to vector<5x1xf32>
    %cst_59 = arith.constant 3.200000e+01 : f32
    %134 = vector.broadcast %cst_59 : f32 to vector<5x1xf32>
    %135 = arith.divf %133, %134 : vector<5x1xf32>
    %136 = vector.broadcast %128 : vector<5x1xf32> to vector<5x32xf32>
    %137 = arith.subf %120, %136 : vector<5x32xf32>
    %cst_60 = arith.constant 9.99999996E-13 : f32
    %138 = vector.broadcast %cst_60 : f32 to vector<5x1xf32>
    %139 = arith.addf %135, %138 : vector<5x1xf32>
    %140 = math.rsqrt %139 : vector<5x1xf32>
    %141 = vector.broadcast %140 : vector<5x1xf32> to vector<5x32xf32>
    %142 = arith.mulf %137, %141 : vector<5x32xf32>
    %143 = vector.broadcast %122 : vector<1x32xf32> to vector<5x32xf32>
    %144 = arith.mulf %142, %143 : vector<5x32xf32>
    %145 = vector.broadcast %124 : vector<1x32xf32> to vector<5x32xf32>
    %146 = arith.addf %144, %145 : vector<5x32xf32>
    %c0_61 = arith.constant 0 : index
    %c0_62 = arith.constant 0 : index
    %c0_63 = arith.constant 0 : index
    %147 = vector.load %arg13[%c0_61, %c0_62, %c0_63] : memref<1x32x64xf32, #tpu.memory_space<vmem>>, vector<1x32x64xf32>
    %148 = vector.shape_cast %147 : vector<1x32x64xf32> to vector<32x64xf32>
    %cst_64 = arith.constant dense<0.000000e+00> : vector<5x64xf32>
    %149 = tpu.matmul %146, %148, %cst_64 {dimension_numbers = #tpu.dot_dimension_numbers<[1], [0], [0], [1], [0, 0, 1, 1], [], []>} : vector<5x32xf32>, vector<32x64xf32>, vector<5x64xf32> -> vector<5x64xf32>
    %c0_65 = arith.constant 0 : index
    %c0_66 = arith.constant 0 : index
    %c0_67 = arith.constant 0 : index
    %150 = vector.load %arg14[%c0_65, %c0_66, %c0_67] : memref<1x1x64xf32, #tpu.memory_space<vmem>>, vector<1x1x64xf32>
    %151 = vector.shape_cast %150 : vector<1x1x64xf32> to vector<1x64xf32>
    %152 = vector.broadcast %151 : vector<1x64xf32> to vector<5x64xf32>
    %153 = arith.addf %149, %152 : vector<5x64xf32>
    %cst_68 = arith.constant 5.000000e-01 : f32
    %154 = vector.broadcast %cst_68 : f32 to vector<5x64xf32>
    %155 = arith.mulf %154, %153 : vector<5x64xf32>
    %cst_69 = arith.constant 0.707106769 : f32
    %156 = vector.broadcast %cst_69 : f32 to vector<5x64xf32>
    %157 = arith.mulf %153, %156 : vector<5x64xf32>
    %158 = math.absf %157 : vector<5x64xf32>
    %cst_70 = arith.constant 0.327591091 : f32
    %159 = vector.broadcast %cst_70 : f32 to vector<5x64xf32>
    %160 = arith.mulf %159, %158 : vector<5x64xf32>
    %cst_71 = arith.constant 1.000000e+00 : f32
    %161 = vector.broadcast %cst_71 : f32 to vector<5x64xf32>
    %162 = arith.addf %161, %160 : vector<5x64xf32>
    %cst_72 = arith.constant 1.000000e+00 : f32
    %163 = vector.broadcast %cst_72 : f32 to vector<5x64xf32>
    %164 = arith.divf %163, %162 : vector<5x64xf32>
    %cst_73 = arith.constant 1.06140542 : f32
    %165 = vector.broadcast %cst_73 : f32 to vector<5x64xf32>
    %166 = arith.mulf %164, %165 : vector<5x64xf32>
    %cst_74 = arith.constant -1.45315206 : f32
    %167 = vector.broadcast %cst_74 : f32 to vector<5x64xf32>
    %168 = arith.addf %167, %166 : vector<5x64xf32>
    %169 = arith.mulf %164, %168 : vector<5x64xf32>
    %cst_75 = arith.constant 1.42141378 : f32
    %170 = vector.broadcast %cst_75 : f32 to vector<5x64xf32>
    %171 = arith.addf %170, %169 : vector<5x64xf32>
    %172 = arith.mulf %164, %171 : vector<5x64xf32>
    %cst_76 = arith.constant -0.284496725 : f32
    %173 = vector.broadcast %cst_76 : f32 to vector<5x64xf32>
    %174 = arith.addf %173, %172 : vector<5x64xf32>
    %175 = arith.mulf %164, %174 : vector<5x64xf32>
    %cst_77 = arith.constant 0.254829586 : f32
    %176 = vector.broadcast %cst_77 : f32 to vector<5x64xf32>
    %177 = arith.addf %176, %175 : vector<5x64xf32>
    %178 = arith.mulf %164, %177 : vector<5x64xf32>
    %cst_78 = arith.constant 0.000000e+00 : f32
    %179 = vector.broadcast %cst_78 : f32 to vector<5x64xf32>
    %180 = arith.subf %179, %158 : vector<5x64xf32>
    %181 = arith.mulf %180, %158 : vector<5x64xf32>
    %182 = math.exp %181 : vector<5x64xf32>
    %183 = arith.mulf %178, %182 : vector<5x64xf32>
    %cst_79 = arith.constant 1.000000e+00 : f32
    %184 = vector.broadcast %cst_79 : f32 to vector<5x64xf32>
    %185 = arith.subf %184, %183 : vector<5x64xf32>
    %cst_80 = arith.constant 0.000000e+00 : f32
    %186 = vector.broadcast %cst_80 : f32 to vector<5x64xf32>
    %187 = arith.cmpf olt, %157, %186 : vector<5x64xf32>
    %cst_81 = arith.constant 0.000000e+00 : f32
    %188 = vector.broadcast %cst_81 : f32 to vector<5x64xf32>
    %189 = arith.subf %188, %185 : vector<5x64xf32>
    %190 = arith.select %187, %189, %185 : vector<5x64xi1>, vector<5x64xf32>
    %cst_82 = arith.constant 1.000000e+00 : f32
    %191 = vector.broadcast %cst_82 : f32 to vector<5x64xf32>
    %192 = arith.addf %191, %190 : vector<5x64xf32>
    %193 = arith.mulf %155, %192 : vector<5x64xf32>
    %c0_83 = arith.constant 0 : index
    %c0_84 = arith.constant 0 : index
    %c0_85 = arith.constant 0 : index
    %194 = vector.load %arg15[%c0_83, %c0_84, %c0_85] : memref<1x64x32xf32, #tpu.memory_space<vmem>>, vector<1x64x32xf32>
    %195 = vector.shape_cast %194 : vector<1x64x32xf32> to vector<64x32xf32>
    %cst_86 = arith.constant dense<0.000000e+00> : vector<5x32xf32>
    %196 = tpu.matmul %193, %195, %cst_86 {dimension_numbers = #tpu.dot_dimension_numbers<[1], [0], [0], [1], [0, 0, 1, 1], [], []>} : vector<5x64xf32>, vector<64x32xf32>, vector<5x32xf32> -> vector<5x32xf32>
    %c0_87 = arith.constant 0 : index
    %c0_88 = arith.constant 0 : index
    %c0_89 = arith.constant 0 : index
    %197 = vector.load %arg16[%c0_87, %c0_88, %c0_89] : memref<1x1x32xf32, #tpu.memory_space<vmem>>, vector<1x1x32xf32>
    %198 = vector.shape_cast %197 : vector<1x1x32xf32> to vector<1x32xf32>
    %199 = vector.broadcast %198 : vector<1x32xf32> to vector<5x32xf32>
    %200 = arith.addf %196, %199 : vector<5x32xf32>
    %201 = arith.addf %120, %200 : vector<5x32xf32>
    %c0_90 = arith.constant 0 : index
    %c0_91 = arith.constant 0 : index
    %202 = vector.load %arg20[%c0_90, %c0_91] : memref<5x32xf32, #tpu.memory_space<vmem>>, vector<5x32xf32>
    tpu.vector_store %arg20[%c0_90, %c0_91], %201 {strides = array<i32>} : memref<5x32xf32, #tpu.memory_space<vmem>>, vector<5x32xf32>,
    %c1_i32 = arith.constant 1 : i32
    %203 = arith.cmpi eq, %arg1, %c1_i32 : i32
    %204 = arith.extui %203 : i1 to i32
    %c0_i32_92 = arith.constant 0 : i32
    %205 = arith.cmpi ne, %204, %c0_i32_92 : i32
    scf.if %205 {
      %c0_93 = arith.constant 0 : index
      %c0_94 = arith.constant 0 : index
      %206 = vector.load %arg17[%c0_93, %c0_94] : memref<1x32xf32, #tpu.memory_space<vmem>>, vector<1x32xf32>
      %c0_95 = arith.constant 0 : index
      %c0_96 = arith.constant 0 : index
      %207 = vector.load %arg18[%c0_95, %c0_96] : memref<1x32xf32, #tpu.memory_space<vmem>>, vector<1x32xf32>
      %cst_97 = arith.constant dense<0.000000e+00> : vector<5xf32>
      %208 = vector.multi_reduction <add>, %201, %cst_97 [1] : vector<5x32xf32> to vector<5xf32>
      %209 = vector.shape_cast %208 : vector<5xf32> to vector<5x1xf32>
      %cst_98 = arith.constant 3.200000e+01 : f32
      %210 = vector.broadcast %cst_98 : f32 to vector<5x1xf32>
      %211 = arith.divf %209, %210 : vector<5x1xf32>
      %212 = vector.broadcast %211 : vector<5x1xf32> to vector<5x32xf32>
      %213 = arith.subf %201, %212 : vector<5x32xf32>
      %214 = arith.mulf %213, %213 : vector<5x32xf32>
      %cst_99 = arith.constant dense<0.000000e+00> : vector<5xf32>
      %215 = vector.multi_reduction <add>, %214, %cst_99 [1] : vector<5x32xf32> to vector<5xf32>
      %216 = vector.shape_cast %215 : vector<5xf32> to vector<5x1xf32>
      %cst_100 = arith.constant 3.200000e+01 : f32
      %217 = vector.broadcast %cst_100 : f32 to vector<5x1xf32>
      %218 = arith.divf %216, %217 : vector<5x1xf32>
      %219 = vector.broadcast %211 : vector<5x1xf32> to vector<5x32xf32>
      %220 = arith.subf %201, %219 : vector<5x32xf32>
      %cst_101 = arith.constant 9.99999996E-13 : f32
      %221 = vector.broadcast %cst_101 : f32 to vector<5x1xf32>
      %222 = arith.addf %218, %221 : vector<5x1xf32>
      %223 = math.rsqrt %222 : vector<5x1xf32>
      %224 = vector.broadcast %223 : vector<5x1xf32> to vector<5x32xf32>
      %225 = arith.mulf %220, %224 : vector<5x32xf32>
      %226 = vector.broadcast %206 : vector<1x32xf32> to vector<5x32xf32>
      %227 = arith.mulf %225, %226 : vector<5x32xf32>
      %228 = vector.broadcast %207 : vector<1x32xf32> to vector<5x32xf32>
      %229 = arith.addf %227, %228 : vector<5x32xf32>
      %c0_102 = arith.constant 0 : index
      %c0_103 = arith.constant 0 : index
      %c0_104 = arith.constant 0 : index
      %230 = vector.load %arg19[%c0_102, %c0_103, %c0_104] : memref<1x5x32xf32, #tpu.memory_space<vmem>>, vector<1x5x32xf32>
      %231 = vector.shape_cast %230 : vector<1x5x32xf32> to vector<5x32xf32>
      %232 = vector.shape_cast %229 : vector<5x32xf32> to vector<1x5x32xf32>
      tpu.vector_store %arg19[%c0_102, %c0_103, %c0_104], %232 {strides = array<i32>} : memref<1x5x32xf32, #tpu.memory_space<vmem>>, vector<1x5x32xf32>,
    } else {
    }
    return
  }
  func.func @transform_0(%arg0: i32, %arg1: i32) -> (i32, i32, i32) {
    %c0_i32 = arith.constant 0 : i32
    %c0_i32_0 = arith.constant 0 : i32
    %c0_i32_1 = arith.constant 0 : i32
    return %arg0, %c0_i32, %c0_i32_0 : i32, i32, i32
  }
  func.func @transform_1(%arg0: i32, %arg1: i32) -> (i32, i32) {
    %c0_i32 = arith.constant 0 : i32
    %c0_i32_0 = arith.constant 0 : i32
    %c0_i32_1 = arith.constant 0 : i32
    return %c0_i32, %c0_i32_0 : i32, i32
  }
  func.func @transform_2(%arg0: i32, %arg1: i32) -> (i32, i32) {
    %c0_i32 = arith.constant 0 : i32
    %c0_i32_0 = arith.constant 0 : i32
    %c0_i32_1 = arith.constant 0 : i32
    return %c0_i32, %c0_i32_0 : i32, i32
  }
  func.func @transform_3(%arg0: i32, %arg1: i32) -> (i32, i32, i32) {
    %c0_i32 = arith.constant 0 : i32
    %c0_i32_0 = arith.constant 0 : i32
    %c0_i32_1 = arith.constant 0 : i32
    return %arg1, %c0_i32, %c0_i32_0 : i32, i32, i32
  }
  func.func @transform_4(%arg0: i32, %arg1: i32) -> (i32, i32, i32) {
    %c0_i32 = arith.constant 0 : i32
    %c0_i32_0 = arith.constant 0 : i32
    %c0_i32_1 = arith.constant 0 : i32
    return %arg1, %c0_i32, %c0_i32_0 : i32, i32, i32
  }
  func.func @transform_5(%arg0: i32, %arg1: i32) -> (i32, i32, i32) {
    %c0_i32 = arith.constant 0 : i32
    %c0_i32_0 = arith.constant 0 : i32
    %c0_i32_1 = arith.constant 0 : i32
    return %arg1, %c0_i32, %c0_i32_0 : i32, i32, i32
  }
  func.func @transform_6(%arg0: i32, %arg1: i32) -> (i32, i32, i32) {
    %c0_i32 = arith.constant 0 : i32
    %c0_i32_0 = arith.constant 0 : i32
    %c0_i32_1 = arith.constant 0 : i32
    return %arg1, %c0_i32, %c0_i32_0 : i32, i32, i32
  }
  func.func @transform_7(%arg0: i32, %arg1: i32) -> (i32, i32, i32) {
    %c0_i32 = arith.constant 0 : i32
    %c0_i32_0 = arith.constant 0 : i32
    %c0_i32_1 = arith.constant 0 : i32
    return %arg1, %c0_i32, %c0_i32_0 : i32, i32, i32
  }
  func.func @transform_8(%arg0: i32, %arg1: i32) -> (i32, i32, i32) {
    %c0_i32 = arith.constant 0 : i32
    %c0_i32_0 = arith.constant 0 : i32
    %c0_i32_1 = arith.constant 0 : i32
    return %arg1, %c0_i32, %c0_i32_0 : i32, i32, i32
  }
  func.func @transform_9(%arg0: i32, %arg1: i32) -> (i32, i32, i32) {
    %c0_i32 = arith.constant 0 : i32
    %c0_i32_0 = arith.constant 0 : i32
    %c0_i32_1 = arith.constant 0 : i32
    return %arg1, %c0_i32, %c0_i32_0 : i32, i32, i32
  }
  func.func @transform_10(%arg0: i32, %arg1: i32) -> (i32, i32, i32) {
    %c0_i32 = arith.constant 0 : i32
    %c0_i32_0 = arith.constant 0 : i32
    %c0_i32_1 = arith.constant 0 : i32
    return %arg1, %c0_i32, %c0_i32_0 : i32, i32, i32
  }
  func.func @transform_11(%arg0: i32, %arg1: i32) -> (i32, i32, i32) {
    %c0_i32 = arith.constant 0 : i32
    %c0_i32_0 = arith.constant 0 : i32
    %c0_i32_1 = arith.constant 0 : i32
    return %arg1, %c0_i32, %c0_i32_0 : i32, i32, i32
  }
  func.func @transform_12(%arg0: i32, %arg1: i32) -> (i32, i32, i32) {
    %c0_i32 = arith.constant 0 : i32
    %c0_i32_0 = arith.constant 0 : i32
    %c0_i32_1 = arith.constant 0 : i32
    return %arg1, %c0_i32, %c0_i32_0 : i32, i32, i32
  }
  func.func @transform_13(%arg0: i32, %arg1: i32) -> (i32, i32, i32) {
    %c0_i32 = arith.constant 0 : i32
    %c0_i32_0 = arith.constant 0 : i32
    %c0_i32_1 = arith.constant 0 : i32
    return %arg1, %c0_i32, %c0_i32_0 : i32, i32, i32
  }
  func.func @transform_14(%arg0: i32, %arg1: i32) -> (i32, i32, i32) {
    %c0_i32 = arith.constant 0 : i32
    %c0_i32_0 = arith.constant 0 : i32
    %c0_i32_1 = arith.constant 0 : i32
    return %arg1, %c0_i32, %c0_i32_0 : i32, i32, i32
  }
  func.func @transform_15(%arg0: i32, %arg1: i32) -> (i32, i32) {
    %c0_i32 = arith.constant 0 : i32
    %c0_i32_0 = arith.constant 0 : i32
    %c0_i32_1 = arith.constant 0 : i32
    return %c0_i32, %c0_i32_0 : i32, i32
  }
  func.func @transform_16(%arg0: i32, %arg1: i32) -> (i32, i32) {
    %c0_i32 = arith.constant 0 : i32
    %c0_i32_0 = arith.constant 0 : i32
    %c0_i32_1 = arith.constant 0 : i32
    return %c0_i32, %c0_i32_0 : i32, i32
  }
  func.func @transform_17(%arg0: i32, %arg1: i32) -> (i32, i32, i32) {
    %c0_i32 = arith.constant 0 : i32
    %c0_i32_0 = arith.constant 0 : i32
    %c0_i32_1 = arith.constant 0 : i32
    return %arg0, %c0_i32, %c0_i32_0 : i32, i32, i32
  }
}

module attributes {stable_mosaic.version = 11 : i64} {
  func.func @_bilstm_head_kernel(%arg0: i32, %arg1: memref<1x5x32xf32, #tpu.memory_space<vmem>>, %arg2: memref<2x32x128xf32, #tpu.memory_space<vmem>>, %arg3: memref<2x2x16x64xf32, #tpu.memory_space<vmem>>, %arg4: memref<2x1x128xf32, #tpu.memory_space<vmem>>, %arg5: memref<32x128xf32, #tpu.memory_space<vmem>>, %arg6: memref<1x128xf32, #tpu.memory_space<vmem>>, %arg7: memref<1x5x128xf32, #tpu.memory_space<vmem>>, %arg8: memref<1x5x128xi32, #tpu.memory_space<vmem>>, %arg9: memref<5x32xf32, #tpu.memory_space<vmem>>) attributes {dimension_semantics = [#tpu.dimension_semantics<parallel>], iteration_bounds = array<i64: 2>, scalar_prefetch = 0 : i64, scratch_operands = 1 : i64, tpu.core_type = #tpu.core_type<tc>, window_params = [{transform_indices = @transform_0, window_bounds = array<i64: 1, 5, 32>}, {pipeline_mode = #tpu.pipeline_mode<synchronous>, transform_indices = @transform_1, window_bounds = array<i64: 2, 32, 128>}, {pipeline_mode = #tpu.pipeline_mode<synchronous>, transform_indices = @transform_2, window_bounds = array<i64: 2, 2, 16, 64>}, {pipeline_mode = #tpu.pipeline_mode<synchronous>, transform_indices = @transform_3, window_bounds = array<i64: 2, 1, 128>}, {pipeline_mode = #tpu.pipeline_mode<synchronous>, transform_indices = @transform_4, window_bounds = array<i64: 32, 128>}, {pipeline_mode = #tpu.pipeline_mode<synchronous>, transform_indices = @transform_5, window_bounds = array<i64: 1, 128>}, {transform_indices = @transform_6, window_bounds = array<i64: 1, 5, 128>}, {transform_indices = @transform_7, window_bounds = array<i64: 1, 5, 128>}]} {
    %c0 = arith.constant 0 : index
    %c0_0 = arith.constant 0 : index
    %c0_1 = arith.constant 0 : index
    %0 = vector.load %arg1[%c0, %c0_0, %c0_1] : memref<1x5x32xf32, #tpu.memory_space<vmem>>, vector<1x5x32xf32>
    %1 = vector.shape_cast %0 : vector<1x5x32xf32> to vector<5x32xf32>
    %c0_2 = arith.constant 0 : index
    %c0_3 = arith.constant 0 : index
    %c0_4 = arith.constant 0 : index
    %2 = vector.load %arg2[%c0_2, %c0_3, %c0_4] : memref<2x32x128xf32, #tpu.memory_space<vmem>>, vector<1x32x128xf32>
    %3 = vector.shape_cast %2 : vector<1x32x128xf32> to vector<32x128xf32>
    %cst = arith.constant dense<0.000000e+00> : vector<5x128xf32>
    %4 = tpu.matmul %1, %3, %cst {dimension_numbers = #tpu.dot_dimension_numbers<[1], [0], [0], [1], [0, 0, 1, 1], [], []>} : vector<5x32xf32>, vector<32x128xf32>, vector<5x128xf32> -> vector<5x128xf32>
    %c0_5 = arith.constant 0 : index
    %c0_6 = arith.constant 0 : index
    %c0_7 = arith.constant 0 : index
    %5 = vector.load %arg4[%c0_5, %c0_6, %c0_7] : memref<2x1x128xf32, #tpu.memory_space<vmem>>, vector<1x1x128xf32>
    %6 = vector.shape_cast %5 : vector<1x1x128xf32> to vector<1x128xf32>
    %7 = vector.broadcast %6 : vector<1x128xf32> to vector<5x128xf32>
    %8 = arith.addf %4, %7 : vector<5x128xf32>
    %c0_8 = arith.constant 0 : index
    %c0_9 = arith.constant 0 : index
    %c0_10 = arith.constant 0 : index
    %c0_11 = arith.constant 0 : index
    %9 = vector.load %arg3[%c0_8, %c0_9, %c0_10, %c0_11] : memref<2x2x16x64xf32, #tpu.memory_space<vmem>>, vector<1x1x16x64xf32>
    %10 = vector.shape_cast %9 : vector<1x1x16x64xf32> to vector<16x64xf32>
    %c0_12 = arith.constant 0 : index
    %c1 = arith.constant 1 : index
    %c0_13 = arith.constant 0 : index
    %c0_14 = arith.constant 0 : index
    %11 = vector.load %arg3[%c0_12, %c1, %c0_13, %c0_14] : memref<2x2x16x64xf32, #tpu.memory_space<vmem>>, vector<1x1x16x64xf32>
    %12 = vector.shape_cast %11 : vector<1x1x16x64xf32> to vector<16x64xf32>
    %cst_15 = arith.constant 0.000000e+00 : f32
    %13 = vector.broadcast %cst_15 : f32 to vector<1x16xf32>
    %cst_16 = arith.constant 0.000000e+00 : f32
    %14 = vector.broadcast %cst_16 : f32 to vector<1x16xf32>
    %15 = vector.extract_strided_slice %8 {offsets = [0, 0], sizes = [1, 64], strides = [1, 1]} : vector<5x128xf32> to vector<1x64xf32>
    %cst_17 = arith.constant dense<0.000000e+00> : vector<1x64xf32>
    %16 = tpu.matmul %13, %10, %cst_17 {dimension_numbers = #tpu.dot_dimension_numbers<[1], [0], [0], [1], [0, 0, 1, 1], [], []>} : vector<1x16xf32>, vector<16x64xf32>, vector<1x64xf32> -> vector<1x64xf32>
    %17 = arith.addf %15, %16 : vector<1x64xf32>
    %18 = vector.extract_strided_slice %17 {offsets = [0, 0], sizes = [1, 16], strides = [1, 1]} : vector<1x64xf32> to vector<1x16xf32>
    %cst_18 = arith.constant 0.000000e+00 : f32
    %19 = vector.broadcast %cst_18 : f32 to vector<1x16xf32>
    %20 = arith.subf %19, %18 : vector<1x16xf32>
    %21 = math.exp %20 : vector<1x16xf32>
    %cst_19 = arith.constant 1.000000e+00 : f32
    %22 = vector.broadcast %cst_19 : f32 to vector<1x16xf32>
    %23 = arith.addf %22, %21 : vector<1x16xf32>
    %cst_20 = arith.constant 1.000000e+00 : f32
    %24 = vector.broadcast %cst_20 : f32 to vector<1x16xf32>
    %25 = arith.divf %24, %23 : vector<1x16xf32>
    %26 = vector.extract_strided_slice %17 {offsets = [0, 16], sizes = [1, 16], strides = [1, 1]} : vector<1x64xf32> to vector<1x16xf32>
    %cst_21 = arith.constant 0.000000e+00 : f32
    %27 = vector.broadcast %cst_21 : f32 to vector<1x16xf32>
    %28 = arith.subf %27, %26 : vector<1x16xf32>
    %29 = math.exp %28 : vector<1x16xf32>
    %cst_22 = arith.constant 1.000000e+00 : f32
    %30 = vector.broadcast %cst_22 : f32 to vector<1x16xf32>
    %31 = arith.addf %30, %29 : vector<1x16xf32>
    %cst_23 = arith.constant 1.000000e+00 : f32
    %32 = vector.broadcast %cst_23 : f32 to vector<1x16xf32>
    %33 = arith.divf %32, %31 : vector<1x16xf32>
    %34 = vector.extract_strided_slice %17 {offsets = [0, 32], sizes = [1, 16], strides = [1, 1]} : vector<1x64xf32> to vector<1x16xf32>
    %35 = math.tanh %34 : vector<1x16xf32>
    %36 = vector.extract_strided_slice %17 {offsets = [0, 48], sizes = [1, 16], strides = [1, 1]} : vector<1x64xf32> to vector<1x16xf32>
    %cst_24 = arith.constant 0.000000e+00 : f32
    %37 = vector.broadcast %cst_24 : f32 to vector<1x16xf32>
    %38 = arith.subf %37, %36 : vector<1x16xf32>
    %39 = math.exp %38 : vector<1x16xf32>
    %cst_25 = arith.constant 1.000000e+00 : f32
    %40 = vector.broadcast %cst_25 : f32 to vector<1x16xf32>
    %41 = arith.addf %40, %39 : vector<1x16xf32>
    %cst_26 = arith.constant 1.000000e+00 : f32
    %42 = vector.broadcast %cst_26 : f32 to vector<1x16xf32>
    %43 = arith.divf %42, %41 : vector<1x16xf32>
    %44 = arith.mulf %33, %14 : vector<1x16xf32>
    %45 = arith.mulf %25, %35 : vector<1x16xf32>
    %46 = arith.addf %44, %45 : vector<1x16xf32>
    %47 = math.tanh %46 : vector<1x16xf32>
    %48 = arith.mulf %43, %47 : vector<1x16xf32>
    %c0_27 = arith.constant 0 : index
    %c0_28 = arith.constant 0 : index
    %49 = vector.load %arg9[%c0_27, %c0_28] : memref<5x32xf32, #tpu.memory_space<vmem>>, vector<1x16xf32>
    tpu.vector_store %arg9[%c0_27, %c0_28], %48 {strides = array<i32>} : memref<5x32xf32, #tpu.memory_space<vmem>>, vector<1x16xf32>,
    %50 = vector.extract_strided_slice %8 {offsets = [1, 0], sizes = [1, 64], strides = [1, 1]} : vector<5x128xf32> to vector<1x64xf32>
    %cst_29 = arith.constant dense<0.000000e+00> : vector<1x64xf32>
    %51 = tpu.matmul %48, %10, %cst_29 {dimension_numbers = #tpu.dot_dimension_numbers<[1], [0], [0], [1], [0, 0, 1, 1], [], []>} : vector<1x16xf32>, vector<16x64xf32>, vector<1x64xf32> -> vector<1x64xf32>
    %52 = arith.addf %50, %51 : vector<1x64xf32>
    %53 = vector.extract_strided_slice %52 {offsets = [0, 0], sizes = [1, 16], strides = [1, 1]} : vector<1x64xf32> to vector<1x16xf32>
    %cst_30 = arith.constant 0.000000e+00 : f32
    %54 = vector.broadcast %cst_30 : f32 to vector<1x16xf32>
    %55 = arith.subf %54, %53 : vector<1x16xf32>
    %56 = math.exp %55 : vector<1x16xf32>
    %cst_31 = arith.constant 1.000000e+00 : f32
    %57 = vector.broadcast %cst_31 : f32 to vector<1x16xf32>
    %58 = arith.addf %57, %56 : vector<1x16xf32>
    %cst_32 = arith.constant 1.000000e+00 : f32
    %59 = vector.broadcast %cst_32 : f32 to vector<1x16xf32>
    %60 = arith.divf %59, %58 : vector<1x16xf32>
    %61 = vector.extract_strided_slice %52 {offsets = [0, 16], sizes = [1, 16], strides = [1, 1]} : vector<1x64xf32> to vector<1x16xf32>
    %cst_33 = arith.constant 0.000000e+00 : f32
    %62 = vector.broadcast %cst_33 : f32 to vector<1x16xf32>
    %63 = arith.subf %62, %61 : vector<1x16xf32>
    %64 = math.exp %63 : vector<1x16xf32>
    %cst_34 = arith.constant 1.000000e+00 : f32
    %65 = vector.broadcast %cst_34 : f32 to vector<1x16xf32>
    %66 = arith.addf %65, %64 : vector<1x16xf32>
    %cst_35 = arith.constant 1.000000e+00 : f32
    %67 = vector.broadcast %cst_35 : f32 to vector<1x16xf32>
    %68 = arith.divf %67, %66 : vector<1x16xf32>
    %69 = vector.extract_strided_slice %52 {offsets = [0, 32], sizes = [1, 16], strides = [1, 1]} : vector<1x64xf32> to vector<1x16xf32>
    %70 = math.tanh %69 : vector<1x16xf32>
    %71 = vector.extract_strided_slice %52 {offsets = [0, 48], sizes = [1, 16], strides = [1, 1]} : vector<1x64xf32> to vector<1x16xf32>
    %cst_36 = arith.constant 0.000000e+00 : f32
    %72 = vector.broadcast %cst_36 : f32 to vector<1x16xf32>
    %73 = arith.subf %72, %71 : vector<1x16xf32>
    %74 = math.exp %73 : vector<1x16xf32>
    %cst_37 = arith.constant 1.000000e+00 : f32
    %75 = vector.broadcast %cst_37 : f32 to vector<1x16xf32>
    %76 = arith.addf %75, %74 : vector<1x16xf32>
    %cst_38 = arith.constant 1.000000e+00 : f32
    %77 = vector.broadcast %cst_38 : f32 to vector<1x16xf32>
    %78 = arith.divf %77, %76 : vector<1x16xf32>
    %79 = arith.mulf %68, %46 : vector<1x16xf32>
    %80 = arith.mulf %60, %70 : vector<1x16xf32>
    %81 = arith.addf %79, %80 : vector<1x16xf32>
    %82 = math.tanh %81 : vector<1x16xf32>
    %83 = arith.mulf %78, %82 : vector<1x16xf32>
    %c1_39 = arith.constant 1 : index
    %c0_40 = arith.constant 0 : index
    %84 = vector.load %arg9[%c1_39, %c0_40] : memref<5x32xf32, #tpu.memory_space<vmem>>, vector<1x16xf32>
    tpu.vector_store %arg9[%c1_39, %c0_40], %83 {strides = array<i32>} : memref<5x32xf32, #tpu.memory_space<vmem>>, vector<1x16xf32>,
    %85 = vector.extract_strided_slice %8 {offsets = [2, 0], sizes = [1, 64], strides = [1, 1]} : vector<5x128xf32> to vector<1x64xf32>
    %cst_41 = arith.constant dense<0.000000e+00> : vector<1x64xf32>
    %86 = tpu.matmul %83, %10, %cst_41 {dimension_numbers = #tpu.dot_dimension_numbers<[1], [0], [0], [1], [0, 0, 1, 1], [], []>} : vector<1x16xf32>, vector<16x64xf32>, vector<1x64xf32> -> vector<1x64xf32>
    %87 = arith.addf %85, %86 : vector<1x64xf32>
    %88 = vector.extract_strided_slice %87 {offsets = [0, 0], sizes = [1, 16], strides = [1, 1]} : vector<1x64xf32> to vector<1x16xf32>
    %cst_42 = arith.constant 0.000000e+00 : f32
    %89 = vector.broadcast %cst_42 : f32 to vector<1x16xf32>
    %90 = arith.subf %89, %88 : vector<1x16xf32>
    %91 = math.exp %90 : vector<1x16xf32>
    %cst_43 = arith.constant 1.000000e+00 : f32
    %92 = vector.broadcast %cst_43 : f32 to vector<1x16xf32>
    %93 = arith.addf %92, %91 : vector<1x16xf32>
    %cst_44 = arith.constant 1.000000e+00 : f32
    %94 = vector.broadcast %cst_44 : f32 to vector<1x16xf32>
    %95 = arith.divf %94, %93 : vector<1x16xf32>
    %96 = vector.extract_strided_slice %87 {offsets = [0, 16], sizes = [1, 16], strides = [1, 1]} : vector<1x64xf32> to vector<1x16xf32>
    %cst_45 = arith.constant 0.000000e+00 : f32
    %97 = vector.broadcast %cst_45 : f32 to vector<1x16xf32>
    %98 = arith.subf %97, %96 : vector<1x16xf32>
    %99 = math.exp %98 : vector<1x16xf32>
    %cst_46 = arith.constant 1.000000e+00 : f32
    %100 = vector.broadcast %cst_46 : f32 to vector<1x16xf32>
    %101 = arith.addf %100, %99 : vector<1x16xf32>
    %cst_47 = arith.constant 1.000000e+00 : f32
    %102 = vector.broadcast %cst_47 : f32 to vector<1x16xf32>
    %103 = arith.divf %102, %101 : vector<1x16xf32>
    %104 = vector.extract_strided_slice %87 {offsets = [0, 32], sizes = [1, 16], strides = [1, 1]} : vector<1x64xf32> to vector<1x16xf32>
    %105 = math.tanh %104 : vector<1x16xf32>
    %106 = vector.extract_strided_slice %87 {offsets = [0, 48], sizes = [1, 16], strides = [1, 1]} : vector<1x64xf32> to vector<1x16xf32>
    %cst_48 = arith.constant 0.000000e+00 : f32
    %107 = vector.broadcast %cst_48 : f32 to vector<1x16xf32>
    %108 = arith.subf %107, %106 : vector<1x16xf32>
    %109 = math.exp %108 : vector<1x16xf32>
    %cst_49 = arith.constant 1.000000e+00 : f32
    %110 = vector.broadcast %cst_49 : f32 to vector<1x16xf32>
    %111 = arith.addf %110, %109 : vector<1x16xf32>
    %cst_50 = arith.constant 1.000000e+00 : f32
    %112 = vector.broadcast %cst_50 : f32 to vector<1x16xf32>
    %113 = arith.divf %112, %111 : vector<1x16xf32>
    %114 = arith.mulf %103, %81 : vector<1x16xf32>
    %115 = arith.mulf %95, %105 : vector<1x16xf32>
    %116 = arith.addf %114, %115 : vector<1x16xf32>
    %117 = math.tanh %116 : vector<1x16xf32>
    %118 = arith.mulf %113, %117 : vector<1x16xf32>
    %c2 = arith.constant 2 : index
    %c0_51 = arith.constant 0 : index
    %119 = vector.load %arg9[%c2, %c0_51] : memref<5x32xf32, #tpu.memory_space<vmem>>, vector<1x16xf32>
    tpu.vector_store %arg9[%c2, %c0_51], %118 {strides = array<i32>} : memref<5x32xf32, #tpu.memory_space<vmem>>, vector<1x16xf32>,
    %120 = vector.extract_strided_slice %8 {offsets = [3, 0], sizes = [1, 64], strides = [1, 1]} : vector<5x128xf32> to vector<1x64xf32>
    %cst_52 = arith.constant dense<0.000000e+00> : vector<1x64xf32>
    %121 = tpu.matmul %118, %10, %cst_52 {dimension_numbers = #tpu.dot_dimension_numbers<[1], [0], [0], [1], [0, 0, 1, 1], [], []>} : vector<1x16xf32>, vector<16x64xf32>, vector<1x64xf32> -> vector<1x64xf32>
    %122 = arith.addf %120, %121 : vector<1x64xf32>
    %123 = vector.extract_strided_slice %122 {offsets = [0, 0], sizes = [1, 16], strides = [1, 1]} : vector<1x64xf32> to vector<1x16xf32>
    %cst_53 = arith.constant 0.000000e+00 : f32
    %124 = vector.broadcast %cst_53 : f32 to vector<1x16xf32>
    %125 = arith.subf %124, %123 : vector<1x16xf32>
    %126 = math.exp %125 : vector<1x16xf32>
    %cst_54 = arith.constant 1.000000e+00 : f32
    %127 = vector.broadcast %cst_54 : f32 to vector<1x16xf32>
    %128 = arith.addf %127, %126 : vector<1x16xf32>
    %cst_55 = arith.constant 1.000000e+00 : f32
    %129 = vector.broadcast %cst_55 : f32 to vector<1x16xf32>
    %130 = arith.divf %129, %128 : vector<1x16xf32>
    %131 = vector.extract_strided_slice %122 {offsets = [0, 16], sizes = [1, 16], strides = [1, 1]} : vector<1x64xf32> to vector<1x16xf32>
    %cst_56 = arith.constant 0.000000e+00 : f32
    %132 = vector.broadcast %cst_56 : f32 to vector<1x16xf32>
    %133 = arith.subf %132, %131 : vector<1x16xf32>
    %134 = math.exp %133 : vector<1x16xf32>
    %cst_57 = arith.constant 1.000000e+00 : f32
    %135 = vector.broadcast %cst_57 : f32 to vector<1x16xf32>
    %136 = arith.addf %135, %134 : vector<1x16xf32>
    %cst_58 = arith.constant 1.000000e+00 : f32
    %137 = vector.broadcast %cst_58 : f32 to vector<1x16xf32>
    %138 = arith.divf %137, %136 : vector<1x16xf32>
    %139 = vector.extract_strided_slice %122 {offsets = [0, 32], sizes = [1, 16], strides = [1, 1]} : vector<1x64xf32> to vector<1x16xf32>
    %140 = math.tanh %139 : vector<1x16xf32>
    %141 = vector.extract_strided_slice %122 {offsets = [0, 48], sizes = [1, 16], strides = [1, 1]} : vector<1x64xf32> to vector<1x16xf32>
    %cst_59 = arith.constant 0.000000e+00 : f32
    %142 = vector.broadcast %cst_59 : f32 to vector<1x16xf32>
    %143 = arith.subf %142, %141 : vector<1x16xf32>
    %144 = math.exp %143 : vector<1x16xf32>
    %cst_60 = arith.constant 1.000000e+00 : f32
    %145 = vector.broadcast %cst_60 : f32 to vector<1x16xf32>
    %146 = arith.addf %145, %144 : vector<1x16xf32>
    %cst_61 = arith.constant 1.000000e+00 : f32
    %147 = vector.broadcast %cst_61 : f32 to vector<1x16xf32>
    %148 = arith.divf %147, %146 : vector<1x16xf32>
    %149 = arith.mulf %138, %116 : vector<1x16xf32>
    %150 = arith.mulf %130, %140 : vector<1x16xf32>
    %151 = arith.addf %149, %150 : vector<1x16xf32>
    %152 = math.tanh %151 : vector<1x16xf32>
    %153 = arith.mulf %148, %152 : vector<1x16xf32>
    %c3 = arith.constant 3 : index
    %c0_62 = arith.constant 0 : index
    %154 = vector.load %arg9[%c3, %c0_62] : memref<5x32xf32, #tpu.memory_space<vmem>>, vector<1x16xf32>
    tpu.vector_store %arg9[%c3, %c0_62], %153 {strides = array<i32>} : memref<5x32xf32, #tpu.memory_space<vmem>>, vector<1x16xf32>,
    %155 = vector.extract_strided_slice %8 {offsets = [4, 0], sizes = [1, 64], strides = [1, 1]} : vector<5x128xf32> to vector<1x64xf32>
    %cst_63 = arith.constant dense<0.000000e+00> : vector<1x64xf32>
    %156 = tpu.matmul %153, %10, %cst_63 {dimension_numbers = #tpu.dot_dimension_numbers<[1], [0], [0], [1], [0, 0, 1, 1], [], []>} : vector<1x16xf32>, vector<16x64xf32>, vector<1x64xf32> -> vector<1x64xf32>
    %157 = arith.addf %155, %156 : vector<1x64xf32>
    %158 = vector.extract_strided_slice %157 {offsets = [0, 0], sizes = [1, 16], strides = [1, 1]} : vector<1x64xf32> to vector<1x16xf32>
    %cst_64 = arith.constant 0.000000e+00 : f32
    %159 = vector.broadcast %cst_64 : f32 to vector<1x16xf32>
    %160 = arith.subf %159, %158 : vector<1x16xf32>
    %161 = math.exp %160 : vector<1x16xf32>
    %cst_65 = arith.constant 1.000000e+00 : f32
    %162 = vector.broadcast %cst_65 : f32 to vector<1x16xf32>
    %163 = arith.addf %162, %161 : vector<1x16xf32>
    %cst_66 = arith.constant 1.000000e+00 : f32
    %164 = vector.broadcast %cst_66 : f32 to vector<1x16xf32>
    %165 = arith.divf %164, %163 : vector<1x16xf32>
    %166 = vector.extract_strided_slice %157 {offsets = [0, 16], sizes = [1, 16], strides = [1, 1]} : vector<1x64xf32> to vector<1x16xf32>
    %cst_67 = arith.constant 0.000000e+00 : f32
    %167 = vector.broadcast %cst_67 : f32 to vector<1x16xf32>
    %168 = arith.subf %167, %166 : vector<1x16xf32>
    %169 = math.exp %168 : vector<1x16xf32>
    %cst_68 = arith.constant 1.000000e+00 : f32
    %170 = vector.broadcast %cst_68 : f32 to vector<1x16xf32>
    %171 = arith.addf %170, %169 : vector<1x16xf32>
    %cst_69 = arith.constant 1.000000e+00 : f32
    %172 = vector.broadcast %cst_69 : f32 to vector<1x16xf32>
    %173 = arith.divf %172, %171 : vector<1x16xf32>
    %174 = vector.extract_strided_slice %157 {offsets = [0, 32], sizes = [1, 16], strides = [1, 1]} : vector<1x64xf32> to vector<1x16xf32>
    %175 = math.tanh %174 : vector<1x16xf32>
    %176 = vector.extract_strided_slice %157 {offsets = [0, 48], sizes = [1, 16], strides = [1, 1]} : vector<1x64xf32> to vector<1x16xf32>
    %cst_70 = arith.constant 0.000000e+00 : f32
    %177 = vector.broadcast %cst_70 : f32 to vector<1x16xf32>
    %178 = arith.subf %177, %176 : vector<1x16xf32>
    %179 = math.exp %178 : vector<1x16xf32>
    %cst_71 = arith.constant 1.000000e+00 : f32
    %180 = vector.broadcast %cst_71 : f32 to vector<1x16xf32>
    %181 = arith.addf %180, %179 : vector<1x16xf32>
    %cst_72 = arith.constant 1.000000e+00 : f32
    %182 = vector.broadcast %cst_72 : f32 to vector<1x16xf32>
    %183 = arith.divf %182, %181 : vector<1x16xf32>
    %184 = arith.mulf %173, %151 : vector<1x16xf32>
    %185 = arith.mulf %165, %175 : vector<1x16xf32>
    %186 = arith.addf %184, %185 : vector<1x16xf32>
    %187 = math.tanh %186 : vector<1x16xf32>
    %188 = arith.mulf %183, %187 : vector<1x16xf32>
    %c4 = arith.constant 4 : index
    %c0_73 = arith.constant 0 : index
    %189 = vector.load %arg9[%c4, %c0_73] : memref<5x32xf32, #tpu.memory_space<vmem>>, vector<1x16xf32>
    tpu.vector_store %arg9[%c4, %c0_73], %188 {strides = array<i32>} : memref<5x32xf32, #tpu.memory_space<vmem>>, vector<1x16xf32>,
    %cst_74 = arith.constant 0.000000e+00 : f32
    %190 = vector.broadcast %cst_74 : f32 to vector<1x16xf32>
    %cst_75 = arith.constant 0.000000e+00 : f32
    %191 = vector.broadcast %cst_75 : f32 to vector<1x16xf32>
    %192 = vector.extract_strided_slice %8 {offsets = [4, 64], sizes = [1, 64], strides = [1, 1]} : vector<5x128xf32> to vector<1x64xf32>
    %cst_76 = arith.constant dense<0.000000e+00> : vector<1x64xf32>
    %193 = tpu.matmul %190, %12, %cst_76 {dimension_numbers = #tpu.dot_dimension_numbers<[1], [0], [0], [1], [0, 0, 1, 1], [], []>} : vector<1x16xf32>, vector<16x64xf32>, vector<1x64xf32> -> vector<1x64xf32>
    %194 = arith.addf %192, %193 : vector<1x64xf32>
    %195 = vector.extract_strided_slice %194 {offsets = [0, 0], sizes = [1, 16], strides = [1, 1]} : vector<1x64xf32> to vector<1x16xf32>
    %cst_77 = arith.constant 0.000000e+00 : f32
    %196 = vector.broadcast %cst_77 : f32 to vector<1x16xf32>
    %197 = arith.subf %196, %195 : vector<1x16xf32>
    %198 = math.exp %197 : vector<1x16xf32>
    %cst_78 = arith.constant 1.000000e+00 : f32
    %199 = vector.broadcast %cst_78 : f32 to vector<1x16xf32>
    %200 = arith.addf %199, %198 : vector<1x16xf32>
    %cst_79 = arith.constant 1.000000e+00 : f32
    %201 = vector.broadcast %cst_79 : f32 to vector<1x16xf32>
    %202 = arith.divf %201, %200 : vector<1x16xf32>
    %203 = vector.extract_strided_slice %194 {offsets = [0, 16], sizes = [1, 16], strides = [1, 1]} : vector<1x64xf32> to vector<1x16xf32>
    %cst_80 = arith.constant 0.000000e+00 : f32
    %204 = vector.broadcast %cst_80 : f32 to vector<1x16xf32>
    %205 = arith.subf %204, %203 : vector<1x16xf32>
    %206 = math.exp %205 : vector<1x16xf32>
    %cst_81 = arith.constant 1.000000e+00 : f32
    %207 = vector.broadcast %cst_81 : f32 to vector<1x16xf32>
    %208 = arith.addf %207, %206 : vector<1x16xf32>
    %cst_82 = arith.constant 1.000000e+00 : f32
    %209 = vector.broadcast %cst_82 : f32 to vector<1x16xf32>
    %210 = arith.divf %209, %208 : vector<1x16xf32>
    %211 = vector.extract_strided_slice %194 {offsets = [0, 32], sizes = [1, 16], strides = [1, 1]} : vector<1x64xf32> to vector<1x16xf32>
    %212 = math.tanh %211 : vector<1x16xf32>
    %213 = vector.extract_strided_slice %194 {offsets = [0, 48], sizes = [1, 16], strides = [1, 1]} : vector<1x64xf32> to vector<1x16xf32>
    %cst_83 = arith.constant 0.000000e+00 : f32
    %214 = vector.broadcast %cst_83 : f32 to vector<1x16xf32>
    %215 = arith.subf %214, %213 : vector<1x16xf32>
    %216 = math.exp %215 : vector<1x16xf32>
    %cst_84 = arith.constant 1.000000e+00 : f32
    %217 = vector.broadcast %cst_84 : f32 to vector<1x16xf32>
    %218 = arith.addf %217, %216 : vector<1x16xf32>
    %cst_85 = arith.constant 1.000000e+00 : f32
    %219 = vector.broadcast %cst_85 : f32 to vector<1x16xf32>
    %220 = arith.divf %219, %218 : vector<1x16xf32>
    %221 = arith.mulf %210, %191 : vector<1x16xf32>
    %222 = arith.mulf %202, %212 : vector<1x16xf32>
    %223 = arith.addf %221, %222 : vector<1x16xf32>
    %224 = math.tanh %223 : vector<1x16xf32>
    %225 = arith.mulf %220, %224 : vector<1x16xf32>
    %c4_86 = arith.constant 4 : index
    %c16 = arith.constant 16 : index
    %226 = vector.load %arg9[%c4_86, %c16] : memref<5x32xf32, #tpu.memory_space<vmem>>, vector<1x16xf32>
    tpu.vector_store %arg9[%c4_86, %c16], %225 {strides = array<i32>} : memref<5x32xf32, #tpu.memory_space<vmem>>, vector<1x16xf32>,
    %227 = vector.extract_strided_slice %8 {offsets = [3, 64], sizes = [1, 64], strides = [1, 1]} : vector<5x128xf32> to vector<1x64xf32>
    %cst_87 = arith.constant dense<0.000000e+00> : vector<1x64xf32>
    %228 = tpu.matmul %225, %12, %cst_87 {dimension_numbers = #tpu.dot_dimension_numbers<[1], [0], [0], [1], [0, 0, 1, 1], [], []>} : vector<1x16xf32>, vector<16x64xf32>, vector<1x64xf32> -> vector<1x64xf32>
    %229 = arith.addf %227, %228 : vector<1x64xf32>
    %230 = vector.extract_strided_slice %229 {offsets = [0, 0], sizes = [1, 16], strides = [1, 1]} : vector<1x64xf32> to vector<1x16xf32>
    %cst_88 = arith.constant 0.000000e+00 : f32
    %231 = vector.broadcast %cst_88 : f32 to vector<1x16xf32>
    %232 = arith.subf %231, %230 : vector<1x16xf32>
    %233 = math.exp %232 : vector<1x16xf32>
    %cst_89 = arith.constant 1.000000e+00 : f32
    %234 = vector.broadcast %cst_89 : f32 to vector<1x16xf32>
    %235 = arith.addf %234, %233 : vector<1x16xf32>
    %cst_90 = arith.constant 1.000000e+00 : f32
    %236 = vector.broadcast %cst_90 : f32 to vector<1x16xf32>
    %237 = arith.divf %236, %235 : vector<1x16xf32>
    %238 = vector.extract_strided_slice %229 {offsets = [0, 16], sizes = [1, 16], strides = [1, 1]} : vector<1x64xf32> to vector<1x16xf32>
    %cst_91 = arith.constant 0.000000e+00 : f32
    %239 = vector.broadcast %cst_91 : f32 to vector<1x16xf32>
    %240 = arith.subf %239, %238 : vector<1x16xf32>
    %241 = math.exp %240 : vector<1x16xf32>
    %cst_92 = arith.constant 1.000000e+00 : f32
    %242 = vector.broadcast %cst_92 : f32 to vector<1x16xf32>
    %243 = arith.addf %242, %241 : vector<1x16xf32>
    %cst_93 = arith.constant 1.000000e+00 : f32
    %244 = vector.broadcast %cst_93 : f32 to vector<1x16xf32>
    %245 = arith.divf %244, %243 : vector<1x16xf32>
    %246 = vector.extract_strided_slice %229 {offsets = [0, 32], sizes = [1, 16], strides = [1, 1]} : vector<1x64xf32> to vector<1x16xf32>
    %247 = math.tanh %246 : vector<1x16xf32>
    %248 = vector.extract_strided_slice %229 {offsets = [0, 48], sizes = [1, 16], strides = [1, 1]} : vector<1x64xf32> to vector<1x16xf32>
    %cst_94 = arith.constant 0.000000e+00 : f32
    %249 = vector.broadcast %cst_94 : f32 to vector<1x16xf32>
    %250 = arith.subf %249, %248 : vector<1x16xf32>
    %251 = math.exp %250 : vector<1x16xf32>
    %cst_95 = arith.constant 1.000000e+00 : f32
    %252 = vector.broadcast %cst_95 : f32 to vector<1x16xf32>
    %253 = arith.addf %252, %251 : vector<1x16xf32>
    %cst_96 = arith.constant 1.000000e+00 : f32
    %254 = vector.broadcast %cst_96 : f32 to vector<1x16xf32>
    %255 = arith.divf %254, %253 : vector<1x16xf32>
    %256 = arith.mulf %245, %223 : vector<1x16xf32>
    %257 = arith.mulf %237, %247 : vector<1x16xf32>
    %258 = arith.addf %256, %257 : vector<1x16xf32>
    %259 = math.tanh %258 : vector<1x16xf32>
    %260 = arith.mulf %255, %259 : vector<1x16xf32>
    %c3_97 = arith.constant 3 : index
    %c16_98 = arith.constant 16 : index
    %261 = vector.load %arg9[%c3_97, %c16_98] : memref<5x32xf32, #tpu.memory_space<vmem>>, vector<1x16xf32>
    tpu.vector_store %arg9[%c3_97, %c16_98], %260 {strides = array<i32>} : memref<5x32xf32, #tpu.memory_space<vmem>>, vector<1x16xf32>,
    %262 = vector.extract_strided_slice %8 {offsets = [2, 64], sizes = [1, 64], strides = [1, 1]} : vector<5x128xf32> to vector<1x64xf32>
    %cst_99 = arith.constant dense<0.000000e+00> : vector<1x64xf32>
    %263 = tpu.matmul %260, %12, %cst_99 {dimension_numbers = #tpu.dot_dimension_numbers<[1], [0], [0], [1], [0, 0, 1, 1], [], []>} : vector<1x16xf32>, vector<16x64xf32>, vector<1x64xf32> -> vector<1x64xf32>
    %264 = arith.addf %262, %263 : vector<1x64xf32>
    %265 = vector.extract_strided_slice %264 {offsets = [0, 0], sizes = [1, 16], strides = [1, 1]} : vector<1x64xf32> to vector<1x16xf32>
    %cst_100 = arith.constant 0.000000e+00 : f32
    %266 = vector.broadcast %cst_100 : f32 to vector<1x16xf32>
    %267 = arith.subf %266, %265 : vector<1x16xf32>
    %268 = math.exp %267 : vector<1x16xf32>
    %cst_101 = arith.constant 1.000000e+00 : f32
    %269 = vector.broadcast %cst_101 : f32 to vector<1x16xf32>
    %270 = arith.addf %269, %268 : vector<1x16xf32>
    %cst_102 = arith.constant 1.000000e+00 : f32
    %271 = vector.broadcast %cst_102 : f32 to vector<1x16xf32>
    %272 = arith.divf %271, %270 : vector<1x16xf32>
    %273 = vector.extract_strided_slice %264 {offsets = [0, 16], sizes = [1, 16], strides = [1, 1]} : vector<1x64xf32> to vector<1x16xf32>
    %cst_103 = arith.constant 0.000000e+00 : f32
    %274 = vector.broadcast %cst_103 : f32 to vector<1x16xf32>
    %275 = arith.subf %274, %273 : vector<1x16xf32>
    %276 = math.exp %275 : vector<1x16xf32>
    %cst_104 = arith.constant 1.000000e+00 : f32
    %277 = vector.broadcast %cst_104 : f32 to vector<1x16xf32>
    %278 = arith.addf %277, %276 : vector<1x16xf32>
    %cst_105 = arith.constant 1.000000e+00 : f32
    %279 = vector.broadcast %cst_105 : f32 to vector<1x16xf32>
    %280 = arith.divf %279, %278 : vector<1x16xf32>
    %281 = vector.extract_strided_slice %264 {offsets = [0, 32], sizes = [1, 16], strides = [1, 1]} : vector<1x64xf32> to vector<1x16xf32>
    %282 = math.tanh %281 : vector<1x16xf32>
    %283 = vector.extract_strided_slice %264 {offsets = [0, 48], sizes = [1, 16], strides = [1, 1]} : vector<1x64xf32> to vector<1x16xf32>
    %cst_106 = arith.constant 0.000000e+00 : f32
    %284 = vector.broadcast %cst_106 : f32 to vector<1x16xf32>
    %285 = arith.subf %284, %283 : vector<1x16xf32>
    %286 = math.exp %285 : vector<1x16xf32>
    %cst_107 = arith.constant 1.000000e+00 : f32
    %287 = vector.broadcast %cst_107 : f32 to vector<1x16xf32>
    %288 = arith.addf %287, %286 : vector<1x16xf32>
    %cst_108 = arith.constant 1.000000e+00 : f32
    %289 = vector.broadcast %cst_108 : f32 to vector<1x16xf32>
    %290 = arith.divf %289, %288 : vector<1x16xf32>
    %291 = arith.mulf %280, %258 : vector<1x16xf32>
    %292 = arith.mulf %272, %282 : vector<1x16xf32>
    %293 = arith.addf %291, %292 : vector<1x16xf32>
    %294 = math.tanh %293 : vector<1x16xf32>
    %295 = arith.mulf %290, %294 : vector<1x16xf32>
    %c2_109 = arith.constant 2 : index
    %c16_110 = arith.constant 16 : index
    %296 = vector.load %arg9[%c2_109, %c16_110] : memref<5x32xf32, #tpu.memory_space<vmem>>, vector<1x16xf32>
    tpu.vector_store %arg9[%c2_109, %c16_110], %295 {strides = array<i32>} : memref<5x32xf32, #tpu.memory_space<vmem>>, vector<1x16xf32>,
    %297 = vector.extract_strided_slice %8 {offsets = [1, 64], sizes = [1, 64], strides = [1, 1]} : vector<5x128xf32> to vector<1x64xf32>
    %cst_111 = arith.constant dense<0.000000e+00> : vector<1x64xf32>
    %298 = tpu.matmul %295, %12, %cst_111 {dimension_numbers = #tpu.dot_dimension_numbers<[1], [0], [0], [1], [0, 0, 1, 1], [], []>} : vector<1x16xf32>, vector<16x64xf32>, vector<1x64xf32> -> vector<1x64xf32>
    %299 = arith.addf %297, %298 : vector<1x64xf32>
    %300 = vector.extract_strided_slice %299 {offsets = [0, 0], sizes = [1, 16], strides = [1, 1]} : vector<1x64xf32> to vector<1x16xf32>
    %cst_112 = arith.constant 0.000000e+00 : f32
    %301 = vector.broadcast %cst_112 : f32 to vector<1x16xf32>
    %302 = arith.subf %301, %300 : vector<1x16xf32>
    %303 = math.exp %302 : vector<1x16xf32>
    %cst_113 = arith.constant 1.000000e+00 : f32
    %304 = vector.broadcast %cst_113 : f32 to vector<1x16xf32>
    %305 = arith.addf %304, %303 : vector<1x16xf32>
    %cst_114 = arith.constant 1.000000e+00 : f32
    %306 = vector.broadcast %cst_114 : f32 to vector<1x16xf32>
    %307 = arith.divf %306, %305 : vector<1x16xf32>
    %308 = vector.extract_strided_slice %299 {offsets = [0, 16], sizes = [1, 16], strides = [1, 1]} : vector<1x64xf32> to vector<1x16xf32>
    %cst_115 = arith.constant 0.000000e+00 : f32
    %309 = vector.broadcast %cst_115 : f32 to vector<1x16xf32>
    %310 = arith.subf %309, %308 : vector<1x16xf32>
    %311 = math.exp %310 : vector<1x16xf32>
    %cst_116 = arith.constant 1.000000e+00 : f32
    %312 = vector.broadcast %cst_116 : f32 to vector<1x16xf32>
    %313 = arith.addf %312, %311 : vector<1x16xf32>
    %cst_117 = arith.constant 1.000000e+00 : f32
    %314 = vector.broadcast %cst_117 : f32 to vector<1x16xf32>
    %315 = arith.divf %314, %313 : vector<1x16xf32>
    %316 = vector.extract_strided_slice %299 {offsets = [0, 32], sizes = [1, 16], strides = [1, 1]} : vector<1x64xf32> to vector<1x16xf32>
    %317 = math.tanh %316 : vector<1x16xf32>
    %318 = vector.extract_strided_slice %299 {offsets = [0, 48], sizes = [1, 16], strides = [1, 1]} : vector<1x64xf32> to vector<1x16xf32>
    %cst_118 = arith.constant 0.000000e+00 : f32
    %319 = vector.broadcast %cst_118 : f32 to vector<1x16xf32>
    %320 = arith.subf %319, %318 : vector<1x16xf32>
    %321 = math.exp %320 : vector<1x16xf32>
    %cst_119 = arith.constant 1.000000e+00 : f32
    %322 = vector.broadcast %cst_119 : f32 to vector<1x16xf32>
    %323 = arith.addf %322, %321 : vector<1x16xf32>
    %cst_120 = arith.constant 1.000000e+00 : f32
    %324 = vector.broadcast %cst_120 : f32 to vector<1x16xf32>
    %325 = arith.divf %324, %323 : vector<1x16xf32>
    %326 = arith.mulf %315, %293 : vector<1x16xf32>
    %327 = arith.mulf %307, %317 : vector<1x16xf32>
    %328 = arith.addf %326, %327 : vector<1x16xf32>
    %329 = math.tanh %328 : vector<1x16xf32>
    %330 = arith.mulf %325, %329 : vector<1x16xf32>
    %c1_121 = arith.constant 1 : index
    %c16_122 = arith.constant 16 : index
    %331 = vector.load %arg9[%c1_121, %c16_122] : memref<5x32xf32, #tpu.memory_space<vmem>>, vector<1x16xf32>
    tpu.vector_store %arg9[%c1_121, %c16_122], %330 {strides = array<i32>} : memref<5x32xf32, #tpu.memory_space<vmem>>, vector<1x16xf32>,
    %332 = vector.extract_strided_slice %8 {offsets = [0, 64], sizes = [1, 64], strides = [1, 1]} : vector<5x128xf32> to vector<1x64xf32>
    %cst_123 = arith.constant dense<0.000000e+00> : vector<1x64xf32>
    %333 = tpu.matmul %330, %12, %cst_123 {dimension_numbers = #tpu.dot_dimension_numbers<[1], [0], [0], [1], [0, 0, 1, 1], [], []>} : vector<1x16xf32>, vector<16x64xf32>, vector<1x64xf32> -> vector<1x64xf32>
    %334 = arith.addf %332, %333 : vector<1x64xf32>
    %335 = vector.extract_strided_slice %334 {offsets = [0, 0], sizes = [1, 16], strides = [1, 1]} : vector<1x64xf32> to vector<1x16xf32>
    %cst_124 = arith.constant 0.000000e+00 : f32
    %336 = vector.broadcast %cst_124 : f32 to vector<1x16xf32>
    %337 = arith.subf %336, %335 : vector<1x16xf32>
    %338 = math.exp %337 : vector<1x16xf32>
    %cst_125 = arith.constant 1.000000e+00 : f32
    %339 = vector.broadcast %cst_125 : f32 to vector<1x16xf32>
    %340 = arith.addf %339, %338 : vector<1x16xf32>
    %cst_126 = arith.constant 1.000000e+00 : f32
    %341 = vector.broadcast %cst_126 : f32 to vector<1x16xf32>
    %342 = arith.divf %341, %340 : vector<1x16xf32>
    %343 = vector.extract_strided_slice %334 {offsets = [0, 16], sizes = [1, 16], strides = [1, 1]} : vector<1x64xf32> to vector<1x16xf32>
    %cst_127 = arith.constant 0.000000e+00 : f32
    %344 = vector.broadcast %cst_127 : f32 to vector<1x16xf32>
    %345 = arith.subf %344, %343 : vector<1x16xf32>
    %346 = math.exp %345 : vector<1x16xf32>
    %cst_128 = arith.constant 1.000000e+00 : f32
    %347 = vector.broadcast %cst_128 : f32 to vector<1x16xf32>
    %348 = arith.addf %347, %346 : vector<1x16xf32>
    %cst_129 = arith.constant 1.000000e+00 : f32
    %349 = vector.broadcast %cst_129 : f32 to vector<1x16xf32>
    %350 = arith.divf %349, %348 : vector<1x16xf32>
    %351 = vector.extract_strided_slice %334 {offsets = [0, 32], sizes = [1, 16], strides = [1, 1]} : vector<1x64xf32> to vector<1x16xf32>
    %352 = math.tanh %351 : vector<1x16xf32>
    %353 = vector.extract_strided_slice %334 {offsets = [0, 48], sizes = [1, 16], strides = [1, 1]} : vector<1x64xf32> to vector<1x16xf32>
    %cst_130 = arith.constant 0.000000e+00 : f32
    %354 = vector.broadcast %cst_130 : f32 to vector<1x16xf32>
    %355 = arith.subf %354, %353 : vector<1x16xf32>
    %356 = math.exp %355 : vector<1x16xf32>
    %cst_131 = arith.constant 1.000000e+00 : f32
    %357 = vector.broadcast %cst_131 : f32 to vector<1x16xf32>
    %358 = arith.addf %357, %356 : vector<1x16xf32>
    %cst_132 = arith.constant 1.000000e+00 : f32
    %359 = vector.broadcast %cst_132 : f32 to vector<1x16xf32>
    %360 = arith.divf %359, %358 : vector<1x16xf32>
    %361 = arith.mulf %350, %328 : vector<1x16xf32>
    %362 = arith.mulf %342, %352 : vector<1x16xf32>
    %363 = arith.addf %361, %362 : vector<1x16xf32>
    %364 = math.tanh %363 : vector<1x16xf32>
    %365 = arith.mulf %360, %364 : vector<1x16xf32>
    %c0_133 = arith.constant 0 : index
    %c16_134 = arith.constant 16 : index
    %366 = vector.load %arg9[%c0_133, %c16_134] : memref<5x32xf32, #tpu.memory_space<vmem>>, vector<1x16xf32>
    tpu.vector_store %arg9[%c0_133, %c16_134], %365 {strides = array<i32>} : memref<5x32xf32, #tpu.memory_space<vmem>>, vector<1x16xf32>,
    %c0_135 = arith.constant 0 : index
    %c0_136 = arith.constant 0 : index
    %367 = vector.load %arg9[%c0_135, %c0_136] : memref<5x32xf32, #tpu.memory_space<vmem>>, vector<5x32xf32>
    %c1_137 = arith.constant 1 : index
    %c0_138 = arith.constant 0 : index
    %c0_139 = arith.constant 0 : index
    %368 = vector.load %arg2[%c1_137, %c0_138, %c0_139] : memref<2x32x128xf32, #tpu.memory_space<vmem>>, vector<1x32x128xf32>
    %369 = vector.shape_cast %368 : vector<1x32x128xf32> to vector<32x128xf32>
    %cst_140 = arith.constant dense<0.000000e+00> : vector<5x128xf32>
    %370 = tpu.matmul %367, %369, %cst_140 {dimension_numbers = #tpu.dot_dimension_numbers<[1], [0], [0], [1], [0, 0, 1, 1], [], []>} : vector<5x32xf32>, vector<32x128xf32>, vector<5x128xf32> -> vector<5x128xf32>
    %c1_141 = arith.constant 1 : index
    %c0_142 = arith.constant 0 : index
    %c0_143 = arith.constant 0 : index
    %371 = vector.load %arg4[%c1_141, %c0_142, %c0_143] : memref<2x1x128xf32, #tpu.memory_space<vmem>>, vector<1x1x128xf32>
    %372 = vector.shape_cast %371 : vector<1x1x128xf32> to vector<1x128xf32>
    %373 = vector.broadcast %372 : vector<1x128xf32> to vector<5x128xf32>
    %374 = arith.addf %370, %373 : vector<5x128xf32>
    %c1_144 = arith.constant 1 : index
    %c0_145 = arith.constant 0 : index
    %c0_146 = arith.constant 0 : index
    %c0_147 = arith.constant 0 : index
    %375 = vector.load %arg3[%c1_144, %c0_145, %c0_146, %c0_147] : memref<2x2x16x64xf32, #tpu.memory_space<vmem>>, vector<1x1x16x64xf32>
    %376 = vector.shape_cast %375 : vector<1x1x16x64xf32> to vector<16x64xf32>
    %c1_148 = arith.constant 1 : index
    %c1_149 = arith.constant 1 : index
    %c0_150 = arith.constant 0 : index
    %c0_151 = arith.constant 0 : index
    %377 = vector.load %arg3[%c1_148, %c1_149, %c0_150, %c0_151] : memref<2x2x16x64xf32, #tpu.memory_space<vmem>>, vector<1x1x16x64xf32>
    %378 = vector.shape_cast %377 : vector<1x1x16x64xf32> to vector<16x64xf32>
    %cst_152 = arith.constant 0.000000e+00 : f32
    %379 = vector.broadcast %cst_152 : f32 to vector<1x16xf32>
    %cst_153 = arith.constant 0.000000e+00 : f32
    %380 = vector.broadcast %cst_153 : f32 to vector<1x16xf32>
    %381 = vector.extract_strided_slice %374 {offsets = [0, 0], sizes = [1, 64], strides = [1, 1]} : vector<5x128xf32> to vector<1x64xf32>
    %cst_154 = arith.constant dense<0.000000e+00> : vector<1x64xf32>
    %382 = tpu.matmul %379, %376, %cst_154 {dimension_numbers = #tpu.dot_dimension_numbers<[1], [0], [0], [1], [0, 0, 1, 1], [], []>} : vector<1x16xf32>, vector<16x64xf32>, vector<1x64xf32> -> vector<1x64xf32>
    %383 = arith.addf %381, %382 : vector<1x64xf32>
    %384 = vector.extract_strided_slice %383 {offsets = [0, 0], sizes = [1, 16], strides = [1, 1]} : vector<1x64xf32> to vector<1x16xf32>
    %cst_155 = arith.constant 0.000000e+00 : f32
    %385 = vector.broadcast %cst_155 : f32 to vector<1x16xf32>
    %386 = arith.subf %385, %384 : vector<1x16xf32>
    %387 = math.exp %386 : vector<1x16xf32>
    %cst_156 = arith.constant 1.000000e+00 : f32
    %388 = vector.broadcast %cst_156 : f32 to vector<1x16xf32>
    %389 = arith.addf %388, %387 : vector<1x16xf32>
    %cst_157 = arith.constant 1.000000e+00 : f32
    %390 = vector.broadcast %cst_157 : f32 to vector<1x16xf32>
    %391 = arith.divf %390, %389 : vector<1x16xf32>
    %392 = vector.extract_strided_slice %383 {offsets = [0, 16], sizes = [1, 16], strides = [1, 1]} : vector<1x64xf32> to vector<1x16xf32>
    %cst_158 = arith.constant 0.000000e+00 : f32
    %393 = vector.broadcast %cst_158 : f32 to vector<1x16xf32>
    %394 = arith.subf %393, %392 : vector<1x16xf32>
    %395 = math.exp %394 : vector<1x16xf32>
    %cst_159 = arith.constant 1.000000e+00 : f32
    %396 = vector.broadcast %cst_159 : f32 to vector<1x16xf32>
    %397 = arith.addf %396, %395 : vector<1x16xf32>
    %cst_160 = arith.constant 1.000000e+00 : f32
    %398 = vector.broadcast %cst_160 : f32 to vector<1x16xf32>
    %399 = arith.divf %398, %397 : vector<1x16xf32>
    %400 = vector.extract_strided_slice %383 {offsets = [0, 32], sizes = [1, 16], strides = [1, 1]} : vector<1x64xf32> to vector<1x16xf32>
    %401 = math.tanh %400 : vector<1x16xf32>
    %402 = vector.extract_strided_slice %383 {offsets = [0, 48], sizes = [1, 16], strides = [1, 1]} : vector<1x64xf32> to vector<1x16xf32>
    %cst_161 = arith.constant 0.000000e+00 : f32
    %403 = vector.broadcast %cst_161 : f32 to vector<1x16xf32>
    %404 = arith.subf %403, %402 : vector<1x16xf32>
    %405 = math.exp %404 : vector<1x16xf32>
    %cst_162 = arith.constant 1.000000e+00 : f32
    %406 = vector.broadcast %cst_162 : f32 to vector<1x16xf32>
    %407 = arith.addf %406, %405 : vector<1x16xf32>
    %cst_163 = arith.constant 1.000000e+00 : f32
    %408 = vector.broadcast %cst_163 : f32 to vector<1x16xf32>
    %409 = arith.divf %408, %407 : vector<1x16xf32>
    %410 = arith.mulf %399, %380 : vector<1x16xf32>
    %411 = arith.mulf %391, %401 : vector<1x16xf32>
    %412 = arith.addf %410, %411 : vector<1x16xf32>
    %413 = math.tanh %412 : vector<1x16xf32>
    %414 = arith.mulf %409, %413 : vector<1x16xf32>
    %c0_164 = arith.constant 0 : index
    %c0_165 = arith.constant 0 : index
    %415 = vector.load %arg9[%c0_164, %c0_165] : memref<5x32xf32, #tpu.memory_space<vmem>>, vector<1x16xf32>
    tpu.vector_store %arg9[%c0_164, %c0_165], %414 {strides = array<i32>} : memref<5x32xf32, #tpu.memory_space<vmem>>, vector<1x16xf32>,
    %416 = vector.extract_strided_slice %374 {offsets = [1, 0], sizes = [1, 64], strides = [1, 1]} : vector<5x128xf32> to vector<1x64xf32>
    %cst_166 = arith.constant dense<0.000000e+00> : vector<1x64xf32>
    %417 = tpu.matmul %414, %376, %cst_166 {dimension_numbers = #tpu.dot_dimension_numbers<[1], [0], [0], [1], [0, 0, 1, 1], [], []>} : vector<1x16xf32>, vector<16x64xf32>, vector<1x64xf32> -> vector<1x64xf32>
    %418 = arith.addf %416, %417 : vector<1x64xf32>
    %419 = vector.extract_strided_slice %418 {offsets = [0, 0], sizes = [1, 16], strides = [1, 1]} : vector<1x64xf32> to vector<1x16xf32>
    %cst_167 = arith.constant 0.000000e+00 : f32
    %420 = vector.broadcast %cst_167 : f32 to vector<1x16xf32>
    %421 = arith.subf %420, %419 : vector<1x16xf32>
    %422 = math.exp %421 : vector<1x16xf32>
    %cst_168 = arith.constant 1.000000e+00 : f32
    %423 = vector.broadcast %cst_168 : f32 to vector<1x16xf32>
    %424 = arith.addf %423, %422 : vector<1x16xf32>
    %cst_169 = arith.constant 1.000000e+00 : f32
    %425 = vector.broadcast %cst_169 : f32 to vector<1x16xf32>
    %426 = arith.divf %425, %424 : vector<1x16xf32>
    %427 = vector.extract_strided_slice %418 {offsets = [0, 16], sizes = [1, 16], strides = [1, 1]} : vector<1x64xf32> to vector<1x16xf32>
    %cst_170 = arith.constant 0.000000e+00 : f32
    %428 = vector.broadcast %cst_170 : f32 to vector<1x16xf32>
    %429 = arith.subf %428, %427 : vector<1x16xf32>
    %430 = math.exp %429 : vector<1x16xf32>
    %cst_171 = arith.constant 1.000000e+00 : f32
    %431 = vector.broadcast %cst_171 : f32 to vector<1x16xf32>
    %432 = arith.addf %431, %430 : vector<1x16xf32>
    %cst_172 = arith.constant 1.000000e+00 : f32
    %433 = vector.broadcast %cst_172 : f32 to vector<1x16xf32>
    %434 = arith.divf %433, %432 : vector<1x16xf32>
    %435 = vector.extract_strided_slice %418 {offsets = [0, 32], sizes = [1, 16], strides = [1, 1]} : vector<1x64xf32> to vector<1x16xf32>
    %436 = math.tanh %435 : vector<1x16xf32>
    %437 = vector.extract_strided_slice %418 {offsets = [0, 48], sizes = [1, 16], strides = [1, 1]} : vector<1x64xf32> to vector<1x16xf32>
    %cst_173 = arith.constant 0.000000e+00 : f32
    %438 = vector.broadcast %cst_173 : f32 to vector<1x16xf32>
    %439 = arith.subf %438, %437 : vector<1x16xf32>
    %440 = math.exp %439 : vector<1x16xf32>
    %cst_174 = arith.constant 1.000000e+00 : f32
    %441 = vector.broadcast %cst_174 : f32 to vector<1x16xf32>
    %442 = arith.addf %441, %440 : vector<1x16xf32>
    %cst_175 = arith.constant 1.000000e+00 : f32
    %443 = vector.broadcast %cst_175 : f32 to vector<1x16xf32>
    %444 = arith.divf %443, %442 : vector<1x16xf32>
    %445 = arith.mulf %434, %412 : vector<1x16xf32>
    %446 = arith.mulf %426, %436 : vector<1x16xf32>
    %447 = arith.addf %445, %446 : vector<1x16xf32>
    %448 = math.tanh %447 : vector<1x16xf32>
    %449 = arith.mulf %444, %448 : vector<1x16xf32>
    %c1_176 = arith.constant 1 : index
    %c0_177 = arith.constant 0 : index
    %450 = vector.load %arg9[%c1_176, %c0_177] : memref<5x32xf32, #tpu.memory_space<vmem>>, vector<1x16xf32>
    tpu.vector_store %arg9[%c1_176, %c0_177], %449 {strides = array<i32>} : memref<5x32xf32, #tpu.memory_space<vmem>>, vector<1x16xf32>,
    %451 = vector.extract_strided_slice %374 {offsets = [2, 0], sizes = [1, 64], strides = [1, 1]} : vector<5x128xf32> to vector<1x64xf32>
    %cst_178 = arith.constant dense<0.000000e+00> : vector<1x64xf32>
    %452 = tpu.matmul %449, %376, %cst_178 {dimension_numbers = #tpu.dot_dimension_numbers<[1], [0], [0], [1], [0, 0, 1, 1], [], []>} : vector<1x16xf32>, vector<16x64xf32>, vector<1x64xf32> -> vector<1x64xf32>
    %453 = arith.addf %451, %452 : vector<1x64xf32>
    %454 = vector.extract_strided_slice %453 {offsets = [0, 0], sizes = [1, 16], strides = [1, 1]} : vector<1x64xf32> to vector<1x16xf32>
    %cst_179 = arith.constant 0.000000e+00 : f32
    %455 = vector.broadcast %cst_179 : f32 to vector<1x16xf32>
    %456 = arith.subf %455, %454 : vector<1x16xf32>
    %457 = math.exp %456 : vector<1x16xf32>
    %cst_180 = arith.constant 1.000000e+00 : f32
    %458 = vector.broadcast %cst_180 : f32 to vector<1x16xf32>
    %459 = arith.addf %458, %457 : vector<1x16xf32>
    %cst_181 = arith.constant 1.000000e+00 : f32
    %460 = vector.broadcast %cst_181 : f32 to vector<1x16xf32>
    %461 = arith.divf %460, %459 : vector<1x16xf32>
    %462 = vector.extract_strided_slice %453 {offsets = [0, 16], sizes = [1, 16], strides = [1, 1]} : vector<1x64xf32> to vector<1x16xf32>
    %cst_182 = arith.constant 0.000000e+00 : f32
    %463 = vector.broadcast %cst_182 : f32 to vector<1x16xf32>
    %464 = arith.subf %463, %462 : vector<1x16xf32>
    %465 = math.exp %464 : vector<1x16xf32>
    %cst_183 = arith.constant 1.000000e+00 : f32
    %466 = vector.broadcast %cst_183 : f32 to vector<1x16xf32>
    %467 = arith.addf %466, %465 : vector<1x16xf32>
    %cst_184 = arith.constant 1.000000e+00 : f32
    %468 = vector.broadcast %cst_184 : f32 to vector<1x16xf32>
    %469 = arith.divf %468, %467 : vector<1x16xf32>
    %470 = vector.extract_strided_slice %453 {offsets = [0, 32], sizes = [1, 16], strides = [1, 1]} : vector<1x64xf32> to vector<1x16xf32>
    %471 = math.tanh %470 : vector<1x16xf32>
    %472 = vector.extract_strided_slice %453 {offsets = [0, 48], sizes = [1, 16], strides = [1, 1]} : vector<1x64xf32> to vector<1x16xf32>
    %cst_185 = arith.constant 0.000000e+00 : f32
    %473 = vector.broadcast %cst_185 : f32 to vector<1x16xf32>
    %474 = arith.subf %473, %472 : vector<1x16xf32>
    %475 = math.exp %474 : vector<1x16xf32>
    %cst_186 = arith.constant 1.000000e+00 : f32
    %476 = vector.broadcast %cst_186 : f32 to vector<1x16xf32>
    %477 = arith.addf %476, %475 : vector<1x16xf32>
    %cst_187 = arith.constant 1.000000e+00 : f32
    %478 = vector.broadcast %cst_187 : f32 to vector<1x16xf32>
    %479 = arith.divf %478, %477 : vector<1x16xf32>
    %480 = arith.mulf %469, %447 : vector<1x16xf32>
    %481 = arith.mulf %461, %471 : vector<1x16xf32>
    %482 = arith.addf %480, %481 : vector<1x16xf32>
    %483 = math.tanh %482 : vector<1x16xf32>
    %484 = arith.mulf %479, %483 : vector<1x16xf32>
    %c2_188 = arith.constant 2 : index
    %c0_189 = arith.constant 0 : index
    %485 = vector.load %arg9[%c2_188, %c0_189] : memref<5x32xf32, #tpu.memory_space<vmem>>, vector<1x16xf32>
    tpu.vector_store %arg9[%c2_188, %c0_189], %484 {strides = array<i32>} : memref<5x32xf32, #tpu.memory_space<vmem>>, vector<1x16xf32>,
    %486 = vector.extract_strided_slice %374 {offsets = [3, 0], sizes = [1, 64], strides = [1, 1]} : vector<5x128xf32> to vector<1x64xf32>
    %cst_190 = arith.constant dense<0.000000e+00> : vector<1x64xf32>
    %487 = tpu.matmul %484, %376, %cst_190 {dimension_numbers = #tpu.dot_dimension_numbers<[1], [0], [0], [1], [0, 0, 1, 1], [], []>} : vector<1x16xf32>, vector<16x64xf32>, vector<1x64xf32> -> vector<1x64xf32>
    %488 = arith.addf %486, %487 : vector<1x64xf32>
    %489 = vector.extract_strided_slice %488 {offsets = [0, 0], sizes = [1, 16], strides = [1, 1]} : vector<1x64xf32> to vector<1x16xf32>
    %cst_191 = arith.constant 0.000000e+00 : f32
    %490 = vector.broadcast %cst_191 : f32 to vector<1x16xf32>
    %491 = arith.subf %490, %489 : vector<1x16xf32>
    %492 = math.exp %491 : vector<1x16xf32>
    %cst_192 = arith.constant 1.000000e+00 : f32
    %493 = vector.broadcast %cst_192 : f32 to vector<1x16xf32>
    %494 = arith.addf %493, %492 : vector<1x16xf32>
    %cst_193 = arith.constant 1.000000e+00 : f32
    %495 = vector.broadcast %cst_193 : f32 to vector<1x16xf32>
    %496 = arith.divf %495, %494 : vector<1x16xf32>
    %497 = vector.extract_strided_slice %488 {offsets = [0, 16], sizes = [1, 16], strides = [1, 1]} : vector<1x64xf32> to vector<1x16xf32>
    %cst_194 = arith.constant 0.000000e+00 : f32
    %498 = vector.broadcast %cst_194 : f32 to vector<1x16xf32>
    %499 = arith.subf %498, %497 : vector<1x16xf32>
    %500 = math.exp %499 : vector<1x16xf32>
    %cst_195 = arith.constant 1.000000e+00 : f32
    %501 = vector.broadcast %cst_195 : f32 to vector<1x16xf32>
    %502 = arith.addf %501, %500 : vector<1x16xf32>
    %cst_196 = arith.constant 1.000000e+00 : f32
    %503 = vector.broadcast %cst_196 : f32 to vector<1x16xf32>
    %504 = arith.divf %503, %502 : vector<1x16xf32>
    %505 = vector.extract_strided_slice %488 {offsets = [0, 32], sizes = [1, 16], strides = [1, 1]} : vector<1x64xf32> to vector<1x16xf32>
    %506 = math.tanh %505 : vector<1x16xf32>
    %507 = vector.extract_strided_slice %488 {offsets = [0, 48], sizes = [1, 16], strides = [1, 1]} : vector<1x64xf32> to vector<1x16xf32>
    %cst_197 = arith.constant 0.000000e+00 : f32
    %508 = vector.broadcast %cst_197 : f32 to vector<1x16xf32>
    %509 = arith.subf %508, %507 : vector<1x16xf32>
    %510 = math.exp %509 : vector<1x16xf32>
    %cst_198 = arith.constant 1.000000e+00 : f32
    %511 = vector.broadcast %cst_198 : f32 to vector<1x16xf32>
    %512 = arith.addf %511, %510 : vector<1x16xf32>
    %cst_199 = arith.constant 1.000000e+00 : f32
    %513 = vector.broadcast %cst_199 : f32 to vector<1x16xf32>
    %514 = arith.divf %513, %512 : vector<1x16xf32>
    %515 = arith.mulf %504, %482 : vector<1x16xf32>
    %516 = arith.mulf %496, %506 : vector<1x16xf32>
    %517 = arith.addf %515, %516 : vector<1x16xf32>
    %518 = math.tanh %517 : vector<1x16xf32>
    %519 = arith.mulf %514, %518 : vector<1x16xf32>
    %c3_200 = arith.constant 3 : index
    %c0_201 = arith.constant 0 : index
    %520 = vector.load %arg9[%c3_200, %c0_201] : memref<5x32xf32, #tpu.memory_space<vmem>>, vector<1x16xf32>
    tpu.vector_store %arg9[%c3_200, %c0_201], %519 {strides = array<i32>} : memref<5x32xf32, #tpu.memory_space<vmem>>, vector<1x16xf32>,
    %521 = vector.extract_strided_slice %374 {offsets = [4, 0], sizes = [1, 64], strides = [1, 1]} : vector<5x128xf32> to vector<1x64xf32>
    %cst_202 = arith.constant dense<0.000000e+00> : vector<1x64xf32>
    %522 = tpu.matmul %519, %376, %cst_202 {dimension_numbers = #tpu.dot_dimension_numbers<[1], [0], [0], [1], [0, 0, 1, 1], [], []>} : vector<1x16xf32>, vector<16x64xf32>, vector<1x64xf32> -> vector<1x64xf32>
    %523 = arith.addf %521, %522 : vector<1x64xf32>
    %524 = vector.extract_strided_slice %523 {offsets = [0, 0], sizes = [1, 16], strides = [1, 1]} : vector<1x64xf32> to vector<1x16xf32>
    %cst_203 = arith.constant 0.000000e+00 : f32
    %525 = vector.broadcast %cst_203 : f32 to vector<1x16xf32>
    %526 = arith.subf %525, %524 : vector<1x16xf32>
    %527 = math.exp %526 : vector<1x16xf32>
    %cst_204 = arith.constant 1.000000e+00 : f32
    %528 = vector.broadcast %cst_204 : f32 to vector<1x16xf32>
    %529 = arith.addf %528, %527 : vector<1x16xf32>
    %cst_205 = arith.constant 1.000000e+00 : f32
    %530 = vector.broadcast %cst_205 : f32 to vector<1x16xf32>
    %531 = arith.divf %530, %529 : vector<1x16xf32>
    %532 = vector.extract_strided_slice %523 {offsets = [0, 16], sizes = [1, 16], strides = [1, 1]} : vector<1x64xf32> to vector<1x16xf32>
    %cst_206 = arith.constant 0.000000e+00 : f32
    %533 = vector.broadcast %cst_206 : f32 to vector<1x16xf32>
    %534 = arith.subf %533, %532 : vector<1x16xf32>
    %535 = math.exp %534 : vector<1x16xf32>
    %cst_207 = arith.constant 1.000000e+00 : f32
    %536 = vector.broadcast %cst_207 : f32 to vector<1x16xf32>
    %537 = arith.addf %536, %535 : vector<1x16xf32>
    %cst_208 = arith.constant 1.000000e+00 : f32
    %538 = vector.broadcast %cst_208 : f32 to vector<1x16xf32>
    %539 = arith.divf %538, %537 : vector<1x16xf32>
    %540 = vector.extract_strided_slice %523 {offsets = [0, 32], sizes = [1, 16], strides = [1, 1]} : vector<1x64xf32> to vector<1x16xf32>
    %541 = math.tanh %540 : vector<1x16xf32>
    %542 = vector.extract_strided_slice %523 {offsets = [0, 48], sizes = [1, 16], strides = [1, 1]} : vector<1x64xf32> to vector<1x16xf32>
    %cst_209 = arith.constant 0.000000e+00 : f32
    %543 = vector.broadcast %cst_209 : f32 to vector<1x16xf32>
    %544 = arith.subf %543, %542 : vector<1x16xf32>
    %545 = math.exp %544 : vector<1x16xf32>
    %cst_210 = arith.constant 1.000000e+00 : f32
    %546 = vector.broadcast %cst_210 : f32 to vector<1x16xf32>
    %547 = arith.addf %546, %545 : vector<1x16xf32>
    %cst_211 = arith.constant 1.000000e+00 : f32
    %548 = vector.broadcast %cst_211 : f32 to vector<1x16xf32>
    %549 = arith.divf %548, %547 : vector<1x16xf32>
    %550 = arith.mulf %539, %517 : vector<1x16xf32>
    %551 = arith.mulf %531, %541 : vector<1x16xf32>
    %552 = arith.addf %550, %551 : vector<1x16xf32>
    %553 = math.tanh %552 : vector<1x16xf32>
    %554 = arith.mulf %549, %553 : vector<1x16xf32>
    %c4_212 = arith.constant 4 : index
    %c0_213 = arith.constant 0 : index
    %555 = vector.load %arg9[%c4_212, %c0_213] : memref<5x32xf32, #tpu.memory_space<vmem>>, vector<1x16xf32>
    tpu.vector_store %arg9[%c4_212, %c0_213], %554 {strides = array<i32>} : memref<5x32xf32, #tpu.memory_space<vmem>>, vector<1x16xf32>,
    %cst_214 = arith.constant 0.000000e+00 : f32
    %556 = vector.broadcast %cst_214 : f32 to vector<1x16xf32>
    %cst_215 = arith.constant 0.000000e+00 : f32
    %557 = vector.broadcast %cst_215 : f32 to vector<1x16xf32>
    %558 = vector.extract_strided_slice %374 {offsets = [4, 64], sizes = [1, 64], strides = [1, 1]} : vector<5x128xf32> to vector<1x64xf32>
    %cst_216 = arith.constant dense<0.000000e+00> : vector<1x64xf32>
    %559 = tpu.matmul %556, %378, %cst_216 {dimension_numbers = #tpu.dot_dimension_numbers<[1], [0], [0], [1], [0, 0, 1, 1], [], []>} : vector<1x16xf32>, vector<16x64xf32>, vector<1x64xf32> -> vector<1x64xf32>
    %560 = arith.addf %558, %559 : vector<1x64xf32>
    %561 = vector.extract_strided_slice %560 {offsets = [0, 0], sizes = [1, 16], strides = [1, 1]} : vector<1x64xf32> to vector<1x16xf32>
    %cst_217 = arith.constant 0.000000e+00 : f32
    %562 = vector.broadcast %cst_217 : f32 to vector<1x16xf32>
    %563 = arith.subf %562, %561 : vector<1x16xf32>
    %564 = math.exp %563 : vector<1x16xf32>
    %cst_218 = arith.constant 1.000000e+00 : f32
    %565 = vector.broadcast %cst_218 : f32 to vector<1x16xf32>
    %566 = arith.addf %565, %564 : vector<1x16xf32>
    %cst_219 = arith.constant 1.000000e+00 : f32
    %567 = vector.broadcast %cst_219 : f32 to vector<1x16xf32>
    %568 = arith.divf %567, %566 : vector<1x16xf32>
    %569 = vector.extract_strided_slice %560 {offsets = [0, 16], sizes = [1, 16], strides = [1, 1]} : vector<1x64xf32> to vector<1x16xf32>
    %cst_220 = arith.constant 0.000000e+00 : f32
    %570 = vector.broadcast %cst_220 : f32 to vector<1x16xf32>
    %571 = arith.subf %570, %569 : vector<1x16xf32>
    %572 = math.exp %571 : vector<1x16xf32>
    %cst_221 = arith.constant 1.000000e+00 : f32
    %573 = vector.broadcast %cst_221 : f32 to vector<1x16xf32>
    %574 = arith.addf %573, %572 : vector<1x16xf32>
    %cst_222 = arith.constant 1.000000e+00 : f32
    %575 = vector.broadcast %cst_222 : f32 to vector<1x16xf32>
    %576 = arith.divf %575, %574 : vector<1x16xf32>
    %577 = vector.extract_strided_slice %560 {offsets = [0, 32], sizes = [1, 16], strides = [1, 1]} : vector<1x64xf32> to vector<1x16xf32>
    %578 = math.tanh %577 : vector<1x16xf32>
    %579 = vector.extract_strided_slice %560 {offsets = [0, 48], sizes = [1, 16], strides = [1, 1]} : vector<1x64xf32> to vector<1x16xf32>
    %cst_223 = arith.constant 0.000000e+00 : f32
    %580 = vector.broadcast %cst_223 : f32 to vector<1x16xf32>
    %581 = arith.subf %580, %579 : vector<1x16xf32>
    %582 = math.exp %581 : vector<1x16xf32>
    %cst_224 = arith.constant 1.000000e+00 : f32
    %583 = vector.broadcast %cst_224 : f32 to vector<1x16xf32>
    %584 = arith.addf %583, %582 : vector<1x16xf32>
    %cst_225 = arith.constant 1.000000e+00 : f32
    %585 = vector.broadcast %cst_225 : f32 to vector<1x16xf32>
    %586 = arith.divf %585, %584 : vector<1x16xf32>
    %587 = arith.mulf %576, %557 : vector<1x16xf32>
    %588 = arith.mulf %568, %578 : vector<1x16xf32>
    %589 = arith.addf %587, %588 : vector<1x16xf32>
    %590 = math.tanh %589 : vector<1x16xf32>
    %591 = arith.mulf %586, %590 : vector<1x16xf32>
    %c4_226 = arith.constant 4 : index
    %c16_227 = arith.constant 16 : index
    %592 = vector.load %arg9[%c4_226, %c16_227] : memref<5x32xf32, #tpu.memory_space<vmem>>, vector<1x16xf32>
    tpu.vector_store %arg9[%c4_226, %c16_227], %591 {strides = array<i32>} : memref<5x32xf32, #tpu.memory_space<vmem>>, vector<1x16xf32>,
    %593 = vector.extract_strided_slice %374 {offsets = [3, 64], sizes = [1, 64], strides = [1, 1]} : vector<5x128xf32> to vector<1x64xf32>
    %cst_228 = arith.constant dense<0.000000e+00> : vector<1x64xf32>
    %594 = tpu.matmul %591, %378, %cst_228 {dimension_numbers = #tpu.dot_dimension_numbers<[1], [0], [0], [1], [0, 0, 1, 1], [], []>} : vector<1x16xf32>, vector<16x64xf32>, vector<1x64xf32> -> vector<1x64xf32>
    %595 = arith.addf %593, %594 : vector<1x64xf32>
    %596 = vector.extract_strided_slice %595 {offsets = [0, 0], sizes = [1, 16], strides = [1, 1]} : vector<1x64xf32> to vector<1x16xf32>
    %cst_229 = arith.constant 0.000000e+00 : f32
    %597 = vector.broadcast %cst_229 : f32 to vector<1x16xf32>
    %598 = arith.subf %597, %596 : vector<1x16xf32>
    %599 = math.exp %598 : vector<1x16xf32>
    %cst_230 = arith.constant 1.000000e+00 : f32
    %600 = vector.broadcast %cst_230 : f32 to vector<1x16xf32>
    %601 = arith.addf %600, %599 : vector<1x16xf32>
    %cst_231 = arith.constant 1.000000e+00 : f32
    %602 = vector.broadcast %cst_231 : f32 to vector<1x16xf32>
    %603 = arith.divf %602, %601 : vector<1x16xf32>
    %604 = vector.extract_strided_slice %595 {offsets = [0, 16], sizes = [1, 16], strides = [1, 1]} : vector<1x64xf32> to vector<1x16xf32>
    %cst_232 = arith.constant 0.000000e+00 : f32
    %605 = vector.broadcast %cst_232 : f32 to vector<1x16xf32>
    %606 = arith.subf %605, %604 : vector<1x16xf32>
    %607 = math.exp %606 : vector<1x16xf32>
    %cst_233 = arith.constant 1.000000e+00 : f32
    %608 = vector.broadcast %cst_233 : f32 to vector<1x16xf32>
    %609 = arith.addf %608, %607 : vector<1x16xf32>
    %cst_234 = arith.constant 1.000000e+00 : f32
    %610 = vector.broadcast %cst_234 : f32 to vector<1x16xf32>
    %611 = arith.divf %610, %609 : vector<1x16xf32>
    %612 = vector.extract_strided_slice %595 {offsets = [0, 32], sizes = [1, 16], strides = [1, 1]} : vector<1x64xf32> to vector<1x16xf32>
    %613 = math.tanh %612 : vector<1x16xf32>
    %614 = vector.extract_strided_slice %595 {offsets = [0, 48], sizes = [1, 16], strides = [1, 1]} : vector<1x64xf32> to vector<1x16xf32>
    %cst_235 = arith.constant 0.000000e+00 : f32
    %615 = vector.broadcast %cst_235 : f32 to vector<1x16xf32>
    %616 = arith.subf %615, %614 : vector<1x16xf32>
    %617 = math.exp %616 : vector<1x16xf32>
    %cst_236 = arith.constant 1.000000e+00 : f32
    %618 = vector.broadcast %cst_236 : f32 to vector<1x16xf32>
    %619 = arith.addf %618, %617 : vector<1x16xf32>
    %cst_237 = arith.constant 1.000000e+00 : f32
    %620 = vector.broadcast %cst_237 : f32 to vector<1x16xf32>
    %621 = arith.divf %620, %619 : vector<1x16xf32>
    %622 = arith.mulf %611, %589 : vector<1x16xf32>
    %623 = arith.mulf %603, %613 : vector<1x16xf32>
    %624 = arith.addf %622, %623 : vector<1x16xf32>
    %625 = math.tanh %624 : vector<1x16xf32>
    %626 = arith.mulf %621, %625 : vector<1x16xf32>
    %c3_238 = arith.constant 3 : index
    %c16_239 = arith.constant 16 : index
    %627 = vector.load %arg9[%c3_238, %c16_239] : memref<5x32xf32, #tpu.memory_space<vmem>>, vector<1x16xf32>
    tpu.vector_store %arg9[%c3_238, %c16_239], %626 {strides = array<i32>} : memref<5x32xf32, #tpu.memory_space<vmem>>, vector<1x16xf32>,
    %628 = vector.extract_strided_slice %374 {offsets = [2, 64], sizes = [1, 64], strides = [1, 1]} : vector<5x128xf32> to vector<1x64xf32>
    %cst_240 = arith.constant dense<0.000000e+00> : vector<1x64xf32>
    %629 = tpu.matmul %626, %378, %cst_240 {dimension_numbers = #tpu.dot_dimension_numbers<[1], [0], [0], [1], [0, 0, 1, 1], [], []>} : vector<1x16xf32>, vector<16x64xf32>, vector<1x64xf32> -> vector<1x64xf32>
    %630 = arith.addf %628, %629 : vector<1x64xf32>
    %631 = vector.extract_strided_slice %630 {offsets = [0, 0], sizes = [1, 16], strides = [1, 1]} : vector<1x64xf32> to vector<1x16xf32>
    %cst_241 = arith.constant 0.000000e+00 : f32
    %632 = vector.broadcast %cst_241 : f32 to vector<1x16xf32>
    %633 = arith.subf %632, %631 : vector<1x16xf32>
    %634 = math.exp %633 : vector<1x16xf32>
    %cst_242 = arith.constant 1.000000e+00 : f32
    %635 = vector.broadcast %cst_242 : f32 to vector<1x16xf32>
    %636 = arith.addf %635, %634 : vector<1x16xf32>
    %cst_243 = arith.constant 1.000000e+00 : f32
    %637 = vector.broadcast %cst_243 : f32 to vector<1x16xf32>
    %638 = arith.divf %637, %636 : vector<1x16xf32>
    %639 = vector.extract_strided_slice %630 {offsets = [0, 16], sizes = [1, 16], strides = [1, 1]} : vector<1x64xf32> to vector<1x16xf32>
    %cst_244 = arith.constant 0.000000e+00 : f32
    %640 = vector.broadcast %cst_244 : f32 to vector<1x16xf32>
    %641 = arith.subf %640, %639 : vector<1x16xf32>
    %642 = math.exp %641 : vector<1x16xf32>
    %cst_245 = arith.constant 1.000000e+00 : f32
    %643 = vector.broadcast %cst_245 : f32 to vector<1x16xf32>
    %644 = arith.addf %643, %642 : vector<1x16xf32>
    %cst_246 = arith.constant 1.000000e+00 : f32
    %645 = vector.broadcast %cst_246 : f32 to vector<1x16xf32>
    %646 = arith.divf %645, %644 : vector<1x16xf32>
    %647 = vector.extract_strided_slice %630 {offsets = [0, 32], sizes = [1, 16], strides = [1, 1]} : vector<1x64xf32> to vector<1x16xf32>
    %648 = math.tanh %647 : vector<1x16xf32>
    %649 = vector.extract_strided_slice %630 {offsets = [0, 48], sizes = [1, 16], strides = [1, 1]} : vector<1x64xf32> to vector<1x16xf32>
    %cst_247 = arith.constant 0.000000e+00 : f32
    %650 = vector.broadcast %cst_247 : f32 to vector<1x16xf32>
    %651 = arith.subf %650, %649 : vector<1x16xf32>
    %652 = math.exp %651 : vector<1x16xf32>
    %cst_248 = arith.constant 1.000000e+00 : f32
    %653 = vector.broadcast %cst_248 : f32 to vector<1x16xf32>
    %654 = arith.addf %653, %652 : vector<1x16xf32>
    %cst_249 = arith.constant 1.000000e+00 : f32
    %655 = vector.broadcast %cst_249 : f32 to vector<1x16xf32>
    %656 = arith.divf %655, %654 : vector<1x16xf32>
    %657 = arith.mulf %646, %624 : vector<1x16xf32>
    %658 = arith.mulf %638, %648 : vector<1x16xf32>
    %659 = arith.addf %657, %658 : vector<1x16xf32>
    %660 = math.tanh %659 : vector<1x16xf32>
    %661 = arith.mulf %656, %660 : vector<1x16xf32>
    %c2_250 = arith.constant 2 : index
    %c16_251 = arith.constant 16 : index
    %662 = vector.load %arg9[%c2_250, %c16_251] : memref<5x32xf32, #tpu.memory_space<vmem>>, vector<1x16xf32>
    tpu.vector_store %arg9[%c2_250, %c16_251], %661 {strides = array<i32>} : memref<5x32xf32, #tpu.memory_space<vmem>>, vector<1x16xf32>,
    %663 = vector.extract_strided_slice %374 {offsets = [1, 64], sizes = [1, 64], strides = [1, 1]} : vector<5x128xf32> to vector<1x64xf32>
    %cst_252 = arith.constant dense<0.000000e+00> : vector<1x64xf32>
    %664 = tpu.matmul %661, %378, %cst_252 {dimension_numbers = #tpu.dot_dimension_numbers<[1], [0], [0], [1], [0, 0, 1, 1], [], []>} : vector<1x16xf32>, vector<16x64xf32>, vector<1x64xf32> -> vector<1x64xf32>
    %665 = arith.addf %663, %664 : vector<1x64xf32>
    %666 = vector.extract_strided_slice %665 {offsets = [0, 0], sizes = [1, 16], strides = [1, 1]} : vector<1x64xf32> to vector<1x16xf32>
    %cst_253 = arith.constant 0.000000e+00 : f32
    %667 = vector.broadcast %cst_253 : f32 to vector<1x16xf32>
    %668 = arith.subf %667, %666 : vector<1x16xf32>
    %669 = math.exp %668 : vector<1x16xf32>
    %cst_254 = arith.constant 1.000000e+00 : f32
    %670 = vector.broadcast %cst_254 : f32 to vector<1x16xf32>
    %671 = arith.addf %670, %669 : vector<1x16xf32>
    %cst_255 = arith.constant 1.000000e+00 : f32
    %672 = vector.broadcast %cst_255 : f32 to vector<1x16xf32>
    %673 = arith.divf %672, %671 : vector<1x16xf32>
    %674 = vector.extract_strided_slice %665 {offsets = [0, 16], sizes = [1, 16], strides = [1, 1]} : vector<1x64xf32> to vector<1x16xf32>
    %cst_256 = arith.constant 0.000000e+00 : f32
    %675 = vector.broadcast %cst_256 : f32 to vector<1x16xf32>
    %676 = arith.subf %675, %674 : vector<1x16xf32>
    %677 = math.exp %676 : vector<1x16xf32>
    %cst_257 = arith.constant 1.000000e+00 : f32
    %678 = vector.broadcast %cst_257 : f32 to vector<1x16xf32>
    %679 = arith.addf %678, %677 : vector<1x16xf32>
    %cst_258 = arith.constant 1.000000e+00 : f32
    %680 = vector.broadcast %cst_258 : f32 to vector<1x16xf32>
    %681 = arith.divf %680, %679 : vector<1x16xf32>
    %682 = vector.extract_strided_slice %665 {offsets = [0, 32], sizes = [1, 16], strides = [1, 1]} : vector<1x64xf32> to vector<1x16xf32>
    %683 = math.tanh %682 : vector<1x16xf32>
    %684 = vector.extract_strided_slice %665 {offsets = [0, 48], sizes = [1, 16], strides = [1, 1]} : vector<1x64xf32> to vector<1x16xf32>
    %cst_259 = arith.constant 0.000000e+00 : f32
    %685 = vector.broadcast %cst_259 : f32 to vector<1x16xf32>
    %686 = arith.subf %685, %684 : vector<1x16xf32>
    %687 = math.exp %686 : vector<1x16xf32>
    %cst_260 = arith.constant 1.000000e+00 : f32
    %688 = vector.broadcast %cst_260 : f32 to vector<1x16xf32>
    %689 = arith.addf %688, %687 : vector<1x16xf32>
    %cst_261 = arith.constant 1.000000e+00 : f32
    %690 = vector.broadcast %cst_261 : f32 to vector<1x16xf32>
    %691 = arith.divf %690, %689 : vector<1x16xf32>
    %692 = arith.mulf %681, %659 : vector<1x16xf32>
    %693 = arith.mulf %673, %683 : vector<1x16xf32>
    %694 = arith.addf %692, %693 : vector<1x16xf32>
    %695 = math.tanh %694 : vector<1x16xf32>
    %696 = arith.mulf %691, %695 : vector<1x16xf32>
    %c1_262 = arith.constant 1 : index
    %c16_263 = arith.constant 16 : index
    %697 = vector.load %arg9[%c1_262, %c16_263] : memref<5x32xf32, #tpu.memory_space<vmem>>, vector<1x16xf32>
    tpu.vector_store %arg9[%c1_262, %c16_263], %696 {strides = array<i32>} : memref<5x32xf32, #tpu.memory_space<vmem>>, vector<1x16xf32>,
    %698 = vector.extract_strided_slice %374 {offsets = [0, 64], sizes = [1, 64], strides = [1, 1]} : vector<5x128xf32> to vector<1x64xf32>
    %cst_264 = arith.constant dense<0.000000e+00> : vector<1x64xf32>
    %699 = tpu.matmul %696, %378, %cst_264 {dimension_numbers = #tpu.dot_dimension_numbers<[1], [0], [0], [1], [0, 0, 1, 1], [], []>} : vector<1x16xf32>, vector<16x64xf32>, vector<1x64xf32> -> vector<1x64xf32>
    %700 = arith.addf %698, %699 : vector<1x64xf32>
    %701 = vector.extract_strided_slice %700 {offsets = [0, 0], sizes = [1, 16], strides = [1, 1]} : vector<1x64xf32> to vector<1x16xf32>
    %cst_265 = arith.constant 0.000000e+00 : f32
    %702 = vector.broadcast %cst_265 : f32 to vector<1x16xf32>
    %703 = arith.subf %702, %701 : vector<1x16xf32>
    %704 = math.exp %703 : vector<1x16xf32>
    %cst_266 = arith.constant 1.000000e+00 : f32
    %705 = vector.broadcast %cst_266 : f32 to vector<1x16xf32>
    %706 = arith.addf %705, %704 : vector<1x16xf32>
    %cst_267 = arith.constant 1.000000e+00 : f32
    %707 = vector.broadcast %cst_267 : f32 to vector<1x16xf32>
    %708 = arith.divf %707, %706 : vector<1x16xf32>
    %709 = vector.extract_strided_slice %700 {offsets = [0, 16], sizes = [1, 16], strides = [1, 1]} : vector<1x64xf32> to vector<1x16xf32>
    %cst_268 = arith.constant 0.000000e+00 : f32
    %710 = vector.broadcast %cst_268 : f32 to vector<1x16xf32>
    %711 = arith.subf %710, %709 : vector<1x16xf32>
    %712 = math.exp %711 : vector<1x16xf32>
    %cst_269 = arith.constant 1.000000e+00 : f32
    %713 = vector.broadcast %cst_269 : f32 to vector<1x16xf32>
    %714 = arith.addf %713, %712 : vector<1x16xf32>
    %cst_270 = arith.constant 1.000000e+00 : f32
    %715 = vector.broadcast %cst_270 : f32 to vector<1x16xf32>
    %716 = arith.divf %715, %714 : vector<1x16xf32>
    %717 = vector.extract_strided_slice %700 {offsets = [0, 32], sizes = [1, 16], strides = [1, 1]} : vector<1x64xf32> to vector<1x16xf32>
    %718 = math.tanh %717 : vector<1x16xf32>
    %719 = vector.extract_strided_slice %700 {offsets = [0, 48], sizes = [1, 16], strides = [1, 1]} : vector<1x64xf32> to vector<1x16xf32>
    %cst_271 = arith.constant 0.000000e+00 : f32
    %720 = vector.broadcast %cst_271 : f32 to vector<1x16xf32>
    %721 = arith.subf %720, %719 : vector<1x16xf32>
    %722 = math.exp %721 : vector<1x16xf32>
    %cst_272 = arith.constant 1.000000e+00 : f32
    %723 = vector.broadcast %cst_272 : f32 to vector<1x16xf32>
    %724 = arith.addf %723, %722 : vector<1x16xf32>
    %cst_273 = arith.constant 1.000000e+00 : f32
    %725 = vector.broadcast %cst_273 : f32 to vector<1x16xf32>
    %726 = arith.divf %725, %724 : vector<1x16xf32>
    %727 = arith.mulf %716, %694 : vector<1x16xf32>
    %728 = arith.mulf %708, %718 : vector<1x16xf32>
    %729 = arith.addf %727, %728 : vector<1x16xf32>
    %730 = math.tanh %729 : vector<1x16xf32>
    %731 = arith.mulf %726, %730 : vector<1x16xf32>
    %c0_274 = arith.constant 0 : index
    %c16_275 = arith.constant 16 : index
    %732 = vector.load %arg9[%c0_274, %c16_275] : memref<5x32xf32, #tpu.memory_space<vmem>>, vector<1x16xf32>
    tpu.vector_store %arg9[%c0_274, %c16_275], %731 {strides = array<i32>} : memref<5x32xf32, #tpu.memory_space<vmem>>, vector<1x16xf32>,
    %c0_276 = arith.constant 0 : index
    %c0_277 = arith.constant 0 : index
    %733 = vector.load %arg9[%c0_276, %c0_277] : memref<5x32xf32, #tpu.memory_space<vmem>>, vector<5x32xf32>
    %c0_278 = arith.constant 0 : index
    %c0_279 = arith.constant 0 : index
    %734 = vector.load %arg5[%c0_278, %c0_279] : memref<32x128xf32, #tpu.memory_space<vmem>>, vector<32x128xf32>
    %cst_280 = arith.constant dense<0.000000e+00> : vector<5x128xf32>
    %735 = tpu.matmul %733, %734, %cst_280 {dimension_numbers = #tpu.dot_dimension_numbers<[1], [0], [0], [1], [0, 0, 1, 1], [], []>} : vector<5x32xf32>, vector<32x128xf32>, vector<5x128xf32> -> vector<5x128xf32>
    %c0_281 = arith.constant 0 : index
    %c0_282 = arith.constant 0 : index
    %736 = vector.load %arg6[%c0_281, %c0_282] : memref<1x128xf32, #tpu.memory_space<vmem>>, vector<1x128xf32>
    %737 = vector.broadcast %736 : vector<1x128xf32> to vector<5x128xf32>
    %738 = arith.addf %735, %737 : vector<5x128xf32>
    %c0_283 = arith.constant 0 : index
    %c0_284 = arith.constant 0 : index
    %c0_285 = arith.constant 0 : index
    %739 = vector.load %arg7[%c0_283, %c0_284, %c0_285] : memref<1x5x128xf32, #tpu.memory_space<vmem>>, vector<1x5x128xf32>
    %740 = vector.shape_cast %739 : vector<1x5x128xf32> to vector<5x128xf32>
    %741 = vector.shape_cast %738 : vector<5x128xf32> to vector<1x5x128xf32>
    tpu.vector_store %arg7[%c0_283, %c0_284, %c0_285], %741 {strides = array<i32>} : memref<1x5x128xf32, #tpu.memory_space<vmem>>, vector<1x5x128xf32>,
    %cst_286 = arith.constant dense<0xFF800000> : vector<5xf32>
    %742 = vector.multi_reduction <maximumf>, %738, %cst_286 [1] : vector<5x128xf32> to vector<5xf32>
    %743 = vector.shape_cast %742 : vector<5xf32> to vector<5x1xf32>
    %744 = tpu.iota {dimensions = array<i32: 1>} : vector<5x128xi32>
    %745 = vector.broadcast %743 : vector<5x1xf32> to vector<5x128xf32>
    %746 = arith.cmpf oeq, %738, %745 : vector<5x128xf32>
    %c128_i32 = arith.constant 128 : i32
    %747 = vector.broadcast %c128_i32 : i32 to vector<5x128xi32>
    %748 = arith.select %746, %744, %747 : vector<5x128xi1>, vector<5x128xi32>
    %cst_287 = arith.constant dense<2147483647> : vector<5xi32>
    %749 = vector.multi_reduction <minsi>, %748, %cst_287 [1] : vector<5x128xi32> to vector<5xi32>
    %750 = vector.shape_cast %749 : vector<5xi32> to vector<5x1xi32>
    %751 = vector.shape_cast %750 : vector<5x1xi32> to vector<5x1xi32>
    %752 = vector.broadcast %751 : vector<5x1xi32> to vector<5x128xi32>
    %c0_288 = arith.constant 0 : index
    %c0_289 = arith.constant 0 : index
    %c0_290 = arith.constant 0 : index
    %753 = vector.load %arg8[%c0_288, %c0_289, %c0_290] : memref<1x5x128xi32, #tpu.memory_space<vmem>>, vector<1x5x128xi32>
    %754 = vector.shape_cast %753 : vector<1x5x128xi32> to vector<5x128xi32>
    %755 = vector.shape_cast %752 : vector<5x128xi32> to vector<1x5x128xi32>
    tpu.vector_store %arg8[%c0_288, %c0_289, %c0_290], %755 {strides = array<i32>} : memref<1x5x128xi32, #tpu.memory_space<vmem>>, vector<1x5x128xi32>,
    return
  }
  func.func @transform_0(%arg0: i32) -> (i32, i32, i32) {
    %c0_i32 = arith.constant 0 : i32
    %c0_i32_0 = arith.constant 0 : i32
    %c0_i32_1 = arith.constant 0 : i32
    return %arg0, %c0_i32, %c0_i32_0 : i32, i32, i32
  }
  func.func @transform_1(%arg0: i32) -> (i32, i32, i32) {
    %c0_i32 = arith.constant 0 : i32
    %c0_i32_0 = arith.constant 0 : i32
    %c0_i32_1 = arith.constant 0 : i32
    %c0_i32_2 = arith.constant 0 : i32
    return %c0_i32, %c0_i32_0, %c0_i32_1 : i32, i32, i32
  }
  func.func @transform_2(%arg0: i32) -> (i32, i32, i32, i32) {
    %c0_i32 = arith.constant 0 : i32
    %c0_i32_0 = arith.constant 0 : i32
    %c0_i32_1 = arith.constant 0 : i32
    %c0_i32_2 = arith.constant 0 : i32
    %c0_i32_3 = arith.constant 0 : i32
    return %c0_i32, %c0_i32_0, %c0_i32_1, %c0_i32_2 : i32, i32, i32, i32
  }
  func.func @transform_3(%arg0: i32) -> (i32, i32, i32) {
    %c0_i32 = arith.constant 0 : i32
    %c0_i32_0 = arith.constant 0 : i32
    %c0_i32_1 = arith.constant 0 : i32
    %c0_i32_2 = arith.constant 0 : i32
    return %c0_i32, %c0_i32_0, %c0_i32_1 : i32, i32, i32
  }
  func.func @transform_4(%arg0: i32) -> (i32, i32) {
    %c0_i32 = arith.constant 0 : i32
    %c0_i32_0 = arith.constant 0 : i32
    %c0_i32_1 = arith.constant 0 : i32
    return %c0_i32, %c0_i32_0 : i32, i32
  }
  func.func @transform_5(%arg0: i32) -> (i32, i32) {
    %c0_i32 = arith.constant 0 : i32
    %c0_i32_0 = arith.constant 0 : i32
    %c0_i32_1 = arith.constant 0 : i32
    return %c0_i32, %c0_i32_0 : i32, i32
  }
  func.func @transform_6(%arg0: i32) -> (i32, i32, i32) {
    %c0_i32 = arith.constant 0 : i32
    %c0_i32_0 = arith.constant 0 : i32
    %c0_i32_1 = arith.constant 0 : i32
    return %arg0, %c0_i32, %c0_i32_0 : i32, i32, i32
  }
  func.func @transform_7(%arg0: i32) -> (i32, i32, i32) {
    %c0_i32 = arith.constant 0 : i32
    %c0_i32_0 = arith.constant 0 : i32
    %c0_i32_1 = arith.constant 0 : i32
    return %arg0, %c0_i32, %c0_i32_0 : i32, i32, i32
  }
}

</mosaic_0001>

<llo_original>
// kernel: ocr_forward.2
$region0: #{ocr_forward.2}
  #allocation0 [shape = 'u32[]', space=smem, size = 0x4, offset = 0x4, fixed_abs, tag = 'smem constant byte address 0x4 - core index']
  #allocation1 [shape = 'u32[144,128]{1,0:T(1,128)}', space=vmem, size = 0x12000, scoped, tag = 'internal scratch']
  #allocation2 [shape = 'f32[5,32]{1,0:T(8,128)}', space=vmem, size = 0x1000, scoped, tag = 'scratch operand']
  %s0 = inlined_call_operand.vmem [shape: f32[2,5,768], index: 0, kind: input, shape index: {}]
  %s1 = inlined_call_operand.vmem [shape: f32[768,32], index: 1, kind: input, shape index: {}]
  %s2 = inlined_call_operand.vmem [shape: f32[5,32], index: 2, kind: input, shape index: {}]
  %s3 = inlined_call_operand.vmem [shape: f32[2,1,32], index: 3, kind: input, shape index: {}]
  %s4 = inlined_call_operand.vmem [shape: f32[2,1,32], index: 4, kind: input, shape index: {}]
  %s5 = inlined_call_operand.vmem [shape: f32[2,32,96], index: 5, kind: input, shape index: {}]
  %s6 = inlined_call_operand.vmem [shape: f32[2,1,96], index: 6, kind: input, shape index: {}]
  %s7 = inlined_call_operand.vmem [shape: f32[2,32,32], index: 7, kind: input, shape index: {}]
  %s8 = inlined_call_operand.vmem [shape: f32[2,1,32], index: 8, kind: input, shape index: {}]
  %s9 = inlined_call_operand.vmem [shape: f32[2,1,32], index: 9, kind: input, shape index: {}]
  %s10 = inlined_call_operand.vmem [shape: f32[2,1,32], index: 10, kind: input, shape index: {}]
  %s11 = inlined_call_operand.vmem [shape: f32[2,32,64], index: 11, kind: input, shape index: {}]
  %s12 = inlined_call_operand.vmem [shape: f32[2,1,64], index: 12, kind: input, shape index: {}]
  %s13 = inlined_call_operand.vmem [shape: f32[2,64,32], index: 13, kind: input, shape index: {}]
  %s14 = inlined_call_operand.vmem [shape: f32[2,1,32], index: 14, kind: input, shape index: {}]
  %s15 = inlined_call_operand.vmem [shape: f32[1,32], index: 15, kind: input, shape index: {}]
  %s16 = inlined_call_operand.vmem [shape: f32[1,32], index: 16, kind: input, shape index: {}]
  %s17 = inlined_call_operand.vmem [shape: f32[2,5,32], index: 17, kind: output, shape index: {}]
  %s18 = sld [smem:[#allocation0]]
  $region109: #{ocr_forward.2} parent=0
    _
  %s20 = ssub.s32 1, %s18
  %s21 = scalar_select 0, %s20, %s18
  loop: start=0, step=1, limit=6
  $region2: #{ocr_forward.2} parent=0 // loop_pre_header
    _
  $region3: #{ocr_forward.2} parent=0 // loop_header
    %s23 = sphi 0, %s27
    %p24 = scmp.ge.s32.totalorder %s23, 6
    %s30 = sphi 0, %s42
    %s31 = sphi 0, %s38
    %s32 = sphi 0, %s30
    %s33 = sphi 0, %s31
    %s34 = sphi 0, %s32
    %s35 = sphi 0, %s33
    %s45 = sphi 0, %s47
    %s48 = sphi 0, %s45
    %s49 = sphi 0, %s48
    %s65 = sphi 0, %s49
    %s69 = sphi 0, %s69
    %s71 = sphi 0, %s69
    %s72 = sphi 0, %s71
    %s86 = sphi 0, %s72
    %s90 = sphi 0, %s90
    %s92 = sphi 0, %s90
    %s93 = sphi 0, %s92
    %s107 = sphi 0, %s93
    %s113 = sphi 0, %s115
    %s116 = sphi 0, %s113
    %s117 = sphi 0, %s116
    %s133 = sphi 0, %s117
    %s139 = sphi 0, %s141
    %s142 = sphi 0, %s139
    %s143 = sphi 0, %s142
    %s159 = sphi 0, %s143
    %s165 = sphi 0, %s167
    %s168 = sphi 0, %s165
    %s169 = sphi 0, %s168
    %s185 = sphi 0, %s169
    %s191 = sphi 0, %s193
    %s194 = sphi 0, %s191
    %s195 = sphi 0, %s194
    %s211 = sphi 0, %s195
    %s217 = sphi 0, %s219
    %s220 = sphi 0, %s217
    %s221 = sphi 0, %s220
    %s237 = sphi 0, %s221
    %s243 = sphi 0, %s245
    %s246 = sphi 0, %s243
    %s247 = sphi 0, %s246
    %s263 = sphi 0, %s247
    %s269 = sphi 0, %s271
    %s272 = sphi 0, %s269
    %s273 = sphi 0, %s272
    %s289 = sphi 0, %s273
    %s295 = sphi 0, %s297
    %s298 = sphi 0, %s295
    %s299 = sphi 0, %s298
    %s315 = sphi 0, %s299
    %s321 = sphi 0, %s323
    %s324 = sphi 0, %s321
    %s325 = sphi 0, %s324
    %s341 = sphi 0, %s325
    %s347 = sphi 0, %s349
    %s350 = sphi 0, %s347
    %s351 = sphi 0, %s350
    %s367 = sphi 0, %s351
    %s373 = sphi 0, %s375
    %s376 = sphi 0, %s373
    %s377 = sphi 0, %s376
    %s393 = sphi 0, %s377
    %s399 = sphi 0, %s401
    %s402 = sphi 0, %s399
    %s403 = sphi 0, %s402
    %s419 = sphi 0, %s403
    %s423 = sphi 0, %s423
    %s425 = sphi 0, %s423
    %s426 = sphi 0, %s425
    %s440 = sphi 0, %s426
    %s444 = sphi 0, %s444
    %s446 = sphi 0, %s444
    %s447 = sphi 0, %s446
    %s461 = sphi 0, %s447
    %s467 = sphi 0, %s469
    %s470 = sphi 0, %s467
    %s471 = sphi 0, %s470
    %s487 = sphi 0, %s471
  $region4: #{ocr_forward.2} parent=0 // loop_header_branch
    %26 = sbr.rel (%p24) target = $region8
  $region5: #{ocr_forward.2} parent=0 // loop_body
    %s28 = ssub.s32 %s23, 1
    %s29 = ssub.s32 %s23, 2
    %s36 = sadd.s32 1, %s31
    %p37 = scmp.ge.s32.totalorder %s36, 2
    %s38 = scalar_select %p37, 0, %s36
    %s39 = sadd.s32 1, %s30
    %s40 = scalar_select %p37, %s39, %s30
    %p41 = scmp.ge.s32.totalorder %s40, 2
    %s42 = scalar_select %p41, 0, %s40
    %s43 = ssub.s32 %s30, %s42
    %p44 = scmp.eq.s32.totalorder %s43, 0
    %s46 = sadd.s32 %s45, 1
    %s47 = scalar_select %p44, %s45, %s46
    %p50 = pneg %p44
    %p51 = scmp.eq.s32.totalorder %s23, 3
    %p52 = por %p50, %p51
    %p53 = scmp.ne.s32.totalorder %s45, %s48
    %p54 = scmp.eq.s32.totalorder %s23, 0
    %p55 = por %p53, %p54
    %p56 = scmp.ne.s32.totalorder %s45, %s48
    %p57 = scmp.eq.s32.totalorder %s28, 3
    %p58 = por %p56, %p57
    %p59 = scmp.ne.s32.totalorder %s48, %s49
    %p60 = scmp.eq.s32.totalorder %s28, 0
    %p61 = por %p59, %p60
    %p62 = scmp.ne.s32.totalorder %s48, %s49
    %p63 = scmp.eq.s32.totalorder %s29, 3
    %p64 = por %p62, %p63
    %p66 = scmp.ne.s32.totalorder %s49, %s65
    %p67 = scmp.eq.s32.totalorder %s29, 0
    %p68 = por %p66, %p67
    %s70 = sadd.s32 %s69, 1
    %p73 = scmp.eq.s32.totalorder %s23, 3
    %p74 = scmp.ne.s32.totalorder %s69, %s71
    %p75 = scmp.eq.s32.totalorder %s23, 0
    %p76 = por %p74, %p75
    %p77 = scmp.ne.s32.totalorder %s69, %s71
    %p78 = scmp.eq.s32.totalorder %s28, 3
    %p79 = por %p77, %p78
    %p80 = scmp.ne.s32.totalorder %s71, %s72
    %p81 = scmp.eq.s32.totalorder %s28, 0
    %p82 = por %p80, %p81
    %p83 = scmp.ne.s32.totalorder %s71, %s72
    %p84 = scmp.eq.s32.totalorder %s29, 3
    %p85 = por %p83, %p84
    %p87 = scmp.ne.s32.totalorder %s72, %s86
    %p88 = scmp.eq.s32.totalorder %s29, 0
    %p89 = por %p87, %p88
    %s91 = sadd.s32 %s90, 1
    %p94 = scmp.eq.s32.totalorder %s23, 3
    %p95 = scmp.ne.s32.totalorder %s90, %s92
    %p96 = scmp.eq.s32.totalorder %s23, 0
    %p97 = por %p95, %p96
    %p98 = scmp.ne.s32.totalorder %s90, %s92
    %p99 = scmp.eq.s32.totalorder %s28, 3
    %p100 = por %p98, %p99
    %p101 = scmp.ne.s32.totalorder %s92, %s93
    %p102 = scmp.eq.s32.totalorder %s28, 0
    %p103 = por %p101, %p102
    %p104 = scmp.ne.s32.totalorder %s92, %s93
    %p105 = scmp.eq.s32.totalorder %s29, 3
    %p106 = por %p104, %p105
    %p108 = scmp.ne.s32.totalorder %s93, %s107
    %p109 = scmp.eq.s32.totalorder %s29, 0
    %p110 = por %p108, %p109
    %s111 = ssub.s32 %s31, %s38
    %p112 = scmp.eq.s32.totalorder %s111, 0
    %s114 = sadd.s32 %s113, 1
    %s115 = scalar_select %p112, %s113, %s114
    %p118 = pneg %p112
    %p119 = scmp.eq.s32.totalorder %s23, 3
    %p120 = por %p118, %p119
    %p121 = scmp.ne.s32.totalorder %s113, %s116
    %p122 = scmp.eq.s32.totalorder %s23, 0
    %p123 = por %p121, %p122
    %p124 = scmp.ne.s32.totalorder %s113, %s116
    %p125 = scmp.eq.s32.totalorder %s28, 3
    %p126 = por %p124, %p125
    %p127 = scmp.ne.s32.totalorder %s116, %s117
    %p128 = scmp.eq.s32.totalorder %s28, 0
    %p129 = por %p127, %p128
    %p130 = scmp.ne.s32.totalorder %s116, %s117
    %p131 = scmp.eq.s32.totalorder %s29, 3
    %p132 = por %p130, %p131
    %p134 = scmp.ne.s32.totalorder %s117, %s133
    %p135 = scmp.eq.s32.totalorder %s29, 0
    %p136 = por %p134, %p135
    %s137 = ssub.s32 %s31, %s38
    %p138 = scmp.eq.s32.totalorder %s137, 0
    %s140 = sadd.s32 %s139, 1
    %s141 = scalar_select %p138, %s139, %s140
    %p144 = pneg %p138
    %p145 = scmp.eq.s32.totalorder %s23, 3
    %p146 = por %p144, %p145
    %p147 = scmp.ne.s32.totalorder %s139, %s142
    %p148 = scmp.eq.s32.totalorder %s23, 0
    %p149 = por %p147, %p148
    %p150 = scmp.ne.s32.totalorder %s139, %s142
    %p151 = scmp.eq.s32.totalorder %s28, 3
    %p152 = por %p150, %p151
    %p153 = scmp.ne.s32.totalorder %s142, %s143
    %p154 = scmp.eq.s32.totalorder %s28, 0
    %p155 = por %p153, %p154
    %p156 = scmp.ne.s32.totalorder %s142, %s143
    %p157 = scmp.eq.s32.totalorder %s29, 3
    %p158 = por %p156, %p157
    %p160 = scmp.ne.s32.totalorder %s143, %s159
    %p161 = scmp.eq.s32.totalorder %s29, 0
    %p162 = por %p160, %p161
    %s163 = ssub.s32 %s31, %s38
    %p164 = scmp.eq.s32.totalorder %s163, 0
    %s166 = sadd.s32 %s165, 1
    %s167 = scalar_select %p164, %s165, %s166
    %p170 = pneg %p164
    %p171 = scmp.eq.s32.totalorder %s23, 3
    %p172 = por %p170, %p171
    %p173 = scmp.ne.s32.totalorder %s165, %s168
    %p174 = scmp.eq.s32.totalorder %s23, 0
    %p175 = por %p173, %p174
    %p176 = scmp.ne.s32.totalorder %s165, %s168
    %p177 = scmp.eq.s32.totalorder %s28, 3
    %p178 = por %p176, %p177
    %p179 = scmp.ne.s32.totalorder %s168, %s169
    %p180 = scmp.eq.s32.totalorder %s28, 0
    %p181 = por %p179, %p180
    %p182 = scmp.ne.s32.totalorder %s168, %s169
    %p183 = scmp.eq.s32.totalorder %s29, 3
    %p184 = por %p182, %p183
    %p186 = scmp.ne.s32.totalorder %s169, %s185
    %p187 = scmp.eq.s32.totalorder %s29, 0
    %p188 = por %p186, %p187
    %s189 = ssub.s32 %s31, %s38
    %p190 = scmp.eq.s32.totalorder %s189, 0
    %s192 = sadd.s32 %s191, 1
    %s193 = scalar_select %p190, %s191, %s192
    %p196 = pneg %p190
    %p197 = scmp.eq.s32.totalorder %s23, 3
    %p198 = por %p196, %p197
    %p199 = scmp.ne.s32.totalorder %s191, %s194
    %p200 = scmp.eq.s32.totalorder %s23, 0
    %p201 = por %p199, %p200
    %p202 = scmp.ne.s32.totalorder %s191, %s194
    %p203 = scmp.eq.s32.totalorder %s28, 3
    %p204 = por %p202, %p203
    %p205 = scmp.ne.s32.totalorder %s194, %s195
    %p206 = scmp.eq.s32.totalorder %s28, 0
    %p207 = por %p205, %p206
    %p208 = scmp.ne.s32.totalorder %s194, %s195
    %p209 = scmp.eq.s32.totalorder %s29, 3
    %p210 = por %p208, %p209
    %p212 = scmp.ne.s32.totalorder %s195, %s211
    %p213 = scmp.eq.s32.totalorder %s29, 0
    %p214 = por %p212, %p213
    %s215 = ssub.s32 %s31, %s38
    %p216 = scmp.eq.s32.totalorder %s215, 0
    %s218 = sadd.s32 %s217, 1
    %s219 = scalar_select %p216, %s217, %s218
    %p222 = pneg %p216
    %p223 = scmp.eq.s32.totalorder %s23, 3
    %p224 = por %p222, %p223
    %p225 = scmp.ne.s32.totalorder %s217, %s220
    %p226 = scmp.eq.s32.totalorder %s23, 0
    %p227 = por %p225, %p226
    %p228 = scmp.ne.s32.totalorder %s217, %s220
    %p229 = scmp.eq.s32.totalorder %s28, 3
    %p230 = por %p228, %p229
    %p231 = scmp.ne.s32.totalorder %s220, %s221
    %p232 = scmp.eq.s32.totalorder %s28, 0
    %p233 = por %p231, %p232
    %p234 = scmp.ne.s32.totalorder %s220, %s221
    %p235 = scmp.eq.s32.totalorder %s29, 3
    %p236 = por %p234, %p235
    %p238 = scmp.ne.s32.totalorder %s221, %s237
    %p239 = scmp.eq.s32.totalorder %s29, 0
    %p240 = por %p238, %p239
    %s241 = ssub.s32 %s31, %s38
    %p242 = scmp.eq.s32.totalorder %s241, 0
    %s244 = sadd.s32 %s243, 1
    %s245 = scalar_select %p242, %s243, %s244
    %p248 = pneg %p242
    %p249 = scmp.eq.s32.totalorder %s23, 3
    %p250 = por %p248, %p249
    %p251 = scmp.ne.s32.totalorder %s243, %s246
    %p252 = scmp.eq.s32.totalorder %s23, 0
    %p253 = por %p251, %p252
    %p254 = scmp.ne.s32.totalorder %s243, %s246
    %p255 = scmp.eq.s32.totalorder %s28, 3
    %p256 = por %p254, %p255
    %p257 = scmp.ne.s32.totalorder %s246, %s247
    %p258 = scmp.eq.s32.totalorder %s28, 0
    %p259 = por %p257, %p258
    %p260 = scmp.ne.s32.totalorder %s246, %s247
    %p261 = scmp.eq.s32.totalorder %s29, 3
    %p262 = por %p260, %p261
    %p264 = scmp.ne.s32.totalorder %s247, %s263
    %p265 = scmp.eq.s32.totalorder %s29, 0
    %p266 = por %p264, %p265
    %s267 = ssub.s32 %s31, %s38
    %p268 = scmp.eq.s32.totalorder %s267, 0
    %s270 = sadd.s32 %s269, 1
    %s271 = scalar_select %p268, %s269, %s270
    %p274 = pneg %p268
    %p275 = scmp.eq.s32.totalorder %s23, 3
    %p276 = por %p274, %p275
    %p277 = scmp.ne.s32.totalorder %s269, %s272
    %p278 = scmp.eq.s32.totalorder %s23, 0
    %p279 = por %p277, %p278
    %p280 = scmp.ne.s32.totalorder %s269, %s272
    %p281 = scmp.eq.s32.totalorder %s28, 3
    %p282 = por %p280, %p281
    %p283 = scmp.ne.s32.totalorder %s272, %s273
    %p284 = scmp.eq.s32.totalorder %s28, 0
    %p285 = por %p283, %p284
    %p286 = scmp.ne.s32.totalorder %s272, %s273
    %p287 = scmp.eq.s32.totalorder %s29, 3
    %p288 = por %p286, %p287
    %p290 = scmp.ne.s32.totalorder %s273, %s289
    %p291 = scmp.eq.s32.totalorder %s29, 0
    %p292 = por %p290, %p291
    %s293 = ssub.s32 %s31, %s38
    %p294 = scmp.eq.s32.totalorder %s293, 0
    %s296 = sadd.s32 %s295, 1
    %s297 = scalar_select %p294, %s295, %s296
    %p300 = pneg %p294
    %p301 = scmp.eq.s32.totalorder %s23, 3
    %p302 = por %p300, %p301
    %p303 = scmp.ne.s32.totalorder %s295, %s298
    %p304 = scmp.eq.s32.totalorder %s23, 0
    %p305 = por %p303, %p304
    %p306 = scmp.ne.s32.totalorder %s295, %s298
    %p307 = scmp.eq.s32.totalorder %s28, 3
    %p308 = por %p306, %p307
    %p309 = scmp.ne.s32.totalorder %s298, %s299
    %p310 = scmp.eq.s32.totalorder %s28, 0
    %p311 = por %p309, %p310
    %p312 = scmp.ne.s32.totalorder %s298, %s299
    %p313 = scmp.eq.s32.totalorder %s29, 3
    %p314 = por %p312, %p313
    %p316 = scmp.ne.s32.totalorder %s299, %s315
    %p317 = scmp.eq.s32.totalorder %s29, 0
    %p318 = por %p316, %p317
    %s319 = ssub.s32 %s31, %s38
    %p320 = scmp.eq.s32.totalorder %s319, 0
    %s322 = sadd.s32 %s321, 1
    %s323 = scalar_select %p320, %s321, %s322
    %p326 = pneg %p320
    %p327 = scmp.eq.s32.totalorder %s23, 3
    %p328 = por %p326, %p327
    %p329 = scmp.ne.s32.totalorder %s321, %s324
    %p330 = scmp.eq.s32.totalorder %s23, 0
    %p331 = por %p329, %p330
    %p332 = scmp.ne.s32.totalorder %s321, %s324
    %p333 = scmp.eq.s32.totalorder %s28, 3
    %p334 = por %p332, %p333
    %p335 = scmp.ne.s32.totalorder %s324, %s325
    %p336 = scmp.eq.s32.totalorder %s28, 0
    %p337 = por %p335, %p336
    %p338 = scmp.ne.s32.totalorder %s324, %s325
    %p339 = scmp.eq.s32.totalorder %s29, 3
    %p340 = por %p338, %p339
    %p342 = scmp.ne.s32.totalorder %s325, %s341
    %p343 = scmp.eq.s32.totalorder %s29, 0
    %p344 = por %p342, %p343
    %s345 = ssub.s32 %s31, %s38
    %p346 = scmp.eq.s32.totalorder %s345, 0
    %s348 = sadd.s32 %s347, 1
    %s349 = scalar_select %p346, %s347, %s348
    %p352 = pneg %p346
    %p353 = scmp.eq.s32.totalorder %s23, 3
    %p354 = por %p352, %p353
    %p355 = scmp.ne.s32.totalorder %s347, %s350
    %p356 = scmp.eq.s32.totalorder %s23, 0
    %p357 = por %p355, %p356
    %p358 = scmp.ne.s32.totalorder %s347, %s350
    %p359 = scmp.eq.s32.totalorder %s28, 3
    %p360 = por %p358, %p359
    %p361 = scmp.ne.s32.totalorder %s350, %s351
    %p362 = scmp.eq.s32.totalorder %s28, 0
    %p363 = por %p361, %p362
    %p364 = scmp.ne.s32.totalorder %s350, %s351
    %p365 = scmp.eq.s32.totalorder %s29, 3
    %p366 = por %p364, %p365
    %p368 = scmp.ne.s32.totalorder %s351, %s367
    %p369 = scmp.eq.s32.totalorder %s29, 0
    %p370 = por %p368, %p369
    %s371 = ssub.s32 %s31, %s38
    %p372 = scmp.eq.s32.totalorder %s371, 0
    %s374 = sadd.s32 %s373, 1
    %s375 = scalar_select %p372, %s373, %s374
    %p378 = pneg %p372
    %p379 = scmp.eq.s32.totalorder %s23, 3
    %p380 = por %p378, %p379
    %p381 = scmp.ne.s32.totalorder %s373, %s376
    %p382 = scmp.eq.s32.totalorder %s23, 0
    %p383 = por %p381, %p382
    %p384 = scmp.ne.s32.totalorder %s373, %s376
    %p385 = scmp.eq.s32.totalorder %s28, 3
    %p386 = por %p384, %p385
    %p387 = scmp.ne.s32.totalorder %s376, %s377
    %p388 = scmp.eq.s32.totalorder %s28, 0
    %p389 = por %p387, %p388
    %p390 = scmp.ne.s32.totalorder %s376, %s377
    %p391 = scmp.eq.s32.totalorder %s29, 3
    %p392 = por %p390, %p391
    %p394 = scmp.ne.s32.totalorder %s377, %s393
    %p395 = scmp.eq.s32.totalorder %s29, 0
    %p396 = por %p394, %p395
    %s397 = ssub.s32 %s31, %s38
    %p398 = scmp.eq.s32.totalorder %s397, 0
    %s400 = sadd.s32 %s399, 1
    %s401 = scalar_select %p398, %s399, %s400
    %p404 = pneg %p398
    %p405 = scmp.eq.s32.totalorder %s23, 3
    %p406 = por %p404, %p405
    %p407 = scmp.ne.s32.totalorder %s399, %s402
    %p408 = scmp.eq.s32.totalorder %s23, 0
    %p409 = por %p407, %p408
    %p410 = scmp.ne.s32.totalorder %s399, %s402
    %p411 = scmp.eq.s32.totalorder %s28, 3
    %p412 = por %p410, %p411
    %p413 = scmp.ne.s32.totalorder %s402, %s403
    %p414 = scmp.eq.s32.totalorder %s28, 0
    %p415 = por %p413, %p414
    %p416 = scmp.ne.s32.totalorder %s402, %s403
    %p417 = scmp.eq.s32.totalorder %s29, 3
    %p418 = por %p416, %p417
    %p420 = scmp.ne.s32.totalorder %s403, %s419
    %p421 = scmp.eq.s32.totalorder %s29, 0
    %p422 = por %p420, %p421
    %s424 = sadd.s32 %s423, 1
    %p427 = scmp.eq.s32.totalorder %s23, 3
    %p428 = scmp.ne.s32.totalorder %s423, %s425
    %p429 = scmp.eq.s32.totalorder %s23, 0
    %p430 = por %p428, %p429
    %p431 = scmp.ne.s32.totalorder %s423, %s425
    %p432 = scmp.eq.s32.totalorder %s28, 3
    %p433 = por %p431, %p432
    %p434 = scmp.ne.s32.totalorder %s425, %s426
    %p435 = scmp.eq.s32.totalorder %s28, 0
    %p436 = por %p434, %p435
    %p437 = scmp.ne.s32.totalorder %s425, %s426
    %p438 = scmp.eq.s32.totalorder %s29, 3
    %p439 = por %p437, %p438
    %p441 = scmp.ne.s32.totalorder %s426, %s440
    %p442 = scmp.eq.s32.totalorder %s29, 0
    %p443 = por %p441, %p442
    %s445 = sadd.s32 %s444, 1
    %p448 = scmp.eq.s32.totalorder %s23, 3
    %p449 = scmp.ne.s32.totalorder %s444, %s446
    %p450 = scmp.eq.s32.totalorder %s23, 0
    %p451 = por %p449, %p450
    %p452 = scmp.ne.s32.totalorder %s444, %s446
    %p453 = scmp.eq.s32.totalorder %s28, 3
    %p454 = por %p452, %p453
    %p455 = scmp.ne.s32.totalorder %s446, %s447
    %p456 = scmp.eq.s32.totalorder %s28, 0
    %p457 = por %p455, %p456
    %p458 = scmp.ne.s32.totalorder %s446, %s447
    %p459 = scmp.eq.s32.totalorder %s29, 3
    %p460 = por %p458, %p459
    %p462 = scmp.ne.s32.totalorder %s447, %s461
    %p463 = scmp.eq.s32.totalorder %s29, 0
    %p464 = por %p462, %p463
    %s465 = ssub.s32 %s30, %s42
    %p466 = scmp.eq.s32.totalorder %s465, 0
    %s468 = sadd.s32 %s467, 1
    %s469 = scalar_select %p466, %s467, %s468
    %p472 = pneg %p466
    %p473 = scmp.eq.s32.totalorder %s23, 3
    %p474 = por %p472, %p473
    %p475 = scmp.ne.s32.totalorder %s467, %s470
    %p476 = scmp.eq.s32.totalorder %s23, 0
    %p477 = por %p475, %p476
    %p478 = scmp.ne.s32.totalorder %s467, %s470
    %p479 = scmp.eq.s32.totalorder %s28, 3
    %p480 = por %p478, %p479
    %p481 = scmp.ne.s32.totalorder %s470, %s471
    %p482 = scmp.eq.s32.totalorder %s28, 0
    %p483 = por %p481, %p482
    %p484 = scmp.ne.s32.totalorder %s470, %s471
    %p485 = scmp.eq.s32.totalorder %s29, 3
    %p486 = por %p484, %p485
    %p488 = scmp.ne.s32.totalorder %s471, %s487
    %p489 = scmp.eq.s32.totalorder %s29, 0
    %p490 = por %p488, %p489
    %p491 = scmp.le.s32.totalorder 1, %s23
    %p492 = scmp.lt.s32.totalorder %s23, 5
    %p493 = pnand %p491, %p492
    %p494 = pneg %p493
    // Predicated region
    $region9: #{ocr_forward.2} parent=5 // pred_check
      _
    $region10: #{ocr_forward.2} parent=5 // pred_check_branch
      %496 = sbr.rel (%p493) target = $region12
    $region11: #{ocr_forward.2} parent=5 // pred_region
      %s497 = ssub.s32 %s23, 1
      // Predicated region
      $region13: #{ocr_forward.2} parent=11 // pred_check
        %p498 = pneg %p82
      $region14: #{ocr_forward.2} parent=11 // pred_check_branch
        %500 = sbr.rel (%p498) target = $region16
      $region15: #{ocr_forward.2} parent=11 // pred_region
        _
      $region16: #{ocr_forward.2} parent=11 // pred_fallthru
        _
      // Predicated region
      $region17: #{ocr_forward.2} parent=11 // pred_check
        %p501 = pneg %p103
      $region18: #{ocr_forward.2} parent=11 // pred_check_branch
        %503 = sbr.rel (%p501) target = $region20
      $region19: #{ocr_forward.2} parent=11 // pred_region
        _
      $region20: #{ocr_forward.2} parent=11 // pred_fallthru
        _
      // Predicated region
      $region21: #{ocr_forward.2} parent=11 // pred_check
        %p504 = pneg %p436
      $region22: #{ocr_forward.2} parent=11 // pred_check_branch
        %506 = sbr.rel (%p504) target = $region24
      $region23: #{ocr_forward.2} parent=11 // pred_region
        _
      $region24: #{ocr_forward.2} parent=11 // pred_fallthru
        _
      // Predicated region
      $region25: #{ocr_forward.2} parent=11 // pred_check
        %p507 = pneg %p457
      $region26: #{ocr_forward.2} parent=11 // pred_check_branch
        %509 = sbr.rel (%p507) target = $region28
      $region27: #{ocr_forward.2} parent=11 // pred_region
        _
      $region28: #{ocr_forward.2} parent=11 // pred_fallthru
        _
    $region12: #{ocr_forward.2} parent=5 // pred_fallthru
      _
    %p510 = scmp.lt.s32.totalorder %s23, 4
    // Predicated region
    $region29: #{ocr_forward.2} parent=5 // pred_check
      %p511 = pneg %p510
    $region30: #{ocr_forward.2} parent=5 // pred_check_branch
      %513 = sbr.rel (%p511) target = $region32
    $region31: #{ocr_forward.2} parent=5 // pred_region
      // Predicated region
      $region33: #{ocr_forward.2} parent=31 // pred_check
        %p514 = pneg %p55
      $region34: #{ocr_forward.2} parent=31 // pred_check_branch
        %516 = sbr.rel (%p514) target = $region36
      $region35: #{ocr_forward.2} parent=31 // pred_region
        %p517 = scmp.lt.s32.totalorder %s30, 1
        %s518 = scalar_select %p517, %s30, 1
        %s519 = smul.addr %s518, 6
        %s520 = smul.addr %s519, 8
        %s521 = scalar_lea.vmem %s0, %s520
      $region36: #{ocr_forward.2} parent=31 // pred_fallthru
        _
      // Predicated region
      $region37: #{ocr_forward.2} parent=31 // pred_check
        %p522 = pneg %p123
      $region38: #{ocr_forward.2} parent=31 // pred_check_branch
        %524 = sbr.rel (%p522) target = $region40
      $region39: #{ocr_forward.2} parent=31 // pred_region
        %p525 = scmp.lt.s32.totalorder %s31, 1
        %s526 = scalar_select %p525, %s31, 1
        %s527 = scalar_lea.vmem %s3, %s526
      $region40: #{ocr_forward.2} parent=31 // pred_fallthru
        _
      // Predicated region
      $region41: #{ocr_forward.2} parent=31 // pred_check
        %p528 = pneg %p149
      $region42: #{ocr_forward.2} parent=31 // pred_check_branch
        %530 = sbr.rel (%p528) target = $region44
      $region43: #{ocr_forward.2} parent=31 // pred_region
        %p531 = scmp.lt.s32.totalorder %s31, 1
        %s532 = scalar_select %p531, %s31, 1
        %s533 = scalar_lea.vmem %s4, %s532
      $region44: #{ocr_forward.2} parent=31 // pred_fallthru
        _
      // Predicated region
      $region45: #{ocr_forward.2} parent=31 // pred_check
        %p534 = pneg %p175
      $region46: #{ocr_forward.2} parent=31 // pred_check_branch
        %536 = sbr.rel (%p534) target = $region48
      $region47: #{ocr_forward.2} parent=31 // pred_region
        %p537 = scmp.lt.s32.totalorder %s31, 1
        %s538 = scalar_select %p537, %s31, 1
        %s539 = smul.addr %s538, 4
        %s540 = smul.addr %s539, 8
        %s541 = scalar_lea.vmem %s5, %s540
      $region48: #{ocr_forward.2} parent=31 // pred_fallthru
        _
      // Predicated region
      $region49: #{ocr_forward.2} parent=31 // pred_check
        %p542 = pneg %p201
      $region50: #{ocr_forward.2} parent=31 // pred_check_branch
        %544 = sbr.rel (%p542) target = $region52
      $region51: #{ocr_forward.2} parent=31 // pred_region
        %p545 = scmp.lt.s32.totalorder %s31, 1
        %s546 = scalar_select %p545, %s31, 1
        %s547 = scalar_lea.vmem %s6, %s546
      $region52: #{ocr_forward.2} parent=31 // pred_fallthru
        _
      // Predicated region
      $region53: #{ocr_forward.2} parent=31 // pred_check
        %p548 = pneg %p227
      $region54: #{ocr_forward.2} parent=31 // pred_check_branch
        %550 = sbr.rel (%p548) target = $region56
      $region55: #{ocr_forward.2} parent=31 // pred_region
        %p551 = scmp.lt.s32.totalorder %s31, 1
        %s552 = scalar_select %p551, %s31, 1
        %s553 = smul.addr %s552, 4
        %s554 = smul.addr %s553, 8
        %s555 = scalar_lea.vmem %s7, %s554
      $region56: #{ocr_forward.2} parent=31 // pred_fallthru
        _
      // Predicated region
      $region57: #{ocr_forward.2} parent=31 // pred_check
        %p556 = pneg %p253
      $region58: #{ocr_forward.2} parent=31 // pred_check_branch
        %558 = sbr.rel (%p556) target = $region60
      $region59: #{ocr_forward.2} parent=31 // pred_region
        %p559 = scmp.lt.s32.totalorder %s31, 1
        %s560 = scalar_select %p559, %s31, 1
        %s561 = scalar_lea.vmem %s8, %s560
      $region60: #{ocr_forward.2} parent=31 // pred_fallthru
        _
      // Predicated region
      $region61: #{ocr_forward.2} parent=31 // pred_check
        %p562 = pneg %p279
      $region62: #{ocr_forward.2} parent=31 // pred_check_branch
        %564 = sbr.rel (%p562) target = $region64
      $region63: #{ocr_forward.2} parent=31 // pred_region
        %p565 = scmp.lt.s32.totalorder %s31, 1
        %s566 = scalar_select %p565, %s31, 1
        %s567 = scalar_lea.vmem %s9, %s566
      $region64: #{ocr_forward.2} parent=31 // pred_fallthru
        _
      // Predicated region
      $region65: #{ocr_forward.2} parent=31 // pred_check
        %p568 = pneg %p305
      $region66: #{ocr_forward.2} parent=31 // pred_check_branch
        %570 = sbr.rel (%p568) target = $region68
      $region67: #{ocr_forward.2} parent=31 // pred_region
        %p571 = scmp.lt.s32.totalorder %s31, 1
        %s572 = scalar_select %p571, %s31, 1
        %s573 = scalar_lea.vmem %s10, %s572
      $region68: #{ocr_forward.2} parent=31 // pred_fallthru
        _
      // Predicated region
      $region69: #{ocr_forward.2} parent=31 // pred_check
        %p574 = pneg %p331
      $region70: #{ocr_forward.2} parent=31 // pred_check_branch
        %576 = sbr.rel (%p574) target = $region72
      $region71: #{ocr_forward.2} parent=31 // pred_region
        %p577 = scmp.lt.s32.totalorder %s31, 1
        %s578 = scalar_select %p577, %s31, 1
        %s579 = smul.addr %s578, 4
        %s580 = smul.addr %s579, 8
        %s581 = scalar_lea.vmem %s11, %s580
      $region72: #{ocr_forward.2} parent=31 // pred_fallthru
        _
      // Predicated region
      $region73: #{ocr_forward.2} parent=31 // pred_check
        %p582 = pneg %p357
      $region74: #{ocr_forward.2} parent=31 // pred_check_branch
        %584 = sbr.rel (%p582) target = $region76
      $region75: #{ocr_forward.2} parent=31 // pred_region
        %p585 = scmp.lt.s32.totalorder %s31, 1
        %s586 = scalar_select %p585, %s31, 1
        %s587 = scalar_lea.vmem %s12, %s586
      $region76: #{ocr_forward.2} parent=31 // pred_fallthru
        _
      // Predicated region
      $region77: #{ocr_forward.2} parent=31 // pred_check
        %p588 = pneg %p383
      $region78: #{ocr_forward.2} parent=31 // pred_check_branch
        %590 = sbr.rel (%p588) target = $region80
      $region79: #{ocr_forward.2} parent=31 // pred_region
        %p591 = scmp.lt.s32.totalorder %s31, 1
        %s592 = scalar_select %p591, %s31, 1
        %s593 = smul.addr %s592, 8
        %s594 = smul.addr %s593, 8
        %s595 = scalar_lea.vmem %s13, %s594
      $region80: #{ocr_forward.2} parent=31 // pred_fallthru
        _
      // Predicated region
      $region81: #{ocr_forward.2} parent=31 // pred_check
        %p596 = pneg %p409
      $region82: #{ocr_forward.2} parent=31 // pred_check_branch
        %598 = sbr.rel (%p596) target = $region84
      $region83: #{ocr_forward.2} parent=31 // pred_region
        %p599 = scmp.lt.s32.totalorder %s31, 1
        %s600 = scalar_select %p599, %s31, 1
        %s601 = scalar_lea.vmem %s14, %s600
      $region84: #{ocr_forward.2} parent=31 // pred_fallthru
        _
    $region32: #{ocr_forward.2} parent=5 // pred_fallthru
      _
    %p602 = scmp.le.s32.totalorder 1, %s23
    %p603 = scmp.lt.s32.totalorder %s23, 5
    %p604 = pnand %p602, %p603
    %p605 = pneg %p604
    // Predicated region
    $region85: #{ocr_forward.2} parent=5 // pred_check
      _
    $region86: #{ocr_forward.2} parent=5 // pred_check_branch
      %607 = sbr.rel (%p604) target = $region88
    $region87: #{ocr_forward.2} parent=5 // pred_region
      %s608 = ssub.s32 %s23, 1
      %p609 = scmp.lt.s32.totalorder %s32, 1
      %s610 = scalar_select %p609, %s32, 1
      %s611 = smul.addr %s610, 6
      %s612 = smul.addr %s611, 8
      %s613 = scalar_lea.vmem %s0, %s612
      %p614 = pneg %p61
      %p615 = pneg %p58
      %p616 = pneg %p82
      %p617 = pneg %p79
      %p618 = pneg %p103
      %p619 = pneg %p100
      %p620 = scmp.lt.s32.totalorder %s33, 1
      %s621 = scalar_select %p620, %s33, 1
      %s622 = scalar_lea.vmem %s3, %s621
      %p623 = pneg %p129
      %p624 = pneg %p126
      %p625 = scmp.lt.s32.totalorder %s33, 1
      %s626 = scalar_select %p625, %s33, 1
      %s627 = scalar_lea.vmem %s4, %s626
      %p628 = pneg %p155
      %p629 = pneg %p152
      %p630 = scmp.lt.s32.totalorder %s33, 1
      %s631 = scalar_select %p630, %s33, 1
      %s632 = smul.addr %s631, 4
      %s633 = smul.addr %s632, 8
      %s634 = scalar_lea.vmem %s5, %s633
      %p635 = pneg %p181
      %p636 = pneg %p178
      %p637 = scmp.lt.s32.totalorder %s33, 1
      %s638 = scalar_select %p637, %s33, 1
      %s639 = scalar_lea.vmem %s6, %s638
      %p640 = pneg %p207
      %p641 = pneg %p204
      %p642 = scmp.lt.s32.totalorder %s33, 1
      %s643 = scalar_select %p642, %s33, 1
      %s644 = smul.addr %s643, 4
      %s645 = smul.addr %s644, 8
      %s646 = scalar_lea.vmem %s7, %s645
      %p647 = pneg %p233
      %p648 = pneg %p230
      %p649 = scmp.lt.s32.totalorder %s33, 1
      %s650 = scalar_select %p649, %s33, 1
      %s651 = scalar_lea.vmem %s8, %s650
      %p652 = pneg %p259
      %p653 = pneg %p256
      %p654 = scmp.lt.s32.totalorder %s33, 1
      %s655 = scalar_select %p654, %s33, 1
      %s656 = scalar_lea.vmem %s9, %s655
      %p657 = pneg %p285
      %p658 = pneg %p282
      %p659 = scmp.lt.s32.totalorder %s33, 1
      %s660 = scalar_select %p659, %s33, 1
      %s661 = scalar_lea.vmem %s10, %s660
      %p662 = pneg %p311
      %p663 = pneg %p308
      %p664 = scmp.lt.s32.totalorder %s33, 1
      %s665 = scalar_select %p664, %s33, 1
      %s666 = smul.addr %s665, 4
      %s667 = smul.addr %s666, 8
      %s668 = scalar_lea.vmem %s11, %s667
      %p669 = pneg %p337
      %p670 = pneg %p334
      %p671 = scmp.lt.s32.totalorder %s33, 1
      %s672 = scalar_select %p671, %s33, 1
      %s673 = scalar_lea.vmem %s12, %s672
      %p674 = pneg %p363
      %p675 = pneg %p360
      %p676 = scmp.lt.s32.totalorder %s33, 1
      %s677 = scalar_select %p676, %s33, 1
      %s678 = smul.addr %s677, 8
      %s679 = smul.addr %s678, 8
      %s680 = scalar_lea.vmem %s13, %s679
      %p681 = pneg %p389
      %p682 = pneg %p386
      %p683 = scmp.lt.s32.totalorder %s33, 1
      %s684 = scalar_select %p683, %s33, 1
      %s685 = scalar_lea.vmem %s14, %s684
      %p686 = pneg %p415
      %p687 = pneg %p412
      %p688 = pneg %p436
      %p689 = pneg %p433
      %p690 = pneg %p457
      %p691 = pneg %p454
      %p692 = pneg %p483
      %p693 = pneg %p480
      %p694 = scmp.lt.s32.totalorder %s32, 1
      %s695 = scalar_select %p694, %s32, 1
      %s696 = smul.addr %s695, 8
      %s697 = scalar_lea.vmem %s17, %s696
      %p698 = scmp.lt.s32.totalorder %s32, 1
      %s699 = scalar_select %p698, %s32, 1
      %s700 = smul.addr %s699, 6
      %s701 = smul.addr %s700, 8
      %s702 = scalar_lea.vmem %s0, %s701
      %p703 = scmp.lt.s32.totalorder %s33, 1
      %s704 = scalar_select %p703, %s33, 1
      %s705 = scalar_lea.vmem %s3, %s704
      %p706 = scmp.lt.s32.totalorder %s33, 1
      %s707 = scalar_select %p706, %s33, 1
      %s708 = scalar_lea.vmem %s4, %s707
      %p709 = scmp.lt.s32.totalorder %s33, 1
      %s710 = scalar_select %p709, %s33, 1
      %s711 = smul.addr %s710, 4
      %s712 = smul.addr %s711, 8
      %s713 = scalar_lea.vmem %s5, %s712
      %p714 = scmp.lt.s32.totalorder %s33, 1
      %s715 = scalar_select %p714, %s33, 1
      %s716 = scalar_lea.vmem %s6, %s715
      %p717 = scmp.lt.s32.totalorder %s33, 1
      %s718 = scalar_select %p717, %s33, 1
      %s719 = smul.addr %s718, 4
      %s720 = smul.addr %s719, 8
      %s721 = scalar_lea.vmem %s7, %s720
      %p722 = scmp.lt.s32.totalorder %s33, 1
      %s723 = scalar_select %p722, %s33, 1
      %s724 = scalar_lea.vmem %s8, %s723
      %p725 = scmp.lt.s32.totalorder %s33, 1
      %s726 = scalar_select %p725, %s33, 1
      %s727 = scalar_lea.vmem %s9, %s726
      %p728 = scmp.lt.s32.totalorder %s33, 1
      %s729 = scalar_select %p728, %s33, 1
      %s730 = scalar_lea.vmem %s10, %s729
      %p731 = scmp.lt.s32.totalorder %s33, 1
      %s732 = scalar_select %p731, %s33, 1
      %s733 = smul.addr %s732, 4
      %s734 = smul.addr %s733, 8
      %s735 = scalar_lea.vmem %s11, %s734
      %p736 = scmp.lt.s32.totalorder %s33, 1
      %s737 = scalar_select %p736, %s33, 1
      %s738 = scalar_lea.vmem %s12, %s737
      %p739 = scmp.lt.s32.totalorder %s33, 1
      %s740 = scalar_select %p739, %s33, 1
      %s741 = smul.addr %s740, 8
      %s742 = smul.addr %s741, 8
      %s743 = scalar_lea.vmem %s13, %s742
      %p744 = scmp.lt.s32.totalorder %s33, 1
      %s745 = scalar_select %p744, %s33, 1
      %s746 = scalar_lea.vmem %s14, %s745
      %p747 = scmp.lt.s32.totalorder %s32, 1
      %s748 = scalar_select %p747, %s32, 1
      %s749 = smul.addr %s748, 8
      %s750 = scalar_lea.vmem %s17, %s749
      %p751 = scmp.eq.s32.totalorder %s33, 0
      // Predicated region
      $region89: #{ocr_forward.2} parent=87 // pred_check
        %p752 = pneg %p751
      $region90: #{ocr_forward.2} parent=87 // pred_check_branch
        %754 = sbr.rel (%p752) target = $region92
      $region91: #{ocr_forward.2} parent=87 // pred_region
        %v755 = vld [vmem:[%s702] sm:$0x1f]
        %v756 = vld [vmem:[%s702 + $0x8] sm:$0x1f]
        %v757 = vld [vmem:[%s702 + $0x10] sm:$0x1f]
        %v758 = vld [vmem:[%s702 + $0x18] sm:$0x1f]
        %v759 = vld [vmem:[%s702 + $0x20] sm:$0x1f]
        %v760 = vld [vmem:[%s702 + $0x28] sm:$0x1f]
        %v761 = vld [vmem:[%s1] sm:$0xff]
        %v762 = vld [vmem:[%s1 + $0x8] sm:$0xff]
        %v763 = vld [vmem:[%s1 + $0x10] sm:$0xff]
        %v764 = vld [vmem:[%s1 + $0x18] sm:$0xff]
        %v765 = vld [vmem:[%s1 + $0x20] sm:$0xff]
        %v766 = vld [vmem:[%s1 + $0x28] sm:$0xff]
        %v767 = vld [vmem:[%s1 + $0x30] sm:$0xff]
        %v768 = vld [vmem:[%s1 + $0x38] sm:$0xff]
        %v769 = vld [vmem:[%s1 + $0x40] sm:$0xff]
        %v770 = vld [vmem:[%s1 + $0x48] sm:$0xff]
        %v771 = vld [vmem:[%s1 + $0x50] sm:$0xff]
        %v772 = vld [vmem:[%s1 + $0x58] sm:$0xff]
        %v773 = vld [vmem:[%s1 + $0x60] sm:$0xff]
        %v774 = vld [vmem:[%s1 + $0x68] sm:$0xff]
        %v775 = vld [vmem:[%s1 + $0x70] sm:$0xff]
        %v776 = vld [vmem:[%s1 + $0x78] sm:$0xff]
        %v777 = vld [vmem:[%s1 + $0x80] sm:$0xff]
        %v778 = vld [vmem:[%s1 + $0x88] sm:$0xff]
        %v779 = vld [vmem:[%s1 + $0x90] sm:$0xff]
        %v780 = vld [vmem:[%s1 + $0x98] sm:$0xff]
        %v781 = vld [vmem:[%s1 + $0xa0] sm:$0xff]
        %v782 = vld [vmem:[%s1 + $0xa8] sm:$0xff]
        %v783 = vld [vmem:[%s1 + $0xb0] sm:$0xff]
        %v784 = vld [vmem:[%s1 + $0xb8] sm:$0xff]
        %v785 = vld [vmem:[%s1 + $0xc0] sm:$0xff]
        %v786 = vld [vmem:[%s1 + $0xc8] sm:$0xff]
        %v787 = vld [vmem:[%s1 + $0xd0] sm:$0xff]
        %v788 = vld [vmem:[%s1 + $0xd8] sm:$0xff]
        %v789 = vld [vmem:[%s1 + $0xe0] sm:$0xff]
        %v790 = vld [vmem:[%s1 + $0xe8] sm:$0xff]
        %v791 = vld [vmem:[%s1 + $0xf0] sm:$0xff]
        %v792 = vld [vmem:[%s1 + $0xf8] sm:$0xff]
        %v793 = vld [vmem:[%s1 + $0x100] sm:$0xff]
        %v794 = vld [vmem:[%s1 + $0x108] sm:$0xff]
        %v795 = vld [vmem:[%s1 + $0x110] sm:$0xff]
        %v796 = vld [vmem:[%s1 + $0x118] sm:$0xff]
        %v797 = vld [vmem:[%s1 + $0x120] sm:$0xff]
        %v798 = vld [vmem:[%s1 + $0x128] sm:$0xff]
        %v799 = vld [vmem:[%s1 + $0x130] sm:$0xff]
        %v800 = vld [vmem:[%s1 + $0x138] sm:$0xff]
        %v801 = vld [vmem:[%s1 + $0x140] sm:$0xff]
        %v802 = vld [vmem:[%s1 + $0x148] sm:$0xff]
        %v803 = vld [vmem:[%s1 + $0x150] sm:$0xff]
        %v804 = vld [vmem:[%s1 + $0x158] sm:$0xff]
        %v805 = vld [vmem:[%s1 + $0x160] sm:$0xff]
        %v806 = vld [vmem:[%s1 + $0x168] sm:$0xff]
        %v807 = vld [vmem:[%s1 + $0x170] sm:$0xff]
        %v808 = vld [vmem:[%s1 + $0x178] sm:$0xff]
        %v809 = vld [vmem:[%s1 + $0x180] sm:$0xff]
        %v810 = vld [vmem:[%s1 + $0x188] sm:$0xff]
        %v811 = vld [vmem:[%s1 + $0x190] sm:$0xff]
        %v812 = vld [vmem:[%s1 + $0x198] sm:$0xff]
        %v813 = vld [vmem:[%s1 + $0x1a0] sm:$0xff]
        %v814 = vld [vmem:[%s1 + $0x1a8] sm:$0xff]
        %v815 = vld [vmem:[%s1 + $0x1b0] sm:$0xff]
        %v816 = vld [vmem:[%s1 + $0x1b8] sm:$0xff]
        %v817 = vld [vmem:[%s1 + $0x1c0] sm:$0xff]
        %v818 = vld [vmem:[%s1 + $0x1c8] sm:$0xff]
        %v819 = vld [vmem:[%s1 + $0x1d0] sm:$0xff]
        %v820 = vld [vmem:[%s1 + $0x1d8] sm:$0xff]
        %v821 = vld [vmem:[%s1 + $0x1e0] sm:$0xff]
        %v822 = vld [vmem:[%s1 + $0x1e8] sm:$0xff]
        %v823 = vld [vmem:[%s1 + $0x1f0] sm:$0xff]
        %v824 = vld [vmem:[%s1 + $0x1f8] sm:$0xff]
        %v825 = vld [vmem:[%s1 + $0x200] sm:$0xff]
        %v826 = vld [vmem:[%s1 + $0x208] sm:$0xff]
        %v827 = vld [vmem:[%s1 + $0x210] sm:$0xff]
        %v828 = vld [vmem:[%s1 + $0x218] sm:$0xff]
        %v829 = vld [vmem:[%s1 + $0x220] sm:$0xff]
        %v830 = vld [vmem:[%s1 + $0x228] sm:$0xff]
        %v831 = vld [vmem:[%s1 + $0x230] sm:$0xff]
        %v832 = vld [vmem:[%s1 + $0x238] sm:$0xff]
        %v833 = vld [vmem:[%s1 + $0x240] sm:$0xff]
        %v834 = vld [vmem:[%s1 + $0x248] sm:$0xff]
        %v835 = vld [vmem:[%s1 + $0x250] sm:$0xff]
        %v836 = vld [vmem:[%s1 + $0x258] sm:$0xff]
        %v837 = vld [vmem:[%s1 + $0x260] sm:$0xff]
        %v838 = vld [vmem:[%s1 + $0x268] sm:$0xff]
        %v839 = vld [vmem:[%s1 + $0x270] sm:$0xff]
        %v840 = vld [vmem:[%s1 + $0x278] sm:$0xff]
        %v841 = vld [vmem:[%s1 + $0x280] sm:$0xff]
        %v842 = vld [vmem:[%s1 + $0x288] sm:$0xff]
        %v843 = vld [vmem:[%s1 + $0x290] sm:$0xff]
        %v844 = vld [vmem:[%s1 + $0x298] sm:$0xff]
        %v845 = vld [vmem:[%s1 + $0x2a0] sm:$0xff]
        %v846 = vld [vmem:[%s1 + $0x2a8] sm:$0xff]
        %v847 = vld [vmem:[%s1 + $0x2b0] sm:$0xff]
        %v848 = vld [vmem:[%s1 + $0x2b8] sm:$0xff]
        %v849 = vld [vmem:[%s1 + $0x2c0] sm:$0xff]
        %v850 = vld [vmem:[%s1 + $0x2c8] sm:$0xff]
        %v851 = vld [vmem:[%s1 + $0x2d0] sm:$0xff]
        %v852 = vld [vmem:[%s1 + $0x2d8] sm:$0xff]
        %v853 = vld [vmem:[%s1 + $0x2e0] sm:$0xff]
        %v854 = vld [vmem:[%s1 + $0x2e8] sm:$0xff]
        %v855 = vld [vmem:[%s1 + $0x2f0] sm:$0xff]
        %v856 = vld [vmem:[%s1 + $0x2f8] sm:$0xff]
        %v857 = vld [vmem:[%s2] sm:$0x1f]
        %858 = vmatprep.subr.mxu0 0.0
        %859 = vmatpush1.msra.mxu0 %v761
        %860 = vmatprep.subr.mxu0 0.0
        %861 = vmatpush1.msra.mxu0 %v762
        %862 = vmatprep.subr.mxu0 0.0
        %863 = vmatpush1.msra.mxu0 %v763
        %864 = vmatprep.subr.mxu0 0.0
        %865 = vmatpush1.msra.mxu0 %v764
        %866 = vmatprep.subr.mxu0 0.0
        %867 = vmatpush1.msra.mxu0 %v765
        %868 = vmatprep.subr.mxu0 0.0
        %869 = vmatpush1.msra.mxu0 %v766
        %870 = vmatprep.subr.mxu0 0.0
        %871 = vmatpush1.msra.mxu0 %v767
        %872 = vmatprep.subr.mxu0 0.0
        %873 = vmatpush1.msra.mxu0 %v768
        %874 = vmatprep.subr.mxu0 0.0
        %875 = vmatpush1.msra.mxu0 %v769
        %876 = vmatprep.subr.mxu0 0.0
        %877 = vmatpush1.msra.mxu0 %v770
        %878 = vmatprep.subr.mxu0 0.0
        %879 = vmatpush1.msra.mxu0 %v771
        %880 = vmatprep.subr.mxu0 0.0
        %881 = vmatpush1.msra.mxu0 %v772
        %882 = vmatprep.subr.mxu0 0.0
        %883 = vmatpush1.msra.mxu0 %v773
        %884 = vmatprep.subr.mxu0 0.0
        %885 = vmatpush1.msra.mxu0 %v774
        %886 = vmatprep.subr.mxu0 0.0
        %887 = vmatpush1.msra.mxu0 %v775
        %888 = vmatprep.subr.mxu0 0.0
        %889 = vmatpush1.msra.mxu0 %v776
        %890 = vmatprep.subr.mxu0 0.0
        %891 = vmatpush1.msra.mxu0 %v777
        %892 = vmatprep.subr.mxu0 0.0
        %893 = vmatpush1.msra.mxu0 %v778
        %894 = vmatprep.subr.mxu0 0.0
        %895 = vmatpush1.msra.mxu0 %v779
        %896 = vmatprep.subr.mxu0 0.0
        %897 = vmatpush1.msra.mxu0 %v780
        %898 = vmatprep.subr.mxu0 0.0
        %899 = vmatpush1.msra.mxu0 %v781
        %900 = vmatprep.subr.mxu0 0.0
        %901 = vmatpush1.msra.mxu0 %v782
        %902 = vmatprep.subr.mxu0 0.0
        %903 = vmatpush1.msra.mxu0 %v783
        %904 = vmatprep.subr.mxu0 0.0
        %905 = vmatpush1.msra.mxu0 %v784
        %906 = vmatprep.subr.mxu0 0.0
        %907 = vmatpush1.msra.mxu0 %v785
        %908 = vmatprep.subr.mxu0 0.0
        %909 = vmatpush1.msra.mxu0 %v786
        %910 = vmatprep.subr.mxu0 0.0
        %911 = vmatpush1.msra.mxu0 %v787
        %912 = vmatprep.subr.mxu0 0.0
        %913 = vmatpush1.msra.mxu0 %v788
        %914 = vmatprep.subr.mxu0 0.0
        %915 = vmatpush1.msra.mxu0 %v789
        %916 = vmatprep.subr.mxu0 0.0
        %917 = vmatpush1.msra.mxu0 %v790
        %918 = vmatprep.subr.mxu0 0.0
        %919 = vmatpush1.msra.mxu0 %v791
        %920 = vmatprep.subr.mxu0 0.0
        %921 = vmatpush1.msra.mxu0 %v792
        %922 = vmatprep.mubr.f32.mxu0 %v756
        %923 = vmatmul.mubr.f32.gmra.mrb[0].mxu0 %v755
        %v924 = vpop.f32.mrb[0].mxu0
        %v925 = vadd.f32 %v857, %v924
        %v926 = vpop.f32.mrb[0].mxu0
        %927 = vdwg.mxu0
        %928 = vmatprep.subr.mxu0 0.0
        %929 = vmatpush1.msra.mxu0 %v793
        %930 = vmatprep.subr.mxu0 0.0
        %931 = vmatpush1.msra.mxu0 %v794
        %932 = vmatprep.subr.mxu0 0.0
        %933 = vmatpush1.msra.mxu0 %v795
        %934 = vmatprep.subr.mxu0 0.0
        %935 = vmatpush1.msra.mxu0 %v796
        %936 = vmatprep.subr.mxu0 0.0
        %937 = vmatpush1.msra.mxu0 %v797
        %938 = vmatprep.subr.mxu0 0.0
        %939 = vmatpush1.msra.mxu0 %v798
        %940 = vmatprep.subr.mxu0 0.0
        %941 = vmatpush1.msra.mxu0 %v799
        %942 = vmatprep.subr.mxu0 0.0
        %943 = vmatpush1.msra.mxu0 %v800
        %944 = vmatprep.subr.mxu0 0.0
        %945 = vmatpush1.msra.mxu0 %v801
        %946 = vmatprep.subr.mxu0 0.0
        %947 = vmatpush1.msra.mxu0 %v802
        %948 = vmatprep.subr.mxu0 0.0
        %949 = vmatpush1.msra.mxu0 %v803
        %950 = vmatprep.subr.mxu0 0.0
        %951 = vmatpush1.msra.mxu0 %v804
        %952 = vmatprep.subr.mxu0 0.0
        %953 = vmatpush1.msra.mxu0 %v805
        %954 = vmatprep.subr.mxu0 0.0
        %955 = vmatpush1.msra.mxu0 %v806
        %956 = vmatprep.subr.mxu0 0.0
        %957 = vmatpush1.msra.mxu0 %v807
        %958 = vmatprep.subr.mxu0 0.0
        %959 = vmatpush1.msra.mxu0 %v808
        %960 = vmatprep.subr.mxu0 0.0
        %961 = vmatpush1.msra.mxu0 %v809
        %962 = vmatprep.subr.mxu0 0.0
        %963 = vmatpush1.msra.mxu0 %v810
        %964 = vmatprep.subr.mxu0 0.0
        %965 = vmatpush1.msra.mxu0 %v811
        %966 = vmatprep.subr.mxu0 0.0
        %967 = vmatpush1.msra.mxu0 %v812
        %968 = vmatprep.subr.mxu0 0.0
        %969 = vmatpush1.msra.mxu0 %v813
        %970 = vmatprep.subr.mxu0 0.0
        %971 = vmatpush1.msra.mxu0 %v814
        %972 = vmatprep.subr.mxu0 0.0
        %973 = vmatpush1.msra.mxu0 %v815
        %974 = vmatprep.subr.mxu0 0.0
        %975 = vmatpush1.msra.mxu0 %v816
        %976 = vmatprep.subr.mxu0 0.0
        %977 = vmatpush1.msra.mxu0 %v817
        %978 = vmatprep.subr.mxu0 0.0
        %979 = vmatpush1.msra.mxu0 %v818
        %980 = vmatprep.subr.mxu0 0.0
        %981 = vmatpush1.msra.mxu0 %v819
        %982 = vmatprep.subr.mxu0 0.0
        %983 = vmatpush1.msra.mxu0 %v820
        %984 = vmatprep.subr.mxu0 0.0
        %985 = vmatpush1.msra.mxu0 %v821
        %986 = vmatprep.subr.mxu0 0.0
        %987 = vmatpush1.msra.mxu0 %v822
        %988 = vmatprep.subr.mxu0 0.0
        %989 = vmatpush1.msra.mxu0 %v823
        %990 = vmatprep.subr.mxu0 0.0
        %991 = vmatpush1.msra.mxu0 %v824
        %992 = vmatprep.mubr.f32.mxu0 %v758
        %993 = vmatmul.mubr.f32.gmra.mrb[0].mxu0 %v757
        %v994 = vpop.f32.mrb[0].mxu0
        %v995 = vadd.f32 %v925, %v994
        %v996 = vpop.f32.mrb[0].mxu0
        %997 = vdwg.mxu0
        %998 = vmatprep.subr.mxu0 0.0
        %999 = vmatpush1.msra.mxu0 %v825
        %1000 = vmatprep.subr.mxu0 0.0
        %1001 = vmatpush1.msra.mxu0 %v826
        %1002 = vmatprep.subr.mxu0 0.0
        %1003 = vmatpush1.msra.mxu0 %v827
        %1004 = vmatprep.subr.mxu0 0.0
        %1005 = vmatpush1.msra.mxu0 %v828
        %1006 = vmatprep.subr.mxu0 0.0
        %1007 = vmatpush1.msra.mxu0 %v829
        %1008 = vmatprep.subr.mxu0 0.0
        %1009 = vmatpush1.msra.mxu0 %v830
        %1010 = vmatprep.subr.mxu0 0.0
        %1011 = vmatpush1.msra.mxu0 %v831
        %1012 = vmatprep.subr.mxu0 0.0
        %1013 = vmatpush1.msra.mxu0 %v832
        %1014 = vmatprep.subr.mxu0 0.0
        %1015 = vmatpush1.msra.mxu0 %v833
        %1016 = vmatprep.subr.mxu0 0.0
        %1017 = vmatpush1.msra.mxu0 %v834
        %1018 = vmatprep.subr.mxu0 0.0
        %1019 = vmatpush1.msra.mxu0 %v835
        %1020 = vmatprep.subr.mxu0 0.0
        %1021 = vmatpush1.msra.mxu0 %v836
        %1022 = vmatprep.subr.mxu0 0.0
        %1023 = vmatpush1.msra.mxu0 %v837
        %1024 = vmatprep.subr.mxu0 0.0
        %1025 = vmatpush1.msra.mxu0 %v838
        %1026 = vmatprep.subr.mxu0 0.0
        %1027 = vmatpush1.msra.mxu0 %v839
        %1028 = vmatprep.subr.mxu0 0.0
        %1029 = vmatpush1.msra.mxu0 %v840
        %1030 = vmatprep.subr.mxu0 0.0
        %1031 = vmatpush1.msra.mxu0 %v841
        %1032 = vmatprep.subr.mxu0 0.0
        %1033 = vmatpush1.msra.mxu0 %v842
        %1034 = vmatprep.subr.mxu0 0.0
        %1035 = vmatpush1.msra.mxu0 %v843
        %1036 = vmatprep.subr.mxu0 0.0
        %1037 = vmatpush1.msra.mxu0 %v844
        %1038 = vmatprep.subr.mxu0 0.0
        %1039 = vmatpush1.msra.mxu0 %v845
        %1040 = vmatprep.subr.mxu0 0.0
        %1041 = vmatpush1.msra.mxu0 %v846
        %1042 = vmatprep.subr.mxu0 0.0
        %1043 = vmatpush1.msra.mxu0 %v847
        %1044 = vmatprep.subr.mxu0 0.0
        %1045 = vmatpush1.msra.mxu0 %v848
        %1046 = vmatprep.subr.mxu0 0.0
        %1047 = vmatpush1.msra.mxu0 %v849
        %1048 = vmatprep.subr.mxu0 0.0
        %1049 = vmatpush1.msra.mxu0 %v850
        %1050 = vmatprep.subr.mxu0 0.0
        %1051 = vmatpush1.msra.mxu0 %v851
        %1052 = vmatprep.subr.mxu0 0.0
        %1053 = vmatpush1.msra.mxu0 %v852
        %1054 = vmatprep.subr.mxu0 0.0
        %1055 = vmatpush1.msra.mxu0 %v853
        %1056 = vmatprep.subr.mxu0 0.0
        %1057 = vmatpush1.msra.mxu0 %v854
        %1058 = vmatprep.subr.mxu0 0.0
        %1059 = vmatpush1.msra.mxu0 %v855
        %1060 = vmatprep.subr.mxu0 0.0
        %1061 = vmatpush1.msra.mxu0 %v856
        %1062 = vmatprep.mubr.f32.mxu0 %v760
        %1063 = vmatmul.mubr.f32.gmra.mrb[0].mxu0 %v759
        %v1064 = vpop.f32.mrb[0].mxu0
        %v1065 = vadd.f32 %v995, %v1064
        %v1066 = vpop.f32.mrb[0].mxu0
        %1067 = vdwg.mxu0
        %vm1068 = vcmask 258048
        %1069 = vst.msk [vmem:[#allocation2] sm:$0x1f] %vm1068, %v1065
      $region92: #{ocr_forward.2} parent=87 // pred_fallthru
        _
      %v1070 = vld [vmem:[#allocation2] sm:$0x1f]
      %v1071 = vld [vmem:[%s705] sm:$0x1]
      %v1072 = vld [vmem:[%s708] sm:$0x1]
      %vm1073 = vcmask 258048
      %v1074 = vsel %vm1073, %v1070, 0.0
      %1075 = vadd.xlane.f32.xlu0 %v1074
      %v1076 = vpop.xlane.xlu0 %1075
      %v1077 = vrcp.pop 32.0
      %v1078 = vmul.f32 %v1076, %v1077
      %v1079 = vsub.f32 %v1070, %v1078
      %v1080 = vmul.f32 %v1079, %v1079
      %v1081 = vsel %vm1073, %v1080, 0.0
      %1082 = vadd.xlane.f32.xlu0 %v1081
      %v1083 = vpop.xlane.xlu0 %1082
      %v1084 = vmul.f32 %v1083, %v1077
      %v1085 = vadd.f32 %v1084, 1e-12
      %v1086 = vrsqrt.pop %v1085
      %v1087 = vmul.f32 %v1079, %v1086
      %v1089 = vlaneseq
      %v1090 = vshrl.u32 %v1089, 7
      %v1091 = vsub.s32 0, %v1090
      %v1092 = vrot.slane %v1071, %v1091
      %v1094 = vmul.f32 %v1087, %v1092
      %v1096 = vlaneseq
      %v1097 = vshrl.u32 %v1096, 7
      %v1098 = vsub.s32 0, %v1097
      %v1099 = vrot.slane %v1072, %v1098
      %v1101 = vadd.f32 %v1094, %v1099
      %v1102 = vld [vmem:[%s713] sm:$0xff]
      %v1103 = vld [vmem:[%s713 + $0x8] sm:$0xff]
      %v1104 = vld [vmem:[%s713 + $0x10] sm:$0xff]
      %v1105 = vld [vmem:[%s713 + $0x18] sm:$0xff]
      %v1106 = vld [vmem:[%s716] sm:$0x1]
      %v1108 = vlaneseq
      %v1109 = vshrl.u32 %v1108, 7
      %v1110 = vsub.s32 0, %v1109
      %v1111 = vrot.slane %v1106, %v1110
      %vm1113 = vcmask 261120
      %v1115 = vsel %vm1113, %v1101, 0
      %1117 = vmatprep.subr.mxu0 0.0
      %1118 = vmatpush1.msra.mxu0 %v1102
      %1119 = vmatprep.subr.mxu0 0.0
      %1120 = vmatpush1.msra.mxu0 %v1103
      %1121 = vmatprep.subr.mxu0 0.0
      %1122 = vmatpush1.msra.mxu0 %v1104
      %1123 = vmatprep.subr.mxu0 0.0
      %1124 = vmatpush1.msra.mxu0 %v1105
      %1125 = vmatprep.subr.mxu0 0.0
      %1126 = vmatpush1.msra.mxu0 0.0
      %1127 = vmatprep.subr.mxu0 0.0
      %1128 = vmatpush1.msra.mxu0 0.0
      %1129 = vmatprep.subr.mxu0 0.0
      %1130 = vmatpush1.msra.mxu0 0.0
      %1131 = vmatprep.subr.mxu0 0.0
      %1132 = vmatpush1.msra.mxu0 0.0
      %1133 = vmatprep.subr.mxu0 0.0
      %1134 = vmatpush1.msra.mxu0 0.0
      %1135 = vmatprep.subr.mxu0 0.0
      %1136 = vmatpush1.msra.mxu0 0.0
      %1137 = vmatprep.subr.mxu0 0.0
      %1138 = vmatpush1.msra.mxu0 0.0
      %1139 = vmatprep.subr.mxu0 0.0
      %1140 = vmatpush1.msra.mxu0 0.0
      %1141 = vmatprep.subr.mxu0 0.0
      %1142 = vmatpush1.msra.mxu0 0.0
      %1143 = vmatprep.subr.mxu0 0.0
      %1144 = vmatpush1.msra.mxu0 0.0
      %1145 = vmatprep.subr.mxu0 0.0
      %1146 = vmatpush1.msra.mxu0 0.0
      %1147 = vmatprep.subr.mxu0 0.0
      %1148 = vmatpush1.msra.mxu0 0.0
      %1149 = vmatprep.subr.mxu0 0.0
      %1150 = vmatpush1.msra.mxu0 0.0
      %1151 = vmatprep.subr.mxu0 0.0
      %1152 = vmatpush1.msra.mxu0 0.0
      %1153 = vmatprep.subr.mxu0 0.0
      %1154 = vmatpush1.msra.mxu0 0.0
      %1155 = vmatprep.subr.mxu0 0.0
      %1156 = vmatpush1.msra.mxu0 0.0
      %1157 = vmatprep.subr.mxu0 0.0
      %1158 = vmatpush1.msra.mxu0 0.0
      %1159 = vmatprep.subr.mxu0 0.0
      %1160 = vmatpush1.msra.mxu0 0.0
      %1161 = vmatprep.subr.mxu0 0.0
      %1162 = vmatpush1.msra.mxu0 0.0
      %1163 = vmatprep.subr.mxu0 0.0
      %1164 = vmatpush1.msra.mxu0 0.0
      %1165 = vmatprep.subr.mxu0 0.0
      %1166 = vmatpush1.msra.mxu0 0.0
      %1167 = vmatprep.subr.mxu0 0.0
      %1168 = vmatpush1.msra.mxu0 0.0
      %1169 = vmatprep.subr.mxu0 0.0
      %1170 = vmatpush1.msra.mxu0 0.0
      %1171 = vmatprep.subr.mxu0 0.0
      %1172 = vmatpush1.msra.mxu0 0.0
      %1173 = vmatprep.subr.mxu0 0.0
      %1174 = vmatpush1.msra.mxu0 0.0
      %1175 = vmatprep.subr.mxu0 0.0
      %1176 = vmatpush1.msra.mxu0 0.0
      %1177 = vmatprep.subr.mxu0 0.0
      %1178 = vmatpush1.msra.mxu0 0.0
      %1179 = vmatprep.subr.mxu0 0.0
      %1180 = vmatpush1.msra.mxu0 0.0
      %1181 = vmatprep.mubr.f32.mxu0 0.0
      %1182 = vmatmul.mubr.f32.gmra.mrb[0].mxu0 %v1115
      %v1183 = vpop.f32.mrb[0].mxu0
      %v1184 = vadd.f32 %v1111, %v1183
      %v1185 = vpop.f32.mrb[0].mxu0
      %1186 = vdwg.mxu0
      %v1187 = vld [vmem:[%s721] sm:$0xff]
      %v1188 = vld [vmem:[%s721 + $0x8] sm:$0xff]
      %v1189 = vld [vmem:[%s721 + $0x10] sm:$0xff]
      %v1190 = vld [vmem:[%s721 + $0x18] sm:$0xff]
      %1192 = vrot.lane.b32.xlu0 %v1184, 96
      %v1193 = vpop.permute.xlu0 %1192
      %vm1194 = vcmask 64512
      %v1195 = vsel %vm1194, %v1184, 0
      %v1197 = vsel %vm1194, %v1193, 0
      %1199 = vmatprep.subr.mxu0 0.0
      %1200 = vmatpush1.xpose.msra.mxu0 %v1197
      %1201 = vmatprep.subr.mxu0 0.0
      %1202 = vmatpush1.xpose.msra.mxu0 0.0
      %1203 = vmatprep.subr.mxu0 0.0
      %1204 = vmatpush1.xpose.msra.mxu0 0.0
      %1205 = vmatprep.subr.mxu0 0.0
      %1206 = vmatpush1.xpose.msra.mxu0 0.0
      %1207 = vmatprep.subr.mxu0 0.0
      %1208 = vmatpush1.xpose.msra.mxu0 0.0
      %1209 = vmatprep.subr.mxu0 0.0
      %1210 = vmatpush1.xpose.msra.mxu0 0.0
      %1211 = vmatprep.subr.mxu0 0.0
      %1212 = vmatpush1.xpose.msra.mxu0 0.0
      %1213 = vmatprep.subr.mxu0 0.0
      %1214 = vmatpush1.xpose.msra.mxu0 0.0
      %1215 = vmatprep.subr.mxu0 0.0
      %1216 = vmatpush1.xpose.msra.mxu0 0.0
      %1217 = vmatprep.subr.mxu0 0.0
      %1218 = vmatpush1.xpose.msra.mxu0 0.0
      %1219 = vmatprep.subr.mxu0 0.0
      %1220 = vmatpush1.xpose.msra.mxu0 0.0
      %1221 = vmatprep.subr.mxu0 0.0
      %1222 = vmatpush1.xpose.msra.mxu0 0.0
      %1223 = vmatprep.subr.mxu0 0.0
      %1224 = vmatpush1.xpose.msra.mxu0 0.0
      %1225 = vmatprep.subr.mxu0 0.0
      %1226 = vmatpush1.xpose.msra.mxu0 0.0
      %1227 = vmatprep.subr.mxu0 0.0
      %1228 = vmatpush1.xpose.msra.mxu0 0.0
      %1229 = vmatprep.subr.mxu0 0.0
      %1230 = vmatpush1.xpose.msra.mxu0 0.0
      %1231 = vmatprep.subr.mxu0 0.0
      %1232 = vmatpush1.xpose.msra.mxu0 0.0
      %1233 = vmatprep.subr.mxu0 0.0
      %1234 = vmatpush1.xpose.msra.mxu0 0.0
      %1235 = vmatprep.subr.mxu0 0.0
      %1236 = vmatpush1.xpose.msra.mxu0 0.0
      %1237 = vmatprep.subr.mxu0 0.0
      %1238 = vmatpush1.xpose.msra.mxu0 0.0
      %1239 = vmatprep.subr.mxu0 0.0
      %1240 = vmatpush1.xpose.msra.mxu0 0.0
      %1241 = vmatprep.subr.mxu0 0.0
      %1242 = vmatpush1.xpose.msra.mxu0 0.0
      %1243 = vmatprep.subr.mxu0 0.0
      %1244 = vmatpush1.xpose.msra.mxu0 0.0
      %1245 = vmatprep.subr.mxu0 0.0
      %1246 = vmatpush1.xpose.msra.mxu0 0.0
      %1247 = vmatprep.subr.mxu0 0.0
      %1248 = vmatpush1.xpose.msra.mxu0 0.0
      %1249 = vmatprep.subr.mxu0 0.0
      %1250 = vmatpush1.xpose.msra.mxu0 0.0
      %1251 = vmatprep.subr.mxu0 0.0
      %1252 = vmatpush1.xpose.msra.mxu0 0.0
      %1253 = vmatprep.subr.mxu0 0.0
      %1254 = vmatpush1.xpose.msra.mxu0 0.0
      %1255 = vmatprep.subr.mxu0 0.0
      %1256 = vmatpush1.xpose.msra.mxu0 0.0
      %1257 = vmatprep.subr.mxu0 0.0
      %1258 = vmatpush1.xpose.msra.mxu0 0.0
      %1259 = vmatprep.subr.mxu0 0.0
      %1260 = vmatpush1.xpose.msra.mxu0 0.0
      %1261 = vmatprep.subr.mxu0 0.0
      %1262 = vmatpush1.xpose.msra.mxu0 0.0
      %1263 = vmatprep.mubr.f32.mxu0 0.0
      %1264 = vmatmul.mubr.f32.gmra.mrb[0].mxu0 %v1195
      %v1265 = vpop.f32.mrb[0].mxu0
      %v1266 = vadd.f32 0.0, %v1265
      %v1267 = vpop.f32.mrb[0].mxu0
      %1268 = vdwg.mxu0
      %v1269 = vmul.f32 %v1266, 0.35355338
      %vm1270 = vcmask 36864
      %v1271 = vsel %vm1270, %v1269, -inf
      %1272 = vmax.xlane.f32.xlu0 %v1271
      %v1273 = vpop.xlane.xlu0 %1272
      %v1274 = vsub.f32 %v1269, %v1273
      %v1275 = vmul.f32 %v1274, 1.442695
      %v1276 = vpow.pop %v1275
      %v1277 = vsel %vm1270, %v1276, 0.0
      %1278 = vadd.xlane.f32.xlu0 %v1277
      %v1279 = vpop.xlane.xlu0 %1278
      %v1280 = vrcp.pop %v1279
      %v1281 = vmul.f32 %v1276, %v1280
      %1282 = vrot.lane.b32.xlu0 %v1184, 64
      %v1283 = vpop.permute.xlu0 %1282
      %vm1284 = vcmask 39936
      %v1286 = vsel %vm1284, %v1281, 0
      %vm1288 = vcmask 1044480
      %v1289 = vsel %vm1288, %v1283, 0
      %1291 = vmatprep.subr.mxu0 0.0
      %1292 = vmatpush1.msra.mxu0 %v1289
      %1293 = vmatprep.subr.mxu0 0.0
      %1294 = vmatpush1.msra.mxu0 0.0
      %1295 = vmatprep.subr.mxu0 0.0
      %1296 = vmatpush1.msra.mxu0 0.0
      %1297 = vmatprep.subr.mxu0 0.0
      %1298 = vmatpush1.msra.mxu0 0.0
      %1299 = vmatprep.subr.mxu0 0.0
      %1300 = vmatpush1.msra.mxu0 0.0
      %1301 = vmatprep.subr.mxu0 0.0
      %1302 = vmatpush1.msra.mxu0 0.0
      %1303 = vmatprep.subr.mxu0 0.0
      %1304 = vmatpush1.msra.mxu0 0.0
      %1305 = vmatprep.subr.mxu0 0.0
      %1306 = vmatpush1.msra.mxu0 0.0
      %1307 = vmatprep.subr.mxu0 0.0
      %1308 = vmatpush1.msra.mxu0 0.0
      %1309 = vmatprep.subr.mxu0 0.0
      %1310 = vmatpush1.msra.mxu0 0.0
      %1311 = vmatprep.subr.mxu0 0.0
      %1312 = vmatpush1.msra.mxu0 0.0
      %1313 = vmatprep.subr.mxu0 0.0
      %1314 = vmatpush1.msra.mxu0 0.0
      %1315 = vmatprep.subr.mxu0 0.0
      %1316 = vmatpush1.msra.mxu0 0.0
      %1317 = vmatprep.subr.mxu0 0.0
      %1318 = vmatpush1.msra.mxu0 0.0
      %1319 = vmatprep.subr.mxu0 0.0
      %1320 = vmatpush1.msra.mxu0 0.0
      %1321 = vmatprep.subr.mxu0 0.0
      %1322 = vmatpush1.msra.mxu0 0.0
      %1323 = vmatprep.subr.mxu0 0.0
      %1324 = vmatpush1.msra.mxu0 0.0
      %1325 = vmatprep.subr.mxu0 0.0
      %1326 = vmatpush1.msra.mxu0 0.0
      %1327 = vmatprep.subr.mxu0 0.0
      %1328 = vmatpush1.msra.mxu0 0.0
      %1329 = vmatprep.subr.mxu0 0.0
      %1330 = vmatpush1.msra.mxu0 0.0
      %1331 = vmatprep.subr.mxu0 0.0
      %1332 = vmatpush1.msra.mxu0 0.0
      %1333 = vmatprep.subr.mxu0 0.0
      %1334 = vmatpush1.msra.mxu0 0.0
      %1335 = vmatprep.subr.mxu0 0.0
      %1336 = vmatpush1.msra.mxu0 0.0
      %1337 = vmatprep.subr.mxu0 0.0
      %1338 = vmatpush1.msra.mxu0 0.0
      %1339 = vmatprep.subr.mxu0 0.0
      %1340 = vmatpush1.msra.mxu0 0.0
      %1341 = vmatprep.subr.mxu0 0.0
      %1342 = vmatpush1.msra.mxu0 0.0
      %1343 = vmatprep.subr.mxu0 0.0
      %1344 = vmatpush1.msra.mxu0 0.0
      %1345 = vmatprep.subr.mxu0 0.0
      %1346 = vmatpush1.msra.mxu0 0.0
      %1347 = vmatprep.subr.mxu0 0.0
      %1348 = vmatpush1.msra.mxu0 0.0
      %1349 = vmatprep.subr.mxu0 0.0
      %1350 = vmatpush1.msra.mxu0 0.0
      %1351 = vmatprep.subr.mxu0 0.0
      %1352 = vmatpush1.msra.mxu0 0.0
      %1353 = vmatprep.subr.mxu0 0.0
      %1354 = vmatpush1.msra.mxu0 0.0
      %1355 = vmatprep.mubr.f32.mxu0 0.0
      %1356 = vmatmul.mubr.f32.gmra.mrb[0].mxu0 %v1286
      %v1357 = vpop.f32.mrb[0].mxu0
      %v1358 = vadd.f32 0.0, %v1357
      %v1359 = vpop.f32.mrb[0].mxu0
      %1360 = vdwg.mxu0
      %1361 = vrot.lane.b32.xlu0 %v1184, 120
      %v1362 = vpop.permute.xlu0 %1361
      %1363 = vrot.lane.b32.xlu0 %v1184, 88
      %v1364 = vpop.permute.xlu0 %1363
      %v1365 = vsel %vm1194, %v1362, 0
      %v1367 = vsel %vm1194, %v1364, 0
      %1369 = vmatprep.subr.mxu0 0.0
      %1370 = vmatpush1.xpose.msra.mxu0 %v1367
      %1371 = vmatprep.subr.mxu0 0.0
      %1372 = vmatpush1.xpose.msra.mxu0 0.0
      %1373 = vmatprep.subr.mxu0 0.0
      %1374 = vmatpush1.xpose.msra.mxu0 0.0
      %1375 = vmatprep.subr.mxu0 0.0
      %1376 = vmatpush1.xpose.msra.mxu0 0.0
      %1377 = vmatprep.subr.mxu0 0.0
      %1378 = vmatpush1.xpose.msra.mxu0 0.0
      %1379 = vmatprep.subr.mxu0 0.0
      %1380 = vmatpush1.xpose.msra.mxu0 0.0
      %1381 = vmatprep.subr.mxu0 0.0
      %1382 = vmatpush1.xpose.msra.mxu0 0.0
      %1383 = vmatprep.subr.mxu0 0.0
      %1384 = vmatpush1.xpose.msra.mxu0 0.0
      %1385 = vmatprep.subr.mxu0 0.0
      %1386 = vmatpush1.xpose.msra.mxu0 0.0
      %1387 = vmatprep.subr.mxu0 0.0
      %1388 = vmatpush1.xpose.msra.mxu0 0.0
      %1389 = vmatprep.subr.mxu0 0.0
      %1390 = vmatpush1.xpose.msra.mxu0 0.0
      %1391 = vmatprep.subr.mxu0 0.0
      %1392 = vmatpush1.xpose.msra.mxu0 0.0
      %1393 = vmatprep.subr.mxu0 0.0
      %1394 = vmatpush1.xpose.msra.mxu0 0.0
      %1395 = vmatprep.subr.mxu0 0.0
      %1396 = vmatpush1.xpose.msra.mxu0 0.0
      %1397 = vmatprep.subr.mxu0 0.0
      %1398 = vmatpush1.xpose.msra.mxu0 0.0
      %1399 = vmatprep.subr.mxu0 0.0
      %1400 = vmatpush1.xpose.msra.mxu0 0.0
      %1401 = vmatprep.subr.mxu0 0.0
      %1402 = vmatpush1.xpose.msra.mxu0 0.0
      %1403 = vmatprep.subr.mxu0 0.0
      %1404 = vmatpush1.xpose.msra.mxu0 0.0
      %1405 = vmatprep.subr.mxu0 0.0
      %1406 = vmatpush1.xpose.msra.mxu0 0.0
      %1407 = vmatprep.subr.mxu0 0.0
      %1408 = vmatpush1.xpose.msra.mxu0 0.0
      %1409 = vmatprep.subr.mxu0 0.0
      %1410 = vmatpush1.xpose.msra.mxu0 0.0
      %1411 = vmatprep.subr.mxu0 0.0
      %1412 = vmatpush1.xpose.msra.mxu0 0.0
      %1413 = vmatprep.subr.mxu0 0.0
      %1414 = vmatpush1.xpose.msra.mxu0 0.0
      %1415 = vmatprep.subr.mxu0 0.0
      %1416 = vmatpush1.xpose.msra.mxu0 0.0
      %1417 = vmatprep.subr.mxu0 0.0
      %1418 = vmatpush1.xpose.msra.mxu0 0.0
      %1419 = vmatprep.subr.mxu0 0.0
      %1420 = vmatpush1.xpose.msra.mxu0 0.0
      %1421 = vmatprep.subr.mxu0 0.0
      %1422 = vmatpush1.xpose.msra.mxu0 0.0
      %1423 = vmatprep.subr.mxu0 0.0
      %1424 = vmatpush1.xpose.msra.mxu0 0.0
      %1425 = vmatprep.subr.mxu0 0.0
      %1426 = vmatpush1.xpose.msra.mxu0 0.0
      %1427 = vmatprep.subr.mxu0 0.0
      %1428 = vmatpush1.xpose.msra.mxu0 0.0
      %1429 = vmatprep.subr.mxu0 0.0
      %1430 = vmatpush1.xpose.msra.mxu0 0.0
      %1431 = vmatprep.subr.mxu0 0.0
      %1432 = vmatpush1.xpose.msra.mxu0 0.0
      %1433 = vmatprep.mubr.f32.mxu0 0.0
      %1434 = vmatmul.mubr.f32.gmra.mrb[0].mxu0 %v1365
      %v1435 = vpop.f32.mrb[0].mxu0
      %v1436 = vadd.f32 0.0, %v1435
      %v1437 = vpop.f32.mrb[0].mxu0
      %1438 = vdwg.mxu0
      %v1439 = vmul.f32 %v1436, 0.35355338
      %v1440 = vsel %vm1270, %v1439, -inf
      %1441 = vmax.xlane.f32.xlu0 %v1440
      %v1442 = vpop.xlane.xlu0 %1441
      %v1443 = vsub.f32 %v1439, %v1442
      %v1444 = vmul.f32 %v1443, 1.442695
      %v1445 = vpow.pop %v1444
      %v1446 = vsel %vm1270, %v1445, 0.0
      %1447 = vadd.xlane.f32.xlu0 %v1446
      %v1448 = vpop.xlane.xlu0 %1447
      %v1449 = vrcp.pop %v1448
      %v1450 = vmul.f32 %v1445, %v1449
      %1451 = vrot.lane.b32.xlu0 %v1184, 56
      %v1452 = vpop.permute.xlu0 %1451
      %v1454 = vsel %vm1284, %v1450, 0
      %v1456 = vsel %vm1288, %v1452, 0
      %1458 = vmatprep.subr.mxu0 0.0
      %1459 = vmatpush1.msra.mxu0 %v1456
      %1460 = vmatprep.subr.mxu0 0.0
      %1461 = vmatpush1.msra.mxu0 0.0
      %1462 = vmatprep.subr.mxu0 0.0
      %1463 = vmatpush1.msra.mxu0 0.0
      %1464 = vmatprep.subr.mxu0 0.0
      %1465 = vmatpush1.msra.mxu0 0.0
      %1466 = vmatprep.subr.mxu0 0.0
      %1467 = vmatpush1.msra.mxu0 0.0
      %1468 = vmatprep.subr.mxu0 0.0
      %1469 = vmatpush1.msra.mxu0 0.0
      %1470 = vmatprep.subr.mxu0 0.0
      %1471 = vmatpush1.msra.mxu0 0.0
      %1472 = vmatprep.subr.mxu0 0.0
      %1473 = vmatpush1.msra.mxu0 0.0
      %1474 = vmatprep.subr.mxu0 0.0
      %1475 = vmatpush1.msra.mxu0 0.0
      %1476 = vmatprep.subr.mxu0 0.0
      %1477 = vmatpush1.msra.mxu0 0.0
      %1478 = vmatprep.subr.mxu0 0.0
      %1479 = vmatpush1.msra.mxu0 0.0
      %1480 = vmatprep.subr.mxu0 0.0
      %1481 = vmatpush1.msra.mxu0 0.0
      %1482 = vmatprep.subr.mxu0 0.0
      %1483 = vmatpush1.msra.mxu0 0.0
      %1484 = vmatprep.subr.mxu0 0.0
      %1485 = vmatpush1.msra.mxu0 0.0
      %1486 = vmatprep.subr.mxu0 0.0
      %1487 = vmatpush1.msra.mxu0 0.0
      %1488 = vmatprep.subr.mxu0 0.0
      %1489 = vmatpush1.msra.mxu0 0.0
      %1490 = vmatprep.subr.mxu0 0.0
      %1491 = vmatpush1.msra.mxu0 0.0
      %1492 = vmatprep.subr.mxu0 0.0
      %1493 = vmatpush1.msra.mxu0 0.0
      %1494 = vmatprep.subr.mxu0 0.0
      %1495 = vmatpush1.msra.mxu0 0.0
      %1496 = vmatprep.subr.mxu0 0.0
      %1497 = vmatpush1.msra.mxu0 0.0
      %1498 = vmatprep.subr.mxu0 0.0
      %1499 = vmatpush1.msra.mxu0 0.0
      %1500 = vmatprep.subr.mxu0 0.0
      %1501 = vmatpush1.msra.mxu0 0.0
      %1502 = vmatprep.subr.mxu0 0.0
      %1503 = vmatpush1.msra.mxu0 0.0
      %1504 = vmatprep.subr.mxu0 0.0
      %1505 = vmatpush1.msra.mxu0 0.0
      %1506 = vmatprep.subr.mxu0 0.0
      %1507 = vmatpush1.msra.mxu0 0.0
      %1508 = vmatprep.subr.mxu0 0.0
      %1509 = vmatpush1.msra.mxu0 0.0
      %1510 = vmatprep.subr.mxu0 0.0
      %1511 = vmatpush1.msra.mxu0 0.0
      %1512 = vmatprep.subr.mxu0 0.0
      %1513 = vmatpush1.msra.mxu0 0.0
      %1514 = vmatprep.subr.mxu0 0.0
      %1515 = vmatpush1.msra.mxu0 0.0
      %1516 = vmatprep.subr.mxu0 0.0
      %1517 = vmatpush1.msra.mxu0 0.0
      %1518 = vmatprep.subr.mxu0 0.0
      %1519 = vmatpush1.msra.mxu0 0.0
      %1520 = vmatprep.subr.mxu0 0.0
      %1521 = vmatpush1.msra.mxu0 0.0
      %1522 = vmatprep.mubr.f32.mxu0 0.0
      %1523 = vmatmul.mubr.f32.gmra.mrb[0].mxu0 %v1454
      %v1524 = vpop.f32.mrb[0].mxu0
      %v1525 = vadd.f32 0.0, %v1524
      %v1526 = vpop.f32.mrb[0].mxu0
      %1527 = vdwg.mxu0
      %v1529 = vsel %vm1194, %v1525, 0
      %1531 = vmatprep.subr.mxu0 0.0
      %1532 = vmatpush1.msra.mxu0 %v1188
      %1533 = vmatprep.subr.mxu0 0.0
      %1534 = vmatpush1.msra.mxu0 0.0
      %1535 = vmatprep.subr.mxu0 0.0
      %1536 = vmatpush1.msra.mxu0 0.0
      %1537 = vmatprep.subr.mxu0 0.0
      %1538 = vmatpush1.msra.mxu0 0.0
      %1539 = vmatprep.subr.mxu0 0.0
      %1540 = vmatpush1.msra.mxu0 0.0
      %1541 = vmatprep.subr.mxu0 0.0
      %1542 = vmatpush1.msra.mxu0 0.0
      %1543 = vmatprep.subr.mxu0 0.0
      %1544 = vmatpush1.msra.mxu0 0.0
      %1545 = vmatprep.subr.mxu0 0.0
      %1546 = vmatpush1.msra.mxu0 0.0
      %1547 = vmatprep.subr.mxu0 0.0
      %1548 = vmatpush1.msra.mxu0 0.0
      %1549 = vmatprep.subr.mxu0 0.0
      %1550 = vmatpush1.msra.mxu0 0.0
      %1551 = vmatprep.subr.mxu0 0.0
      %1552 = vmatpush1.msra.mxu0 0.0
      %1553 = vmatprep.subr.mxu0 0.0
      %1554 = vmatpush1.msra.mxu0 0.0
      %1555 = vmatprep.subr.mxu0 0.0
      %1556 = vmatpush1.msra.mxu0 0.0
      %1557 = vmatprep.subr.mxu0 0.0
      %1558 = vmatpush1.msra.mxu0 0.0
      %1559 = vmatprep.subr.mxu0 0.0
      %1560 = vmatpush1.msra.mxu0 0.0
      %1561 = vmatprep.subr.mxu0 0.0
      %1562 = vmatpush1.msra.mxu0 0.0
      %1563 = vmatprep.subr.mxu0 0.0
      %1564 = vmatpush1.msra.mxu0 0.0
      %1565 = vmatprep.subr.mxu0 0.0
      %1566 = vmatpush1.msra.mxu0 0.0
      %1567 = vmatprep.subr.mxu0 0.0
      %1568 = vmatpush1.msra.mxu0 0.0
      %1569 = vmatprep.subr.mxu0 0.0
      %1570 = vmatpush1.msra.mxu0 0.0
      %1571 = vmatprep.subr.mxu0 0.0
      %1572 = vmatpush1.msra.mxu0 0.0
      %1573 = vmatprep.subr.mxu0 0.0
      %1574 = vmatpush1.msra.mxu0 0.0
      %1575 = vmatprep.subr.mxu0 0.0
      %1576 = vmatpush1.msra.mxu0 0.0
      %1577 = vmatprep.subr.mxu0 0.0
      %1578 = vmatpush1.msra.mxu0 0.0
      %1579 = vmatprep.subr.mxu0 0.0
      %1580 = vmatpush1.msra.mxu0 0.0
      %1581 = vmatprep.subr.mxu0 0.0
      %1582 = vmatpush1.msra.mxu0 0.0
      %1583 = vmatprep.subr.mxu0 0.0
      %1584 = vmatpush1.msra.mxu0 0.0
      %1585 = vmatprep.subr.mxu0 0.0
      %1586 = vmatpush1.msra.mxu0 0.0
      %1587 = vmatprep.subr.mxu0 0.0
      %1588 = vmatpush1.msra.mxu0 0.0
      %1589 = vmatprep.subr.mxu0 0.0
      %1590 = vmatpush1.msra.mxu0 0.0
      %1591 = vmatprep.subr.mxu0 0.0
      %1592 = vmatpush1.msra.mxu0 0.0
      %1593 = vmatprep.subr.mxu0 0.0
      %1594 = vmatpush1.msra.mxu0 0.0
      %1595 = vmatprep.mubr.f32.mxu0 0.0
      %1596 = vmatmul.mubr.f32.gmra.mrb[0].mxu0 %v1529
      %v1597 = vpop.f32.mrb[0].mxu0
      %v1598 = vadd.f32 0.0, %v1597
      %v1599 = vpop.f32.mrb[0].mxu0
      %1600 = vdwg.mxu0
      %v1602 = vsel %vm1194, %v1358, 0
      %1604 = vmatprep.subr.mxu0 0.0
      %1605 = vmatpush1.msra.mxu0 %v1187
      %1606 = vmatprep.subr.mxu0 0.0
      %1607 = vmatpush1.msra.mxu0 0.0
      %1608 = vmatprep.subr.mxu0 0.0
      %1609 = vmatpush1.msra.mxu0 0.0
      %1610 = vmatprep.subr.mxu0 0.0
      %1611 = vmatpush1.msra.mxu0 0.0
      %1612 = vmatprep.subr.mxu0 0.0
      %1613 = vmatpush1.msra.mxu0 0.0
      %1614 = vmatprep.subr.mxu0 0.0
      %1615 = vmatpush1.msra.mxu0 0.0
      %1616 = vmatprep.subr.mxu0 0.0
      %1617 = vmatpush1.msra.mxu0 0.0
      %1618 = vmatprep.subr.mxu0 0.0
      %1619 = vmatpush1.msra.mxu0 0.0
      %1620 = vmatprep.subr.mxu0 0.0
      %1621 = vmatpush1.msra.mxu0 0.0
      %1622 = vmatprep.subr.mxu0 0.0
      %1623 = vmatpush1.msra.mxu0 0.0
      %1624 = vmatprep.subr.mxu0 0.0
      %1625 = vmatpush1.msra.mxu0 0.0
      %1626 = vmatprep.subr.mxu0 0.0
      %1627 = vmatpush1.msra.mxu0 0.0
      %1628 = vmatprep.subr.mxu0 0.0
      %1629 = vmatpush1.msra.mxu0 0.0
      %1630 = vmatprep.subr.mxu0 0.0
      %1631 = vmatpush1.msra.mxu0 0.0
      %1632 = vmatprep.subr.mxu0 0.0
      %1633 = vmatpush1.msra.mxu0 0.0
      %1634 = vmatprep.subr.mxu0 0.0
      %1635 = vmatpush1.msra.mxu0 0.0
      %1636 = vmatprep.subr.mxu0 0.0
      %1637 = vmatpush1.msra.mxu0 0.0
      %1638 = vmatprep.subr.mxu0 0.0
      %1639 = vmatpush1.msra.mxu0 0.0
      %1640 = vmatprep.subr.mxu0 0.0
      %1641 = vmatpush1.msra.mxu0 0.0
      %1642 = vmatprep.subr.mxu0 0.0
      %1643 = vmatpush1.msra.mxu0 0.0
      %1644 = vmatprep.subr.mxu0 0.0
      %1645 = vmatpush1.msra.mxu0 0.0
      %1646 = vmatprep.subr.mxu0 0.0
      %1647 = vmatpush1.msra.mxu0 0.0
      %1648 = vmatprep.subr.mxu0 0.0
      %1649 = vmatpush1.msra.mxu0 0.0
      %1650 = vmatprep.subr.mxu0 0.0
      %1651 = vmatpush1.msra.mxu0 0.0
      %1652 = vmatprep.subr.mxu0 0.0
      %1653 = vmatpush1.msra.mxu0 0.0
      %1654 = vmatprep.subr.mxu0 0.0
      %1655 = vmatpush1.msra.mxu0 0.0
      %1656 = vmatprep.subr.mxu0 0.0
      %1657 = vmatpush1.msra.mxu0 0.0
      %1658 = vmatprep.subr.mxu0 0.0
      %1659 = vmatpush1.msra.mxu0 0.0
      %1660 = vmatprep.subr.mxu0 0.0
      %1661 = vmatpush1.msra.mxu0 0.0
      %1662 = vmatprep.subr.mxu0 0.0
      %1663 = vmatpush1.msra.mxu0 0.0
      %1664 = vmatprep.subr.mxu0 0.0
      %1665 = vmatpush1.msra.mxu0 0.0
      %1666 = vmatprep.subr.mxu0 0.0
      %1667 = vmatpush1.msra.mxu0 0.0
      %1668 = vmatprep.mubr.f32.mxu0 0.0
      %1669 = vmatmul.mubr.f32.gmra.mrb[0].mxu0 %v1602
      %v1670 = vpop.f32.mrb[0].mxu0
      %v1671 = vadd.f32 %v1598, %v1670
      %v1672 = vpop.f32.mrb[0].mxu0
      %1673 = vdwg.mxu0
      %1674 = vrot.lane.b32.xlu0 %v1184, 112
      %v1675 = vpop.permute.xlu0 %1674
      %1676 = vrot.lane.b32.xlu0 %v1184, 80
      %v1677 = vpop.permute.xlu0 %1676
      %v1678 = vsel %vm1194, %v1675, 0
      %v1680 = vsel %vm1194, %v1677, 0
      %1682 = vmatprep.subr.mxu0 0.0
      %1683 = vmatpush1.xpose.msra.mxu0 %v1680
      %1684 = vmatprep.subr.mxu0 0.0
      %1685 = vmatpush1.xpose.msra.mxu0 0.0
      %1686 = vmatprep.subr.mxu0 0.0
      %1687 = vmatpush1.xpose.msra.mxu0 0.0
      %1688 = vmatprep.subr.mxu0 0.0
      %1689 = vmatpush1.xpose.msra.mxu0 0.0
      %1690 = vmatprep.subr.mxu0 0.0
      %1691 = vmatpush1.xpose.msra.mxu0 0.0
      %1692 = vmatprep.subr.mxu0 0.0
      %1693 = vmatpush1.xpose.msra.mxu0 0.0
      %1694 = vmatprep.subr.mxu0 0.0
      %1695 = vmatpush1.xpose.msra.mxu0 0.0
      %1696 = vmatprep.subr.mxu0 0.0
      %1697 = vmatpush1.xpose.msra.mxu0 0.0
      %1698 = vmatprep.subr.mxu0 0.0
      %1699 = vmatpush1.xpose.msra.mxu0 0.0
      %1700 = vmatprep.subr.mxu0 0.0
      %1701 = vmatpush1.xpose.msra.mxu0 0.0
      %1702 = vmatprep.subr.mxu0 0.0
      %1703 = vmatpush1.xpose.msra.mxu0 0.0
      %1704 = vmatprep.subr.mxu0 0.0
      %1705 = vmatpush1.xpose.msra.mxu0 0.0
      %1706 = vmatprep.subr.mxu0 0.0
      %1707 = vmatpush1.xpose.msra.mxu0 0.0
      %1708 = vmatprep.subr.mxu0 0.0
      %1709 = vmatpush1.xpose.msra.mxu0 0.0
      %1710 = vmatprep.subr.mxu0 0.0
      %1711 = vmatpush1.xpose.msra.mxu0 0.0
      %1712 = vmatprep.subr.mxu0 0.0
      %1713 = vmatpush1.xpose.msra.mxu0 0.0
      %1714 = vmatprep.subr.mxu0 0.0
      %1715 = vmatpush1.xpose.msra.mxu0 0.0
      %1716 = vmatprep.subr.mxu0 0.0
      %1717 = vmatpush1.xpose.msra.mxu0 0.0
      %1718 = vmatprep.subr.mxu0 0.0
      %1719 = vmatpush1.xpose.msra.mxu0 0.0
      %1720 = vmatprep.subr.mxu0 0.0
      %1721 = vmatpush1.xpose.msra.mxu0 0.0
      %1722 = vmatprep.subr.mxu0 0.0
      %1723 = vmatpush1.xpose.msra.mxu0 0.0
      %1724 = vmatprep.subr.mxu0 0.0
      %1725 = vmatpush1.xpose.msra.mxu0 0.0
      %1726 = vmatprep.subr.mxu0 0.0
      %1727 = vmatpush1.xpose.msra.mxu0 0.0
      %1728 = vmatprep.subr.mxu0 0.0
      %1729 = vmatpush1.xpose.msra.mxu0 0.0
      %1730 = vmatprep.subr.mxu0 0.0
      %1731 = vmatpush1.xpose.msra.mxu0 0.0
      %1732 = vmatprep.subr.mxu0 0.0
      %1733 = vmatpush1.xpose.msra.mxu0 0.0
      %1734 = vmatprep.subr.mxu0 0.0
      %1735 = vmatpush1.xpose.msra.mxu0 0.0
      %1736 = vmatprep.subr.mxu0 0.0
      %1737 = vmatpush1.xpose.msra.mxu0 0.0
      %1738 = vmatprep.subr.mxu0 0.0
      %1739 = vmatpush1.xpose.msra.mxu0 0.0
      %1740 = vmatprep.subr.mxu0 0.0
      %1741 = vmatpush1.xpose.msra.mxu0 0.0
      %1742 = vmatprep.subr.mxu0 0.0
      %1743 = vmatpush1.xpose.msra.mxu0 0.0
      %1744 = vmatprep.subr.mxu0 0.0
      %1745 = vmatpush1.xpose.msra.mxu0 0.0
      %1746 = vmatprep.mubr.f32.mxu0 0.0
      %1747 = vmatmul.mubr.f32.gmra.mrb[0].mxu0 %v1678
      %v1748 = vpop.f32.mrb[0].mxu0
      %v1749 = vadd.f32 0.0, %v1748
      %v1750 = vpop.f32.mrb[0].mxu0
      %1751 = vdwg.mxu0
      %v1752 = vmul.f32 %v1749, 0.35355338
      %v1753 = vsel %vm1270, %v1752, -inf
      %1754 = vmax.xlane.f32.xlu0 %v1753
      %v1755 = vpop.xlane.xlu0 %1754
      %v1756 = vsub.f32 %v1752, %v1755
      %v1757 = vmul.f32 %v1756, 1.442695
      %v1758 = vpow.pop %v1757
      %v1759 = vsel %vm1270, %v1758, 0.0
      %1760 = vadd.xlane.f32.xlu0 %v1759
      %v1761 = vpop.xlane.xlu0 %1760
      %v1762 = vrcp.pop %v1761
      %v1763 = vmul.f32 %v1758, %v1762
      %1764 = vrot.lane.b32.xlu0 %v1184, 48
      %v1765 = vpop.permute.xlu0 %1764
      %v1767 = vsel %vm1284, %v1763, 0
      %v1769 = vsel %vm1288, %v1765, 0
      %1771 = vmatprep.subr.mxu0 0.0
      %1772 = vmatpush1.msra.mxu0 %v1769
      %1773 = vmatprep.subr.mxu0 0.0
      %1774 = vmatpush1.msra.mxu0 0.0
      %1775 = vmatprep.subr.mxu0 0.0
      %1776 = vmatpush1.msra.mxu0 0.0
      %1777 = vmatprep.subr.mxu0 0.0
      %1778 = vmatpush1.msra.mxu0 0.0
      %1779 = vmatprep.subr.mxu0 0.0
      %1780 = vmatpush1.msra.mxu0 0.0
      %1781 = vmatprep.subr.mxu0 0.0
      %1782 = vmatpush1.msra.mxu0 0.0
      %1783 = vmatprep.subr.mxu0 0.0
      %1784 = vmatpush1.msra.mxu0 0.0
      %1785 = vmatprep.subr.mxu0 0.0
      %1786 = vmatpush1.msra.mxu0 0.0
      %1787 = vmatprep.subr.mxu0 0.0
      %1788 = vmatpush1.msra.mxu0 0.0
      %1789 = vmatprep.subr.mxu0 0.0
      %1790 = vmatpush1.msra.mxu0 0.0
      %1791 = vmatprep.subr.mxu0 0.0
      %1792 = vmatpush1.msra.mxu0 0.0
      %1793 = vmatprep.subr.mxu0 0.0
      %1794 = vmatpush1.msra.mxu0 0.0
      %1795 = vmatprep.subr.mxu0 0.0
      %1796 = vmatpush1.msra.mxu0 0.0
      %1797 = vmatprep.subr.mxu0 0.0
      %1798 = vmatpush1.msra.mxu0 0.0
      %1799 = vmatprep.subr.mxu0 0.0
      %1800 = vmatpush1.msra.mxu0 0.0
      %1801 = vmatprep.subr.mxu0 0.0
      %1802 = vmatpush1.msra.mxu0 0.0
      %1803 = vmatprep.subr.mxu0 0.0
      %1804 = vmatpush1.msra.mxu0 0.0
      %1805 = vmatprep.subr.mxu0 0.0
      %1806 = vmatpush1.msra.mxu0 0.0
      %1807 = vmatprep.subr.mxu0 0.0
      %1808 = vmatpush1.msra.mxu0 0.0
      %1809 = vmatprep.subr.mxu0 0.0
      %1810 = vmatpush1.msra.mxu0 0.0
      %1811 = vmatprep.subr.mxu0 0.0
      %1812 = vmatpush1.msra.mxu0 0.0
      %1813 = vmatprep.subr.mxu0 0.0
      %1814 = vmatpush1.msra.mxu0 0.0
      %1815 = vmatprep.subr.mxu0 0.0
      %1816 = vmatpush1.msra.mxu0 0.0
      %1817 = vmatprep.subr.mxu0 0.0
      %1818 = vmatpush1.msra.mxu0 0.0
      %1819 = vmatprep.subr.mxu0 0.0
      %1820 = vmatpush1.msra.mxu0 0.0
      %1821 = vmatprep.subr.mxu0 0.0
      %1822 = vmatpush1.msra.mxu0 0.0
      %1823 = vmatprep.subr.mxu0 0.0
      %1824 = vmatpush1.msra.mxu0 0.0
      %1825 = vmatprep.subr.mxu0 0.0
      %1826 = vmatpush1.msra.mxu0 0.0
      %1827 = vmatprep.subr.mxu0 0.0
      %1828 = vmatpush1.msra.mxu0 0.0
      %1829 = vmatprep.subr.mxu0 0.0
      %1830 = vmatpush1.msra.mxu0 0.0
      %1831 = vmatprep.subr.mxu0 0.0
      %1832 = vmatpush1.msra.mxu0 0.0
      %1833 = vmatprep.subr.mxu0 0.0
      %1834 = vmatpush1.msra.mxu0 0.0
      %1835 = vmatprep.mubr.f32.mxu0 0.0
      %1836 = vmatmul.mubr.f32.gmra.mrb[0].mxu0 %v1767
      %v1837 = vpop.f32.mrb[0].mxu0
      %v1838 = vadd.f32 0.0, %v1837
      %v1839 = vpop.f32.mrb[0].mxu0
      %1840 = vdwg.mxu0
      %v1842 = vsel %vm1194, %v1838, 0
      %1844 = vmatprep.subr.mxu0 0.0
      %1845 = vmatpush1.msra.mxu0 %v1189
      %1846 = vmatprep.subr.mxu0 0.0
      %1847 = vmatpush1.msra.mxu0 0.0
      %1848 = vmatprep.subr.mxu0 0.0
      %1849 = vmatpush1.msra.mxu0 0.0
      %1850 = vmatprep.subr.mxu0 0.0
      %1851 = vmatpush1.msra.mxu0 0.0
      %1852 = vmatprep.subr.mxu0 0.0
      %1853 = vmatpush1.msra.mxu0 0.0
      %1854 = vmatprep.subr.mxu0 0.0
      %1855 = vmatpush1.msra.mxu0 0.0
      %1856 = vmatprep.subr.mxu0 0.0
      %1857 = vmatpush1.msra.mxu0 0.0
      %1858 = vmatprep.subr.mxu0 0.0
      %1859 = vmatpush1.msra.mxu0 0.0
      %1860 = vmatprep.subr.mxu0 0.0
      %1861 = vmatpush1.msra.mxu0 0.0
      %1862 = vmatprep.subr.mxu0 0.0
      %1863 = vmatpush1.msra.mxu0 0.0
      %1864 = vmatprep.subr.mxu0 0.0
      %1865 = vmatpush1.msra.mxu0 0.0
      %1866 = vmatprep.subr.mxu0 0.0
      %1867 = vmatpush1.msra.mxu0 0.0
      %1868 = vmatprep.subr.mxu0 0.0
      %1869 = vmatpush1.msra.mxu0 0.0
      %1870 = vmatprep.subr.mxu0 0.0
      %1871 = vmatpush1.msra.mxu0 0.0
      %1872 = vmatprep.subr.mxu0 0.0
      %1873 = vmatpush1.msra.mxu0 0.0
      %1874 = vmatprep.subr.mxu0 0.0
      %1875 = vmatpush1.msra.mxu0 0.0
      %1876 = vmatprep.subr.mxu0 0.0
      %1877 = vmatpush1.msra.mxu0 0.0
      %1878 = vmatprep.subr.mxu0 0.0
      %1879 = vmatpush1.msra.mxu0 0.0
      %1880 = vmatprep.subr.mxu0 0.0
      %1881 = vmatpush1.msra.mxu0 0.0
      %1882 = vmatprep.subr.mxu0 0.0
      %1883 = vmatpush1.msra.mxu0 0.0
      %1884 = vmatprep.subr.mxu0 0.0
      %1885 = vmatpush1.msra.mxu0 0.0
      %1886 = vmatprep.subr.mxu0 0.0
      %1887 = vmatpush1.msra.mxu0 0.0
      %1888 = vmatprep.subr.mxu0 0.0
      %1889 = vmatpush1.msra.mxu0 0.0
      %1890 = vmatprep.subr.mxu0 0.0
      %1891 = vmatpush1.msra.mxu0 0.0
      %1892 = vmatprep.subr.mxu0 0.0
      %1893 = vmatpush1.msra.mxu0 0.0
      %1894 = vmatprep.subr.mxu0 0.0
      %1895 = vmatpush1.msra.mxu0 0.0
      %1896 = vmatprep.subr.mxu0 0.0
      %1897 = vmatpush1.msra.mxu0 0.0
      %1898 = vmatprep.subr.mxu0 0.0
      %1899 = vmatpush1.msra.mxu0 0.0
      %1900 = vmatprep.subr.mxu0 0.0
      %1901 = vmatpush1.msra.mxu0 0.0
      %1902 = vmatprep.subr.mxu0 0.0
      %1903 = vmatpush1.msra.mxu0 0.0
      %1904 = vmatprep.subr.mxu0 0.0
      %1905 = vmatpush1.msra.mxu0 0.0
      %1906 = vmatprep.subr.mxu0 0.0
      %1907 = vmatpush1.msra.mxu0 0.0
      %1908 = vmatprep.mubr.f32.mxu0 0.0
      %1909 = vmatmul.mubr.f32.gmra.mrb[0].mxu0 %v1842
      %v1910 = vpop.f32.mrb[0].mxu0
      %v1911 = vadd.f32 0.0, %v1910
      %v1912 = vpop.f32.mrb[0].mxu0
      %1913 = vdwg.mxu0
      %v1914 = vadd.f32 %v1671, %v1911
      %1915 = vrot.lane.b32.xlu0 %v1184, 104
      %v1916 = vpop.permute.xlu0 %1915
      %1917 = vrot.lane.b32.xlu0 %v1184, 72
      %v1918 = vpop.permute.xlu0 %1917
      %v1919 = vsel %vm1194, %v1916, 0
      %v1921 = vsel %vm1194, %v1918, 0
      %1923 = vmatprep.subr.mxu0 0.0
      %1924 = vmatpush1.xpose.msra.mxu0 %v1921
      %1925 = vmatprep.subr.mxu0 0.0
      %1926 = vmatpush1.xpose.msra.mxu0 0.0
      %1927 = vmatprep.subr.mxu0 0.0
      %1928 = vmatpush1.xpose.msra.mxu0 0.0
      %1929 = vmatprep.subr.mxu0 0.0
      %1930 = vmatpush1.xpose.msra.mxu0 0.0
      %1931 = vmatprep.subr.mxu0 0.0
      %1932 = vmatpush1.xpose.msra.mxu0 0.0
      %1933 = vmatprep.subr.mxu0 0.0
      %1934 = vmatpush1.xpose.msra.mxu0 0.0
      %1935 = vmatprep.subr.mxu0 0.0
      %1936 = vmatpush1.xpose.msra.mxu0 0.0
      %1937 = vmatprep.subr.mxu0 0.0
      %1938 = vmatpush1.xpose.msra.mxu0 0.0
      %1939 = vmatprep.subr.mxu0 0.0
      %1940 = vmatpush1.xpose.msra.mxu0 0.0
      %1941 = vmatprep.subr.mxu0 0.0
      %1942 = vmatpush1.xpose.msra.mxu0 0.0
      %1943 = vmatprep.subr.mxu0 0.0
      %1944 = vmatpush1.xpose.msra.mxu0 0.0
      %1945 = vmatprep.subr.mxu0 0.0
      %1946 = vmatpush1.xpose.msra.mxu0 0.0
      %1947 = vmatprep.subr.mxu0 0.0
      %1948 = vmatpush1.xpose.msra.mxu0 0.0
      %1949 = vmatprep.subr.mxu0 0.0
      %1950 = vmatpush1.xpose.msra.mxu0 0.0
      %1951 = vmatprep.subr.mxu0 0.0
      %1952 = vmatpush1.xpose.msra.mxu0 0.0
      %1953 = vmatprep.subr.mxu0 0.0
      %1954 = vmatpush1.xpose.msra.mxu0 0.0
      %1955 = vmatprep.subr.mxu0 0.0
      %1956 = vmatpush1.xpose.msra.mxu0 0.0
      %1957 = vmatprep.subr.mxu0 0.0
      %1958 = vmatpush1.xpose.msra.mxu0 0.0
      %1959 = vmatprep.subr.mxu0 0.0
      %1960 = vmatpush1.xpose.msra.mxu0 0.0
      %1961 = vmatprep.subr.mxu0 0.0
      %1962 = vmatpush1.xpose.msra.mxu0 0.0
      %1963 = vmatprep.subr.mxu0 0.0
      %1964 = vmatpush1.xpose.msra.mxu0 0.0
      %1965 = vmatprep.subr.mxu0 0.0
      %1966 = vmatpush1.xpose.msra.mxu0 0.0
      %1967 = vmatprep.subr.mxu0 0.0
      %1968 = vmatpush1.xpose.msra.mxu0 0.0
      %1969 = vmatprep.subr.mxu0 0.0
      %1970 = vmatpush1.xpose.msra.mxu0 0.0
      %1971 = vmatprep.subr.mxu0 0.0
      %1972 = vmatpush1.xpose.msra.mxu0 0.0
      %1973 = vmatprep.subr.mxu0 0.0
      %1974 = vmatpush1.xpose.msra.mxu0 0.0
      %1975 = vmatprep.subr.mxu0 0.0
      %1976 = vmatpush1.xpose.msra.mxu0 0.0
      %1977 = vmatprep.subr.mxu0 0.0
      %1978 = vmatpush1.xpose.msra.mxu0 0.0
      %1979 = vmatprep.subr.mxu0 0.0
      %1980 = vmatpush1.xpose.msra.mxu0 0.0
      %1981 = vmatprep.subr.mxu0 0.0
      %1982 = vmatpush1.xpose.msra.mxu0 0.0
      %1983 = vmatprep.subr.mxu0 0.0
      %1984 = vmatpush1.xpose.msra.mxu0 0.0
      %1985 = vmatprep.subr.mxu0 0.0
      %1986 = vmatpush1.xpose.msra.mxu0 0.0
      %1987 = vmatprep.mubr.f32.mxu0 0.0
      %1988 = vmatmul.mubr.f32.gmra.mrb[0].mxu0 %v1919
      %v1989 = vpop.f32.mrb[0].mxu0
      %v1990 = vadd.f32 0.0, %v1989
      %v1991 = vpop.f32.mrb[0].mxu0
      %1992 = vdwg.mxu0
      %v1993 = vmul.f32 %v1990, 0.35355338
      %v1994 = vsel %vm1270, %v1993, -inf
      %1995 = vmax.xlane.f32.xlu0 %v1994
      %v1996 = vpop.xlane.xlu0 %1995
      %v1997 = vsub.f32 %v1993, %v1996
      %v1998 = vmul.f32 %v1997, 1.442695
      %v1999 = vpow.pop %v1998
      %v2000 = vsel %vm1270, %v1999, 0.0
      %2001 = vadd.xlane.f32.xlu0 %v2000
      %v2002 = vpop.xlane.xlu0 %2001
      %v2003 = vrcp.pop %v2002
      %v2004 = vmul.f32 %v1999, %v2003
      %2005 = vrot.lane.b32.xlu0 %v1184, 40
      %v2006 = vpop.permute.xlu0 %2005
      %v2008 = vsel %vm1284, %v2004, 0
      %v2010 = vsel %vm1288, %v2006, 0
      %2012 = vmatprep.subr.mxu0 0.0
      %2013 = vmatpush1.msra.mxu0 %v2010
      %2014 = vmatprep.subr.mxu0 0.0
      %2015 = vmatpush1.msra.mxu0 0.0
      %2016 = vmatprep.subr.mxu0 0.0
      %2017 = vmatpush1.msra.mxu0 0.0
      %2018 = vmatprep.subr.mxu0 0.0
      %2019 = vmatpush1.msra.mxu0 0.0
      %2020 = vmatprep.subr.mxu0 0.0
      %2021 = vmatpush1.msra.mxu0 0.0
      %2022 = vmatprep.subr.mxu0 0.0
      %2023 = vmatpush1.msra.mxu0 0.0
      %2024 = vmatprep.subr.mxu0 0.0
      %2025 = vmatpush1.msra.mxu0 0.0
      %2026 = vmatprep.subr.mxu0 0.0
      %2027 = vmatpush1.msra.mxu0 0.0
      %2028 = vmatprep.subr.mxu0 0.0
      %2029 = vmatpush1.msra.mxu0 0.0
      %2030 = vmatprep.subr.mxu0 0.0
      %2031 = vmatpush1.msra.mxu0 0.0
      %2032 = vmatprep.subr.mxu0 0.0
      %2033 = vmatpush1.msra.mxu0 0.0
      %2034 = vmatprep.subr.mxu0 0.0
      %2035 = vmatpush1.msra.mxu0 0.0
      %2036 = vmatprep.subr.mxu0 0.0
      %2037 = vmatpush1.msra.mxu0 0.0
      %2038 = vmatprep.subr.mxu0 0.0
      %2039 = vmatpush1.msra.mxu0 0.0
      %2040 = vmatprep.subr.mxu0 0.0
      %2041 = vmatpush1.msra.mxu0 0.0
      %2042 = vmatprep.subr.mxu0 0.0
      %2043 = vmatpush1.msra.mxu0 0.0
      %2044 = vmatprep.subr.mxu0 0.0
      %2045 = vmatpush1.msra.mxu0 0.0
      %2046 = vmatprep.subr.mxu0 0.0
      %2047 = vmatpush1.msra.mxu0 0.0
      %2048 = vmatprep.subr.mxu0 0.0
      %2049 = vmatpush1.msra.mxu0 0.0
      %2050 = vmatprep.subr.mxu0 0.0
      %2051 = vmatpush1.msra.mxu0 0.0
      %2052 = vmatprep.subr.mxu0 0.0
      %2053 = vmatpush1.msra.mxu0 0.0
      %2054 = vmatprep.subr.mxu0 0.0
      %2055 = vmatpush1.msra.mxu0 0.0
      %2056 = vmatprep.subr.mxu0 0.0
      %2057 = vmatpush1.msra.mxu0 0.0
      %2058 = vmatprep.subr.mxu0 0.0
      %2059 = vmatpush1.msra.mxu0 0.0
      %2060 = vmatprep.subr.mxu0 0.0
      %2061 = vmatpush1.msra.mxu0 0.0
      %2062 = vmatprep.subr.mxu0 0.0
      %2063 = vmatpush1.msra.mxu0 0.0
      %2064 = vmatprep.subr.mxu0 0.0
      %2065 = vmatpush1.msra.mxu0 0.0
      %2066 = vmatprep.subr.mxu0 0.0
      %2067 = vmatpush1.msra.mxu0 0.0
      %2068 = vmatprep.subr.mxu0 0.0
      %2069 = vmatpush1.msra.mxu0 0.0
      %2070 = vmatprep.subr.mxu0 0.0
      %2071 = vmatpush1.msra.mxu0 0.0
      %2072 = vmatprep.subr.mxu0 0.0
      %2073 = vmatpush1.msra.mxu0 0.0
      %2074 = vmatprep.subr.mxu0 0.0
      %2075 = vmatpush1.msra.mxu0 0.0
      %2076 = vmatprep.mubr.f32.mxu0 0.0
      %2077 = vmatmul.mubr.f32.gmra.mrb[0].mxu0 %v2008
      %v2078 = vpop.f32.mrb[0].mxu0
      %v2079 = vadd.f32 0.0, %v2078
      %v2080 = vpop.f32.mrb[0].mxu0
      %2081 = vdwg.mxu0
      %v2083 = vsel %vm1194, %v2079, 0
      %2085 = vmatprep.subr.mxu0 0.0
      %2086 = vmatpush1.msra.mxu0 %v1190
      %2087 = vmatprep.subr.mxu0 0.0
      %2088 = vmatpush1.msra.mxu0 0.0
      %2089 = vmatprep.subr.mxu0 0.0
      %2090 = vmatpush1.msra.mxu0 0.0
      %2091 = vmatprep.subr.mxu0 0.0
      %2092 = vmatpush1.msra.mxu0 0.0
      %2093 = vmatprep.subr.mxu0 0.0
      %2094 = vmatpush1.msra.mxu0 0.0
      %2095 = vmatprep.subr.mxu0 0.0
      %2096 = vmatpush1.msra.mxu0 0.0
      %2097 = vmatprep.subr.mxu0 0.0
      %2098 = vmatpush1.msra.mxu0 0.0
      %2099 = vmatprep.subr.mxu0 0.0
      %2100 = vmatpush1.msra.mxu0 0.0
      %2101 = vmatprep.subr.mxu0 0.0
      %2102 = vmatpush1.msra.mxu0 0.0
      %2103 = vmatprep.subr.mxu0 0.0
      %2104 = vmatpush1.msra.mxu0 0.0
      %2105 = vmatprep.subr.mxu0 0.0
      %2106 = vmatpush1.msra.mxu0 0.0
      %2107 = vmatprep.subr.mxu0 0.0
      %2108 = vmatpush1.msra.mxu0 0.0
      %2109 = vmatprep.subr.mxu0 0.0
      %2110 = vmatpush1.msra.mxu0 0.0
      %2111 = vmatprep.subr.mxu0 0.0
      %2112 = vmatpush1.msra.mxu0 0.0
      %2113 = vmatprep.subr.mxu0 0.0
      %2114 = vmatpush1.msra.mxu0 0.0
      %2115 = vmatprep.subr.mxu0 0.0
      %2116 = vmatpush1.msra.mxu0 0.0
      %2117 = vmatprep.subr.mxu0 0.0
      %2118 = vmatpush1.msra.mxu0 0.0
      %2119 = vmatprep.subr.mxu0 0.0
      %2120 = vmatpush1.msra.mxu0 0.0
      %2121 = vmatprep.subr.mxu0 0.0
      %2122 = vmatpush1.msra.mxu0 0.0
      %2123 = vmatprep.subr.mxu0 0.0
      %2124 = vmatpush1.msra.mxu0 0.0
      %2125 = vmatprep.subr.mxu0 0.0
      %2126 = vmatpush1.msra.mxu0 0.0
      %2127 = vmatprep.subr.mxu0 0.0
      %2128 = vmatpush1.msra.mxu0 0.0
      %2129 = vmatprep.subr.mxu0 0.0
      %2130 = vmatpush1.msra.mxu0 0.0
      %2131 = vmatprep.subr.mxu0 0.0
      %2132 = vmatpush1.msra.mxu0 0.0
      %2133 = vmatprep.subr.mxu0 0.0
      %2134 = vmatpush1.msra.mxu0 0.0
      %2135 = vmatprep.subr.mxu0 0.0
      %2136 = vmatpush1.msra.mxu0 0.0
      %2137 = vmatprep.subr.mxu0 0.0
      %2138 = vmatpush1.msra.mxu0 0.0
      %2139 = vmatprep.subr.mxu0 0.0
      %2140 = vmatpush1.msra.mxu0 0.0
      %2141 = vmatprep.subr.mxu0 0.0
      %2142 = vmatpush1.msra.mxu0 0.0
      %2143 = vmatprep.subr.mxu0 0.0
      %2144 = vmatpush1.msra.mxu0 0.0
      %2145 = vmatprep.subr.mxu0 0.0
      %2146 = vmatpush1.msra.mxu0 0.0
      %2147 = vmatprep.subr.mxu0 0.0
      %2148 = vmatpush1.msra.mxu0 0.0
      %2149 = vmatprep.mubr.f32.mxu0 0.0
      %2150 = vmatmul.mubr.f32.gmra.mrb[0].mxu0 %v2083
      %v2151 = vpop.f32.mrb[0].mxu0
      %v2152 = vadd.f32 0.0, %v2151
      %v2153 = vpop.f32.mrb[0].mxu0
      %2154 = vdwg.mxu0
      %v2155 = vadd.f32 %v1914, %v2152
      %v2156 = vadd.f32 %v1070, %v2155
      %v2157 = vld [vmem:[%s724] sm:$0x1]
      %v2159 = vlaneseq
      %v2160 = vshrl.u32 %v2159, 7
      %v2161 = vsub.s32 0, %v2160
      %v2162 = vrot.slane %v2157, %v2161
      %v2164 = vadd.f32 %v2156, %v2162
      %v2165 = vld [vmem:[%s727] sm:$0x1]
      %v2166 = vld [vmem:[%s730] sm:$0x1]
      %v2167 = vsel %vm1073, %v2164, 0.0
      %2168 = vadd.xlane.f32.xlu0 %v2167
      %v2169 = vpop.xlane.xlu0 %2168
      %v2170 = vmul.f32 %v2169, %v1077
      %v2171 = vsub.f32 %v2164, %v2170
      %v2172 = vmul.f32 %v2171, %v2171
      %v2173 = vsel %vm1073, %v2172, 0.0
      %2174 = vadd.xlane.f32.xlu0 %v2173
      %v2175 = vpop.xlane.xlu0 %2174
      %v2176 = vmul.f32 %v2175, %v1077
      %v2177 = vadd.f32 %v2176, 1e-12
      %v2178 = vrsqrt.pop %v2177
      %v2179 = vmul.f32 %v2171, %v2178
      %v2181 = vlaneseq
      %v2182 = vshrl.u32 %v2181, 7
      %v2183 = vsub.s32 0, %v2182
      %v2184 = vrot.slane %v2165, %v2183
      %v2186 = vmul.f32 %v2179, %v2184
      %v2188 = vlaneseq
      %v2189 = vshrl.u32 %v2188, 7
      %v2190 = vsub.s32 0, %v2189
      %v2191 = vrot.slane %v2166, %v2190
      %v2193 = vadd.f32 %v2186, %v2191
      %v2194 = vld [vmem:[%s735] sm:$0xff]
      %v2195 = vld [vmem:[%s735 + $0x8] sm:$0xff]
      %v2196 = vld [vmem:[%s735 + $0x10] sm:$0xff]
      %v2197 = vld [vmem:[%s735 + $0x18] sm:$0xff]
      %v2198 = vld [vmem:[%s738] sm:$0x1]
      %v2200 = vlaneseq
      %v2201 = vshrl.u32 %v2200, 7
      %v2202 = vsub.s32 0, %v2201
      %v2203 = vrot.slane %v2198, %v2202
      %v2206 = vsel %vm1113, %v2193, 0
      %2208 = vmatprep.subr.mxu0 0.0
      %2209 = vmatpush1.msra.mxu0 %v2194
      %2210 = vmatprep.subr.mxu0 0.0
      %2211 = vmatpush1.msra.mxu0 %v2195
      %2212 = vmatprep.subr.mxu0 0.0
      %2213 = vmatpush1.msra.mxu0 %v2196
      %2214 = vmatprep.subr.mxu0 0.0
      %2215 = vmatpush1.msra.mxu0 %v2197
      %2216 = vmatprep.subr.mxu0 0.0
      %2217 = vmatpush1.msra.mxu0 0.0
      %2218 = vmatprep.subr.mxu0 0.0
      %2219 = vmatpush1.msra.mxu0 0.0
      %2220 = vmatprep.subr.mxu0 0.0
      %2221 = vmatpush1.msra.mxu0 0.0
      %2222 = vmatprep.subr.mxu0 0.0
      %2223 = vmatpush1.msra.mxu0 0.0
      %2224 = vmatprep.subr.mxu0 0.0
      %2225 = vmatpush1.msra.mxu0 0.0
      %2226 = vmatprep.subr.mxu0 0.0
      %2227 = vmatpush1.msra.mxu0 0.0
      %2228 = vmatprep.subr.mxu0 0.0
      %2229 = vmatpush1.msra.mxu0 0.0
      %2230 = vmatprep.subr.mxu0 0.0
      %2231 = vmatpush1.msra.mxu0 0.0
      %2232 = vmatprep.subr.mxu0 0.0
      %2233 = vmatpush1.msra.mxu0 0.0
      %2234 = vmatprep.subr.mxu0 0.0
      %2235 = vmatpush1.msra.mxu0 0.0
      %2236 = vmatprep.subr.mxu0 0.0
      %2237 = vmatpush1.msra.mxu0 0.0
      %2238 = vmatprep.subr.mxu0 0.0
      %2239 = vmatpush1.msra.mxu0 0.0
      %2240 = vmatprep.subr.mxu0 0.0
      %2241 = vmatpush1.msra.mxu0 0.0
      %2242 = vmatprep.subr.mxu0 0.0
      %2243 = vmatpush1.msra.mxu0 0.0
      %2244 = vmatprep.subr.mxu0 0.0
      %2245 = vmatpush1.msra.mxu0 0.0
      %2246 = vmatprep.subr.mxu0 0.0
      %2247 = vmatpush1.msra.mxu0 0.0
      %2248 = vmatprep.subr.mxu0 0.0
      %2249 = vmatpush1.msra.mxu0 0.0
      %2250 = vmatprep.subr.mxu0 0.0
      %2251 = vmatpush1.msra.mxu0 0.0
      %2252 = vmatprep.subr.mxu0 0.0
      %2253 = vmatpush1.msra.mxu0 0.0
      %2254 = vmatprep.subr.mxu0 0.0
      %2255 = vmatpush1.msra.mxu0 0.0
      %2256 = vmatprep.subr.mxu0 0.0
      %2257 = vmatpush1.msra.mxu0 0.0
      %2258 = vmatprep.subr.mxu0 0.0
      %2259 = vmatpush1.msra.mxu0 0.0
      %2260 = vmatprep.subr.mxu0 0.0
      %2261 = vmatpush1.msra.mxu0 0.0
      %2262 = vmatprep.subr.mxu0 0.0
      %2263 = vmatpush1.msra.mxu0 0.0
      %2264 = vmatprep.subr.mxu0 0.0
      %2265 = vmatpush1.msra.mxu0 0.0
      %2266 = vmatprep.subr.mxu0 0.0
      %2267 = vmatpush1.msra.mxu0 0.0
      %2268 = vmatprep.subr.mxu0 0.0
      %2269 = vmatpush1.msra.mxu0 0.0
      %2270 = vmatprep.subr.mxu0 0.0
      %2271 = vmatpush1.msra.mxu0 0.0
      %2272 = vmatprep.mubr.f32.mxu0 0.0
      %2273 = vmatmul.mubr.f32.gmra.mrb[0].mxu0 %v2206
      %v2274 = vpop.f32.mrb[0].mxu0
      %v2275 = vadd.f32 %v2203, %v2274
      %v2276 = vpop.f32.mrb[0].mxu0
      %2277 = vdwg.mxu0
      %v2278 = vmul.f32 %v2275, 0.5
      %v2279 = vmul.f32 %v2275, 0.70710677
      %v2280 = vand.u32 2147483647, %v2279
      %v2281 = vmul.f32 %v2280, 0.3275911
      %v2282 = vadd.f32 %v2281, 1.0
      %v2283 = vrcp.pop %v2282
      %v2284 = vmul.f32 1.0, %v2283
      %v2285 = vmul.f32 %v2284, 1.0614054
      %v2286 = vadd.f32 %v2285, -1.4531521
      %v2287 = vmul.f32 %v2284, %v2286
      %v2288 = vadd.f32 %v2287, 1.4214138
      %v2289 = vmul.f32 %v2284, %v2288
      %v2290 = vadd.f32 %v2289, -0.28449672
      %v2291 = vmul.f32 %v2284, %v2290
      %v2292 = vadd.f32 %v2291, 0.2548296
      %v2293 = vmul.f32 %v2284, %v2292
      %v2294 = vsub.f32 0.0, %v2280
      %v2295 = vmul.f32 %v2294, %v2280
      %v2296 = vmul.f32 %v2295, 1.442695
      %v2297 = vpow.pop %v2296
      %v2298 = vmul.f32 %v2293, %v2297
      %v2299 = vsub.f32 1.0, %v2298
      %vm2300 = vcmp.lt.f32.partialorder %v2279, 0.0
      %v2301 = vsub.f32 0.0, %v2299
      %v2302 = vsel %vm2300, %v2301, %v2299
      %v2303 = vadd.f32 %v2302, 1.0
      %v2304 = vmul.f32 %v2278, %v2303
      %v2305 = vld [vmem:[%s743] sm:$0xff]
      %v2306 = vld [vmem:[%s743 + $0x8] sm:$0xff]
      %v2307 = vld [vmem:[%s743 + $0x10] sm:$0xff]
      %v2308 = vld [vmem:[%s743 + $0x18] sm:$0xff]
      %v2309 = vld [vmem:[%s743 + $0x20] sm:$0xff]
      %v2310 = vld [vmem:[%s743 + $0x28] sm:$0xff]
      %v2311 = vld [vmem:[%s743 + $0x30] sm:$0xff]
      %v2312 = vld [vmem:[%s743 + $0x38] sm:$0xff]
      %v2313 = vld [vmem:[%s746] sm:$0x1]
      %v2315 = vlaneseq
      %v2316 = vshrl.u32 %v2315, 7
      %v2317 = vsub.s32 0, %v2316
      %v2318 = vrot.slane %v2313, %v2317
      %vm2320 = vcmask 523264
      %v2322 = vsel %vm2320, %v2304, 0
      %2324 = vmatprep.subr.mxu0 0.0
      %2325 = vmatpush1.msra.mxu0 %v2305
      %2326 = vmatprep.subr.mxu0 0.0
      %2327 = vmatpush1.msra.mxu0 %v2306
      %2328 = vmatprep.subr.mxu0 0.0
      %2329 = vmatpush1.msra.mxu0 %v2307
      %2330 = vmatprep.subr.mxu0 0.0
      %2331 = vmatpush1.msra.mxu0 %v2308
      %2332 = vmatprep.subr.mxu0 0.0
      %2333 = vmatpush1.msra.mxu0 %v2309
      %2334 = vmatprep.subr.mxu0 0.0
      %2335 = vmatpush1.msra.mxu0 %v2310
      %2336 = vmatprep.subr.mxu0 0.0
      %2337 = vmatpush1.msra.mxu0 %v2311
      %2338 = vmatprep.subr.mxu0 0.0
      %2339 = vmatpush1.msra.mxu0 %v2312
      %2340 = vmatprep.subr.mxu0 0.0
      %2341 = vmatpush1.msra.mxu0 0.0
      %2342 = vmatprep.subr.mxu0 0.0
      %2343 = vmatpush1.msra.mxu0 0.0
      %2344 = vmatprep.subr.mxu0 0.0
      %2345 = vmatpush1.msra.mxu0 0.0
      %2346 = vmatprep.subr.mxu0 0.0
      %2347 = vmatpush1.msra.mxu0 0.0
      %2348 = vmatprep.subr.mxu0 0.0
      %2349 = vmatpush1.msra.mxu0 0.0
      %2350 = vmatprep.subr.mxu0 0.0
      %2351 = vmatpush1.msra.mxu0 0.0
      %2352 = vmatprep.subr.mxu0 0.0
      %2353 = vmatpush1.msra.mxu0 0.0
      %2354 = vmatprep.subr.mxu0 0.0
      %2355 = vmatpush1.msra.mxu0 0.0
      %2356 = vmatprep.subr.mxu0 0.0
      %2357 = vmatpush1.msra.mxu0 0.0
      %2358 = vmatprep.subr.mxu0 0.0
      %2359 = vmatpush1.msra.mxu0 0.0
      %2360 = vmatprep.subr.mxu0 0.0
      %2361 = vmatpush1.msra.mxu0 0.0
      %2362 = vmatprep.subr.mxu0 0.0
      %2363 = vmatpush1.msra.mxu0 0.0
      %2364 = vmatprep.subr.mxu0 0.0
      %2365 = vmatpush1.msra.mxu0 0.0
      %2366 = vmatprep.subr.mxu0 0.0
      %2367 = vmatpush1.msra.mxu0 0.0
      %2368 = vmatprep.subr.mxu0 0.0
      %2369 = vmatpush1.msra.mxu0 0.0
      %2370 = vmatprep.subr.mxu0 0.0
      %2371 = vmatpush1.msra.mxu0 0.0
      %2372 = vmatprep.subr.mxu0 0.0
      %2373 = vmatpush1.msra.mxu0 0.0
      %2374 = vmatprep.subr.mxu0 0.0
      %2375 = vmatpush1.msra.mxu0 0.0
      %2376 = vmatprep.subr.mxu0 0.0
      %2377 = vmatpush1.msra.mxu0 0.0
      %2378 = vmatprep.subr.mxu0 0.0
      %2379 = vmatpush1.msra.mxu0 0.0
      %2380 = vmatprep.subr.mxu0 0.0
      %2381 = vmatpush1.msra.mxu0 0.0
      %2382 = vmatprep.subr.mxu0 0.0
      %2383 = vmatpush1.msra.mxu0 0.0
      %2384 = vmatprep.subr.mxu0 0.0
      %2385 = vmatpush1.msra.mxu0 0.0
      %2386 = vmatprep.subr.mxu0 0.0
      %2387 = vmatpush1.msra.mxu0 0.0
      %2388 = vmatprep.mubr.f32.mxu0 0.0
      %2389 = vmatmul.mubr.f32.gmra.mrb[0].mxu0 %v2322
      %v2390 = vpop.f32.mrb[0].mxu0
      %v2391 = vadd.f32 %v2318, %v2390
      %v2392 = vpop.f32.mrb[0].mxu0
      %2393 = vdwg.mxu0
      %v2394 = vadd.f32 %v2164, %v2391
      %2395 = vst.msk [vmem:[#allocation2] sm:$0x1f] %vm1073, %v2394
      %p2396 = scmp.eq.s32.totalorder %s33, 1
      // Predicated region
      $region93: #{ocr_forward.2} parent=87 // pred_check
        %p2397 = pneg %p2396
      $region94: #{ocr_forward.2} parent=87 // pred_check_branch
        %2399 = sbr.rel (%p2397) target = $region96
      $region95: #{ocr_forward.2} parent=87 // pred_region
        %v2400 = vld [vmem:[%s15] sm:$0x1]
        %v2401 = vld [vmem:[%s16] sm:$0x1]
        %v2402 = vsel %vm1073, %v2394, 0.0
        %2403 = vadd.xlane.f32.xlu0 %v2402
        %v2404 = vpop.xlane.xlu0 %2403
        %v2405 = vmul.f32 %v2404, %v1077
        %v2406 = vsub.f32 %v2394, %v2405
        %v2407 = vmul.f32 %v2406, %v2406
        %v2408 = vsel %vm1073, %v2407, 0.0
        %2409 = vadd.xlane.f32.xlu0 %v2408
        %v2410 = vpop.xlane.xlu0 %2409
        %v2411 = vmul.f32 %v2410, %v1077
        %v2412 = vadd.f32 %v2411, 1e-12
        %v2413 = vrsqrt.pop %v2412
        %v2414 = vmul.f32 %v2406, %v2413
        %v2416 = vlaneseq
        %v2417 = vshrl.u32 %v2416, 7
        %v2418 = vsub.s32 0, %v2417
        %v2419 = vrot.slane %v2400, %v2418
        %v2421 = vmul.f32 %v2414, %v2419
        %v2423 = vlaneseq
        %v2424 = vshrl.u32 %v2423, 7
        %v2425 = vsub.s32 0, %v2424
        %v2426 = vrot.slane %v2401, %v2425
        %v2428 = vadd.f32 %v2421, %v2426
        %2429 = vst.msk [vmem:[%s750] sm:$0x1f] %vm1073, %v2428
      $region96: #{ocr_forward.2} parent=87 // pred_fallthru
        _
      %p2430 = scmp.lt.s32.totalorder %s32, 1
      %s2431 = scalar_select %p2430, %s32, 1
      %s2432 = smul.addr %s2431, 8
      %s2433 = scalar_lea.vmem %s17, %s2432
      // Predicated region
      $region97: #{ocr_forward.2} parent=87 // pred_check
        %p2434 = pneg %p480
      $region98: #{ocr_forward.2} parent=87 // pred_check_branch
        %2436 = sbr.rel (%p2434) target = $region100
      $region99: #{ocr_forward.2} parent=87 // pred_region
        _
      $region100: #{ocr_forward.2} parent=87 // pred_fallthru
        _
    $region88: #{ocr_forward.2} parent=5 // pred_fallthru
      _
    %p2437 = scmp.le.s32.totalorder 2, %s23
    // Predicated region
    $region101: #{ocr_forward.2} parent=5 // pred_check
      %p2438 = pneg %p2437
    $region102: #{ocr_forward.2} parent=5 // pred_check_branch
      %2440 = sbr.rel (%p2438) target = $region104
    $region103: #{ocr_forward.2} parent=5 // pred_region
      %s2441 = ssub.s32 %s23, 2
      // Predicated region
      $region105: #{ocr_forward.2} parent=103 // pred_check
        %p2442 = pneg %p486
      $region106: #{ocr_forward.2} parent=103 // pred_check_branch
        %2444 = sbr.rel (%p2442) target = $region108
      $region107: #{ocr_forward.2} parent=103 // pred_region
        %p2445 = scmp.lt.s32.totalorder %s34, 1
        %s2446 = scalar_select %p2445, %s34, 1
        %s2447 = smul.addr %s2446, 8
        %s2448 = scalar_lea.vmem %s17, %s2447
      $region108: #{ocr_forward.2} parent=103 // pred_fallthru
        _
    $region104: #{ocr_forward.2} parent=5 // pred_fallthru
      _
  $region6: #{ocr_forward.2} parent=0 // loop_footer
    %s27 = sadd.s32 1, %s23
  $region7: #{ocr_forward.2} parent=0 // loop_footer_branch
    %22 = sbr.rel target = $region3
  $region8: #{ocr_forward.2} parent=0 // loop_exit
    _

// kernel: ocr_forward.3
$region0: #{ocr_forward.3}
  #allocation0 [shape = 'u32[]', space=smem, size = 0x4, offset = 0x4, fixed_abs, tag = 'smem constant byte address 0x4 - core index']
  #allocation1 [shape = 'u32[144,128]{1,0:T(1,128)}', space=vmem, size = 0x12000, scoped, tag = 'internal scratch']
  #allocation2 [shape = 'f32[5,32]{1,0:T(8,128)}', space=vmem, size = 0x1000, scoped, tag = 'scratch operand']
  %s0 = inlined_call_operand.vmem [shape: f32[2,5,32], index: 0, kind: input, shape index: {}]
  %s1 = inlined_call_operand.vmem [shape: f32[2,32,128], index: 1, kind: input, shape index: {}]
  %s2 = inlined_call_operand.vmem [shape: f32[2,2,16,64], index: 2, kind: input, shape index: {}]
  %s3 = inlined_call_operand.vmem [shape: f32[2,1,128], index: 3, kind: input, shape index: {}]
  %s4 = inlined_call_operand.vmem [shape: f32[32,128], index: 4, kind: input, shape index: {}]
  %s5 = inlined_call_operand.vmem [shape: f32[1,128], index: 5, kind: input, shape index: {}]
  %s6 = inlined_call_operand.vmem [shape: f32[2,5,128], index: 6, kind: output, shape index: {0}]
  %s7 = inlined_call_operand.vmem [shape: s32[2,5,128], index: 7, kind: output, shape index: {1}]
  %8 = xla_tuple %s6, %s7
  %s9 = sld [smem:[#allocation0]]
  $region65: #{ocr_forward.3} parent=0
    _
  %s11 = ssub.s32 1, %s9
  %s12 = scalar_select 0, %s11, %s9
  loop: start=0, step=1, limit=4
  $region2: #{ocr_forward.3} parent=0 // loop_pre_header
    _
  $region3: #{ocr_forward.3} parent=0 // loop_header
    %s14 = sphi 0, %s18
    %p15 = scmp.ge.s32.totalorder %s14, 4
    %s24 = sphi 0, %s26
    %s27 = sphi 0, %s24
    %s28 = sphi 0, %s27
    %s44 = sphi 0, %s28
    %s48 = sphi 0, %s48
    %s50 = sphi 0, %s48
    %s51 = sphi 0, %s50
    %s65 = sphi 0, %s51
    %s69 = sphi 0, %s69
    %s71 = sphi 0, %s69
    %s72 = sphi 0, %s71
    %s86 = sphi 0, %s72
    %s90 = sphi 0, %s90
    %s92 = sphi 0, %s90
    %s93 = sphi 0, %s92
    %s107 = sphi 0, %s93
    %s111 = sphi 0, %s111
    %s113 = sphi 0, %s111
    %s114 = sphi 0, %s113
    %s128 = sphi 0, %s114
    %s132 = sphi 0, %s132
    %s134 = sphi 0, %s132
    %s135 = sphi 0, %s134
    %s149 = sphi 0, %s135
    %s155 = sphi 0, %s157
    %s158 = sphi 0, %s155
    %s159 = sphi 0, %s158
    %s175 = sphi 0, %s159
    %s181 = sphi 0, %s183
    %s184 = sphi 0, %s181
    %s185 = sphi 0, %s184
    %s201 = sphi 0, %s185
  $region4: #{ocr_forward.3} parent=0 // loop_header_branch
    %17 = sbr.rel (%p15) target = $region8
  $region5: #{ocr_forward.3} parent=0 // loop_body
    %s19 = ssub.s32 %s14, 1
    %s20 = ssub.s32 %s14, 2
    %s21 = sadd.s32 %s14, 1
    %s22 = ssub.s32 %s14, %s21
    %p23 = scmp.eq.s32.totalorder %s22, 0
    %s25 = sadd.s32 %s24, 1
    %s26 = scalar_select %p23, %s24, %s25
    %p29 = pneg %p23
    %p30 = scmp.eq.s32.totalorder %s14, 1
    %p31 = por %p29, %p30
    %p32 = scmp.ne.s32.totalorder %s24, %s27
    %p33 = scmp.eq.s32.totalorder %s14, 0
    %p34 = por %p32, %p33
    %p35 = scmp.ne.s32.totalorder %s24, %s27
    %p36 = scmp.eq.s32.totalorder %s19, 1
    %p37 = por %p35, %p36
    %p38 = scmp.ne.s32.totalorder %s27, %s28
    %p39 = scmp.eq.s32.totalorder %s19, 0
    %p40 = por %p38, %p39
    %p41 = scmp.ne.s32.totalorder %s27, %s28
    %p42 = scmp.eq.s32.totalorder %s20, 1
    %p43 = por %p41, %p42
    %p45 = scmp.ne.s32.totalorder %s28, %s44
    %p46 = scmp.eq.s32.totalorder %s20, 0
    %p47 = por %p45, %p46
    %s49 = sadd.s32 %s48, 1
    %p52 = scmp.eq.s32.totalorder %s14, 1
    %p53 = scmp.ne.s32.totalorder %s48, %s50
    %p54 = scmp.eq.s32.totalorder %s14, 0
    %p55 = por %p53, %p54
    %p56 = scmp.ne.s32.totalorder %s48, %s50
    %p57 = scmp.eq.s32.totalorder %s19, 1
    %p58 = por %p56, %p57
    %p59 = scmp.ne.s32.totalorder %s50, %s51
    %p60 = scmp.eq.s32.totalorder %s19, 0
    %p61 = por %p59, %p60
    %p62 = scmp.ne.s32.totalorder %s50, %s51
    %p63 = scmp.eq.s32.totalorder %s20, 1
    %p64 = por %p62, %p63
    %p66 = scmp.ne.s32.totalorder %s51, %s65
    %p67 = scmp.eq.s32.totalorder %s20, 0
    %p68 = por %p66, %p67
    %s70 = sadd.s32 %s69, 1
    %p73 = scmp.eq.s32.totalorder %s14, 1
    %p74 = scmp.ne.s32.totalorder %s69, %s71
    %p75 = scmp.eq.s32.totalorder %s14, 0
    %p76 = por %p74, %p75
    %p77 = scmp.ne.s32.totalorder %s69, %s71
    %p78 = scmp.eq.s32.totalorder %s19, 1
    %p79 = por %p77, %p78
    %p80 = scmp.ne.s32.totalorder %s71, %s72
    %p81 = scmp.eq.s32.totalorder %s19, 0
    %p82 = por %p80, %p81
    %p83 = scmp.ne.s32.totalorder %s71, %s72
    %p84 = scmp.eq.s32.totalorder %s20, 1
    %p85 = por %p83, %p84
    %p87 = scmp.ne.s32.totalorder %s72, %s86
    %p88 = scmp.eq.s32.totalorder %s20, 0
    %p89 = por %p87, %p88
    %s91 = sadd.s32 %s90, 1
    %p94 = scmp.eq.s32.totalorder %s14, 1
    %p95 = scmp.ne.s32.totalorder %s90, %s92
    %p96 = scmp.eq.s32.totalorder %s14, 0
    %p97 = por %p95, %p96
    %p98 = scmp.ne.s32.totalorder %s90, %s92
    %p99 = scmp.eq.s32.totalorder %s19, 1
    %p100 = por %p98, %p99
    %p101 = scmp.ne.s32.totalorder %s92, %s93
    %p102 = scmp.eq.s32.totalorder %s19, 0
    %p103 = por %p101, %p102
    %p104 = scmp.ne.s32.totalorder %s92, %s93
    %p105 = scmp.eq.s32.totalorder %s20, 1
    %p106 = por %p104, %p105
    %p108 = scmp.ne.s32.totalorder %s93, %s107
    %p109 = scmp.eq.s32.totalorder %s20, 0
    %p110 = por %p108, %p109
    %s112 = sadd.s32 %s111, 1
    %p115 = scmp.eq.s32.totalorder %s14, 1
    %p116 = scmp.ne.s32.totalorder %s111, %s113
    %p117 = scmp.eq.s32.totalorder %s14, 0
    %p118 = por %p116, %p117
    %p119 = scmp.ne.s32.totalorder %s111, %s113
    %p120 = scmp.eq.s32.totalorder %s19, 1
    %p121 = por %p119, %p120
    %p122 = scmp.ne.s32.totalorder %s113, %s114
    %p123 = scmp.eq.s32.totalorder %s19, 0
    %p124 = por %p122, %p123
    %p125 = scmp.ne.s32.totalorder %s113, %s114
    %p126 = scmp.eq.s32.totalorder %s20, 1
    %p127 = por %p125, %p126
    %p129 = scmp.ne.s32.totalorder %s114, %s128
    %p130 = scmp.eq.s32.totalorder %s20, 0
    %p131 = por %p129, %p130
    %s133 = sadd.s32 %s132, 1
    %p136 = scmp.eq.s32.totalorder %s14, 1
    %p137 = scmp.ne.s32.totalorder %s132, %s134
    %p138 = scmp.eq.s32.totalorder %s14, 0
    %p139 = por %p137, %p138
    %p140 = scmp.ne.s32.totalorder %s132, %s134
    %p141 = scmp.eq.s32.totalorder %s19, 1
    %p142 = por %p140, %p141
    %p143 = scmp.ne.s32.totalorder %s134, %s135
    %p144 = scmp.eq.s32.totalorder %s19, 0
    %p145 = por %p143, %p144
    %p146 = scmp.ne.s32.totalorder %s134, %s135
    %p147 = scmp.eq.s32.totalorder %s20, 1
    %p148 = por %p146, %p147
    %p150 = scmp.ne.s32.totalorder %s135, %s149
    %p151 = scmp.eq.s32.totalorder %s20, 0
    %p152 = por %p150, %p151
    %s153 = ssub.s32 %s14, %s21
    %p154 = scmp.eq.s32.totalorder %s153, 0
    %s156 = sadd.s32 %s155, 1
    %s157 = scalar_select %p154, %s155, %s156
    %p160 = pneg %p154
    %p161 = scmp.eq.s32.totalorder %s14, 1
    %p162 = por %p160, %p161
    %p163 = scmp.ne.s32.totalorder %s155, %s158
    %p164 = scmp.eq.s32.totalorder %s14, 0
    %p165 = por %p163, %p164
    %p166 = scmp.ne.s32.totalorder %s155, %s158
    %p167 = scmp.eq.s32.totalorder %s19, 1
    %p168 = por %p166, %p167
    %p169 = scmp.ne.s32.totalorder %s158, %s159
    %p170 = scmp.eq.s32.totalorder %s19, 0
    %p171 = por %p169, %p170
    %p172 = scmp.ne.s32.totalorder %s158, %s159
    %p173 = scmp.eq.s32.totalorder %s20, 1
    %p174 = por %p172, %p173
    %p176 = scmp.ne.s32.totalorder %s159, %s175
    %p177 = scmp.eq.s32.totalorder %s20, 0
    %p178 = por %p176, %p177
    %s179 = ssub.s32 %s14, %s21
    %p180 = scmp.eq.s32.totalorder %s179, 0
    %s182 = sadd.s32 %s181, 1
    %s183 = scalar_select %p180, %s181, %s182
    %p186 = pneg %p180
    %p187 = scmp.eq.s32.totalorder %s14, 1
    %p188 = por %p186, %p187
    %p189 = scmp.ne.s32.totalorder %s181, %s184
    %p190 = scmp.eq.s32.totalorder %s14, 0
    %p191 = por %p189, %p190
    %p192 = scmp.ne.s32.totalorder %s181, %s184
    %p193 = scmp.eq.s32.totalorder %s19, 1
    %p194 = por %p192, %p193
    %p195 = scmp.ne.s32.totalorder %s184, %s185
    %p196 = scmp.eq.s32.totalorder %s19, 0
    %p197 = por %p195, %p196
    %p198 = scmp.ne.s32.totalorder %s184, %s185
    %p199 = scmp.eq.s32.totalorder %s20, 1
    %p200 = por %p198, %p199
    %p202 = scmp.ne.s32.totalorder %s185, %s201
    %p203 = scmp.eq.s32.totalorder %s20, 0
    %p204 = por %p202, %p203
    %p205 = scmp.le.s32.totalorder 1, %s14
    %p206 = scmp.lt.s32.totalorder %s14, 3
    %p207 = pnand %p205, %p206
    %p208 = pneg %p207
    // Predicated region
    $region9: #{ocr_forward.3} parent=5 // pred_check
      _
    $region10: #{ocr_forward.3} parent=5 // pred_check_branch
      %210 = sbr.rel (%p207) target = $region12
    $region11: #{ocr_forward.3} parent=5 // pred_region
      %s211 = ssub.s32 %s14, 1
      // Predicated region
      $region13: #{ocr_forward.3} parent=11 // pred_check
        %p212 = pneg %p61
      $region14: #{ocr_forward.3} parent=11 // pred_check_branch
        %214 = sbr.rel (%p212) target = $region16
      $region15: #{ocr_forward.3} parent=11 // pred_region
        _
      $region16: #{ocr_forward.3} parent=11 // pred_fallthru
        _
      // Predicated region
      $region17: #{ocr_forward.3} parent=11 // pred_check
        %p215 = pneg %p82
      $region18: #{ocr_forward.3} parent=11 // pred_check_branch
        %217 = sbr.rel (%p215) target = $region20
      $region19: #{ocr_forward.3} parent=11 // pred_region
        _
      $region20: #{ocr_forward.3} parent=11 // pred_fallthru
        _
      // Predicated region
      $region21: #{ocr_forward.3} parent=11 // pred_check
        %p218 = pneg %p103
      $region22: #{ocr_forward.3} parent=11 // pred_check_branch
        %220 = sbr.rel (%p218) target = $region24
      $region23: #{ocr_forward.3} parent=11 // pred_region
        _
      $region24: #{ocr_forward.3} parent=11 // pred_fallthru
        _
      // Predicated region
      $region25: #{ocr_forward.3} parent=11 // pred_check
        %p221 = pneg %p124
      $region26: #{ocr_forward.3} parent=11 // pred_check_branch
        %223 = sbr.rel (%p221) target = $region28
      $region27: #{ocr_forward.3} parent=11 // pred_region
        _
      $region28: #{ocr_forward.3} parent=11 // pred_fallthru
        _
      // Predicated region
      $region29: #{ocr_forward.3} parent=11 // pred_check
        %p224 = pneg %p145
      $region30: #{ocr_forward.3} parent=11 // pred_check_branch
        %226 = sbr.rel (%p224) target = $region32
      $region31: #{ocr_forward.3} parent=11 // pred_region
        _
      $region32: #{ocr_forward.3} parent=11 // pred_fallthru
        _
    $region12: #{ocr_forward.3} parent=5 // pred_fallthru
      _
    %p227 = scmp.lt.s32.totalorder %s14, 2
    // Predicated region
    $region33: #{ocr_forward.3} parent=5 // pred_check
      %p228 = pneg %p227
    $region34: #{ocr_forward.3} parent=5 // pred_check_branch
      %230 = sbr.rel (%p228) target = $region36
    $region35: #{ocr_forward.3} parent=5 // pred_region
      // Predicated region
      $region37: #{ocr_forward.3} parent=35 // pred_check
        %p231 = pneg %p34
      $region38: #{ocr_forward.3} parent=35 // pred_check_branch
        %233 = sbr.rel (%p231) target = $region40
      $region39: #{ocr_forward.3} parent=35 // pred_region
        %p234 = scmp.lt.s32.totalorder %s14, 1
        %s235 = scalar_select %p234, %s14, 1
        %s236 = smul.addr %s235, 8
        %s237 = scalar_lea.vmem %s0, %s236
      $region40: #{ocr_forward.3} parent=35 // pred_fallthru
        _
    $region36: #{ocr_forward.3} parent=5 // pred_fallthru
      _
    %p238 = scmp.le.s32.totalorder 1, %s14
    %p239 = scmp.lt.s32.totalorder %s14, 3
    %p240 = pnand %p238, %p239
    %p241 = pneg %p240
    // Predicated region
    $region41: #{ocr_forward.3} parent=5 // pred_check
      _
    $region42: #{ocr_forward.3} parent=5 // pred_check_branch
      %243 = sbr.rel (%p240) target = $region44
    $region43: #{ocr_forward.3} parent=5 // pred_region
      %s244 = ssub.s32 %s14, 1
      %p245 = scmp.lt.s32.totalorder %s19, 1
      %s246 = scalar_select %p245, %s19, 1
      %s247 = smul.addr %s246, 8
      %s248 = scalar_lea.vmem %s0, %s247
      %p249 = pneg %p40
      %p250 = pneg %p37
      %p251 = pneg %p61
      %p252 = pneg %p58
      %p253 = pneg %p82
      %p254 = pneg %p79
      %p255 = pneg %p103
      %p256 = pneg %p100
      %p257 = pneg %p124
      %p258 = pneg %p121
      %p259 = pneg %p145
      %p260 = pneg %p142
      %p261 = pneg %p171
      %p262 = pneg %p168
      %p263 = scmp.lt.s32.totalorder %s19, 1
      %s264 = scalar_select %p263, %s19, 1
      %s265 = smul.addr %s264, 8
      %s266 = scalar_lea.vmem %s6, %s265
      %p267 = pneg %p197
      %p268 = pneg %p194
      %p269 = scmp.lt.s32.totalorder %s19, 1
      %s270 = scalar_select %p269, %s19, 1
      %s271 = smul.addr %s270, 8
      %s272 = scalar_lea.vmem %s7, %s271
      %p273 = scmp.lt.s32.totalorder %s19, 1
      %s274 = scalar_select %p273, %s19, 1
      %s275 = smul.addr %s274, 8
      %s276 = scalar_lea.vmem %s0, %s275
      %p277 = scmp.lt.s32.totalorder %s19, 1
      %s278 = scalar_select %p277, %s19, 1
      %s279 = smul.addr %s278, 8
      %s280 = scalar_lea.vmem %s6, %s279
      %p281 = scmp.lt.s32.totalorder %s19, 1
      %s282 = scalar_select %p281, %s19, 1
      %s283 = smul.addr %s282, 8
      %s284 = scalar_lea.vmem %s7, %s283
      %v285 = vld [vmem:[%s276] sm:$0x1f]
      %v286 = vld [vmem:[%s1] sm:$0xff]
      %v287 = vld [vmem:[%s1 + $0x8] sm:$0xff]
      %v288 = vld [vmem:[%s1 + $0x10] sm:$0xff]
      %v289 = vld [vmem:[%s1 + $0x18] sm:$0xff]
      %v290 = vld [vmem:[%s3] sm:$0x1]
      %v292 = vlaneseq
      %v293 = vshrl.u32 %v292, 7
      %v294 = vsub.s32 0, %v293
      %v295 = vrot.slane %v290, %v294
      %vm297 = vcmask 261120
      %v299 = vsel %vm297, %v285, 0
      %301 = vmatprep.subr.mxu0 0.0
      %302 = vmatpush1.msra.mxu0 %v286
      %303 = vmatprep.subr.mxu0 0.0
      %304 = vmatpush1.msra.mxu0 %v287
      %305 = vmatprep.subr.mxu0 0.0
      %306 = vmatpush1.msra.mxu0 %v288
      %307 = vmatprep.subr.mxu0 0.0
      %308 = vmatpush1.msra.mxu0 %v289
      %309 = vmatprep.subr.mxu0 0.0
      %310 = vmatpush1.msra.mxu0 0.0
      %311 = vmatprep.subr.mxu0 0.0
      %312 = vmatpush1.msra.mxu0 0.0
      %313 = vmatprep.subr.mxu0 0.0
      %314 = vmatpush1.msra.mxu0 0.0
      %315 = vmatprep.subr.mxu0 0.0
      %316 = vmatpush1.msra.mxu0 0.0
      %317 = vmatprep.subr.mxu0 0.0
      %318 = vmatpush1.msra.mxu0 0.0
      %319 = vmatprep.subr.mxu0 0.0
      %320 = vmatpush1.msra.mxu0 0.0
      %321 = vmatprep.subr.mxu0 0.0
      %322 = vmatpush1.msra.mxu0 0.0
      %323 = vmatprep.subr.mxu0 0.0
      %324 = vmatpush1.msra.mxu0 0.0
      %325 = vmatprep.subr.mxu0 0.0
      %326 = vmatpush1.msra.mxu0 0.0
      %327 = vmatprep.subr.mxu0 0.0
      %328 = vmatpush1.msra.mxu0 0.0
      %329 = vmatprep.subr.mxu0 0.0
      %330 = vmatpush1.msra.mxu0 0.0
      %331 = vmatprep.subr.mxu0 0.0
      %332 = vmatpush1.msra.mxu0 0.0
      %333 = vmatprep.subr.mxu0 0.0
      %334 = vmatpush1.msra.mxu0 0.0
      %335 = vmatprep.subr.mxu0 0.0
      %336 = vmatpush1.msra.mxu0 0.0
      %337 = vmatprep.subr.mxu0 0.0
      %338 = vmatpush1.msra.mxu0 0.0
      %339 = vmatprep.subr.mxu0 0.0
      %340 = vmatpush1.msra.mxu0 0.0
      %341 = vmatprep.subr.mxu0 0.0
      %342 = vmatpush1.msra.mxu0 0.0
      %343 = vmatprep.subr.mxu0 0.0
      %344 = vmatpush1.msra.mxu0 0.0
      %345 = vmatprep.subr.mxu0 0.0
      %346 = vmatpush1.msra.mxu0 0.0
      %347 = vmatprep.subr.mxu0 0.0
      %348 = vmatpush1.msra.mxu0 0.0
      %349 = vmatprep.subr.mxu0 0.0
      %350 = vmatpush1.msra.mxu0 0.0
      %351 = vmatprep.subr.mxu0 0.0
      %352 = vmatpush1.msra.mxu0 0.0
      %353 = vmatprep.subr.mxu0 0.0
      %354 = vmatpush1.msra.mxu0 0.0
      %355 = vmatprep.subr.mxu0 0.0
      %356 = vmatpush1.msra.mxu0 0.0
      %357 = vmatprep.subr.mxu0 0.0
      %358 = vmatpush1.msra.mxu0 0.0
      %359 = vmatprep.subr.mxu0 0.0
      %360 = vmatpush1.msra.mxu0 0.0
      %361 = vmatprep.subr.mxu0 0.0
      %362 = vmatpush1.msra.mxu0 0.0
      %363 = vmatprep.subr.mxu0 0.0
      %364 = vmatpush1.msra.mxu0 0.0
      %365 = vmatprep.mubr.f32.mxu0 0.0
      %366 = vmatmul.mubr.f32.gmra.mrb[0].mxu0 %v299
      %v367 = vpop.f32.mrb[0].mxu0
      %v368 = vadd.f32 %v295, %v367
      %v369 = vpop.f32.mrb[0].mxu0
      %370 = vdwg.mxu0
      %v371 = vld [vmem:[%s2] sm:$0xff]
      %v372 = vld [vmem:[%s2 + $0x8] sm:$0xff]
      %s373 = scalar_lea.vmem %s2, 16
      %v374 = vld [vmem:[%s373] sm:$0xff]
      %v375 = vld [vmem:[%s373 + $0x8] sm:$0xff]
      %vm376 = vcmask 130048
      %v378 = vsel %vm376, 0.0, 0
      %380 = vmatprep.subr.mxu0 0.0
      %381 = vmatpush1.msra.mxu0 %v371
      %382 = vmatprep.subr.mxu0 0.0
      %383 = vmatpush1.msra.mxu0 %v372
      %384 = vmatprep.subr.mxu0 0.0
      %385 = vmatpush1.msra.mxu0 0.0
      %386 = vmatprep.subr.mxu0 0.0
      %387 = vmatpush1.msra.mxu0 0.0
      %388 = vmatprep.subr.mxu0 0.0
      %389 = vmatpush1.msra.mxu0 0.0
      %390 = vmatprep.subr.mxu0 0.0
      %391 = vmatpush1.msra.mxu0 0.0
      %392 = vmatprep.subr.mxu0 0.0
      %393 = vmatpush1.msra.mxu0 0.0
      %394 = vmatprep.subr.mxu0 0.0
      %395 = vmatpush1.msra.mxu0 0.0
      %396 = vmatprep.subr.mxu0 0.0
      %397 = vmatpush1.msra.mxu0 0.0
      %398 = vmatprep.subr.mxu0 0.0
      %399 = vmatpush1.msra.mxu0 0.0
      %400 = vmatprep.subr.mxu0 0.0
      %401 = vmatpush1.msra.mxu0 0.0
      %402 = vmatprep.subr.mxu0 0.0
      %403 = vmatpush1.msra.mxu0 0.0
      %404 = vmatprep.subr.mxu0 0.0
      %405 = vmatpush1.msra.mxu0 0.0
      %406 = vmatprep.subr.mxu0 0.0
      %407 = vmatpush1.msra.mxu0 0.0
      %408 = vmatprep.subr.mxu0 0.0
      %409 = vmatpush1.msra.mxu0 0.0
      %410 = vmatprep.subr.mxu0 0.0
      %411 = vmatpush1.msra.mxu0 0.0
      %412 = vmatprep.subr.mxu0 0.0
      %413 = vmatpush1.msra.mxu0 0.0
      %414 = vmatprep.subr.mxu0 0.0
      %415 = vmatpush1.msra.mxu0 0.0
      %416 = vmatprep.subr.mxu0 0.0
      %417 = vmatpush1.msra.mxu0 0.0
      %418 = vmatprep.subr.mxu0 0.0
      %419 = vmatpush1.msra.mxu0 0.0
      %420 = vmatprep.subr.mxu0 0.0
      %421 = vmatpush1.msra.mxu0 0.0
      %422 = vmatprep.subr.mxu0 0.0
      %423 = vmatpush1.msra.mxu0 0.0
      %424 = vmatprep.subr.mxu0 0.0
      %425 = vmatpush1.msra.mxu0 0.0
      %426 = vmatprep.subr.mxu0 0.0
      %427 = vmatpush1.msra.mxu0 0.0
      %428 = vmatprep.subr.mxu0 0.0
      %429 = vmatpush1.msra.mxu0 0.0
      %430 = vmatprep.subr.mxu0 0.0
      %431 = vmatpush1.msra.mxu0 0.0
      %432 = vmatprep.subr.mxu0 0.0
      %433 = vmatpush1.msra.mxu0 0.0
      %434 = vmatprep.subr.mxu0 0.0
      %435 = vmatpush1.msra.mxu0 0.0
      %436 = vmatprep.subr.mxu0 0.0
      %437 = vmatpush1.msra.mxu0 0.0
      %438 = vmatprep.subr.mxu0 0.0
      %439 = vmatpush1.msra.mxu0 0.0
      %440 = vmatprep.subr.mxu0 0.0
      %441 = vmatpush1.msra.mxu0 0.0
      %442 = vmatprep.subr.mxu0 0.0
      %443 = vmatpush1.msra.mxu0 0.0
      %444 = vmatprep.mubr.f32.mxu0 0.0
      %445 = vmatmul.mubr.f32.gmra.mrb[0].mxu0 %v378
      %v446 = vpop.f32.mrb[0].mxu0
      %v447 = vadd.f32 0.0, %v446
      %v448 = vpop.f32.mrb[0].mxu0
      %449 = vdwg.mxu0
      %v450 = vadd.f32 %v368, %v447
      %v451 = vsub.f32 0.0, %v450
      %v452 = vmul.f32 %v451, 1.442695
      %v453 = vpow.pop %v452
      %v454 = vadd.f32 %v453, 1.0
      %v455 = vrcp.pop %v454
      %v456 = vmul.f32 1.0, %v455
      %v457 = vtanh.pop %v450
      %v458 = vmul.f32 %v456, 0.0
      %460 = vrot.lane.b32.xlu0 %v457, 96
      %v461 = vpop.permute.xlu0 %460
      %v463 = vmul.f32 %v456, %v461
      %465 = vrot.lane.b32.xlu0 %v463, 16
      %v466 = vpop.permute.xlu0 %465
      %v468 = vadd.f32 %v458, %v466
      %v469 = vtanh.pop %v468
      %471 = vrot.lane.b32.xlu0 %v469, 32
      %v472 = vpop.permute.xlu0 %471
      %v474 = vmul.f32 %v456, %v472
      %476 = vrot.lane.b32.xlu0 %v474, 80
      %v477 = vpop.permute.xlu0 %476
      %vm479 = vcmask 122880
      %480 = vst.msk [vmem:[#allocation2] sm:$0x1] %vm479, %v477
      %v481 = vsel %vm376, %v477, 0
      %483 = vmatprep.subr.mxu0 0.0
      %484 = vmatpush1.msra.mxu0 %v371
      %485 = vmatprep.subr.mxu0 0.0
      %486 = vmatpush1.msra.mxu0 %v372
      %487 = vmatprep.subr.mxu0 0.0
      %488 = vmatpush1.msra.mxu0 0.0
      %489 = vmatprep.subr.mxu0 0.0
      %490 = vmatpush1.msra.mxu0 0.0
      %491 = vmatprep.subr.mxu0 0.0
      %492 = vmatpush1.msra.mxu0 0.0
      %493 = vmatprep.subr.mxu0 0.0
      %494 = vmatpush1.msra.mxu0 0.0
      %495 = vmatprep.subr.mxu0 0.0
      %496 = vmatpush1.msra.mxu0 0.0
      %497 = vmatprep.subr.mxu0 0.0
      %498 = vmatpush1.msra.mxu0 0.0
      %499 = vmatprep.subr.mxu0 0.0
      %500 = vmatpush1.msra.mxu0 0.0
      %501 = vmatprep.subr.mxu0 0.0
      %502 = vmatpush1.msra.mxu0 0.0
      %503 = vmatprep.subr.mxu0 0.0
      %504 = vmatpush1.msra.mxu0 0.0
      %505 = vmatprep.subr.mxu0 0.0
      %506 = vmatpush1.msra.mxu0 0.0
      %507 = vmatprep.subr.mxu0 0.0
      %508 = vmatpush1.msra.mxu0 0.0
      %509 = vmatprep.subr.mxu0 0.0
      %510 = vmatpush1.msra.mxu0 0.0
      %511 = vmatprep.subr.mxu0 0.0
      %512 = vmatpush1.msra.mxu0 0.0
      %513 = vmatprep.subr.mxu0 0.0
      %514 = vmatpush1.msra.mxu0 0.0
      %515 = vmatprep.subr.mxu0 0.0
      %516 = vmatpush1.msra.mxu0 0.0
      %517 = vmatprep.subr.mxu0 0.0
      %518 = vmatpush1.msra.mxu0 0.0
      %519 = vmatprep.subr.mxu0 0.0
      %520 = vmatpush1.msra.mxu0 0.0
      %521 = vmatprep.subr.mxu0 0.0
      %522 = vmatpush1.msra.mxu0 0.0
      %523 = vmatprep.subr.mxu0 0.0
      %524 = vmatpush1.msra.mxu0 0.0
      %525 = vmatprep.subr.mxu0 0.0
      %526 = vmatpush1.msra.mxu0 0.0
      %527 = vmatprep.subr.mxu0 0.0
      %528 = vmatpush1.msra.mxu0 0.0
      %529 = vmatprep.subr.mxu0 0.0
      %530 = vmatpush1.msra.mxu0 0.0
      %531 = vmatprep.subr.mxu0 0.0
      %532 = vmatpush1.msra.mxu0 0.0
      %533 = vmatprep.subr.mxu0 0.0
      %534 = vmatpush1.msra.mxu0 0.0
      %535 = vmatprep.subr.mxu0 0.0
      %536 = vmatpush1.msra.mxu0 0.0
      %537 = vmatprep.subr.mxu0 0.0
      %538 = vmatpush1.msra.mxu0 0.0
      %539 = vmatprep.subr.mxu0 0.0
      %540 = vmatpush1.msra.mxu0 0.0
      %541 = vmatprep.subr.mxu0 0.0
      %542 = vmatpush1.msra.mxu0 0.0
      %543 = vmatprep.subr.mxu0 0.0
      %544 = vmatpush1.msra.mxu0 0.0
      %545 = vmatprep.subr.mxu0 0.0
      %546 = vmatpush1.msra.mxu0 0.0
      %547 = vmatprep.mubr.f32.mxu0 0.0
      %548 = vmatmul.mubr.f32.gmra.mrb[0].mxu0 %v481
      %v549 = vpop.f32.mrb[0].mxu0
      %v550 = vadd.f32 0.0, %v549
      %v551 = vpop.f32.mrb[0].mxu0
      %552 = vdwg.mxu0
      %v554 = vrot.slane %v550, 7
      %v556 = vadd.f32 %v368, %v554
      %v557 = vsub.f32 0.0, %v556
      %v558 = vmul.f32 %v557, 1.442695
      %v559 = vpow.pop %v558
      %v560 = vadd.f32 %v559, 1.0
      %v561 = vrcp.pop %v560
      %v562 = vmul.f32 1.0, %v561
      %v563 = vtanh.pop %v556
      %v565 = vrot.slane %v468, 7
      %v567 = vmul.f32 %v562, %v565
      %569 = vrot.lane.b32.xlu0 %v563, 96
      %v570 = vpop.permute.xlu0 %569
      %v572 = vmul.f32 %v562, %v570
      %574 = vrot.lane.b32.xlu0 %v572, 16
      %v575 = vpop.permute.xlu0 %574
      %v577 = vadd.f32 %v567, %v575
      %v578 = vtanh.pop %v577
      %580 = vrot.lane.b32.xlu0 %v578, 32
      %v581 = vpop.permute.xlu0 %580
      %v583 = vmul.f32 %v562, %v581
      %585 = vrot.lane.b32.xlu0 %v583, 80
      %v586 = vpop.permute.xlu0 %585
      %vm588 = vcmask 123905
      %589 = vst.msk [vmem:[#allocation2] sm:$0x2] %vm588, %v586
      %v590 = vrot.slane %v583, 1
      %591 = vrot.lane.b32.xlu0 %v590, 80
      %v592 = vpop.permute.xlu0 %591
      %v593 = vsel %vm376, %v592, 0
      %595 = vmatprep.subr.mxu0 0.0
      %596 = vmatpush1.msra.mxu0 %v371
      %597 = vmatprep.subr.mxu0 0.0
      %598 = vmatpush1.msra.mxu0 %v372
      %599 = vmatprep.subr.mxu0 0.0
      %600 = vmatpush1.msra.mxu0 0.0
      %601 = vmatprep.subr.mxu0 0.0
      %602 = vmatpush1.msra.mxu0 0.0
      %603 = vmatprep.subr.mxu0 0.0
      %604 = vmatpush1.msra.mxu0 0.0
      %605 = vmatprep.subr.mxu0 0.0
      %606 = vmatpush1.msra.mxu0 0.0
      %607 = vmatprep.subr.mxu0 0.0
      %608 = vmatpush1.msra.mxu0 0.0
      %609 = vmatprep.subr.mxu0 0.0
      %610 = vmatpush1.msra.mxu0 0.0
      %611 = vmatprep.subr.mxu0 0.0
      %612 = vmatpush1.msra.mxu0 0.0
      %613 = vmatprep.subr.mxu0 0.0
      %614 = vmatpush1.msra.mxu0 0.0
      %615 = vmatprep.subr.mxu0 0.0
      %616 = vmatpush1.msra.mxu0 0.0
      %617 = vmatprep.subr.mxu0 0.0
      %618 = vmatpush1.msra.mxu0 0.0
      %619 = vmatprep.subr.mxu0 0.0
      %620 = vmatpush1.msra.mxu0 0.0
      %621 = vmatprep.subr.mxu0 0.0
      %622 = vmatpush1.msra.mxu0 0.0
      %623 = vmatprep.subr.mxu0 0.0
      %624 = vmatpush1.msra.mxu0 0.0
      %625 = vmatprep.subr.mxu0 0.0
      %626 = vmatpush1.msra.mxu0 0.0
      %627 = vmatprep.subr.mxu0 0.0
      %628 = vmatpush1.msra.mxu0 0.0
      %629 = vmatprep.subr.mxu0 0.0
      %630 = vmatpush1.msra.mxu0 0.0
      %631 = vmatprep.subr.mxu0 0.0
      %632 = vmatpush1.msra.mxu0 0.0
      %633 = vmatprep.subr.mxu0 0.0
      %634 = vmatpush1.msra.mxu0 0.0
      %635 = vmatprep.subr.mxu0 0.0
      %636 = vmatpush1.msra.mxu0 0.0
      %637 = vmatprep.subr.mxu0 0.0
      %638 = vmatpush1.msra.mxu0 0.0
      %639 = vmatprep.subr.mxu0 0.0
      %640 = vmatpush1.msra.mxu0 0.0
      %641 = vmatprep.subr.mxu0 0.0
      %642 = vmatpush1.msra.mxu0 0.0
      %643 = vmatprep.subr.mxu0 0.0
      %644 = vmatpush1.msra.mxu0 0.0
      %645 = vmatprep.subr.mxu0 0.0
      %646 = vmatpush1.msra.mxu0 0.0
      %647 = vmatprep.subr.mxu0 0.0
      %648 = vmatpush1.msra.mxu0 0.0
      %649 = vmatprep.subr.mxu0 0.0
      %650 = vmatpush1.msra.mxu0 0.0
      %651 = vmatprep.subr.mxu0 0.0
      %652 = vmatpush1.msra.mxu0 0.0
      %653 = vmatprep.subr.mxu0 0.0
      %654 = vmatpush1.msra.mxu0 0.0
      %655 = vmatprep.subr.mxu0 0.0
      %656 = vmatpush1.msra.mxu0 0.0
      %657 = vmatprep.subr.mxu0 0.0
      %658 = vmatpush1.msra.mxu0 0.0
      %659 = vmatprep.mubr.f32.mxu0 0.0
      %660 = vmatmul.mubr.f32.gmra.mrb[0].mxu0 %v593
      %v661 = vpop.f32.mrb[0].mxu0
      %v662 = vadd.f32 0.0, %v661
      %v663 = vpop.f32.mrb[0].mxu0
      %664 = vdwg.mxu0
      %v666 = vrot.slane %v662, 6
      %v668 = vadd.f32 %v368, %v666
      %v669 = vsub.f32 0.0, %v668
      %v670 = vmul.f32 %v669, 1.442695
      %v671 = vpow.pop %v670
      %v672 = vadd.f32 %v671, 1.0
      %v673 = vrcp.pop %v672
      %v674 = vmul.f32 1.0, %v673
      %v675 = vtanh.pop %v668
      %v677 = vrot.slane %v577, 7
      %v679 = vmul.f32 %v674, %v677
      %681 = vrot.lane.b32.xlu0 %v675, 96
      %v682 = vpop.permute.xlu0 %681
      %v684 = vmul.f32 %v674, %v682
      %686 = vrot.lane.b32.xlu0 %v684, 16
      %v687 = vpop.permute.xlu0 %686
      %v689 = vadd.f32 %v679, %v687
      %v690 = vtanh.pop %v689
      %692 = vrot.lane.b32.xlu0 %v690, 32
      %v693 = vpop.permute.xlu0 %692
      %v695 = vmul.f32 %v674, %v693
      %697 = vrot.lane.b32.xlu0 %v695, 80
      %v698 = vpop.permute.xlu0 %697
      %vm700 = vcmask 124930
      %701 = vst.msk [vmem:[#allocation2] sm:$0x4] %vm700, %v698
      %v702 = vrot.slane %v695, 2
      %703 = vrot.lane.b32.xlu0 %v702, 80
      %v704 = vpop.permute.xlu0 %703
      %v705 = vsel %vm376, %v704, 0
      %707 = vmatprep.subr.mxu0 0.0
      %708 = vmatpush1.msra.mxu0 %v371
      %709 = vmatprep.subr.mxu0 0.0
      %710 = vmatpush1.msra.mxu0 %v372
      %711 = vmatprep.subr.mxu0 0.0
      %712 = vmatpush1.msra.mxu0 0.0
      %713 = vmatprep.subr.mxu0 0.0
      %714 = vmatpush1.msra.mxu0 0.0
      %715 = vmatprep.subr.mxu0 0.0
      %716 = vmatpush1.msra.mxu0 0.0
      %717 = vmatprep.subr.mxu0 0.0
      %718 = vmatpush1.msra.mxu0 0.0
      %719 = vmatprep.subr.mxu0 0.0
      %720 = vmatpush1.msra.mxu0 0.0
      %721 = vmatprep.subr.mxu0 0.0
      %722 = vmatpush1.msra.mxu0 0.0
      %723 = vmatprep.subr.mxu0 0.0
      %724 = vmatpush1.msra.mxu0 0.0
      %725 = vmatprep.subr.mxu0 0.0
      %726 = vmatpush1.msra.mxu0 0.0
      %727 = vmatprep.subr.mxu0 0.0
      %728 = vmatpush1.msra.mxu0 0.0
      %729 = vmatprep.subr.mxu0 0.0
      %730 = vmatpush1.msra.mxu0 0.0
      %731 = vmatprep.subr.mxu0 0.0
      %732 = vmatpush1.msra.mxu0 0.0
      %733 = vmatprep.subr.mxu0 0.0
      %734 = vmatpush1.msra.mxu0 0.0
      %735 = vmatprep.subr.mxu0 0.0
      %736 = vmatpush1.msra.mxu0 0.0
      %737 = vmatprep.subr.mxu0 0.0
      %738 = vmatpush1.msra.mxu0 0.0
      %739 = vmatprep.subr.mxu0 0.0
      %740 = vmatpush1.msra.mxu0 0.0
      %741 = vmatprep.subr.mxu0 0.0
      %742 = vmatpush1.msra.mxu0 0.0
      %743 = vmatprep.subr.mxu0 0.0
      %744 = vmatpush1.msra.mxu0 0.0
      %745 = vmatprep.subr.mxu0 0.0
      %746 = vmatpush1.msra.mxu0 0.0
      %747 = vmatprep.subr.mxu0 0.0
      %748 = vmatpush1.msra.mxu0 0.0
      %749 = vmatprep.subr.mxu0 0.0
      %750 = vmatpush1.msra.mxu0 0.0
      %751 = vmatprep.subr.mxu0 0.0
      %752 = vmatpush1.msra.mxu0 0.0
      %753 = vmatprep.subr.mxu0 0.0
      %754 = vmatpush1.msra.mxu0 0.0
      %755 = vmatprep.subr.mxu0 0.0
      %756 = vmatpush1.msra.mxu0 0.0
      %757 = vmatprep.subr.mxu0 0.0
      %758 = vmatpush1.msra.mxu0 0.0
      %759 = vmatprep.subr.mxu0 0.0
      %760 = vmatpush1.msra.mxu0 0.0
      %761 = vmatprep.subr.mxu0 0.0
      %762 = vmatpush1.msra.mxu0 0.0
      %763 = vmatprep.subr.mxu0 0.0
      %764 = vmatpush1.msra.mxu0 0.0
      %765 = vmatprep.subr.mxu0 0.0
      %766 = vmatpush1.msra.mxu0 0.0
      %767 = vmatprep.subr.mxu0 0.0
      %768 = vmatpush1.msra.mxu0 0.0
      %769 = vmatprep.subr.mxu0 0.0
      %770 = vmatpush1.msra.mxu0 0.0
      %771 = vmatprep.mubr.f32.mxu0 0.0
      %772 = vmatmul.mubr.f32.gmra.mrb[0].mxu0 %v705
      %v773 = vpop.f32.mrb[0].mxu0
      %v774 = vadd.f32 0.0, %v773
      %v775 = vpop.f32.mrb[0].mxu0
      %776 = vdwg.mxu0
      %v778 = vrot.slane %v774, 5
      %v780 = vadd.f32 %v368, %v778
      %v781 = vsub.f32 0.0, %v780
      %v782 = vmul.f32 %v781, 1.442695
      %v783 = vpow.pop %v782
      %v784 = vadd.f32 %v783, 1.0
      %v785 = vrcp.pop %v784
      %v786 = vmul.f32 1.0, %v785
      %v787 = vtanh.pop %v780
      %v789 = vrot.slane %v689, 7
      %v791 = vmul.f32 %v786, %v789
      %793 = vrot.lane.b32.xlu0 %v787, 96
      %v794 = vpop.permute.xlu0 %793
      %v796 = vmul.f32 %v786, %v794
      %798 = vrot.lane.b32.xlu0 %v796, 16
      %v799 = vpop.permute.xlu0 %798
      %v801 = vadd.f32 %v791, %v799
      %v802 = vtanh.pop %v801
      %804 = vrot.lane.b32.xlu0 %v802, 32
      %v805 = vpop.permute.xlu0 %804
      %v807 = vmul.f32 %v786, %v805
      %809 = vrot.lane.b32.xlu0 %v807, 80
      %v810 = vpop.permute.xlu0 %809
      %vm812 = vcmask 125955
      %813 = vst.msk [vmem:[#allocation2] sm:$0x8] %vm812, %v810
      %v814 = vrot.slane %v807, 3
      %815 = vrot.lane.b32.xlu0 %v814, 80
      %v816 = vpop.permute.xlu0 %815
      %v817 = vsel %vm376, %v816, 0
      %819 = vmatprep.subr.mxu0 0.0
      %820 = vmatpush1.msra.mxu0 %v371
      %821 = vmatprep.subr.mxu0 0.0
      %822 = vmatpush1.msra.mxu0 %v372
      %823 = vmatprep.subr.mxu0 0.0
      %824 = vmatpush1.msra.mxu0 0.0
      %825 = vmatprep.subr.mxu0 0.0
      %826 = vmatpush1.msra.mxu0 0.0
      %827 = vmatprep.subr.mxu0 0.0
      %828 = vmatpush1.msra.mxu0 0.0
      %829 = vmatprep.subr.mxu0 0.0
      %830 = vmatpush1.msra.mxu0 0.0
      %831 = vmatprep.subr.mxu0 0.0
      %832 = vmatpush1.msra.mxu0 0.0
      %833 = vmatprep.subr.mxu0 0.0
      %834 = vmatpush1.msra.mxu0 0.0
      %835 = vmatprep.subr.mxu0 0.0
      %836 = vmatpush1.msra.mxu0 0.0
      %837 = vmatprep.subr.mxu0 0.0
      %838 = vmatpush1.msra.mxu0 0.0
      %839 = vmatprep.subr.mxu0 0.0
      %840 = vmatpush1.msra.mxu0 0.0
      %841 = vmatprep.subr.mxu0 0.0
      %842 = vmatpush1.msra.mxu0 0.0
      %843 = vmatprep.subr.mxu0 0.0
      %844 = vmatpush1.msra.mxu0 0.0
      %845 = vmatprep.subr.mxu0 0.0
      %846 = vmatpush1.msra.mxu0 0.0
      %847 = vmatprep.subr.mxu0 0.0
      %848 = vmatpush1.msra.mxu0 0.0
      %849 = vmatprep.subr.mxu0 0.0
      %850 = vmatpush1.msra.mxu0 0.0
      %851 = vmatprep.subr.mxu0 0.0
      %852 = vmatpush1.msra.mxu0 0.0
      %853 = vmatprep.subr.mxu0 0.0
      %854 = vmatpush1.msra.mxu0 0.0
      %855 = vmatprep.subr.mxu0 0.0
      %856 = vmatpush1.msra.mxu0 0.0
      %857 = vmatprep.subr.mxu0 0.0
      %858 = vmatpush1.msra.mxu0 0.0
      %859 = vmatprep.subr.mxu0 0.0
      %860 = vmatpush1.msra.mxu0 0.0
      %861 = vmatprep.subr.mxu0 0.0
      %862 = vmatpush1.msra.mxu0 0.0
      %863 = vmatprep.subr.mxu0 0.0
      %864 = vmatpush1.msra.mxu0 0.0
      %865 = vmatprep.subr.mxu0 0.0
      %866 = vmatpush1.msra.mxu0 0.0
      %867 = vmatprep.subr.mxu0 0.0
      %868 = vmatpush1.msra.mxu0 0.0
      %869 = vmatprep.subr.mxu0 0.0
      %870 = vmatpush1.msra.mxu0 0.0
      %871 = vmatprep.subr.mxu0 0.0
      %872 = vmatpush1.msra.mxu0 0.0
      %873 = vmatprep.subr.mxu0 0.0
      %874 = vmatpush1.msra.mxu0 0.0
      %875 = vmatprep.subr.mxu0 0.0
      %876 = vmatpush1.msra.mxu0 0.0
      %877 = vmatprep.subr.mxu0 0.0
      %878 = vmatpush1.msra.mxu0 0.0
      %879 = vmatprep.subr.mxu0 0.0
      %880 = vmatpush1.msra.mxu0 0.0
      %881 = vmatprep.subr.mxu0 0.0
      %882 = vmatpush1.msra.mxu0 0.0
      %883 = vmatprep.mubr.f32.mxu0 0.0
      %884 = vmatmul.mubr.f32.gmra.mrb[0].mxu0 %v817
      %v885 = vpop.f32.mrb[0].mxu0
      %v886 = vadd.f32 0.0, %v885
      %v887 = vpop.f32.mrb[0].mxu0
      %888 = vdwg.mxu0
      %v890 = vrot.slane %v886, 4
      %v892 = vadd.f32 %v368, %v890
      %v893 = vsub.f32 0.0, %v892
      %v894 = vmul.f32 %v893, 1.442695
      %v895 = vpow.pop %v894
      %v896 = vadd.f32 %v895, 1.0
      %v897 = vrcp.pop %v896
      %v898 = vmul.f32 1.0, %v897
      %v899 = vtanh.pop %v892
      %v901 = vrot.slane %v801, 7
      %v903 = vmul.f32 %v898, %v901
      %905 = vrot.lane.b32.xlu0 %v899, 96
      %v906 = vpop.permute.xlu0 %905
      %v908 = vmul.f32 %v898, %v906
      %910 = vrot.lane.b32.xlu0 %v908, 16
      %v911 = vpop.permute.xlu0 %910
      %v913 = vadd.f32 %v903, %v911
      %v914 = vtanh.pop %v913
      %916 = vrot.lane.b32.xlu0 %v914, 32
      %v917 = vpop.permute.xlu0 %916
      %v919 = vmul.f32 %v898, %v917
      %921 = vrot.lane.b32.xlu0 %v919, 80
      %v922 = vpop.permute.xlu0 %921
      %vm924 = vcmask 126980
      %925 = vst.msk [vmem:[#allocation2] sm:$0x10] %vm924, %v922
      %926 = vmatprep.subr.mxu0 0.0
      %927 = vmatpush1.msra.mxu0 %v374
      %928 = vmatprep.subr.mxu0 0.0
      %929 = vmatpush1.msra.mxu0 %v375
      %930 = vmatprep.subr.mxu0 0.0
      %931 = vmatpush1.msra.mxu0 0.0
      %932 = vmatprep.subr.mxu0 0.0
      %933 = vmatpush1.msra.mxu0 0.0
      %934 = vmatprep.subr.mxu0 0.0
      %935 = vmatpush1.msra.mxu0 0.0
      %936 = vmatprep.subr.mxu0 0.0
      %937 = vmatpush1.msra.mxu0 0.0
      %938 = vmatprep.subr.mxu0 0.0
      %939 = vmatpush1.msra.mxu0 0.0
      %940 = vmatprep.subr.mxu0 0.0
      %941 = vmatpush1.msra.mxu0 0.0
      %942 = vmatprep.subr.mxu0 0.0
      %943 = vmatpush1.msra.mxu0 0.0
      %944 = vmatprep.subr.mxu0 0.0
      %945 = vmatpush1.msra.mxu0 0.0
      %946 = vmatprep.subr.mxu0 0.0
      %947 = vmatpush1.msra.mxu0 0.0
      %948 = vmatprep.subr.mxu0 0.0
      %949 = vmatpush1.msra.mxu0 0.0
      %950 = vmatprep.subr.mxu0 0.0
      %951 = vmatpush1.msra.mxu0 0.0
      %952 = vmatprep.subr.mxu0 0.0
      %953 = vmatpush1.msra.mxu0 0.0
      %954 = vmatprep.subr.mxu0 0.0
      %955 = vmatpush1.msra.mxu0 0.0
      %956 = vmatprep.subr.mxu0 0.0
      %957 = vmatpush1.msra.mxu0 0.0
      %958 = vmatprep.subr.mxu0 0.0
      %959 = vmatpush1.msra.mxu0 0.0
      %960 = vmatprep.subr.mxu0 0.0
      %961 = vmatpush1.msra.mxu0 0.0
      %962 = vmatprep.subr.mxu0 0.0
      %963 = vmatpush1.msra.mxu0 0.0
      %964 = vmatprep.subr.mxu0 0.0
      %965 = vmatpush1.msra.mxu0 0.0
      %966 = vmatprep.subr.mxu0 0.0
      %967 = vmatpush1.msra.mxu0 0.0
      %968 = vmatprep.subr.mxu0 0.0
      %969 = vmatpush1.msra.mxu0 0.0
      %970 = vmatprep.subr.mxu0 0.0
      %971 = vmatpush1.msra.mxu0 0.0
      %972 = vmatprep.subr.mxu0 0.0
      %973 = vmatpush1.msra.mxu0 0.0
      %974 = vmatprep.subr.mxu0 0.0
      %975 = vmatpush1.msra.mxu0 0.0
      %976 = vmatprep.subr.mxu0 0.0
      %977 = vmatpush1.msra.mxu0 0.0
      %978 = vmatprep.subr.mxu0 0.0
      %979 = vmatpush1.msra.mxu0 0.0
      %980 = vmatprep.subr.mxu0 0.0
      %981 = vmatpush1.msra.mxu0 0.0
      %982 = vmatprep.subr.mxu0 0.0
      %983 = vmatpush1.msra.mxu0 0.0
      %984 = vmatprep.subr.mxu0 0.0
      %985 = vmatpush1.msra.mxu0 0.0
      %986 = vmatprep.subr.mxu0 0.0
      %987 = vmatpush1.msra.mxu0 0.0
      %988 = vmatprep.subr.mxu0 0.0
      %989 = vmatpush1.msra.mxu0 0.0
      %990 = vmatprep.mubr.f32.mxu0 0.0
      %991 = vmatmul.mubr.f32.gmra.mrb[0].mxu0 %v378
      %v992 = vpop.f32.mrb[0].mxu0
      %v993 = vadd.f32 0.0, %v992
      %v994 = vpop.f32.mrb[0].mxu0
      %995 = vdwg.mxu0
      %v997 = vrot.slane %v993, 4
      %998 = vrot.lane.b32.xlu0 %v997, 64
      %v999 = vpop.permute.xlu0 %998
      %v1001 = vadd.f32 %v368, %v999
      %v1002 = vsub.f32 0.0, %v1001
      %v1003 = vmul.f32 %v1002, 1.442695
      %v1004 = vpow.pop %v1003
      %v1005 = vadd.f32 %v1004, 1.0
      %v1006 = vrcp.pop %v1005
      %v1007 = vmul.f32 1.0, %v1006
      %v1008 = vtanh.pop %v1001
      %v1009 = vmul.f32 %v1007, 0.0
      %1011 = vrot.lane.b32.xlu0 %v1008, 96
      %v1012 = vpop.permute.xlu0 %1011
      %v1014 = vmul.f32 %v1007, %v1012
      %1016 = vrot.lane.b32.xlu0 %v1014, 16
      %v1017 = vpop.permute.xlu0 %1016
      %v1019 = vadd.f32 %v1009, %v1017
      %v1020 = vtanh.pop %v1019
      %1022 = vrot.lane.b32.xlu0 %v1020, 32
      %v1023 = vpop.permute.xlu0 %1022
      %v1025 = vmul.f32 %v1007, %v1023
      %1027 = vrot.lane.b32.xlu0 %v1025, 32
      %v1028 = vpop.permute.xlu0 %1027
      %vm1030 = vcmask 258180
      %1031 = vst.msk [vmem:[#allocation2] sm:$0x10] %vm1030, %v1028
      %v1032 = vrot.slane %v1025, 4
      %1033 = vrot.lane.b32.xlu0 %v1032, 16
      %v1034 = vpop.permute.xlu0 %1033
      %v1035 = vsel %vm376, %v1034, 0
      %1037 = vmatprep.subr.mxu0 0.0
      %1038 = vmatpush1.msra.mxu0 %v374
      %1039 = vmatprep.subr.mxu0 0.0
      %1040 = vmatpush1.msra.mxu0 %v375
      %1041 = vmatprep.subr.mxu0 0.0
      %1042 = vmatpush1.msra.mxu0 0.0
      %1043 = vmatprep.subr.mxu0 0.0
      %1044 = vmatpush1.msra.mxu0 0.0
      %1045 = vmatprep.subr.mxu0 0.0
      %1046 = vmatpush1.msra.mxu0 0.0
      %1047 = vmatprep.subr.mxu0 0.0
      %1048 = vmatpush1.msra.mxu0 0.0
      %1049 = vmatprep.subr.mxu0 0.0
      %1050 = vmatpush1.msra.mxu0 0.0
      %1051 = vmatprep.subr.mxu0 0.0
      %1052 = vmatpush1.msra.mxu0 0.0
      %1053 = vmatprep.subr.mxu0 0.0
      %1054 = vmatpush1.msra.mxu0 0.0
      %1055 = vmatprep.subr.mxu0 0.0
      %1056 = vmatpush1.msra.mxu0 0.0
      %1057 = vmatprep.subr.mxu0 0.0
      %1058 = vmatpush1.msra.mxu0 0.0
      %1059 = vmatprep.subr.mxu0 0.0
      %1060 = vmatpush1.msra.mxu0 0.0
      %1061 = vmatprep.subr.mxu0 0.0
      %1062 = vmatpush1.msra.mxu0 0.0
      %1063 = vmatprep.subr.mxu0 0.0
      %1064 = vmatpush1.msra.mxu0 0.0
      %1065 = vmatprep.subr.mxu0 0.0
      %1066 = vmatpush1.msra.mxu0 0.0
      %1067 = vmatprep.subr.mxu0 0.0
      %1068 = vmatpush1.msra.mxu0 0.0
      %1069 = vmatprep.subr.mxu0 0.0
      %1070 = vmatpush1.msra.mxu0 0.0
      %1071 = vmatprep.subr.mxu0 0.0
      %1072 = vmatpush1.msra.mxu0 0.0
      %1073 = vmatprep.subr.mxu0 0.0
      %1074 = vmatpush1.msra.mxu0 0.0
      %1075 = vmatprep.subr.mxu0 0.0
      %1076 = vmatpush1.msra.mxu0 0.0
      %1077 = vmatprep.subr.mxu0 0.0
      %1078 = vmatpush1.msra.mxu0 0.0
      %1079 = vmatprep.subr.mxu0 0.0
      %1080 = vmatpush1.msra.mxu0 0.0
      %1081 = vmatprep.subr.mxu0 0.0
      %1082 = vmatpush1.msra.mxu0 0.0
      %1083 = vmatprep.subr.mxu0 0.0
      %1084 = vmatpush1.msra.mxu0 0.0
      %1085 = vmatprep.subr.mxu0 0.0
      %1086 = vmatpush1.msra.mxu0 0.0
      %1087 = vmatprep.subr.mxu0 0.0
      %1088 = vmatpush1.msra.mxu0 0.0
      %1089 = vmatprep.subr.mxu0 0.0
      %1090 = vmatpush1.msra.mxu0 0.0
      %1091 = vmatprep.subr.mxu0 0.0
      %1092 = vmatpush1.msra.mxu0 0.0
      %1093 = vmatprep.subr.mxu0 0.0
      %1094 = vmatpush1.msra.mxu0 0.0
      %1095 = vmatprep.subr.mxu0 0.0
      %1096 = vmatpush1.msra.mxu0 0.0
      %1097 = vmatprep.subr.mxu0 0.0
      %1098 = vmatpush1.msra.mxu0 0.0
      %1099 = vmatprep.subr.mxu0 0.0
      %1100 = vmatpush1.msra.mxu0 0.0
      %1101 = vmatprep.mubr.f32.mxu0 0.0
      %1102 = vmatmul.mubr.f32.gmra.mrb[0].mxu0 %v1035
      %v1103 = vpop.f32.mrb[0].mxu0
      %v1104 = vadd.f32 0.0, %v1103
      %v1105 = vpop.f32.mrb[0].mxu0
      %1106 = vdwg.mxu0
      %v1108 = vrot.slane %v1104, 5
      %1109 = vrot.lane.b32.xlu0 %v1108, 64
      %v1110 = vpop.permute.xlu0 %1109
      %v1112 = vadd.f32 %v368, %v1110
      %v1113 = vsub.f32 0.0, %v1112
      %v1114 = vmul.f32 %v1113, 1.442695
      %v1115 = vpow.pop %v1114
      %v1116 = vadd.f32 %v1115, 1.0
      %v1117 = vrcp.pop %v1116
      %v1118 = vmul.f32 1.0, %v1117
      %v1119 = vtanh.pop %v1112
      %v1121 = vrot.slane %v1019, 1
      %v1123 = vmul.f32 %v1118, %v1121
      %1125 = vrot.lane.b32.xlu0 %v1119, 96
      %v1126 = vpop.permute.xlu0 %1125
      %v1128 = vmul.f32 %v1118, %v1126
      %1130 = vrot.lane.b32.xlu0 %v1128, 16
      %v1131 = vpop.permute.xlu0 %1130
      %v1133 = vadd.f32 %v1123, %v1131
      %v1134 = vtanh.pop %v1133
      %1136 = vrot.lane.b32.xlu0 %v1134, 32
      %v1137 = vpop.permute.xlu0 %1136
      %v1139 = vmul.f32 %v1118, %v1137
      %1141 = vrot.lane.b32.xlu0 %v1139, 32
      %v1142 = vpop.permute.xlu0 %1141
      %vm1144 = vcmask 257155
      %1145 = vst.msk [vmem:[#allocation2] sm:$0x8] %vm1144, %v1142
      %v1146 = vrot.slane %v1139, 3
      %1147 = vrot.lane.b32.xlu0 %v1146, 16
      %v1148 = vpop.permute.xlu0 %1147
      %v1149 = vsel %vm376, %v1148, 0
      %1151 = vmatprep.subr.mxu0 0.0
      %1152 = vmatpush1.msra.mxu0 %v374
      %1153 = vmatprep.subr.mxu0 0.0
      %1154 = vmatpush1.msra.mxu0 %v375
      %1155 = vmatprep.subr.mxu0 0.0
      %1156 = vmatpush1.msra.mxu0 0.0
      %1157 = vmatprep.subr.mxu0 0.0
      %1158 = vmatpush1.msra.mxu0 0.0
      %1159 = vmatprep.subr.mxu0 0.0
      %1160 = vmatpush1.msra.mxu0 0.0
      %1161 = vmatprep.subr.mxu0 0.0
      %1162 = vmatpush1.msra.mxu0 0.0
      %1163 = vmatprep.subr.mxu0 0.0
      %1164 = vmatpush1.msra.mxu0 0.0
      %1165 = vmatprep.subr.mxu0 0.0
      %1166 = vmatpush1.msra.mxu0 0.0
      %1167 = vmatprep.subr.mxu0 0.0
      %1168 = vmatpush1.msra.mxu0 0.0
      %1169 = vmatprep.subr.mxu0 0.0
      %1170 = vmatpush1.msra.mxu0 0.0
      %1171 = vmatprep.subr.mxu0 0.0
      %1172 = vmatpush1.msra.mxu0 0.0
      %1173 = vmatprep.subr.mxu0 0.0
      %1174 = vmatpush1.msra.mxu0 0.0
      %1175 = vmatprep.subr.mxu0 0.0
      %1176 = vmatpush1.msra.mxu0 0.0
      %1177 = vmatprep.subr.mxu0 0.0
      %1178 = vmatpush1.msra.mxu0 0.0
      %1179 = vmatprep.subr.mxu0 0.0
      %1180 = vmatpush1.msra.mxu0 0.0
      %1181 = vmatprep.subr.mxu0 0.0
      %1182 = vmatpush1.msra.mxu0 0.0
      %1183 = vmatprep.subr.mxu0 0.0
      %1184 = vmatpush1.msra.mxu0 0.0
      %1185 = vmatprep.subr.mxu0 0.0
      %1186 = vmatpush1.msra.mxu0 0.0
      %1187 = vmatprep.subr.mxu0 0.0
      %1188 = vmatpush1.msra.mxu0 0.0
      %1189 = vmatprep.subr.mxu0 0.0
      %1190 = vmatpush1.msra.mxu0 0.0
      %1191 = vmatprep.subr.mxu0 0.0
      %1192 = vmatpush1.msra.mxu0 0.0
      %1193 = vmatprep.subr.mxu0 0.0
      %1194 = vmatpush1.msra.mxu0 0.0
      %1195 = vmatprep.subr.mxu0 0.0
      %1196 = vmatpush1.msra.mxu0 0.0
      %1197 = vmatprep.subr.mxu0 0.0
      %1198 = vmatpush1.msra.mxu0 0.0
      %1199 = vmatprep.subr.mxu0 0.0
      %1200 = vmatpush1.msra.mxu0 0.0
      %1201 = vmatprep.subr.mxu0 0.0
      %1202 = vmatpush1.msra.mxu0 0.0
      %1203 = vmatprep.subr.mxu0 0.0
      %1204 = vmatpush1.msra.mxu0 0.0
      %1205 = vmatprep.subr.mxu0 0.0
      %1206 = vmatpush1.msra.mxu0 0.0
      %1207 = vmatprep.subr.mxu0 0.0
      %1208 = vmatpush1.msra.mxu0 0.0
      %1209 = vmatprep.subr.mxu0 0.0
      %1210 = vmatpush1.msra.mxu0 0.0
      %1211 = vmatprep.subr.mxu0 0.0
      %1212 = vmatpush1.msra.mxu0 0.0
      %1213 = vmatprep.subr.mxu0 0.0
      %1214 = vmatpush1.msra.mxu0 0.0
      %1215 = vmatprep.mubr.f32.mxu0 0.0
      %1216 = vmatmul.mubr.f32.gmra.mrb[0].mxu0 %v1149
      %v1217 = vpop.f32.mrb[0].mxu0
      %v1218 = vadd.f32 0.0, %v1217
      %v1219 = vpop.f32.mrb[0].mxu0
      %1220 = vdwg.mxu0
      %v1222 = vrot.slane %v1218, 6
      %1223 = vrot.lane.b32.xlu0 %v1222, 64
      %v1224 = vpop.permute.xlu0 %1223
      %v1226 = vadd.f32 %v368, %v1224
      %v1227 = vsub.f32 0.0, %v1226
      %v1228 = vmul.f32 %v1227, 1.442695
      %v1229 = vpow.pop %v1228
      %v1230 = vadd.f32 %v1229, 1.0
      %v1231 = vrcp.pop %v1230
      %v1232 = vmul.f32 1.0, %v1231
      %v1233 = vtanh.pop %v1226
      %v1235 = vrot.slane %v1133, 1
      %v1237 = vmul.f32 %v1232, %v1235
      %1239 = vrot.lane.b32.xlu0 %v1233, 96
      %v1240 = vpop.permute.xlu0 %1239
      %v1242 = vmul.f32 %v1232, %v1240
      %1244 = vrot.lane.b32.xlu0 %v1242, 16
      %v1245 = vpop.permute.xlu0 %1244
      %v1247 = vadd.f32 %v1237, %v1245
      %v1248 = vtanh.pop %v1247
      %1250 = vrot.lane.b32.xlu0 %v1248, 32
      %v1251 = vpop.permute.xlu0 %1250
      %v1253 = vmul.f32 %v1232, %v1251
      %1255 = vrot.lane.b32.xlu0 %v1253, 32
      %v1256 = vpop.permute.xlu0 %1255
      %vm1258 = vcmask 256130
      %1259 = vst.msk [vmem:[#allocation2] sm:$0x4] %vm1258, %v1256
      %v1260 = vrot.slane %v1253, 2
      %1261 = vrot.lane.b32.xlu0 %v1260, 16
      %v1262 = vpop.permute.xlu0 %1261
      %v1263 = vsel %vm376, %v1262, 0
      %1265 = vmatprep.subr.mxu0 0.0
      %1266 = vmatpush1.msra.mxu0 %v374
      %1267 = vmatprep.subr.mxu0 0.0
      %1268 = vmatpush1.msra.mxu0 %v375
      %1269 = vmatprep.subr.mxu0 0.0
      %1270 = vmatpush1.msra.mxu0 0.0
      %1271 = vmatprep.subr.mxu0 0.0
      %1272 = vmatpush1.msra.mxu0 0.0
      %1273 = vmatprep.subr.mxu0 0.0
      %1274 = vmatpush1.msra.mxu0 0.0
      %1275 = vmatprep.subr.mxu0 0.0
      %1276 = vmatpush1.msra.mxu0 0.0
      %1277 = vmatprep.subr.mxu0 0.0
      %1278 = vmatpush1.msra.mxu0 0.0
      %1279 = vmatprep.subr.mxu0 0.0
      %1280 = vmatpush1.msra.mxu0 0.0
      %1281 = vmatprep.subr.mxu0 0.0
      %1282 = vmatpush1.msra.mxu0 0.0
      %1283 = vmatprep.subr.mxu0 0.0
      %1284 = vmatpush1.msra.mxu0 0.0
      %1285 = vmatprep.subr.mxu0 0.0
      %1286 = vmatpush1.msra.mxu0 0.0
      %1287 = vmatprep.subr.mxu0 0.0
      %1288 = vmatpush1.msra.mxu0 0.0
      %1289 = vmatprep.subr.mxu0 0.0
      %1290 = vmatpush1.msra.mxu0 0.0
      %1291 = vmatprep.subr.mxu0 0.0
      %1292 = vmatpush1.msra.mxu0 0.0
      %1293 = vmatprep.subr.mxu0 0.0
      %1294 = vmatpush1.msra.mxu0 0.0
      %1295 = vmatprep.subr.mxu0 0.0
      %1296 = vmatpush1.msra.mxu0 0.0
      %1297 = vmatprep.subr.mxu0 0.0
      %1298 = vmatpush1.msra.mxu0 0.0
      %1299 = vmatprep.subr.mxu0 0.0
      %1300 = vmatpush1.msra.mxu0 0.0
      %1301 = vmatprep.subr.mxu0 0.0
      %1302 = vmatpush1.msra.mxu0 0.0
      %1303 = vmatprep.subr.mxu0 0.0
      %1304 = vmatpush1.msra.mxu0 0.0
      %1305 = vmatprep.subr.mxu0 0.0
      %1306 = vmatpush1.msra.mxu0 0.0
      %1307 = vmatprep.subr.mxu0 0.0
      %1308 = vmatpush1.msra.mxu0 0.0
      %1309 = vmatprep.subr.mxu0 0.0
      %1310 = vmatpush1.msra.mxu0 0.0
      %1311 = vmatprep.subr.mxu0 0.0
      %1312 = vmatpush1.msra.mxu0 0.0
      %1313 = vmatprep.subr.mxu0 0.0
      %1314 = vmatpush1.msra.mxu0 0.0
      %1315 = vmatprep.subr.mxu0 0.0
      %1316 = vmatpush1.msra.mxu0 0.0
      %1317 = vmatprep.subr.mxu0 0.0
      %1318 = vmatpush1.msra.mxu0 0.0
      %1319 = vmatprep.subr.mxu0 0.0
      %1320 = vmatpush1.msra.mxu0 0.0
      %1321 = vmatprep.subr.mxu0 0.0
      %1322 = vmatpush1.msra.mxu0 0.0
      %1323 = vmatprep.subr.mxu0 0.0
      %1324 = vmatpush1.msra.mxu0 0.0
      %1325 = vmatprep.subr.mxu0 0.0
      %1326 = vmatpush1.msra.mxu0 0.0
      %1327 = vmatprep.subr.mxu0 0.0
      %1328 = vmatpush1.msra.mxu0 0.0
      %1329 = vmatprep.mubr.f32.mxu0 0.0
      %1330 = vmatmul.mubr.f32.gmra.mrb[0].mxu0 %v1263
      %v1331 = vpop.f32.mrb[0].mxu0
      %v1332 = vadd.f32 0.0, %v1331
      %v1333 = vpop.f32.mrb[0].mxu0
      %1334 = vdwg.mxu0
      %v1336 = vrot.slane %v1332, 7
      %1337 = vrot.lane.b32.xlu0 %v1336, 64
      %v1338 = vpop.permute.xlu0 %1337
      %v1340 = vadd.f32 %v368, %v1338
      %v1341 = vsub.f32 0.0, %v1340
      %v1342 = vmul.f32 %v1341, 1.442695
      %v1343 = vpow.pop %v1342
      %v1344 = vadd.f32 %v1343, 1.0
      %v1345 = vrcp.pop %v1344
      %v1346 = vmul.f32 1.0, %v1345
      %v1347 = vtanh.pop %v1340
      %v1349 = vrot.slane %v1247, 1
      %v1351 = vmul.f32 %v1346, %v1349
      %1353 = vrot.lane.b32.xlu0 %v1347, 96
      %v1354 = vpop.permute.xlu0 %1353
      %v1356 = vmul.f32 %v1346, %v1354
      %1358 = vrot.lane.b32.xlu0 %v1356, 16
      %v1359 = vpop.permute.xlu0 %1358
      %v1361 = vadd.f32 %v1351, %v1359
      %v1362 = vtanh.pop %v1361
      %1364 = vrot.lane.b32.xlu0 %v1362, 32
      %v1365 = vpop.permute.xlu0 %1364
      %v1367 = vmul.f32 %v1346, %v1365
      %1369 = vrot.lane.b32.xlu0 %v1367, 32
      %v1370 = vpop.permute.xlu0 %1369
      %vm1372 = vcmask 255105
      %1373 = vst.msk [vmem:[#allocation2] sm:$0x2] %vm1372, %v1370
      %v1374 = vrot.slane %v1367, 1
      %1375 = vrot.lane.b32.xlu0 %v1374, 16
      %v1376 = vpop.permute.xlu0 %1375
      %v1377 = vsel %vm376, %v1376, 0
      %1379 = vmatprep.subr.mxu0 0.0
      %1380 = vmatpush1.msra.mxu0 %v374
      %1381 = vmatprep.subr.mxu0 0.0
      %1382 = vmatpush1.msra.mxu0 %v375
      %1383 = vmatprep.subr.mxu0 0.0
      %1384 = vmatpush1.msra.mxu0 0.0
      %1385 = vmatprep.subr.mxu0 0.0
      %1386 = vmatpush1.msra.mxu0 0.0
      %1387 = vmatprep.subr.mxu0 0.0
      %1388 = vmatpush1.msra.mxu0 0.0
      %1389 = vmatprep.subr.mxu0 0.0
      %1390 = vmatpush1.msra.mxu0 0.0
      %1391 = vmatprep.subr.mxu0 0.0
      %1392 = vmatpush1.msra.mxu0 0.0
      %1393 = vmatprep.subr.mxu0 0.0
      %1394 = vmatpush1.msra.mxu0 0.0
      %1395 = vmatprep.subr.mxu0 0.0
      %1396 = vmatpush1.msra.mxu0 0.0
      %1397 = vmatprep.subr.mxu0 0.0
      %1398 = vmatpush1.msra.mxu0 0.0
      %1399 = vmatprep.subr.mxu0 0.0
      %1400 = vmatpush1.msra.mxu0 0.0
      %1401 = vmatprep.subr.mxu0 0.0
      %1402 = vmatpush1.msra.mxu0 0.0
      %1403 = vmatprep.subr.mxu0 0.0
      %1404 = vmatpush1.msra.mxu0 0.0
      %1405 = vmatprep.subr.mxu0 0.0
      %1406 = vmatpush1.msra.mxu0 0.0
      %1407 = vmatprep.subr.mxu0 0.0
      %1408 = vmatpush1.msra.mxu0 0.0
      %1409 = vmatprep.subr.mxu0 0.0
      %1410 = vmatpush1.msra.mxu0 0.0
      %1411 = vmatprep.subr.mxu0 0.0
      %1412 = vmatpush1.msra.mxu0 0.0
      %1413 = vmatprep.subr.mxu0 0.0
      %1414 = vmatpush1.msra.mxu0 0.0
      %1415 = vmatprep.subr.mxu0 0.0
      %1416 = vmatpush1.msra.mxu0 0.0
      %1417 = vmatprep.subr.mxu0 0.0
      %1418 = vmatpush1.msra.mxu0 0.0
      %1419 = vmatprep.subr.mxu0 0.0
      %1420 = vmatpush1.msra.mxu0 0.0
      %1421 = vmatprep.subr.mxu0 0.0
      %1422 = vmatpush1.msra.mxu0 0.0
      %1423 = vmatprep.subr.mxu0 0.0
      %1424 = vmatpush1.msra.mxu0 0.0
      %1425 = vmatprep.subr.mxu0 0.0
      %1426 = vmatpush1.msra.mxu0 0.0
      %1427 = vmatprep.subr.mxu0 0.0
      %1428 = vmatpush1.msra.mxu0 0.0
      %1429 = vmatprep.subr.mxu0 0.0
      %1430 = vmatpush1.msra.mxu0 0.0
      %1431 = vmatprep.subr.mxu0 0.0
      %1432 = vmatpush1.msra.mxu0 0.0
      %1433 = vmatprep.subr.mxu0 0.0
      %1434 = vmatpush1.msra.mxu0 0.0
      %1435 = vmatprep.subr.mxu0 0.0
      %1436 = vmatpush1.msra.mxu0 0.0
      %1437 = vmatprep.subr.mxu0 0.0
      %1438 = vmatpush1.msra.mxu0 0.0
      %1439 = vmatprep.subr.mxu0 0.0
      %1440 = vmatpush1.msra.mxu0 0.0
      %1441 = vmatprep.subr.mxu0 0.0
      %1442 = vmatpush1.msra.mxu0 0.0
      %1443 = vmatprep.mubr.f32.mxu0 0.0
      %1444 = vmatmul.mubr.f32.gmra.mrb[0].mxu0 %v1377
      %v1445 = vpop.f32.mrb[0].mxu0
      %v1446 = vadd.f32 0.0, %v1445
      %v1447 = vpop.f32.mrb[0].mxu0
      %1448 = vdwg.mxu0
      %1450 = vrot.lane.b32.xlu0 %v1446, 64
      %v1451 = vpop.permute.xlu0 %1450
      %v1453 = vadd.f32 %v368, %v1451
      %v1454 = vsub.f32 0.0, %v1453
      %v1455 = vmul.f32 %v1454, 1.442695
      %v1456 = vpow.pop %v1455
      %v1457 = vadd.f32 %v1456, 1.0
      %v1458 = vrcp.pop %v1457
      %v1459 = vmul.f32 1.0, %v1458
      %v1460 = vtanh.pop %v1453
      %v1462 = vrot.slane %v1361, 1
      %v1464 = vmul.f32 %v1459, %v1462
      %1466 = vrot.lane.b32.xlu0 %v1460, 96
      %v1467 = vpop.permute.xlu0 %1466
      %v1469 = vmul.f32 %v1459, %v1467
      %1471 = vrot.lane.b32.xlu0 %v1469, 16
      %v1472 = vpop.permute.xlu0 %1471
      %v1474 = vadd.f32 %v1464, %v1472
      %v1475 = vtanh.pop %v1474
      %1477 = vrot.lane.b32.xlu0 %v1475, 32
      %v1478 = vpop.permute.xlu0 %1477
      %v1480 = vmul.f32 %v1459, %v1478
      %1482 = vrot.lane.b32.xlu0 %v1480, 32
      %v1483 = vpop.permute.xlu0 %1482
      %vm1485 = vcmask 254080
      %1486 = vst.msk [vmem:[#allocation2] sm:$0x1] %vm1485, %v1483
      %v1487 = vld [vmem:[#allocation2] sm:$0x1f]
      %s1488 = scalar_lea.vmem %s1, 32
      %v1489 = vld [vmem:[%s1488] sm:$0xff]
      %v1490 = vld [vmem:[%s1488 + $0x8] sm:$0xff]
      %v1491 = vld [vmem:[%s1488 + $0x10] sm:$0xff]
      %v1492 = vld [vmem:[%s1488 + $0x18] sm:$0xff]
      %s1493 = scalar_lea.vmem %s3, 1
      %v1494 = vld [vmem:[%s1493] sm:$0x1]
      %v1496 = vlaneseq
      %v1497 = vshrl.u32 %v1496, 7
      %v1498 = vsub.s32 0, %v1497
      %v1499 = vrot.slane %v1494, %v1498
      %v1502 = vsel %vm297, %v1487, 0
      %1504 = vmatprep.subr.mxu0 0.0
      %1505 = vmatpush1.msra.mxu0 %v1489
      %1506 = vmatprep.subr.mxu0 0.0
      %1507 = vmatpush1.msra.mxu0 %v1490
      %1508 = vmatprep.subr.mxu0 0.0
      %1509 = vmatpush1.msra.mxu0 %v1491
      %1510 = vmatprep.subr.mxu0 0.0
      %1511 = vmatpush1.msra.mxu0 %v1492
      %1512 = vmatprep.subr.mxu0 0.0
      %1513 = vmatpush1.msra.mxu0 0.0
      %1514 = vmatprep.subr.mxu0 0.0
      %1515 = vmatpush1.msra.mxu0 0.0
      %1516 = vmatprep.subr.mxu0 0.0
      %1517 = vmatpush1.msra.mxu0 0.0
      %1518 = vmatprep.subr.mxu0 0.0
      %1519 = vmatpush1.msra.mxu0 0.0
      %1520 = vmatprep.subr.mxu0 0.0
      %1521 = vmatpush1.msra.mxu0 0.0
      %1522 = vmatprep.subr.mxu0 0.0
      %1523 = vmatpush1.msra.mxu0 0.0
      %1524 = vmatprep.subr.mxu0 0.0
      %1525 = vmatpush1.msra.mxu0 0.0
      %1526 = vmatprep.subr.mxu0 0.0
      %1527 = vmatpush1.msra.mxu0 0.0
      %1528 = vmatprep.subr.mxu0 0.0
      %1529 = vmatpush1.msra.mxu0 0.0
      %1530 = vmatprep.subr.mxu0 0.0
      %1531 = vmatpush1.msra.mxu0 0.0
      %1532 = vmatprep.subr.mxu0 0.0
      %1533 = vmatpush1.msra.mxu0 0.0
      %1534 = vmatprep.subr.mxu0 0.0
      %1535 = vmatpush1.msra.mxu0 0.0
      %1536 = vmatprep.subr.mxu0 0.0
      %1537 = vmatpush1.msra.mxu0 0.0
      %1538 = vmatprep.subr.mxu0 0.0
      %1539 = vmatpush1.msra.mxu0 0.0
      %1540 = vmatprep.subr.mxu0 0.0
      %1541 = vmatpush1.msra.mxu0 0.0
      %1542 = vmatprep.subr.mxu0 0.0
      %1543 = vmatpush1.msra.mxu0 0.0
      %1544 = vmatprep.subr.mxu0 0.0
      %1545 = vmatpush1.msra.mxu0 0.0
      %1546 = vmatprep.subr.mxu0 0.0
      %1547 = vmatpush1.msra.mxu0 0.0
      %1548 = vmatprep.subr.mxu0 0.0
      %1549 = vmatpush1.msra.mxu0 0.0
      %1550 = vmatprep.subr.mxu0 0.0
      %1551 = vmatpush1.msra.mxu0 0.0
      %1552 = vmatprep.subr.mxu0 0.0
      %1553 = vmatpush1.msra.mxu0 0.0
      %1554 = vmatprep.subr.mxu0 0.0
      %1555 = vmatpush1.msra.mxu0 0.0
      %1556 = vmatprep.subr.mxu0 0.0
      %1557 = vmatpush1.msra.mxu0 0.0
      %1558 = vmatprep.subr.mxu0 0.0
      %1559 = vmatpush1.msra.mxu0 0.0
      %1560 = vmatprep.subr.mxu0 0.0
      %1561 = vmatpush1.msra.mxu0 0.0
      %1562 = vmatprep.subr.mxu0 0.0
      %1563 = vmatpush1.msra.mxu0 0.0
      %1564 = vmatprep.subr.mxu0 0.0
      %1565 = vmatpush1.msra.mxu0 0.0
      %1566 = vmatprep.subr.mxu0 0.0
      %1567 = vmatpush1.msra.mxu0 0.0
      %1568 = vmatprep.mubr.f32.mxu0 0.0
      %1569 = vmatmul.mubr.f32.gmra.mrb[0].mxu0 %v1502
      %v1570 = vpop.f32.mrb[0].mxu0
      %v1571 = vadd.f32 %v1499, %v1570
      %v1572 = vpop.f32.mrb[0].mxu0
      %1573 = vdwg.mxu0
      %s1574 = scalar_lea.vmem %s2, 32
      %v1575 = vld [vmem:[%s1574] sm:$0xff]
      %v1576 = vld [vmem:[%s1574 + $0x8] sm:$0xff]
      %s1577 = scalar_lea.vmem %s2, 48
      %v1578 = vld [vmem:[%s1577] sm:$0xff]
      %v1579 = vld [vmem:[%s1577 + $0x8] sm:$0xff]
      %1580 = vmatprep.subr.mxu0 0.0
      %1581 = vmatpush1.msra.mxu0 %v1575
      %1582 = vmatprep.subr.mxu0 0.0
      %1583 = vmatpush1.msra.mxu0 %v1576
      %1584 = vmatprep.subr.mxu0 0.0
      %1585 = vmatpush1.msra.mxu0 0.0
      %1586 = vmatprep.subr.mxu0 0.0
      %1587 = vmatpush1.msra.mxu0 0.0
      %1588 = vmatprep.subr.mxu0 0.0
      %1589 = vmatpush1.msra.mxu0 0.0
      %1590 = vmatprep.subr.mxu0 0.0
      %1591 = vmatpush1.msra.mxu0 0.0
      %1592 = vmatprep.subr.mxu0 0.0
      %1593 = vmatpush1.msra.mxu0 0.0
      %1594 = vmatprep.subr.mxu0 0.0
      %1595 = vmatpush1.msra.mxu0 0.0
      %1596 = vmatprep.subr.mxu0 0.0
      %1597 = vmatpush1.msra.mxu0 0.0
      %1598 = vmatprep.subr.mxu0 0.0
      %1599 = vmatpush1.msra.mxu0 0.0
      %1600 = vmatprep.subr.mxu0 0.0
      %1601 = vmatpush1.msra.mxu0 0.0
      %1602 = vmatprep.subr.mxu0 0.0
      %1603 = vmatpush1.msra.mxu0 0.0
      %1604 = vmatprep.subr.mxu0 0.0
      %1605 = vmatpush1.msra.mxu0 0.0
      %1606 = vmatprep.subr.mxu0 0.0
      %1607 = vmatpush1.msra.mxu0 0.0
      %1608 = vmatprep.subr.mxu0 0.0
      %1609 = vmatpush1.msra.mxu0 0.0
      %1610 = vmatprep.subr.mxu0 0.0
      %1611 = vmatpush1.msra.mxu0 0.0
      %1612 = vmatprep.subr.mxu0 0.0
      %1613 = vmatpush1.msra.mxu0 0.0
      %1614 = vmatprep.subr.mxu0 0.0
      %1615 = vmatpush1.msra.mxu0 0.0
      %1616 = vmatprep.subr.mxu0 0.0
      %1617 = vmatpush1.msra.mxu0 0.0
      %1618 = vmatprep.subr.mxu0 0.0
      %1619 = vmatpush1.msra.mxu0 0.0
      %1620 = vmatprep.subr.mxu0 0.0
      %1621 = vmatpush1.msra.mxu0 0.0
      %1622 = vmatprep.subr.mxu0 0.0
      %1623 = vmatpush1.msra.mxu0 0.0
      %1624 = vmatprep.subr.mxu0 0.0
      %1625 = vmatpush1.msra.mxu0 0.0
      %1626 = vmatprep.subr.mxu0 0.0
      %1627 = vmatpush1.msra.mxu0 0.0
      %1628 = vmatprep.subr.mxu0 0.0
      %1629 = vmatpush1.msra.mxu0 0.0
      %1630 = vmatprep.subr.mxu0 0.0
      %1631 = vmatpush1.msra.mxu0 0.0
      %1632 = vmatprep.subr.mxu0 0.0
      %1633 = vmatpush1.msra.mxu0 0.0
      %1634 = vmatprep.subr.mxu0 0.0
      %1635 = vmatpush1.msra.mxu0 0.0
      %1636 = vmatprep.subr.mxu0 0.0
      %1637 = vmatpush1.msra.mxu0 0.0
      %1638 = vmatprep.subr.mxu0 0.0
      %1639 = vmatpush1.msra.mxu0 0.0
      %1640 = vmatprep.subr.mxu0 0.0
      %1641 = vmatpush1.msra.mxu0 0.0
      %1642 = vmatprep.subr.mxu0 0.0
      %1643 = vmatpush1.msra.mxu0 0.0
      %1644 = vmatprep.mubr.f32.mxu0 0.0
      %1645 = vmatmul.mubr.f32.gmra.mrb[0].mxu0 %v378
      %v1646 = vpop.f32.mrb[0].mxu0
      %v1647 = vadd.f32 0.0, %v1646
      %v1648 = vpop.f32.mrb[0].mxu0
      %1649 = vdwg.mxu0
      %v1650 = vadd.f32 %v1571, %v1647
      %v1651 = vsub.f32 0.0, %v1650
      %v1652 = vmul.f32 %v1651, 1.442695
      %v1653 = vpow.pop %v1652
      %v1654 = vadd.f32 %v1653, 1.0
      %v1655 = vrcp.pop %v1654
      %v1656 = vmul.f32 1.0, %v1655
      %v1657 = vtanh.pop %v1650
      %v1658 = vmul.f32 %v1656, 0.0
      %1660 = vrot.lane.b32.xlu0 %v1657, 96
      %v1661 = vpop.permute.xlu0 %1660
      %v1663 = vmul.f32 %v1656, %v1661
      %1665 = vrot.lane.b32.xlu0 %v1663, 16
      %v1666 = vpop.permute.xlu0 %1665
      %v1668 = vadd.f32 %v1658, %v1666
      %v1669 = vtanh.pop %v1668
      %1671 = vrot.lane.b32.xlu0 %v1669, 32
      %v1672 = vpop.permute.xlu0 %1671
      %v1674 = vmul.f32 %v1656, %v1672
      %1676 = vrot.lane.b32.xlu0 %v1674, 80
      %v1677 = vpop.permute.xlu0 %1676
      %1679 = vst.msk [vmem:[#allocation2] sm:$0x1] %vm479, %v1677
      %v1680 = vsel %vm376, %v1677, 0
      %1682 = vmatprep.subr.mxu0 0.0
      %1683 = vmatpush1.msra.mxu0 %v1575
      %1684 = vmatprep.subr.mxu0 0.0
      %1685 = vmatpush1.msra.mxu0 %v1576
      %1686 = vmatprep.subr.mxu0 0.0
      %1687 = vmatpush1.msra.mxu0 0.0
      %1688 = vmatprep.subr.mxu0 0.0
      %1689 = vmatpush1.msra.mxu0 0.0
      %1690 = vmatprep.subr.mxu0 0.0
      %1691 = vmatpush1.msra.mxu0 0.0
      %1692 = vmatprep.subr.mxu0 0.0
      %1693 = vmatpush1.msra.mxu0 0.0
      %1694 = vmatprep.subr.mxu0 0.0
      %1695 = vmatpush1.msra.mxu0 0.0
      %1696 = vmatprep.subr.mxu0 0.0
      %1697 = vmatpush1.msra.mxu0 0.0
      %1698 = vmatprep.subr.mxu0 0.0
      %1699 = vmatpush1.msra.mxu0 0.0
      %1700 = vmatprep.subr.mxu0 0.0
      %1701 = vmatpush1.msra.mxu0 0.0
      %1702 = vmatprep.subr.mxu0 0.0
      %1703 = vmatpush1.msra.mxu0 0.0
      %1704 = vmatprep.subr.mxu0 0.0
      %1705 = vmatpush1.msra.mxu0 0.0
      %1706 = vmatprep.subr.mxu0 0.0
      %1707 = vmatpush1.msra.mxu0 0.0
      %1708 = vmatprep.subr.mxu0 0.0
      %1709 = vmatpush1.msra.mxu0 0.0
      %1710 = vmatprep.subr.mxu0 0.0
      %1711 = vmatpush1.msra.mxu0 0.0
      %1712 = vmatprep.subr.mxu0 0.0
      %1713 = vmatpush1.msra.mxu0 0.0
      %1714 = vmatprep.subr.mxu0 0.0
      %1715 = vmatpush1.msra.mxu0 0.0
      %1716 = vmatprep.subr.mxu0 0.0
      %1717 = vmatpush1.msra.mxu0 0.0
      %1718 = vmatprep.subr.mxu0 0.0
      %1719 = vmatpush1.msra.mxu0 0.0
      %1720 = vmatprep.subr.mxu0 0.0
      %1721 = vmatpush1.msra.mxu0 0.0
      %1722 = vmatprep.subr.mxu0 0.0
      %1723 = vmatpush1.msra.mxu0 0.0
      %1724 = vmatprep.subr.mxu0 0.0
      %1725 = vmatpush1.msra.mxu0 0.0
      %1726 = vmatprep.subr.mxu0 0.0
      %1727 = vmatpush1.msra.mxu0 0.0
      %1728 = vmatprep.subr.mxu0 0.0
      %1729 = vmatpush1.msra.mxu0 0.0
      %1730 = vmatprep.subr.mxu0 0.0
      %1731 = vmatpush1.msra.mxu0 0.0
      %1732 = vmatprep.subr.mxu0 0.0
      %1733 = vmatpush1.msra.mxu0 0.0
      %1734 = vmatprep.subr.mxu0 0.0
      %1735 = vmatpush1.msra.mxu0 0.0
      %1736 = vmatprep.subr.mxu0 0.0
      %1737 = vmatpush1.msra.mxu0 0.0
      %1738 = vmatprep.subr.mxu0 0.0
      %1739 = vmatpush1.msra.mxu0 0.0
      %1740 = vmatprep.subr.mxu0 0.0
      %1741 = vmatpush1.msra.mxu0 0.0
      %1742 = vmatprep.subr.mxu0 0.0
      %1743 = vmatpush1.msra.mxu0 0.0
      %1744 = vmatprep.subr.mxu0 0.0
      %1745 = vmatpush1.msra.mxu0 0.0
      %1746 = vmatprep.mubr.f32.mxu0 0.0
      %1747 = vmatmul.mubr.f32.gmra.mrb[0].mxu0 %v1680
      %v1748 = vpop.f32.mrb[0].mxu0
      %v1749 = vadd.f32 0.0, %v1748
      %v1750 = vpop.f32.mrb[0].mxu0
      %1751 = vdwg.mxu0
      %v1753 = vrot.slane %v1749, 7
      %v1755 = vadd.f32 %v1571, %v1753
      %v1756 = vsub.f32 0.0, %v1755
      %v1757 = vmul.f32 %v1756, 1.442695
      %v1758 = vpow.pop %v1757
      %v1759 = vadd.f32 %v1758, 1.0
      %v1760 = vrcp.pop %v1759
      %v1761 = vmul.f32 1.0, %v1760
      %v1762 = vtanh.pop %v1755
      %v1764 = vrot.slane %v1668, 7
      %v1766 = vmul.f32 %v1761, %v1764
      %1768 = vrot.lane.b32.xlu0 %v1762, 96
      %v1769 = vpop.permute.xlu0 %1768
      %v1771 = vmul.f32 %v1761, %v1769
      %1773 = vrot.lane.b32.xlu0 %v1771, 16
      %v1774 = vpop.permute.xlu0 %1773
      %v1776 = vadd.f32 %v1766, %v1774
      %v1777 = vtanh.pop %v1776
      %1779 = vrot.lane.b32.xlu0 %v1777, 32
      %v1780 = vpop.permute.xlu0 %1779
      %v1782 = vmul.f32 %v1761, %v1780
      %1784 = vrot.lane.b32.xlu0 %v1782, 80
      %v1785 = vpop.permute.xlu0 %1784
      %1787 = vst.msk [vmem:[#allocation2] sm:$0x2] %vm588, %v1785
      %v1788 = vrot.slane %v1782, 1
      %1789 = vrot.lane.b32.xlu0 %v1788, 80
      %v1790 = vpop.permute.xlu0 %1789
      %v1791 = vsel %vm376, %v1790, 0
      %1793 = vmatprep.subr.mxu0 0.0
      %1794 = vmatpush1.msra.mxu0 %v1575
      %1795 = vmatprep.subr.mxu0 0.0
      %1796 = vmatpush1.msra.mxu0 %v1576
      %1797 = vmatprep.subr.mxu0 0.0
      %1798 = vmatpush1.msra.mxu0 0.0
      %1799 = vmatprep.subr.mxu0 0.0
      %1800 = vmatpush1.msra.mxu0 0.0
      %1801 = vmatprep.subr.mxu0 0.0
      %1802 = vmatpush1.msra.mxu0 0.0
      %1803 = vmatprep.subr.mxu0 0.0
      %1804 = vmatpush1.msra.mxu0 0.0
      %1805 = vmatprep.subr.mxu0 0.0
      %1806 = vmatpush1.msra.mxu0 0.0
      %1807 = vmatprep.subr.mxu0 0.0
      %1808 = vmatpush1.msra.mxu0 0.0
      %1809 = vmatprep.subr.mxu0 0.0
      %1810 = vmatpush1.msra.mxu0 0.0
      %1811 = vmatprep.subr.mxu0 0.0
      %1812 = vmatpush1.msra.mxu0 0.0
      %1813 = vmatprep.subr.mxu0 0.0
      %1814 = vmatpush1.msra.mxu0 0.0
      %1815 = vmatprep.subr.mxu0 0.0
      %1816 = vmatpush1.msra.mxu0 0.0
      %1817 = vmatprep.subr.mxu0 0.0
      %1818 = vmatpush1.msra.mxu0 0.0
      %1819 = vmatprep.subr.mxu0 0.0
      %1820 = vmatpush1.msra.mxu0 0.0
      %1821 = vmatprep.subr.mxu0 0.0
      %1822 = vmatpush1.msra.mxu0 0.0
      %1823 = vmatprep.subr.mxu0 0.0
      %1824 = vmatpush1.msra.mxu0 0.0
      %1825 = vmatprep.subr.mxu0 0.0
      %1826 = vmatpush1.msra.mxu0 0.0
      %1827 = vmatprep.subr.mxu0 0.0
      %1828 = vmatpush1.msra.mxu0 0.0
      %1829 = vmatprep.subr.mxu0 0.0
      %1830 = vmatpush1.msra.mxu0 0.0
      %1831 = vmatprep.subr.mxu0 0.0
      %1832 = vmatpush1.msra.mxu0 0.0
      %1833 = vmatprep.subr.mxu0 0.0
      %1834 = vmatpush1.msra.mxu0 0.0
      %1835 = vmatprep.subr.mxu0 0.0
      %1836 = vmatpush1.msra.mxu0 0.0
      %1837 = vmatprep.subr.mxu0 0.0
      %1838 = vmatpush1.msra.mxu0 0.0
      %1839 = vmatprep.subr.mxu0 0.0
      %1840 = vmatpush1.msra.mxu0 0.0
      %1841 = vmatprep.subr.mxu0 0.0
      %1842 = vmatpush1.msra.mxu0 0.0
      %1843 = vmatprep.subr.mxu0 0.0
      %1844 = vmatpush1.msra.mxu0 0.0
      %1845 = vmatprep.subr.mxu0 0.0
      %1846 = vmatpush1.msra.mxu0 0.0
      %1847 = vmatprep.subr.mxu0 0.0
      %1848 = vmatpush1.msra.mxu0 0.0
      %1849 = vmatprep.subr.mxu0 0.0
      %1850 = vmatpush1.msra.mxu0 0.0
      %1851 = vmatprep.subr.mxu0 0.0
      %1852 = vmatpush1.msra.mxu0 0.0
      %1853 = vmatprep.subr.mxu0 0.0
      %1854 = vmatpush1.msra.mxu0 0.0
      %1855 = vmatprep.subr.mxu0 0.0
      %1856 = vmatpush1.msra.mxu0 0.0
      %1857 = vmatprep.mubr.f32.mxu0 0.0
      %1858 = vmatmul.mubr.f32.gmra.mrb[0].mxu0 %v1791
      %v1859 = vpop.f32.mrb[0].mxu0
      %v1860 = vadd.f32 0.0, %v1859
      %v1861 = vpop.f32.mrb[0].mxu0
      %1862 = vdwg.mxu0
      %v1864 = vrot.slane %v1860, 6
      %v1866 = vadd.f32 %v1571, %v1864
      %v1867 = vsub.f32 0.0, %v1866
      %v1868 = vmul.f32 %v1867, 1.442695
      %v1869 = vpow.pop %v1868
      %v1870 = vadd.f32 %v1869, 1.0
      %v1871 = vrcp.pop %v1870
      %v1872 = vmul.f32 1.0, %v1871
      %v1873 = vtanh.pop %v1866
      %v1875 = vrot.slane %v1776, 7
      %v1877 = vmul.f32 %v1872, %v1875
      %1879 = vrot.lane.b32.xlu0 %v1873, 96
      %v1880 = vpop.permute.xlu0 %1879
      %v1882 = vmul.f32 %v1872, %v1880
      %1884 = vrot.lane.b32.xlu0 %v1882, 16
      %v1885 = vpop.permute.xlu0 %1884
      %v1887 = vadd.f32 %v1877, %v1885
      %v1888 = vtanh.pop %v1887
      %1890 = vrot.lane.b32.xlu0 %v1888, 32
      %v1891 = vpop.permute.xlu0 %1890
      %v1893 = vmul.f32 %v1872, %v1891
      %1895 = vrot.lane.b32.xlu0 %v1893, 80
      %v1896 = vpop.permute.xlu0 %1895
      %1898 = vst.msk [vmem:[#allocation2] sm:$0x4] %vm700, %v1896
      %v1899 = vrot.slane %v1893, 2
      %1900 = vrot.lane.b32.xlu0 %v1899, 80
      %v1901 = vpop.permute.xlu0 %1900
      %v1902 = vsel %vm376, %v1901, 0
      %1904 = vmatprep.subr.mxu0 0.0
      %1905 = vmatpush1.msra.mxu0 %v1575
      %1906 = vmatprep.subr.mxu0 0.0
      %1907 = vmatpush1.msra.mxu0 %v1576
      %1908 = vmatprep.subr.mxu0 0.0
      %1909 = vmatpush1.msra.mxu0 0.0
      %1910 = vmatprep.subr.mxu0 0.0
      %1911 = vmatpush1.msra.mxu0 0.0
      %1912 = vmatprep.subr.mxu0 0.0
      %1913 = vmatpush1.msra.mxu0 0.0
      %1914 = vmatprep.subr.mxu0 0.0
      %1915 = vmatpush1.msra.mxu0 0.0
      %1916 = vmatprep.subr.mxu0 0.0
      %1917 = vmatpush1.msra.mxu0 0.0
      %1918 = vmatprep.subr.mxu0 0.0
      %1919 = vmatpush1.msra.mxu0 0.0
      %1920 = vmatprep.subr.mxu0 0.0
      %1921 = vmatpush1.msra.mxu0 0.0
      %1922 = vmatprep.subr.mxu0 0.0
      %1923 = vmatpush1.msra.mxu0 0.0
      %1924 = vmatprep.subr.mxu0 0.0
      %1925 = vmatpush1.msra.mxu0 0.0
      %1926 = vmatprep.subr.mxu0 0.0
      %1927 = vmatpush1.msra.mxu0 0.0
      %1928 = vmatprep.subr.mxu0 0.0
      %1929 = vmatpush1.msra.mxu0 0.0
      %1930 = vmatprep.subr.mxu0 0.0
      %1931 = vmatpush1.msra.mxu0 0.0
      %1932 = vmatprep.subr.mxu0 0.0
      %1933 = vmatpush1.msra.mxu0 0.0
      %1934 = vmatprep.subr.mxu0 0.0
      %1935 = vmatpush1.msra.mxu0 0.0
      %1936 = vmatprep.subr.mxu0 0.0
      %1937 = vmatpush1.msra.mxu0 0.0
      %1938 = vmatprep.subr.mxu0 0.0
      %1939 = vmatpush1.msra.mxu0 0.0
      %1940 = vmatprep.subr.mxu0 0.0
      %1941 = vmatpush1.msra.mxu0 0.0
      %1942 = vmatprep.subr.mxu0 0.0
      %1943 = vmatpush1.msra.mxu0 0.0
      %1944 = vmatprep.subr.mxu0 0.0
      %1945 = vmatpush1.msra.mxu0 0.0
      %1946 = vmatprep.subr.mxu0 0.0
      %1947 = vmatpush1.msra.mxu0 0.0
      %1948 = vmatprep.subr.mxu0 0.0
      %1949 = vmatpush1.msra.mxu0 0.0
      %1950 = vmatprep.subr.mxu0 0.0
      %1951 = vmatpush1.msra.mxu0 0.0
      %1952 = vmatprep.subr.mxu0 0.0
      %1953 = vmatpush1.msra.mxu0 0.0
      %1954 = vmatprep.subr.mxu0 0.0
      %1955 = vmatpush1.msra.mxu0 0.0
      %1956 = vmatprep.subr.mxu0 0.0
      %1957 = vmatpush1.msra.mxu0 0.0
      %1958 = vmatprep.subr.mxu0 0.0
      %1959 = vmatpush1.msra.mxu0 0.0
      %1960 = vmatprep.subr.mxu0 0.0
      %1961 = vmatpush1.msra.mxu0 0.0
      %1962 = vmatprep.subr.mxu0 0.0
      %1963 = vmatpush1.msra.mxu0 0.0
      %1964 = vmatprep.subr.mxu0 0.0
      %1965 = vmatpush1.msra.mxu0 0.0
      %1966 = vmatprep.subr.mxu0 0.0
      %1967 = vmatpush1.msra.mxu0 0.0
      %1968 = vmatprep.mubr.f32.mxu0 0.0
      %1969 = vmatmul.mubr.f32.gmra.mrb[0].mxu0 %v1902
      %v1970 = vpop.f32.mrb[0].mxu0
      %v1971 = vadd.f32 0.0, %v1970
      %v1972 = vpop.f32.mrb[0].mxu0
      %1973 = vdwg.mxu0
      %v1975 = vrot.slane %v1971, 5
      %v1977 = vadd.f32 %v1571, %v1975
      %v1978 = vsub.f32 0.0, %v1977
      %v1979 = vmul.f32 %v1978, 1.442695
      %v1980 = vpow.pop %v1979
      %v1981 = vadd.f32 %v1980, 1.0
      %v1982 = vrcp.pop %v1981
      %v1983 = vmul.f32 1.0, %v1982
      %v1984 = vtanh.pop %v1977
      %v1986 = vrot.slane %v1887, 7
      %v1988 = vmul.f32 %v1983, %v1986
      %1990 = vrot.lane.b32.xlu0 %v1984, 96
      %v1991 = vpop.permute.xlu0 %1990
      %v1993 = vmul.f32 %v1983, %v1991
      %1995 = vrot.lane.b32.xlu0 %v1993, 16
      %v1996 = vpop.permute.xlu0 %1995
      %v1998 = vadd.f32 %v1988, %v1996
      %v1999 = vtanh.pop %v1998
      %2001 = vrot.lane.b32.xlu0 %v1999, 32
      %v2002 = vpop.permute.xlu0 %2001
      %v2004 = vmul.f32 %v1983, %v2002
      %2006 = vrot.lane.b32.xlu0 %v2004, 80
      %v2007 = vpop.permute.xlu0 %2006
      %2009 = vst.msk [vmem:[#allocation2] sm:$0x8] %vm812, %v2007
      %v2010 = vrot.slane %v2004, 3
      %2011 = vrot.lane.b32.xlu0 %v2010, 80
      %v2012 = vpop.permute.xlu0 %2011
      %v2013 = vsel %vm376, %v2012, 0
      %2015 = vmatprep.subr.mxu0 0.0
      %2016 = vmatpush1.msra.mxu0 %v1575
      %2017 = vmatprep.subr.mxu0 0.0
      %2018 = vmatpush1.msra.mxu0 %v1576
      %2019 = vmatprep.subr.mxu0 0.0
      %2020 = vmatpush1.msra.mxu0 0.0
      %2021 = vmatprep.subr.mxu0 0.0
      %2022 = vmatpush1.msra.mxu0 0.0
      %2023 = vmatprep.subr.mxu0 0.0
      %2024 = vmatpush1.msra.mxu0 0.0
      %2025 = vmatprep.subr.mxu0 0.0
      %2026 = vmatpush1.msra.mxu0 0.0
      %2027 = vmatprep.subr.mxu0 0.0
      %2028 = vmatpush1.msra.mxu0 0.0
      %2029 = vmatprep.subr.mxu0 0.0
      %2030 = vmatpush1.msra.mxu0 0.0
      %2031 = vmatprep.subr.mxu0 0.0
      %2032 = vmatpush1.msra.mxu0 0.0
      %2033 = vmatprep.subr.mxu0 0.0
      %2034 = vmatpush1.msra.mxu0 0.0
      %2035 = vmatprep.subr.mxu0 0.0
      %2036 = vmatpush1.msra.mxu0 0.0
      %2037 = vmatprep.subr.mxu0 0.0
      %2038 = vmatpush1.msra.mxu0 0.0
      %2039 = vmatprep.subr.mxu0 0.0
      %2040 = vmatpush1.msra.mxu0 0.0
      %2041 = vmatprep.subr.mxu0 0.0
      %2042 = vmatpush1.msra.mxu0 0.0
      %2043 = vmatprep.subr.mxu0 0.0
      %2044 = vmatpush1.msra.mxu0 0.0
      %2045 = vmatprep.subr.mxu0 0.0
      %2046 = vmatpush1.msra.mxu0 0.0
      %2047 = vmatprep.subr.mxu0 0.0
      %2048 = vmatpush1.msra.mxu0 0.0
      %2049 = vmatprep.subr.mxu0 0.0
      %2050 = vmatpush1.msra.mxu0 0.0
      %2051 = vmatprep.subr.mxu0 0.0
      %2052 = vmatpush1.msra.mxu0 0.0
      %2053 = vmatprep.subr.mxu0 0.0
      %2054 = vmatpush1.msra.mxu0 0.0
      %2055 = vmatprep.subr.mxu0 0.0
      %2056 = vmatpush1.msra.mxu0 0.0
      %2057 = vmatprep.subr.mxu0 0.0
      %2058 = vmatpush1.msra.mxu0 0.0
      %2059 = vmatprep.subr.mxu0 0.0
      %2060 = vmatpush1.msra.mxu0 0.0
      %2061 = vmatprep.subr.mxu0 0.0
      %2062 = vmatpush1.msra.mxu0 0.0
      %2063 = vmatprep.subr.mxu0 0.0
      %2064 = vmatpush1.msra.mxu0 0.0
      %2065 = vmatprep.subr.mxu0 0.0
      %2066 = vmatpush1.msra.mxu0 0.0
      %2067 = vmatprep.subr.mxu0 0.0
      %2068 = vmatpush1.msra.mxu0 0.0
      %2069 = vmatprep.subr.mxu0 0.0
      %2070 = vmatpush1.msra.mxu0 0.0
      %2071 = vmatprep.subr.mxu0 0.0
      %2072 = vmatpush1.msra.mxu0 0.0
      %2073 = vmatprep.subr.mxu0 0.0
      %2074 = vmatpush1.msra.mxu0 0.0
      %2075 = vmatprep.subr.mxu0 0.0
      %2076 = vmatpush1.msra.mxu0 0.0
      %2077 = vmatprep.subr.mxu0 0.0
      %2078 = vmatpush1.msra.mxu0 0.0
      %2079 = vmatprep.mubr.f32.mxu0 0.0
      %2080 = vmatmul.mubr.f32.gmra.mrb[0].mxu0 %v2013
      %v2081 = vpop.f32.mrb[0].mxu0
      %v2082 = vadd.f32 0.0, %v2081
      %v2083 = vpop.f32.mrb[0].mxu0
      %2084 = vdwg.mxu0
      %v2086 = vrot.slane %v2082, 4
      %v2088 = vadd.f32 %v1571, %v2086
      %v2089 = vsub.f32 0.0, %v2088
      %v2090 = vmul.f32 %v2089, 1.442695
      %v2091 = vpow.pop %v2090
      %v2092 = vadd.f32 %v2091, 1.0
      %v2093 = vrcp.pop %v2092
      %v2094 = vmul.f32 1.0, %v2093
      %v2095 = vtanh.pop %v2088
      %v2097 = vrot.slane %v1998, 7
      %v2099 = vmul.f32 %v2094, %v2097
      %2101 = vrot.lane.b32.xlu0 %v2095, 96
      %v2102 = vpop.permute.xlu0 %2101
      %v2104 = vmul.f32 %v2094, %v2102
      %2106 = vrot.lane.b32.xlu0 %v2104, 16
      %v2107 = vpop.permute.xlu0 %2106
      %v2109 = vadd.f32 %v2099, %v2107
      %v2110 = vtanh.pop %v2109
      %2112 = vrot.lane.b32.xlu0 %v2110, 32
      %v2113 = vpop.permute.xlu0 %2112
      %v2115 = vmul.f32 %v2094, %v2113
      %2117 = vrot.lane.b32.xlu0 %v2115, 80
      %v2118 = vpop.permute.xlu0 %2117
      %2120 = vst.msk [vmem:[#allocation2] sm:$0x10] %vm924, %v2118
      %2121 = vmatprep.subr.mxu0 0.0
      %2122 = vmatpush1.msra.mxu0 %v1578
      %2123 = vmatprep.subr.mxu0 0.0
      %2124 = vmatpush1.msra.mxu0 %v1579
      %2125 = vmatprep.subr.mxu0 0.0
      %2126 = vmatpush1.msra.mxu0 0.0
      %2127 = vmatprep.subr.mxu0 0.0
      %2128 = vmatpush1.msra.mxu0 0.0
      %2129 = vmatprep.subr.mxu0 0.0
      %2130 = vmatpush1.msra.mxu0 0.0
      %2131 = vmatprep.subr.mxu0 0.0
      %2132 = vmatpush1.msra.mxu0 0.0
      %2133 = vmatprep.subr.mxu0 0.0
      %2134 = vmatpush1.msra.mxu0 0.0
      %2135 = vmatprep.subr.mxu0 0.0
      %2136 = vmatpush1.msra.mxu0 0.0
      %2137 = vmatprep.subr.mxu0 0.0
      %2138 = vmatpush1.msra.mxu0 0.0
      %2139 = vmatprep.subr.mxu0 0.0
      %2140 = vmatpush1.msra.mxu0 0.0
      %2141 = vmatprep.subr.mxu0 0.0
      %2142 = vmatpush1.msra.mxu0 0.0
      %2143 = vmatprep.subr.mxu0 0.0
      %2144 = vmatpush1.msra.mxu0 0.0
      %2145 = vmatprep.subr.mxu0 0.0
      %2146 = vmatpush1.msra.mxu0 0.0
      %2147 = vmatprep.subr.mxu0 0.0
      %2148 = vmatpush1.msra.mxu0 0.0
      %2149 = vmatprep.subr.mxu0 0.0
      %2150 = vmatpush1.msra.mxu0 0.0
      %2151 = vmatprep.subr.mxu0 0.0
      %2152 = vmatpush1.msra.mxu0 0.0
      %2153 = vmatprep.subr.mxu0 0.0
      %2154 = vmatpush1.msra.mxu0 0.0
      %2155 = vmatprep.subr.mxu0 0.0
      %2156 = vmatpush1.msra.mxu0 0.0
      %2157 = vmatprep.subr.mxu0 0.0
      %2158 = vmatpush1.msra.mxu0 0.0
      %2159 = vmatprep.subr.mxu0 0.0
      %2160 = vmatpush1.msra.mxu0 0.0
      %2161 = vmatprep.subr.mxu0 0.0
      %2162 = vmatpush1.msra.mxu0 0.0
      %2163 = vmatprep.subr.mxu0 0.0
      %2164 = vmatpush1.msra.mxu0 0.0
      %2165 = vmatprep.subr.mxu0 0.0
      %2166 = vmatpush1.msra.mxu0 0.0
      %2167 = vmatprep.subr.mxu0 0.0
      %2168 = vmatpush1.msra.mxu0 0.0
      %2169 = vmatprep.subr.mxu0 0.0
      %2170 = vmatpush1.msra.mxu0 0.0
      %2171 = vmatprep.subr.mxu0 0.0
      %2172 = vmatpush1.msra.mxu0 0.0
      %2173 = vmatprep.subr.mxu0 0.0
      %2174 = vmatpush1.msra.mxu0 0.0
      %2175 = vmatprep.subr.mxu0 0.0
      %2176 = vmatpush1.msra.mxu0 0.0
      %2177 = vmatprep.subr.mxu0 0.0
      %2178 = vmatpush1.msra.mxu0 0.0
      %2179 = vmatprep.subr.mxu0 0.0
      %2180 = vmatpush1.msra.mxu0 0.0
      %2181 = vmatprep.subr.mxu0 0.0
      %2182 = vmatpush1.msra.mxu0 0.0
      %2183 = vmatprep.subr.mxu0 0.0
      %2184 = vmatpush1.msra.mxu0 0.0
      %2185 = vmatprep.mubr.f32.mxu0 0.0
      %2186 = vmatmul.mubr.f32.gmra.mrb[0].mxu0 %v378
      %v2187 = vpop.f32.mrb[0].mxu0
      %v2188 = vadd.f32 0.0, %v2187
      %v2189 = vpop.f32.mrb[0].mxu0
      %2190 = vdwg.mxu0
      %v2192 = vrot.slane %v2188, 4
      %2193 = vrot.lane.b32.xlu0 %v2192, 64
      %v2194 = vpop.permute.xlu0 %2193
      %v2196 = vadd.f32 %v1571, %v2194
      %v2197 = vsub.f32 0.0, %v2196
      %v2198 = vmul.f32 %v2197, 1.442695
      %v2199 = vpow.pop %v2198
      %v2200 = vadd.f32 %v2199, 1.0
      %v2201 = vrcp.pop %v2200
      %v2202 = vmul.f32 1.0, %v2201
      %v2203 = vtanh.pop %v2196
      %v2204 = vmul.f32 %v2202, 0.0
      %2206 = vrot.lane.b32.xlu0 %v2203, 96
      %v2207 = vpop.permute.xlu0 %2206
      %v2209 = vmul.f32 %v2202, %v2207
      %2211 = vrot.lane.b32.xlu0 %v2209, 16
      %v2212 = vpop.permute.xlu0 %2211
      %v2214 = vadd.f32 %v2204, %v2212
      %v2215 = vtanh.pop %v2214
      %2217 = vrot.lane.b32.xlu0 %v2215, 32
      %v2218 = vpop.permute.xlu0 %2217
      %v2220 = vmul.f32 %v2202, %v2218
      %2222 = vrot.lane.b32.xlu0 %v2220, 32
      %v2223 = vpop.permute.xlu0 %2222
      %2225 = vst.msk [vmem:[#allocation2] sm:$0x10] %vm1030, %v2223
      %v2226 = vrot.slane %v2220, 4
      %2227 = vrot.lane.b32.xlu0 %v2226, 16
      %v2228 = vpop.permute.xlu0 %2227
      %v2229 = vsel %vm376, %v2228, 0
      %2231 = vmatprep.subr.mxu0 0.0
      %2232 = vmatpush1.msra.mxu0 %v1578
      %2233 = vmatprep.subr.mxu0 0.0
      %2234 = vmatpush1.msra.mxu0 %v1579
      %2235 = vmatprep.subr.mxu0 0.0
      %2236 = vmatpush1.msra.mxu0 0.0
      %2237 = vmatprep.subr.mxu0 0.0
      %2238 = vmatpush1.msra.mxu0 0.0
      %2239 = vmatprep.subr.mxu0 0.0
      %2240 = vmatpush1.msra.mxu0 0.0
      %2241 = vmatprep.subr.mxu0 0.0
      %2242 = vmatpush1.msra.mxu0 0.0
      %2243 = vmatprep.subr.mxu0 0.0
      %2244 = vmatpush1.msra.mxu0 0.0
      %2245 = vmatprep.subr.mxu0 0.0
      %2246 = vmatpush1.msra.mxu0 0.0
      %2247 = vmatprep.subr.mxu0 0.0
      %2248 = vmatpush1.msra.mxu0 0.0
      %2249 = vmatprep.subr.mxu0 0.0
      %2250 = vmatpush1.msra.mxu0 0.0
      %2251 = vmatprep.subr.mxu0 0.0
      %2252 = vmatpush1.msra.mxu0 0.0
      %2253 = vmatprep.subr.mxu0 0.0
      %2254 = vmatpush1.msra.mxu0 0.0
      %2255 = vmatprep.subr.mxu0 0.0
      %2256 = vmatpush1.msra.mxu0 0.0
      %2257 = vmatprep.subr.mxu0 0.0
      %2258 = vmatpush1.msra.mxu0 0.0
      %2259 = vmatprep.subr.mxu0 0.0
      %2260 = vmatpush1.msra.mxu0 0.0
      %2261 = vmatprep.subr.mxu0 0.0
      %2262 = vmatpush1.msra.mxu0 0.0
      %2263 = vmatprep.subr.mxu0 0.0
      %2264 = vmatpush1.msra.mxu0 0.0
      %2265 = vmatprep.subr.mxu0 0.0
      %2266 = vmatpush1.msra.mxu0 0.0
      %2267 = vmatprep.subr.mxu0 0.0
      %2268 = vmatpush1.msra.mxu0 0.0
      %2269 = vmatprep.subr.mxu0 0.0
      %2270 = vmatpush1.msra.mxu0 0.0
      %2271 = vmatprep.subr.mxu0 0.0
      %2272 = vmatpush1.msra.mxu0 0.0
      %2273 = vmatprep.subr.mxu0 0.0
      %2274 = vmatpush1.msra.mxu0 0.0
      %2275 = vmatprep.subr.mxu0 0.0
      %2276 = vmatpush1.msra.mxu0 0.0
      %2277 = vmatprep.subr.mxu0 0.0
      %2278 = vmatpush1.msra.mxu0 0.0
      %2279 = vmatprep.subr.mxu0 0.0
      %2280 = vmatpush1.msra.mxu0 0.0
      %2281 = vmatprep.subr.mxu0 0.0
      %2282 = vmatpush1.msra.mxu0 0.0
      %2283 = vmatprep.subr.mxu0 0.0
      %2284 = vmatpush1.msra.mxu0 0.0
      %2285 = vmatprep.subr.mxu0 0.0
      %2286 = vmatpush1.msra.mxu0 0.0
      %2287 = vmatprep.subr.mxu0 0.0
      %2288 = vmatpush1.msra.mxu0 0.0
      %2289 = vmatprep.subr.mxu0 0.0
      %2290 = vmatpush1.msra.mxu0 0.0
      %2291 = vmatprep.subr.mxu0 0.0
      %2292 = vmatpush1.msra.mxu0 0.0
      %2293 = vmatprep.subr.mxu0 0.0
      %2294 = vmatpush1.msra.mxu0 0.0
      %2295 = vmatprep.mubr.f32.mxu0 0.0
      %2296 = vmatmul.mubr.f32.gmra.mrb[0].mxu0 %v2229
      %v2297 = vpop.f32.mrb[0].mxu0
      %v2298 = vadd.f32 0.0, %v2297
      %v2299 = vpop.f32.mrb[0].mxu0
      %2300 = vdwg.mxu0
      %v2302 = vrot.slane %v2298, 5
      %2303 = vrot.lane.b32.xlu0 %v2302, 64
      %v2304 = vpop.permute.xlu0 %2303
      %v2306 = vadd.f32 %v1571, %v2304
      %v2307 = vsub.f32 0.0, %v2306
      %v2308 = vmul.f32 %v2307, 1.442695
      %v2309 = vpow.pop %v2308
      %v2310 = vadd.f32 %v2309, 1.0
      %v2311 = vrcp.pop %v2310
      %v2312 = vmul.f32 1.0, %v2311
      %v2313 = vtanh.pop %v2306
      %v2315 = vrot.slane %v2214, 1
      %v2317 = vmul.f32 %v2312, %v2315
      %2319 = vrot.lane.b32.xlu0 %v2313, 96
      %v2320 = vpop.permute.xlu0 %2319
      %v2322 = vmul.f32 %v2312, %v2320
      %2324 = vrot.lane.b32.xlu0 %v2322, 16
      %v2325 = vpop.permute.xlu0 %2324
      %v2327 = vadd.f32 %v2317, %v2325
      %v2328 = vtanh.pop %v2327
      %2330 = vrot.lane.b32.xlu0 %v2328, 32
      %v2331 = vpop.permute.xlu0 %2330
      %v2333 = vmul.f32 %v2312, %v2331
      %2335 = vrot.lane.b32.xlu0 %v2333, 32
      %v2336 = vpop.permute.xlu0 %2335
      %2338 = vst.msk [vmem:[#allocation2] sm:$0x8] %vm1144, %v2336
      %v2339 = vrot.slane %v2333, 3
      %2340 = vrot.lane.b32.xlu0 %v2339, 16
      %v2341 = vpop.permute.xlu0 %2340
      %v2342 = vsel %vm376, %v2341, 0
      %2344 = vmatprep.subr.mxu0 0.0
      %2345 = vmatpush1.msra.mxu0 %v1578
      %2346 = vmatprep.subr.mxu0 0.0
      %2347 = vmatpush1.msra.mxu0 %v1579
      %2348 = vmatprep.subr.mxu0 0.0
      %2349 = vmatpush1.msra.mxu0 0.0
      %2350 = vmatprep.subr.mxu0 0.0
      %2351 = vmatpush1.msra.mxu0 0.0
      %2352 = vmatprep.subr.mxu0 0.0
      %2353 = vmatpush1.msra.mxu0 0.0
      %2354 = vmatprep.subr.mxu0 0.0
      %2355 = vmatpush1.msra.mxu0 0.0
      %2356 = vmatprep.subr.mxu0 0.0
      %2357 = vmatpush1.msra.mxu0 0.0
      %2358 = vmatprep.subr.mxu0 0.0
      %2359 = vmatpush1.msra.mxu0 0.0
      %2360 = vmatprep.subr.mxu0 0.0
      %2361 = vmatpush1.msra.mxu0 0.0
      %2362 = vmatprep.subr.mxu0 0.0
      %2363 = vmatpush1.msra.mxu0 0.0
      %2364 = vmatprep.subr.mxu0 0.0
      %2365 = vmatpush1.msra.mxu0 0.0
      %2366 = vmatprep.subr.mxu0 0.0
      %2367 = vmatpush1.msra.mxu0 0.0
      %2368 = vmatprep.subr.mxu0 0.0
      %2369 = vmatpush1.msra.mxu0 0.0
      %2370 = vmatprep.subr.mxu0 0.0
      %2371 = vmatpush1.msra.mxu0 0.0
      %2372 = vmatprep.subr.mxu0 0.0
      %2373 = vmatpush1.msra.mxu0 0.0
      %2374 = vmatprep.subr.mxu0 0.0
      %2375 = vmatpush1.msra.mxu0 0.0
      %2376 = vmatprep.subr.mxu0 0.0
      %2377 = vmatpush1.msra.mxu0 0.0
      %2378 = vmatprep.subr.mxu0 0.0
      %2379 = vmatpush1.msra.mxu0 0.0
      %2380 = vmatprep.subr.mxu0 0.0
      %2381 = vmatpush1.msra.mxu0 0.0
      %2382 = vmatprep.subr.mxu0 0.0
      %2383 = vmatpush1.msra.mxu0 0.0
      %2384 = vmatprep.subr.mxu0 0.0
      %2385 = vmatpush1.msra.mxu0 0.0
      %2386 = vmatprep.subr.mxu0 0.0
      %2387 = vmatpush1.msra.mxu0 0.0
      %2388 = vmatprep.subr.mxu0 0.0
      %2389 = vmatpush1.msra.mxu0 0.0
      %2390 = vmatprep.subr.mxu0 0.0
      %2391 = vmatpush1.msra.mxu0 0.0
      %2392 = vmatprep.subr.mxu0 0.0
      %2393 = vmatpush1.msra.mxu0 0.0
      %2394 = vmatprep.subr.mxu0 0.0
      %2395 = vmatpush1.msra.mxu0 0.0
      %2396 = vmatprep.subr.mxu0 0.0
      %2397 = vmatpush1.msra.mxu0 0.0
      %2398 = vmatprep.subr.mxu0 0.0
      %2399 = vmatpush1.msra.mxu0 0.0
      %2400 = vmatprep.subr.mxu0 0.0
      %2401 = vmatpush1.msra.mxu0 0.0
      %2402 = vmatprep.subr.mxu0 0.0
      %2403 = vmatpush1.msra.mxu0 0.0
      %2404 = vmatprep.subr.mxu0 0.0
      %2405 = vmatpush1.msra.mxu0 0.0
      %2406 = vmatprep.subr.mxu0 0.0
      %2407 = vmatpush1.msra.mxu0 0.0
      %2408 = vmatprep.mubr.f32.mxu0 0.0
      %2409 = vmatmul.mubr.f32.gmra.mrb[0].mxu0 %v2342
      %v2410 = vpop.f32.mrb[0].mxu0
      %v2411 = vadd.f32 0.0, %v2410
      %v2412 = vpop.f32.mrb[0].mxu0
      %2413 = vdwg.mxu0
      %v2415 = vrot.slane %v2411, 6
      %2416 = vrot.lane.b32.xlu0 %v2415, 64
      %v2417 = vpop.permute.xlu0 %2416
      %v2419 = vadd.f32 %v1571, %v2417
      %v2420 = vsub.f32 0.0, %v2419
      %v2421 = vmul.f32 %v2420, 1.442695
      %v2422 = vpow.pop %v2421
      %v2423 = vadd.f32 %v2422, 1.0
      %v2424 = vrcp.pop %v2423
      %v2425 = vmul.f32 1.0, %v2424
      %v2426 = vtanh.pop %v2419
      %v2428 = vrot.slane %v2327, 1
      %v2430 = vmul.f32 %v2425, %v2428
      %2432 = vrot.lane.b32.xlu0 %v2426, 96
      %v2433 = vpop.permute.xlu0 %2432
      %v2435 = vmul.f32 %v2425, %v2433
      %2437 = vrot.lane.b32.xlu0 %v2435, 16
      %v2438 = vpop.permute.xlu0 %2437
      %v2440 = vadd.f32 %v2430, %v2438
      %v2441 = vtanh.pop %v2440
      %2443 = vrot.lane.b32.xlu0 %v2441, 32
      %v2444 = vpop.permute.xlu0 %2443
      %v2446 = vmul.f32 %v2425, %v2444
      %2448 = vrot.lane.b32.xlu0 %v2446, 32
      %v2449 = vpop.permute.xlu0 %2448
      %2451 = vst.msk [vmem:[#allocation2] sm:$0x4] %vm1258, %v2449
      %v2452 = vrot.slane %v2446, 2
      %2453 = vrot.lane.b32.xlu0 %v2452, 16
      %v2454 = vpop.permute.xlu0 %2453
      %v2455 = vsel %vm376, %v2454, 0
      %2457 = vmatprep.subr.mxu0 0.0
      %2458 = vmatpush1.msra.mxu0 %v1578
      %2459 = vmatprep.subr.mxu0 0.0
      %2460 = vmatpush1.msra.mxu0 %v1579
      %2461 = vmatprep.subr.mxu0 0.0
      %2462 = vmatpush1.msra.mxu0 0.0
      %2463 = vmatprep.subr.mxu0 0.0
      %2464 = vmatpush1.msra.mxu0 0.0
      %2465 = vmatprep.subr.mxu0 0.0
      %2466 = vmatpush1.msra.mxu0 0.0
      %2467 = vmatprep.subr.mxu0 0.0
      %2468 = vmatpush1.msra.mxu0 0.0
      %2469 = vmatprep.subr.mxu0 0.0
      %2470 = vmatpush1.msra.mxu0 0.0
      %2471 = vmatprep.subr.mxu0 0.0
      %2472 = vmatpush1.msra.mxu0 0.0
      %2473 = vmatprep.subr.mxu0 0.0
      %2474 = vmatpush1.msra.mxu0 0.0
      %2475 = vmatprep.subr.mxu0 0.0
      %2476 = vmatpush1.msra.mxu0 0.0
      %2477 = vmatprep.subr.mxu0 0.0
      %2478 = vmatpush1.msra.mxu0 0.0
      %2479 = vmatprep.subr.mxu0 0.0
      %2480 = vmatpush1.msra.mxu0 0.0
      %2481 = vmatprep.subr.mxu0 0.0
      %2482 = vmatpush1.msra.mxu0 0.0
      %2483 = vmatprep.subr.mxu0 0.0
      %2484 = vmatpush1.msra.mxu0 0.0
      %2485 = vmatprep.subr.mxu0 0.0
      %2486 = vmatpush1.msra.mxu0 0.0
      %2487 = vmatprep.subr.mxu0 0.0
      %2488 = vmatpush1.msra.mxu0 0.0
      %2489 = vmatprep.subr.mxu0 0.0
      %2490 = vmatpush1.msra.mxu0 0.0
      %2491 = vmatprep.subr.mxu0 0.0
      %2492 = vmatpush1.msra.mxu0 0.0
      %2493 = vmatprep.subr.mxu0 0.0
      %2494 = vmatpush1.msra.mxu0 0.0
      %2495 = vmatprep.subr.mxu0 0.0
      %2496 = vmatpush1.msra.mxu0 0.0
      %2497 = vmatprep.subr.mxu0 0.0
      %2498 = vmatpush1.msra.mxu0 0.0
      %2499 = vmatprep.subr.mxu0 0.0
      %2500 = vmatpush1.msra.mxu0 0.0
      %2501 = vmatprep.subr.mxu0 0.0
      %2502 = vmatpush1.msra.mxu0 0.0
      %2503 = vmatprep.subr.mxu0 0.0
      %2504 = vmatpush1.msra.mxu0 0.0
      %2505 = vmatprep.subr.mxu0 0.0
      %2506 = vmatpush1.msra.mxu0 0.0
      %2507 = vmatprep.subr.mxu0 0.0
      %2508 = vmatpush1.msra.mxu0 0.0
      %2509 = vmatprep.subr.mxu0 0.0
      %2510 = vmatpush1.msra.mxu0 0.0
      %2511 = vmatprep.subr.mxu0 0.0
      %2512 = vmatpush1.msra.mxu0 0.0
      %2513 = vmatprep.subr.mxu0 0.0
      %2514 = vmatpush1.msra.mxu0 0.0
      %2515 = vmatprep.subr.mxu0 0.0
      %2516 = vmatpush1.msra.mxu0 0.0
      %2517 = vmatprep.subr.mxu0 0.0
      %2518 = vmatpush1.msra.mxu0 0.0
      %2519 = vmatprep.subr.mxu0 0.0
      %2520 = vmatpush1.msra.mxu0 0.0
      %2521 = vmatprep.mubr.f32.mxu0 0.0
      %2522 = vmatmul.mubr.f32.gmra.mrb[0].mxu0 %v2455
      %v2523 = vpop.f32.mrb[0].mxu0
      %v2524 = vadd.f32 0.0, %v2523
      %v2525 = vpop.f32.mrb[0].mxu0
      %2526 = vdwg.mxu0
      %v2528 = vrot.slane %v2524, 7
      %2529 = vrot.lane.b32.xlu0 %v2528, 64
      %v2530 = vpop.permute.xlu0 %2529
      %v2532 = vadd.f32 %v1571, %v2530
      %v2533 = vsub.f32 0.0, %v2532
      %v2534 = vmul.f32 %v2533, 1.442695
      %v2535 = vpow.pop %v2534
      %v2536 = vadd.f32 %v2535, 1.0
      %v2537 = vrcp.pop %v2536
      %v2538 = vmul.f32 1.0, %v2537
      %v2539 = vtanh.pop %v2532
      %v2541 = vrot.slane %v2440, 1
      %v2543 = vmul.f32 %v2538, %v2541
      %2545 = vrot.lane.b32.xlu0 %v2539, 96
      %v2546 = vpop.permute.xlu0 %2545
      %v2548 = vmul.f32 %v2538, %v2546
      %2550 = vrot.lane.b32.xlu0 %v2548, 16
      %v2551 = vpop.permute.xlu0 %2550
      %v2553 = vadd.f32 %v2543, %v2551
      %v2554 = vtanh.pop %v2553
      %2556 = vrot.lane.b32.xlu0 %v2554, 32
      %v2557 = vpop.permute.xlu0 %2556
      %v2559 = vmul.f32 %v2538, %v2557
      %2561 = vrot.lane.b32.xlu0 %v2559, 32
      %v2562 = vpop.permute.xlu0 %2561
      %2564 = vst.msk [vmem:[#allocation2] sm:$0x2] %vm1372, %v2562
      %v2565 = vrot.slane %v2559, 1
      %2566 = vrot.lane.b32.xlu0 %v2565, 16
      %v2567 = vpop.permute.xlu0 %2566
      %v2568 = vsel %vm376, %v2567, 0
      %2570 = vmatprep.subr.mxu0 0.0
      %2571 = vmatpush1.msra.mxu0 %v1578
      %2572 = vmatprep.subr.mxu0 0.0
      %2573 = vmatpush1.msra.mxu0 %v1579
      %2574 = vmatprep.subr.mxu0 0.0
      %2575 = vmatpush1.msra.mxu0 0.0
      %2576 = vmatprep.subr.mxu0 0.0
      %2577 = vmatpush1.msra.mxu0 0.0
      %2578 = vmatprep.subr.mxu0 0.0
      %2579 = vmatpush1.msra.mxu0 0.0
      %2580 = vmatprep.subr.mxu0 0.0
      %2581 = vmatpush1.msra.mxu0 0.0
      %2582 = vmatprep.subr.mxu0 0.0
      %2583 = vmatpush1.msra.mxu0 0.0
      %2584 = vmatprep.subr.mxu0 0.0
      %2585 = vmatpush1.msra.mxu0 0.0
      %2586 = vmatprep.subr.mxu0 0.0
      %2587 = vmatpush1.msra.mxu0 0.0
      %2588 = vmatprep.subr.mxu0 0.0
      %2589 = vmatpush1.msra.mxu0 0.0
      %2590 = vmatprep.subr.mxu0 0.0
      %2591 = vmatpush1.msra.mxu0 0.0
      %2592 = vmatprep.subr.mxu0 0.0
      %2593 = vmatpush1.msra.mxu0 0.0
      %2594 = vmatprep.subr.mxu0 0.0
      %2595 = vmatpush1.msra.mxu0 0.0
      %2596 = vmatprep.subr.mxu0 0.0
      %2597 = vmatpush1.msra.mxu0 0.0
      %2598 = vmatprep.subr.mxu0 0.0
      %2599 = vmatpush1.msra.mxu0 0.0
      %2600 = vmatprep.subr.mxu0 0.0
      %2601 = vmatpush1.msra.mxu0 0.0
      %2602 = vmatprep.subr.mxu0 0.0
      %2603 = vmatpush1.msra.mxu0 0.0
      %2604 = vmatprep.subr.mxu0 0.0
      %2605 = vmatpush1.msra.mxu0 0.0
      %2606 = vmatprep.subr.mxu0 0.0
      %2607 = vmatpush1.msra.mxu0 0.0
      %2608 = vmatprep.subr.mxu0 0.0
      %2609 = vmatpush1.msra.mxu0 0.0
      %2610 = vmatprep.subr.mxu0 0.0
      %2611 = vmatpush1.msra.mxu0 0.0
      %2612 = vmatprep.subr.mxu0 0.0
      %2613 = vmatpush1.msra.mxu0 0.0
      %2614 = vmatprep.subr.mxu0 0.0
      %2615 = vmatpush1.msra.mxu0 0.0
      %2616 = vmatprep.subr.mxu0 0.0
      %2617 = vmatpush1.msra.mxu0 0.0
      %2618 = vmatprep.subr.mxu0 0.0
      %2619 = vmatpush1.msra.mxu0 0.0
      %2620 = vmatprep.subr.mxu0 0.0
      %2621 = vmatpush1.msra.mxu0 0.0
      %2622 = vmatprep.subr.mxu0 0.0
      %2623 = vmatpush1.msra.mxu0 0.0
      %2624 = vmatprep.subr.mxu0 0.0
      %2625 = vmatpush1.msra.mxu0 0.0
      %2626 = vmatprep.subr.mxu0 0.0
      %2627 = vmatpush1.msra.mxu0 0.0
      %2628 = vmatprep.subr.mxu0 0.0
      %2629 = vmatpush1.msra.mxu0 0.0
      %2630 = vmatprep.subr.mxu0 0.0
      %2631 = vmatpush1.msra.mxu0 0.0
      %2632 = vmatprep.subr.mxu0 0.0
      %2633 = vmatpush1.msra.mxu0 0.0
      %2634 = vmatprep.mubr.f32.mxu0 0.0
      %2635 = vmatmul.mubr.f32.gmra.mrb[0].mxu0 %v2568
      %v2636 = vpop.f32.mrb[0].mxu0
      %v2637 = vadd.f32 0.0, %v2636
      %v2638 = vpop.f32.mrb[0].mxu0
      %2639 = vdwg.mxu0
      %2641 = vrot.lane.b32.xlu0 %v2637, 64
      %v2642 = vpop.permute.xlu0 %2641
      %v2644 = vadd.f32 %v1571, %v2642
      %v2645 = vsub.f32 0.0, %v2644
      %v2646 = vmul.f32 %v2645, 1.442695
      %v2647 = vpow.pop %v2646
      %v2648 = vadd.f32 %v2647, 1.0
      %v2649 = vrcp.pop %v2648
      %v2650 = vmul.f32 1.0, %v2649
      %v2651 = vtanh.pop %v2644
      %v2653 = vrot.slane %v2553, 1
      %v2655 = vmul.f32 %v2650, %v2653
      %2657 = vrot.lane.b32.xlu0 %v2651, 96
      %v2658 = vpop.permute.xlu0 %2657
      %v2660 = vmul.f32 %v2650, %v2658
      %2662 = vrot.lane.b32.xlu0 %v2660, 16
      %v2663 = vpop.permute.xlu0 %2662
      %v2665 = vadd.f32 %v2655, %v2663
      %v2666 = vtanh.pop %v2665
      %2668 = vrot.lane.b32.xlu0 %v2666, 32
      %v2669 = vpop.permute.xlu0 %2668
      %v2671 = vmul.f32 %v2650, %v2669
      %2673 = vrot.lane.b32.xlu0 %v2671, 32
      %v2674 = vpop.permute.xlu0 %2673
      %2676 = vst.msk [vmem:[#allocation2] sm:$0x1] %vm1485, %v2674
      %v2677 = vld [vmem:[#allocation2] sm:$0x1f]
      %v2678 = vld [vmem:[%s4] sm:$0xff]
      %v2679 = vld [vmem:[%s4 + $0x8] sm:$0xff]
      %v2680 = vld [vmem:[%s4 + $0x10] sm:$0xff]
      %v2681 = vld [vmem:[%s4 + $0x18] sm:$0xff]
      %v2682 = vld [vmem:[%s5] sm:$0x1]
      %v2684 = vlaneseq
      %v2685 = vshrl.u32 %v2684, 7
      %v2686 = vsub.s32 0, %v2685
      %v2687 = vrot.slane %v2682, %v2686
      %v2690 = vsel %vm297, %v2677, 0
      %2692 = vmatprep.subr.mxu0 0.0
      %2693 = vmatpush1.msra.mxu0 %v2678
      %2694 = vmatprep.subr.mxu0 0.0
      %2695 = vmatpush1.msra.mxu0 %v2679
      %2696 = vmatprep.subr.mxu0 0.0
      %2697 = vmatpush1.msra.mxu0 %v2680
      %2698 = vmatprep.subr.mxu0 0.0
      %2699 = vmatpush1.msra.mxu0 %v2681
      %2700 = vmatprep.subr.mxu0 0.0
      %2701 = vmatpush1.msra.mxu0 0.0
      %2702 = vmatprep.subr.mxu0 0.0
      %2703 = vmatpush1.msra.mxu0 0.0
      %2704 = vmatprep.subr.mxu0 0.0
      %2705 = vmatpush1.msra.mxu0 0.0
      %2706 = vmatprep.subr.mxu0 0.0
      %2707 = vmatpush1.msra.mxu0 0.0
      %2708 = vmatprep.subr.mxu0 0.0
      %2709 = vmatpush1.msra.mxu0 0.0
      %2710 = vmatprep.subr.mxu0 0.0
      %2711 = vmatpush1.msra.mxu0 0.0
      %2712 = vmatprep.subr.mxu0 0.0
      %2713 = vmatpush1.msra.mxu0 0.0
      %2714 = vmatprep.subr.mxu0 0.0
      %2715 = vmatpush1.msra.mxu0 0.0
      %2716 = vmatprep.subr.mxu0 0.0
      %2717 = vmatpush1.msra.mxu0 0.0
      %2718 = vmatprep.subr.mxu0 0.0
      %2719 = vmatpush1.msra.mxu0 0.0
      %2720 = vmatprep.subr.mxu0 0.0
      %2721 = vmatpush1.msra.mxu0 0.0
      %2722 = vmatprep.subr.mxu0 0.0
      %2723 = vmatpush1.msra.mxu0 0.0
      %2724 = vmatprep.subr.mxu0 0.0
      %2725 = vmatpush1.msra.mxu0 0.0
      %2726 = vmatprep.subr.mxu0 0.0
      %2727 = vmatpush1.msra.mxu0 0.0
      %2728 = vmatprep.subr.mxu0 0.0
      %2729 = vmatpush1.msra.mxu0 0.0
      %2730 = vmatprep.subr.mxu0 0.0
      %2731 = vmatpush1.msra.mxu0 0.0
      %2732 = vmatprep.subr.mxu0 0.0
      %2733 = vmatpush1.msra.mxu0 0.0
      %2734 = vmatprep.subr.mxu0 0.0
      %2735 = vmatpush1.msra.mxu0 0.0
      %2736 = vmatprep.subr.mxu0 0.0
      %2737 = vmatpush1.msra.mxu0 0.0
      %2738 = vmatprep.subr.mxu0 0.0
      %2739 = vmatpush1.msra.mxu0 0.0
      %2740 = vmatprep.subr.mxu0 0.0
      %2741 = vmatpush1.msra.mxu0 0.0
      %2742 = vmatprep.subr.mxu0 0.0
      %2743 = vmatpush1.msra.mxu0 0.0
      %2744 = vmatprep.subr.mxu0 0.0
      %2745 = vmatpush1.msra.mxu0 0.0
      %2746 = vmatprep.subr.mxu0 0.0
      %2747 = vmatpush1.msra.mxu0 0.0
      %2748 = vmatprep.subr.mxu0 0.0
      %2749 = vmatpush1.msra.mxu0 0.0
      %2750 = vmatprep.subr.mxu0 0.0
      %2751 = vmatpush1.msra.mxu0 0.0
      %2752 = vmatprep.subr.mxu0 0.0
      %2753 = vmatpush1.msra.mxu0 0.0
      %2754 = vmatprep.subr.mxu0 0.0
      %2755 = vmatpush1.msra.mxu0 0.0
      %2756 = vmatprep.mubr.f32.mxu0 0.0
      %2757 = vmatmul.mubr.f32.gmra.mrb[0].mxu0 %v2690
      %v2758 = vpop.f32.mrb[0].mxu0
      %v2759 = vadd.f32 %v2687, %v2758
      %v2760 = vpop.f32.mrb[0].mxu0
      %2761 = vdwg.mxu0
      %2762 = vst [vmem:[%s280] sm:$0x1f] %v2759
      %vm2763 = vcmask 1044480
      %v2764 = vsel %vm2763, %v2759, -inf
      %2765 = vmax.xlane.f32.xlu0 %v2764
      %v2766 = vpop.xlane.xlu0 %2765
      %v2767 = vlaneseq
      %v2768 = vand.u32 %v2767, 127
      %vm2769 = vcmp.eq.f32.partialorder %v2759, %v2766
      %v2770 = vsel %vm2769, %v2768, 128
      %v2771 = vsel %vm2763, %v2770, 2147483647
      %v2772 = vand.u32 %v2771, 65535
      %v2773 = vshra.s32 %v2771, 16
      %v2774 = vcvt.s32.f32 %v2772
      %v2775 = vcvt.s32.f32 %v2773
      %2776 = vmin.xlane.f32.xlu0 %v2775
      %v2777 = vpop.xlane.xlu0 %2776
      %vm2778 = vcmp.eq.f32.partialorder %v2775, %v2777
      %v2779 = vsel %vm2778, %v2774, inf
      %2780 = vmin.xlane.f32.xlu0 %v2779
      %v2781 = vpop.xlane.xlu0 %2780
      %v2782 = vcvt.f32.s32 %v2781
      %v2783 = vcvt.f32.s32 %v2777
      %v2784 = vshll.u32 %v2783, 16
      %v2785 = vadd.s32 %v2784, %v2782
      %2786 = vst [vmem:[%s284] sm:$0x1f] %v2785
      %p2787 = scmp.lt.s32.totalorder %s19, 1
      %s2788 = scalar_select %p2787, %s19, 1
      %s2789 = smul.addr %s2788, 8
      %s2790 = scalar_lea.vmem %s6, %s2789
      %p2791 = scmp.lt.s32.totalorder %s19, 1
      %s2792 = scalar_select %p2791, %s19, 1
      %s2793 = smul.addr %s2792, 8
      %s2794 = scalar_lea.vmem %s7, %s2793
      // Predicated region
      $region45: #{ocr_forward.3} parent=43 // pred_check
        %p2795 = pneg %p168
      $region46: #{ocr_forward.3} parent=43 // pred_check_branch
        %2797 = sbr.rel (%p2795) target = $region48
      $region47: #{ocr_forward.3} parent=43 // pred_region
        _
      $region48: #{ocr_forward.3} parent=43 // pred_fallthru
        _
      // Predicated region
      $region49: #{ocr_forward.3} parent=43 // pred_check
        %p2798 = pneg %p194
      $region50: #{ocr_forward.3} parent=43 // pred_check_branch
        %2800 = sbr.rel (%p2798) target = $region52
      $region51: #{ocr_forward.3} parent=43 // pred_region
        _
      $region52: #{ocr_forward.3} parent=43 // pred_fallthru
        _
    $region44: #{ocr_forward.3} parent=5 // pred_fallthru
      _
    %p2801 = scmp.le.s32.totalorder 2, %s14
    // Predicated region
    $region53: #{ocr_forward.3} parent=5 // pred_check
      %p2802 = pneg %p2801
    $region54: #{ocr_forward.3} parent=5 // pred_check_branch
      %2804 = sbr.rel (%p2802) target = $region56
    $region55: #{ocr_forward.3} parent=5 // pred_region
      %s2805 = ssub.s32 %s14, 2
      // Predicated region
      $region57: #{ocr_forward.3} parent=55 // pred_check
        %p2806 = pneg %p174
      $region58: #{ocr_forward.3} parent=55 // pred_check_branch
        %2808 = sbr.rel (%p2806) target = $region60
      $region59: #{ocr_forward.3} parent=55 // pred_region
        %p2809 = scmp.lt.s32.totalorder %s20, 1
        %s2810 = scalar_select %p2809, %s20, 1
        %s2811 = smul.addr %s2810, 8
        %s2812 = scalar_lea.vmem %s6, %s2811
      $region60: #{ocr_forward.3} parent=55 // pred_fallthru
        _
      // Predicated region
      $region61: #{ocr_forward.3} parent=55 // pred_check
        %p2813 = pneg %p200
      $region62: #{ocr_forward.3} parent=55 // pred_check_branch
        %2815 = sbr.rel (%p2813) target = $region64
      $region63: #{ocr_forward.3} parent=55 // pred_region
        %p2816 = scmp.lt.s32.totalorder %s20, 1
        %s2817 = scalar_select %p2816, %s20, 1
        %s2818 = smul.addr %s2817, 8
        %s2819 = scalar_lea.vmem %s7, %s2818
      $region64: #{ocr_forward.3} parent=55 // pred_fallthru
        _
    $region56: #{ocr_forward.3} parent=5 // pred_fallthru
      _
  $region6: #{ocr_forward.3} parent=0 // loop_footer
    %s18 = sadd.s32 1, %s14
  $region7: #{ocr_forward.3} parent=0 // loop_footer_branch
    %13 = sbr.rel target = $region3
  $region8: #{ocr_forward.3} parent=0 // loop_exit
    _

</llo_original>
